<compile_context>
chip_gen: v7x
topology: tpu7x:2x2x1
jax: 0.10.0
libtpu: 0.0.40
codegen_flags: <defaults>
</compile_context>

<pallas_src>
import math
import functools
import jax
import jax.numpy as jnp
from jax.experimental import pallas as pl
from jax.experimental.pallas import tpu as pltpu


# --------------------------------------------------------------------------- glue
def to_dense_batch(X, batch, num_graphs, max_nodes):
    """X: (N, F) node features, batch: (N,) sorted graph ids ->
    (B, max_nodes, F) dense batch and (B, max_nodes) validity mask."""
    N, F = X.shape
    counts = jnp.bincount(batch, length=num_graphs)
    starts = jnp.cumsum(counts) - counts                  # exclusive prefix sum
    pos = jnp.arange(N) - starts[batch]                   # position inside own graph
    dense = jnp.zeros((num_graphs, max_nodes, F), X.dtype).at[batch, pos].set(X)
    mask = jnp.zeros((num_graphs, max_nodes), jnp.bool_).at[batch, pos].set(True)
    return dense, mask


# --------------------------------------------------------------------------- in-kernel building blocks
def _proj_heads(x, w_h, b_h):
    """x: (S, D); w_h: (H, D, dh); b_h: (H, 1, dh) -> (H, S, dh) (head-batched matmul)."""
    H = w_h.shape[0]
    S, D = x.shape
    xb = jnp.broadcast_to(x[None], (H, S, D))
    return jnp.einsum('hsd,hde->hse', xb, w_h,
                      preferred_element_type=jnp.float32) + b_h


def _mab(q_h, x_k, mask_add, wk_h, bk_h, wv_h, bv_h, unsplit, wo, bo, scale):
    """
    Head-batched MAB block (Set-Transformer, ln=False).
      q_h      : (H, Sq, dh)  already-projected queries, split by head
      x_k      : (Sk, Dk)     raw keys/values
      mask_add : (1, Sk) additive mask (0 valid / -1e9 pad) or None
      unsplit  : (H, dh, Dv)  one-hot weights placing head h at lanes [h*dh,(h+1)*dh)
    returns (Sq, Dv) = O + relu(O @ wo + bo),
            O = concat_h( Q_h + softmax(Q_h K_h^T * scale + mask) V_h )
    """
    K = _proj_heads(x_k, wk_h, bk_h)                         # (H, Sk, dh)
    V = _proj_heads(x_k, wv_h, bv_h)                         # (H, Sk, dh)
    s = jnp.einsum('hqd,hkd->hqk', q_h, K,
                   preferred_element_type=jnp.float32) * scale
    if mask_add is not None:
        s = s + mask_add                                     # (1, Sk) broadcasts
    s = s - jnp.max(s, axis=-1, keepdims=True)
    e = jnp.exp(s)
    a = e * pl.reciprocal(jnp.sum(e, axis=-1, keepdims=True), approx=True)
    o_h = q_h + jnp.einsum('hqk,hkd->hqd', a, V,
                           preferred_element_type=jnp.float32)   # (H, Sq, dh)
    # concat heads via matmul with one-hot "unsplit" weights -> no lane shuffles
    o = jnp.sum(jnp.einsum('hqd,hdv->hqv', o_h, unsplit,
                           preferred_element_type=jnp.float32), axis=0)  # (Sq, Dv)
    ofc = jnp.dot(o, wo, preferred_element_type=jnp.float32) + bo
    return o + jnp.maximum(ofc, 0.0)


# --------------------------------------------------------------------------- fused PSP kernel
def _psp_kernel(scale1, scale2, x_ref, m_ref, *refs):
    (q1, wk1, bk1, wv1, bv1, u1, wo1, bo1,
     wq2, bq2, wk2, bk2, wv2, bv2, u2, wo2, bo2,
     q3, wk3, bk3, wv3, bv3, u3, wo3, bo3,
     lw, lb, o_ref) = refs

    x = x_ref[...]                    # (S, Din)  one graph per grid step
    m = m_ref[...]                    # (1, S)    additive key mask

    # PMA1: queries = precomputed projected seeds (hoisted out of the grid)
    x1 = _mab(q1[...], x, m, wk1[...], bk1[...], wv1[...], bv1[...],
              u1[...], wo1[...], bo1[...], scale1)                    # (k1, Din)
    # SAB: self-attention over the k1 pooled tokens (no padding -> no mask)
    q2 = _proj_heads(x1, wq2[...], bq2[...])
    x2 = _mab(q2, x1, None, wk2[...], bk2[...], wv2[...], bv2[...],
              u2[...], wo2[...], bo2[...], scale2)                    # (k1, Dh)
    # PMA2: pool down to a single token
    x3 = _mab(q3[...], x2, None, wk3[...], bk3[...], wv3[...], bv3[...],
              u3[...], wo3[...], bo3[...], scale2)                    # (1, Dh)
    # final Linear (fused epilogue)
    o_ref[...] = (jnp.dot(x3, lw[...], preferred_element_type=jnp.float32)
                  + lb[...]).astype(o_ref.dtype)


def psp_forward(kp, dense_X, add_mask):
    """dense_X: (B, S, Din); add_mask: (B, 1, S) additive mask -> (B, Dout)."""
    B, S, Din = dense_X.shape
    Dh = kp["wo2"].shape[0]
    Dout = kp["lin_w"].shape[1]
    scale1 = 1.0 / math.sqrt(Din)    # dim_V of PMA1 == dim_input  (Set-Transformer scaling)
    scale2 = 1.0 / math.sqrt(Dh)     # dim_V of SAB / PMA2 == dim_hidden

    weight_names = ["q1", "wk1", "bk1", "wv1", "bv1", "u1", "wo1", "bo1",
                    "wq2", "bq2", "wk2", "bk2", "wv2", "bv2", "u2", "wo2", "bo2",
                    "q3", "wk3", "bk3", "wv3", "bv3", "u3", "wo3", "bo3",
                    "lin_w", "lin_b"]
    weights = [kp[n] for n in weight_names]

    def const_spec(a):
        n = a.ndim
        return pl.BlockSpec(a.shape, lambda b, n=n: (0,) * n)   # resident, fetched once

    in_specs = ([pl.BlockSpec((None, S, Din), lambda b: (b, 0, 0)),
                 pl.BlockSpec((None, 1, S), lambda b: (b, 0, 0))]
                + [const_spec(a) for a in weights])

    out = pl.pallas_call(
        functools.partial(_psp_kernel, scale1, scale2),
        out_shape=jax.ShapeDtypeStruct((B, 1, Dout), jnp.float32),
        grid=(B,),
        in_specs=in_specs,
        out_specs=pl.BlockSpec((None, 1, Dout), lambda b: (b, 0, 0)),
        compiler_params=pltpu.CompilerParams(
            dimension_semantics=("parallel",)),
    )(dense_X, add_mask, *weights)
    return out[:, 0, :]


# --------------------------------------------------------------------------- parameter init
def init_mab_params(key, dq, dk, dv):
    ks = jax.random.split(key, 8)

    def u(k, shape, fan_in):
        bound = 1.0 / math.sqrt(fan_in)
        return jax.random.uniform(k, shape, jnp.float32, -bound, bound)

    return dict(
        wq=u(ks[0], (dq, dv), dq), bq=u(ks[1], (1, dv), dq),
        wk=u(ks[2], (dk, dv), dk), bk=u(ks[3], (1, dv), dk),
        wv=u(ks[4], (dk, dv), dk), bv=u(ks[5], (1, dv), dk),
        wo=u(ks[6], (dv, dv), dv), bo=u(ks[7], (1, dv), dv),
    )


def init_psp_params(key, dim_input, dim_hidden, dim_output, num_keys):
    ks = jax.random.split(key, 7)
    xavier = lambda k, shape: jax.random.normal(k, shape, jnp.float32) * math.sqrt(
        2.0 / (shape[0] + shape[1]))
    return dict(
        pma1_seed=xavier(ks[0], (num_keys[0], dim_input)),
        pma1=init_mab_params(ks[1], dim_input, dim_input, dim_input),
        sab=init_mab_params(ks[2], dim_input, dim_input, dim_hidden),
        pma2_seed=xavier(ks[3], (num_keys[1], dim_hidden)),
        pma2=init_mab_params(ks[4], dim_hidden, dim_hidden, dim_hidden),
        lin_w=xavier(ks[5], (dim_hidden, dim_output)),
        lin_b=jax.random.normal(ks[6], (1, dim_output), jnp.float32) * 0.01,
    )


# ------------------------------------------------------------ one-time weight preprocessing
def _split_w(w, H):                       # (D, Dv) -> (H, D, dh)
    D, Dv = w.shape
    return jnp.transpose(w.reshape(D, H, Dv // H), (1, 0, 2))


def _split_b(b, H):                       # (1, Dv) -> (H, 1, dh)
    Dv = b.shape[-1]
    return jnp.transpose(b.reshape(1, H, Dv // H), (1, 0, 2))


def _split_rows(x, H):                    # (S, Dv) -> (H, S, dh)
    S, Dv = x.shape
    return jnp.transpose(x.reshape(S, H, Dv // H), (1, 0, 2))


def _unsplit(H, dv):                      # one-hot head re-concat weights (H, dh, Dv)
    return jnp.eye(dv, dtype=jnp.float32).reshape(H, dv // H, dv)


def prepare_kernel_params(p, num_heads):
    """Head-split all projection weights once and hoist the batch-invariant
    seed-query projections Q = seed @ wq + bq out of the kernel grid."""
    H = num_heads
    pma1, sab, pma2 = p["pma1"], p["sab"], p["pma2"]
    din = pma1["wq"].shape[1]             # dim_V of PMA1 (= dim_input)
    dh_ = sab["wq"].shape[1]              # dim_hidden
    q1 = p["pma1_seed"] @ pma1["wq"] + pma1["bq"]     # (k1, din)   computed ONCE
    q3 = p["pma2_seed"] @ pma2["wq"] + pma2["bq"]     # (k2, dh_)   computed ONCE
    return dict(
        q1=_split_rows(q1, H),
        wk1=_split_w(pma1["wk"], H), bk1=_split_b(pma1["bk"], H),
        wv1=_split_w(pma1["wv"], H), bv1=_split_b(pma1["bv"], H),
        u1=_unsplit(H, din), wo1=pma1["wo"], bo1=pma1["bo"],
        wq2=_split_w(sab["wq"], H), bq2=_split_b(sab["bq"], H),
        wk2=_split_w(sab["wk"], H), bk2=_split_b(sab["bk"], H),
        wv2=_split_w(sab["wv"], H), bv2=_split_b(sab["bv"], H),
        u2=_unsplit(H, dh_), wo2=sab["wo"], bo2=sab["bo"],
        q3=_split_rows(q3, H),
        wk3=_split_w(pma2["wk"], H), bk3=_split_b(pma2["bk"], H),
        wv3=_split_w(pma2["wv"], H), bv3=_split_b(pma2["bv"], H),
        u3=_unsplit(H, dh_), wo3=pma2["wo"], bo3=pma2["bo"],
        lin_w=p["lin_w"], lin_b=p["lin_b"],
    )


# --------------------------------------------------------------------------- main
if __name__ == "__main__":
    dim_input, dim_hidden, dim_output = 16, 32, 8
    num_heads, num_keys = 4, [4, 1]
    num_graphs = 2
    nodes_per_graph = [6, 8]
    max_nodes = max(nodes_per_graph)
    N = sum(nodes_per_graph)

    key = jax.random.PRNGKey(0)
    k_params, k_x = jax.random.split(key)
    params = init_psp_params(k_params, dim_input, dim_hidden, dim_output, num_keys)
    kparams = prepare_kernel_params(params, num_heads)

    X = jax.random.normal(k_x, (N, dim_input), jnp.float32)
    batch = jnp.concatenate(
        [jnp.full((n,), g, jnp.int32) for g, n in enumerate(nodes_per_graph)])

    dense_X, mask = to_dense_batch(X, batch, num_graphs, max_nodes)      # (B, S, Din)
    # NOTE: a graph with zero nodes would have all keys masked -> softmax over pure
    # padding; callers should guard against empty graphs.
    add_mask = (1.0 - mask.astype(jnp.float32))[:, None, :] * -1e9        # (B, 1, S)

    out = psp_forward(kparams, dense_X, add_mask)
    out = jax.block_until_ready(out)
    assert out.shape == (num_graphs, dim_output), out.shape
    print("KERNEL_OK")
</pallas_src>

<mosaic_0001>
module attributes {stable_mosaic.version = 11 : i64} {
  func.func @_psp_kernel(%arg0: i32, %arg1: memref<1x8x16xf32, #tpu.memory_space<vmem>>, %arg2: memref<1x1x8xf32, #tpu.memory_space<vmem>>, %arg3: memref<4x4x4xf32, #tpu.memory_space<vmem>>, %arg4: memref<4x16x4xf32, #tpu.memory_space<vmem>>, %arg5: memref<4x1x4xf32, #tpu.memory_space<vmem>>, %arg6: memref<4x16x4xf32, #tpu.memory_space<vmem>>, %arg7: memref<4x1x4xf32, #tpu.memory_space<vmem>>, %arg8: memref<4x4x16xf32, #tpu.memory_space<vmem>>, %arg9: memref<16x16xf32, #tpu.memory_space<vmem>>, %arg10: memref<1x16xf32, #tpu.memory_space<vmem>>, %arg11: memref<4x16x8xf32, #tpu.memory_space<vmem>>, %arg12: memref<4x1x8xf32, #tpu.memory_space<vmem>>, %arg13: memref<4x16x8xf32, #tpu.memory_space<vmem>>, %arg14: memref<4x1x8xf32, #tpu.memory_space<vmem>>, %arg15: memref<4x16x8xf32, #tpu.memory_space<vmem>>, %arg16: memref<4x1x8xf32, #tpu.memory_space<vmem>>, %arg17: memref<4x8x32xf32, #tpu.memory_space<vmem>>, %arg18: memref<32x32xf32, #tpu.memory_space<vmem>>, %arg19: memref<1x32xf32, #tpu.memory_space<vmem>>, %arg20: memref<4x1x8xf32, #tpu.memory_space<vmem>>, %arg21: memref<4x32x8xf32, #tpu.memory_space<vmem>>, %arg22: memref<4x1x8xf32, #tpu.memory_space<vmem>>, %arg23: memref<4x32x8xf32, #tpu.memory_space<vmem>>, %arg24: memref<4x1x8xf32, #tpu.memory_space<vmem>>, %arg25: memref<4x8x32xf32, #tpu.memory_space<vmem>>, %arg26: memref<32x32xf32, #tpu.memory_space<vmem>>, %arg27: memref<1x32xf32, #tpu.memory_space<vmem>>, %arg28: memref<32x8xf32, #tpu.memory_space<vmem>>, %arg29: memref<1x8xf32, #tpu.memory_space<vmem>>, %arg30: memref<1x1x8xf32, #tpu.memory_space<vmem>>) attributes {dimension_semantics = [#tpu.dimension_semantics<parallel>], iteration_bounds = array<i64: 2>, scalar_prefetch = 0 : i64, scratch_operands = 0 : i64, tpu.core_type = #tpu.core_type<tc>, window_params = [{transform_indices = @transform_0, window_bounds = array<i64: 1, 8, 16>}, {transform_indices = @transform_1, window_bounds = array<i64: 1, 1, 8>}, {pipeline_mode = #tpu.pipeline_mode<synchronous>, transform_indices = @transform_2, window_bounds = array<i64: 4, 4, 4>}, {pipeline_mode = #tpu.pipeline_mode<synchronous>, transform_indices = @transform_3, window_bounds = array<i64: 4, 16, 4>}, {pipeline_mode = #tpu.pipeline_mode<synchronous>, transform_indices = @transform_4, window_bounds = array<i64: 4, 1, 4>}, {pipeline_mode = #tpu.pipeline_mode<synchronous>, transform_indices = @transform_5, window_bounds = array<i64: 4, 16, 4>}, {pipeline_mode = #tpu.pipeline_mode<synchronous>, transform_indices = @transform_6, window_bounds = array<i64: 4, 1, 4>}, {pipeline_mode = #tpu.pipeline_mode<synchronous>, transform_indices = @transform_7, window_bounds = array<i64: 4, 4, 16>}, {pipeline_mode = #tpu.pipeline_mode<synchronous>, transform_indices = @transform_8, window_bounds = array<i64: 16, 16>}, {pipeline_mode = #tpu.pipeline_mode<synchronous>, transform_indices = @transform_9, window_bounds = array<i64: 1, 16>}, {pipeline_mode = #tpu.pipeline_mode<synchronous>, transform_indices = @transform_10, window_bounds = array<i64: 4, 16, 8>}, {pipeline_mode = #tpu.pipeline_mode<synchronous>, transform_indices = @transform_11, window_bounds = array<i64: 4, 1, 8>}, {pipeline_mode = #tpu.pipeline_mode<synchronous>, transform_indices = @transform_12, window_bounds = array<i64: 4, 16, 8>}, {pipeline_mode = #tpu.pipeline_mode<synchronous>, transform_indices = @transform_13, window_bounds = array<i64: 4, 1, 8>}, {pipeline_mode = #tpu.pipeline_mode<synchronous>, transform_indices = @transform_14, window_bounds = array<i64: 4, 16, 8>}, {pipeline_mode = #tpu.pipeline_mode<synchronous>, transform_indices = @transform_15, window_bounds = array<i64: 4, 1, 8>}, {pipeline_mode = #tpu.pipeline_mode<synchronous>, transform_indices = @transform_16, window_bounds = array<i64: 4, 8, 32>}, {pipeline_mode = #tpu.pipeline_mode<synchronous>, transform_indices = @transform_17, window_bounds = array<i64: 32, 32>}, {pipeline_mode = #tpu.pipeline_mode<synchronous>, transform_indices = @transform_18, window_bounds = array<i64: 1, 32>}, {pipeline_mode = #tpu.pipeline_mode<synchronous>, transform_indices = @transform_19, window_bounds = array<i64: 4, 1, 8>}, {pipeline_mode = #tpu.pipeline_mode<synchronous>, transform_indices = @transform_20, window_bounds = array<i64: 4, 32, 8>}, {pipeline_mode = #tpu.pipeline_mode<synchronous>, transform_indices = @transform_21, window_bounds = array<i64: 4, 1, 8>}, {pipeline_mode = #tpu.pipeline_mode<synchronous>, transform_indices = @transform_22, window_bounds = array<i64: 4, 32, 8>}, {pipeline_mode = #tpu.pipeline_mode<synchronous>, transform_indices = @transform_23, window_bounds = array<i64: 4, 1, 8>}, {pipeline_mode = #tpu.pipeline_mode<synchronous>, transform_indices = @transform_24, window_bounds = array<i64: 4, 8, 32>}, {pipeline_mode = #tpu.pipeline_mode<synchronous>, transform_indices = @transform_25, window_bounds = array<i64: 32, 32>}, {pipeline_mode = #tpu.pipeline_mode<synchronous>, transform_indices = @transform_26, window_bounds = array<i64: 1, 32>}, {pipeline_mode = #tpu.pipeline_mode<synchronous>, transform_indices = @transform_27, window_bounds = array<i64: 32, 8>}, {pipeline_mode = #tpu.pipeline_mode<synchronous>, transform_indices = @transform_28, window_bounds = array<i64: 1, 8>}, {transform_indices = @transform_29, window_bounds = array<i64: 1, 1, 8>}]} {
    %c0 = arith.constant 0 : index
    %c0_0 = arith.constant 0 : index
    %c0_1 = arith.constant 0 : index
    %0 = vector.load %arg1[%c0, %c0_0, %c0_1] : memref<1x8x16xf32, #tpu.memory_space<vmem>>, vector<1x8x16xf32>
    %1 = vector.shape_cast %0 : vector<1x8x16xf32> to vector<8x16xf32>
    %c0_2 = arith.constant 0 : index
    %c0_3 = arith.constant 0 : index
    %c0_4 = arith.constant 0 : index
    %2 = vector.load %arg2[%c0_2, %c0_3, %c0_4] : memref<1x1x8xf32, #tpu.memory_space<vmem>>, vector<1x1x8xf32>
    %3 = vector.shape_cast %2 : vector<1x1x8xf32> to vector<1x8xf32>
    %c0_5 = arith.constant 0 : index
    %c0_6 = arith.constant 0 : index
    %c0_7 = arith.constant 0 : index
    %4 = vector.load %arg3[%c0_5, %c0_6, %c0_7] : memref<4x4x4xf32, #tpu.memory_space<vmem>>, vector<4x4x4xf32>
    %c0_8 = arith.constant 0 : index
    %c0_9 = arith.constant 0 : index
    %c0_10 = arith.constant 0 : index
    %5 = vector.load %arg4[%c0_8, %c0_9, %c0_10] : memref<4x16x4xf32, #tpu.memory_space<vmem>>, vector<4x16x4xf32>
    %c0_11 = arith.constant 0 : index
    %c0_12 = arith.constant 0 : index
    %c0_13 = arith.constant 0 : index
    %6 = vector.load %arg5[%c0_11, %c0_12, %c0_13] : memref<4x1x4xf32, #tpu.memory_space<vmem>>, vector<4x1x4xf32>
    %c0_14 = arith.constant 0 : index
    %c0_15 = arith.constant 0 : index
    %c0_16 = arith.constant 0 : index
    %7 = vector.load %arg6[%c0_14, %c0_15, %c0_16] : memref<4x16x4xf32, #tpu.memory_space<vmem>>, vector<4x16x4xf32>
    %c0_17 = arith.constant 0 : index
    %c0_18 = arith.constant 0 : index
    %c0_19 = arith.constant 0 : index
    %8 = vector.load %arg7[%c0_17, %c0_18, %c0_19] : memref<4x1x4xf32, #tpu.memory_space<vmem>>, vector<4x1x4xf32>
    %c0_20 = arith.constant 0 : index
    %c0_21 = arith.constant 0 : index
    %c0_22 = arith.constant 0 : index
    %9 = vector.load %arg8[%c0_20, %c0_21, %c0_22] : memref<4x4x16xf32, #tpu.memory_space<vmem>>, vector<4x4x16xf32>
    %c0_23 = arith.constant 0 : index
    %c0_24 = arith.constant 0 : index
    %10 = vector.load %arg9[%c0_23, %c0_24] : memref<16x16xf32, #tpu.memory_space<vmem>>, vector<16x16xf32>
    %c0_25 = arith.constant 0 : index
    %c0_26 = arith.constant 0 : index
    %11 = vector.load %arg10[%c0_25, %c0_26] : memref<1x16xf32, #tpu.memory_space<vmem>>, vector<1x16xf32>
    %12 = vector.shape_cast %1 : vector<8x16xf32> to vector<1x8x16xf32>
    %13 = vector.shape_cast %12 : vector<1x8x16xf32> to vector<1x8x16xf32>
    %14 = vector.broadcast %13 : vector<1x8x16xf32> to vector<4x8x16xf32>
    "tpu.trace_start"() <{level = 10 : i32, message = "hsd,hde->hse"}> : () -> ()
    %cst = arith.constant dense<0.000000e+00> : vector<4x8x4xf32>
    %15 = tpu.matmul %14, %5, %cst {dimension_numbers = #tpu.dot_dimension_numbers<[2], [1], [1], [2], [0, 0, 0, 1, 1, 2], [0], [0]>} : vector<4x8x16xf32>, vector<4x16x4xf32>, vector<4x8x4xf32> -> vector<4x8x4xf32>
    "tpu.trace_stop"() : () -> ()
    %16 = vector.broadcast %6 : vector<4x1x4xf32> to vector<4x8x4xf32>
    %17 = arith.addf %15, %16 : vector<4x8x4xf32>
    %18 = vector.shape_cast %1 : vector<8x16xf32> to vector<1x8x16xf32>
    %19 = vector.shape_cast %18 : vector<1x8x16xf32> to vector<1x8x16xf32>
    %20 = vector.broadcast %19 : vector<1x8x16xf32> to vector<4x8x16xf32>
    "tpu.trace_start"() <{level = 10 : i32, message = "hsd,hde->hse"}> : () -> ()
    %cst_27 = arith.constant dense<0.000000e+00> : vector<4x8x4xf32>
    %21 = tpu.matmul %20, %7, %cst_27 {dimension_numbers = #tpu.dot_dimension_numbers<[2], [1], [1], [2], [0, 0, 0, 1, 1, 2], [0], [0]>} : vector<4x8x16xf32>, vector<4x16x4xf32>, vector<4x8x4xf32> -> vector<4x8x4xf32>
    "tpu.trace_stop"() : () -> ()
    %22 = vector.broadcast %8 : vector<4x1x4xf32> to vector<4x8x4xf32>
    %23 = arith.addf %21, %22 : vector<4x8x4xf32>
    "tpu.trace_start"() <{level = 10 : i32, message = "hqd,hkd->hqk"}> : () -> ()
    %cst_28 = arith.constant dense<0.000000e+00> : vector<4x4x8xf32>
    %24 = tpu.matmul %4, %17, %cst_28 {dimension_numbers = #tpu.dot_dimension_numbers<[2], [2], [1], [1], [0, 0, 0, 1, 1, 1], [0], [0]>} : vector<4x4x4xf32>, vector<4x8x4xf32>, vector<4x4x8xf32> -> vector<4x4x8xf32>
    "tpu.trace_stop"() : () -> ()
    %cst_29 = arith.constant 2.500000e-01 : f32
    %25 = vector.broadcast %cst_29 : f32 to vector<4x4x8xf32>
    %26 = arith.mulf %24, %25 : vector<4x4x8xf32>
    %27 = vector.shape_cast %3 : vector<1x8xf32> to vector<1x1x8xf32>
    %28 = vector.broadcast %27 : vector<1x1x8xf32> to vector<4x4x8xf32>
    %29 = arith.addf %26, %28 : vector<4x4x8xf32>
    %cst_30 = arith.constant dense<0xFF800000> : vector<4x4xf32>
    %30 = vector.multi_reduction <maximumf>, %29, %cst_30 [2] : vector<4x4x8xf32> to vector<4x4xf32>
    %31 = vector.shape_cast %30 : vector<4x4xf32> to vector<4x4x1xf32>
    %32 = vector.broadcast %31 : vector<4x4x1xf32> to vector<4x4x8xf32>
    %33 = arith.subf %29, %32 : vector<4x4x8xf32>
    %34 = math.exp %33 : vector<4x4x8xf32>
    %cst_31 = arith.constant dense<0.000000e+00> : vector<4x4xf32>
    %35 = vector.multi_reduction <add>, %34, %cst_31 [2] : vector<4x4x8xf32> to vector<4x4xf32>
    %36 = vector.shape_cast %35 : vector<4x4xf32> to vector<4x4x1xf32>
    %37 = tpu.reciprocal %36 {approx = true} : vector<4x4x1xf32> -> vector<4x4x1xf32>
    %38 = vector.broadcast %37 : vector<4x4x1xf32> to vector<4x4x8xf32>
    %39 = arith.mulf %34, %38 : vector<4x4x8xf32>
    "tpu.trace_start"() <{level = 10 : i32, message = "hqk,hkd->hqd"}> : () -> ()
    %cst_32 = arith.constant dense<0.000000e+00> : vector<4x4x4xf32>
    %40 = tpu.matmul %39, %23, %cst_32 {dimension_numbers = #tpu.dot_dimension_numbers<[2], [1], [1], [2], [0, 0, 0, 1, 1, 2], [0], [0]>} : vector<4x4x8xf32>, vector<4x8x4xf32>, vector<4x4x4xf32> -> vector<4x4x4xf32>
    "tpu.trace_stop"() : () -> ()
    %41 = arith.addf %4, %40 : vector<4x4x4xf32>
    "tpu.trace_start"() <{level = 10 : i32, message = "hqd,hdv->hqv"}> : () -> ()
    %cst_33 = arith.constant dense<0.000000e+00> : vector<4x4x16xf32>
    %42 = tpu.matmul %41, %9, %cst_33 {dimension_numbers = #tpu.dot_dimension_numbers<[2], [1], [1], [2], [0, 0, 0, 1, 1, 2], [0], [0]>} : vector<4x4x4xf32>, vector<4x4x16xf32>, vector<4x4x16xf32> -> vector<4x4x16xf32>
    "tpu.trace_stop"() : () -> ()
    %cst_34 = arith.constant dense<0.000000e+00> : vector<4x16xf32>
    %43 = vector.multi_reduction <add>, %42, %cst_34 [0] : vector<4x4x16xf32> to vector<4x16xf32>
    %cst_35 = arith.constant dense<0.000000e+00> : vector<4x16xf32>
    %44 = tpu.matmul %43, %10, %cst_35 {dimension_numbers = #tpu.dot_dimension_numbers<[1], [0], [0], [1], [0, 0, 1, 1], [], []>} : vector<4x16xf32>, vector<16x16xf32>, vector<4x16xf32> -> vector<4x16xf32>
    %45 = vector.broadcast %11 : vector<1x16xf32> to vector<4x16xf32>
    %46 = arith.addf %44, %45 : vector<4x16xf32>
    %cst_36 = arith.constant 0.000000e+00 : f32
    %47 = vector.broadcast %cst_36 : f32 to vector<4x16xf32>
    %48 = arith.maximumf %46, %47 : vector<4x16xf32>
    %49 = arith.addf %43, %48 : vector<4x16xf32>
    %c0_37 = arith.constant 0 : index
    %c0_38 = arith.constant 0 : index
    %c0_39 = arith.constant 0 : index
    %50 = vector.load %arg11[%c0_37, %c0_38, %c0_39] : memref<4x16x8xf32, #tpu.memory_space<vmem>>, vector<4x16x8xf32>
    %c0_40 = arith.constant 0 : index
    %c0_41 = arith.constant 0 : index
    %c0_42 = arith.constant 0 : index
    %51 = vector.load %arg12[%c0_40, %c0_41, %c0_42] : memref<4x1x8xf32, #tpu.memory_space<vmem>>, vector<4x1x8xf32>
    %52 = vector.shape_cast %49 : vector<4x16xf32> to vector<1x4x16xf32>
    %53 = vector.shape_cast %52 : vector<1x4x16xf32> to vector<1x4x16xf32>
    %54 = vector.broadcast %53 : vector<1x4x16xf32> to vector<4x4x16xf32>
    "tpu.trace_start"() <{level = 10 : i32, message = "hsd,hde->hse"}> : () -> ()
    %cst_43 = arith.constant dense<0.000000e+00> : vector<4x4x8xf32>
    %55 = tpu.matmul %54, %50, %cst_43 {dimension_numbers = #tpu.dot_dimension_numbers<[2], [1], [1], [2], [0, 0, 0, 1, 1, 2], [0], [0]>} : vector<4x4x16xf32>, vector<4x16x8xf32>, vector<4x4x8xf32> -> vector<4x4x8xf32>
    "tpu.trace_stop"() : () -> ()
    %56 = vector.broadcast %51 : vector<4x1x8xf32> to vector<4x4x8xf32>
    %57 = arith.addf %55, %56 : vector<4x4x8xf32>
    %c0_44 = arith.constant 0 : index
    %c0_45 = arith.constant 0 : index
    %c0_46 = arith.constant 0 : index
    %58 = vector.load %arg13[%c0_44, %c0_45, %c0_46] : memref<4x16x8xf32, #tpu.memory_space<vmem>>, vector<4x16x8xf32>
    %c0_47 = arith.constant 0 : index
    %c0_48 = arith.constant 0 : index
    %c0_49 = arith.constant 0 : index
    %59 = vector.load %arg14[%c0_47, %c0_48, %c0_49] : memref<4x1x8xf32, #tpu.memory_space<vmem>>, vector<4x1x8xf32>
    %c0_50 = arith.constant 0 : index
    %c0_51 = arith.constant 0 : index
    %c0_52 = arith.constant 0 : index
    %60 = vector.load %arg15[%c0_50, %c0_51, %c0_52] : memref<4x16x8xf32, #tpu.memory_space<vmem>>, vector<4x16x8xf32>
    %c0_53 = arith.constant 0 : index
    %c0_54 = arith.constant 0 : index
    %c0_55 = arith.constant 0 : index
    %61 = vector.load %arg16[%c0_53, %c0_54, %c0_55] : memref<4x1x8xf32, #tpu.memory_space<vmem>>, vector<4x1x8xf32>
    %c0_56 = arith.constant 0 : index
    %c0_57 = arith.constant 0 : index
    %c0_58 = arith.constant 0 : index
    %62 = vector.load %arg17[%c0_56, %c0_57, %c0_58] : memref<4x8x32xf32, #tpu.memory_space<vmem>>, vector<4x8x32xf32>
    %c0_59 = arith.constant 0 : index
    %c0_60 = arith.constant 0 : index
    %63 = vector.load %arg18[%c0_59, %c0_60] : memref<32x32xf32, #tpu.memory_space<vmem>>, vector<32x32xf32>
    %c0_61 = arith.constant 0 : index
    %c0_62 = arith.constant 0 : index
    %64 = vector.load %arg19[%c0_61, %c0_62] : memref<1x32xf32, #tpu.memory_space<vmem>>, vector<1x32xf32>
    %65 = vector.shape_cast %49 : vector<4x16xf32> to vector<1x4x16xf32>
    %66 = vector.shape_cast %65 : vector<1x4x16xf32> to vector<1x4x16xf32>
    %67 = vector.broadcast %66 : vector<1x4x16xf32> to vector<4x4x16xf32>
    "tpu.trace_start"() <{level = 10 : i32, message = "hsd,hde->hse"}> : () -> ()
    %cst_63 = arith.constant dense<0.000000e+00> : vector<4x4x8xf32>
    %68 = tpu.matmul %67, %58, %cst_63 {dimension_numbers = #tpu.dot_dimension_numbers<[2], [1], [1], [2], [0, 0, 0, 1, 1, 2], [0], [0]>} : vector<4x4x16xf32>, vector<4x16x8xf32>, vector<4x4x8xf32> -> vector<4x4x8xf32>
    "tpu.trace_stop"() : () -> ()
    %69 = vector.broadcast %59 : vector<4x1x8xf32> to vector<4x4x8xf32>
    %70 = arith.addf %68, %69 : vector<4x4x8xf32>
    %71 = vector.shape_cast %49 : vector<4x16xf32> to vector<1x4x16xf32>
    %72 = vector.shape_cast %71 : vector<1x4x16xf32> to vector<1x4x16xf32>
    %73 = vector.broadcast %72 : vector<1x4x16xf32> to vector<4x4x16xf32>
    "tpu.trace_start"() <{level = 10 : i32, message = "hsd,hde->hse"}> : () -> ()
    %cst_64 = arith.constant dense<0.000000e+00> : vector<4x4x8xf32>
    %74 = tpu.matmul %73, %60, %cst_64 {dimension_numbers = #tpu.dot_dimension_numbers<[2], [1], [1], [2], [0, 0, 0, 1, 1, 2], [0], [0]>} : vector<4x4x16xf32>, vector<4x16x8xf32>, vector<4x4x8xf32> -> vector<4x4x8xf32>
    "tpu.trace_stop"() : () -> ()
    %75 = vector.broadcast %61 : vector<4x1x8xf32> to vector<4x4x8xf32>
    %76 = arith.addf %74, %75 : vector<4x4x8xf32>
    "tpu.trace_start"() <{level = 10 : i32, message = "hqd,hkd->hqk"}> : () -> ()
    %cst_65 = arith.constant dense<0.000000e+00> : vector<4x4x4xf32>
    %77 = tpu.matmul %57, %70, %cst_65 {dimension_numbers = #tpu.dot_dimension_numbers<[2], [2], [1], [1], [0, 0, 0, 1, 1, 1], [0], [0]>} : vector<4x4x8xf32>, vector<4x4x8xf32>, vector<4x4x4xf32> -> vector<4x4x4xf32>
    "tpu.trace_stop"() : () -> ()
    %cst_66 = arith.constant 0.176776692 : f32
    %78 = vector.broadcast %cst_66 : f32 to vector<4x4x4xf32>
    %79 = arith.mulf %77, %78 : vector<4x4x4xf32>
    %cst_67 = arith.constant dense<0xFF800000> : vector<4x4xf32>
    %80 = vector.multi_reduction <maximumf>, %79, %cst_67 [2] : vector<4x4x4xf32> to vector<4x4xf32>
    %81 = vector.shape_cast %80 : vector<4x4xf32> to vector<4x4x1xf32>
    %82 = vector.broadcast %81 : vector<4x4x1xf32> to vector<4x4x4xf32>
    %83 = arith.subf %79, %82 : vector<4x4x4xf32>
    %84 = math.exp %83 : vector<4x4x4xf32>
    %cst_68 = arith.constant dense<0.000000e+00> : vector<4x4xf32>
    %85 = vector.multi_reduction <add>, %84, %cst_68 [2] : vector<4x4x4xf32> to vector<4x4xf32>
    %86 = vector.shape_cast %85 : vector<4x4xf32> to vector<4x4x1xf32>
    %87 = tpu.reciprocal %86 {approx = true} : vector<4x4x1xf32> -> vector<4x4x1xf32>
    %88 = vector.broadcast %87 : vector<4x4x1xf32> to vector<4x4x4xf32>
    %89 = arith.mulf %84, %88 : vector<4x4x4xf32>
    "tpu.trace_start"() <{level = 10 : i32, message = "hqk,hkd->hqd"}> : () -> ()
    %cst_69 = arith.constant dense<0.000000e+00> : vector<4x4x8xf32>
    %90 = tpu.matmul %89, %76, %cst_69 {dimension_numbers = #tpu.dot_dimension_numbers<[2], [1], [1], [2], [0, 0, 0, 1, 1, 2], [0], [0]>} : vector<4x4x4xf32>, vector<4x4x8xf32>, vector<4x4x8xf32> -> vector<4x4x8xf32>
    "tpu.trace_stop"() : () -> ()
    %91 = arith.addf %57, %90 : vector<4x4x8xf32>
    "tpu.trace_start"() <{level = 10 : i32, message = "hqd,hdv->hqv"}> : () -> ()
    %cst_70 = arith.constant dense<0.000000e+00> : vector<4x4x32xf32>
    %92 = tpu.matmul %91, %62, %cst_70 {dimension_numbers = #tpu.dot_dimension_numbers<[2], [1], [1], [2], [0, 0, 0, 1, 1, 2], [0], [0]>} : vector<4x4x8xf32>, vector<4x8x32xf32>, vector<4x4x32xf32> -> vector<4x4x32xf32>
    "tpu.trace_stop"() : () -> ()
    %cst_71 = arith.constant dense<0.000000e+00> : vector<4x32xf32>
    %93 = vector.multi_reduction <add>, %92, %cst_71 [0] : vector<4x4x32xf32> to vector<4x32xf32>
    %cst_72 = arith.constant dense<0.000000e+00> : vector<4x32xf32>
    %94 = tpu.matmul %93, %63, %cst_72 {dimension_numbers = #tpu.dot_dimension_numbers<[1], [0], [0], [1], [0, 0, 1, 1], [], []>} : vector<4x32xf32>, vector<32x32xf32>, vector<4x32xf32> -> vector<4x32xf32>
    %95 = vector.broadcast %64 : vector<1x32xf32> to vector<4x32xf32>
    %96 = arith.addf %94, %95 : vector<4x32xf32>
    %cst_73 = arith.constant 0.000000e+00 : f32
    %97 = vector.broadcast %cst_73 : f32 to vector<4x32xf32>
    %98 = arith.maximumf %96, %97 : vector<4x32xf32>
    %99 = arith.addf %93, %98 : vector<4x32xf32>
    %c0_74 = arith.constant 0 : index
    %c0_75 = arith.constant 0 : index
    %c0_76 = arith.constant 0 : index
    %100 = vector.load %arg20[%c0_74, %c0_75, %c0_76] : memref<4x1x8xf32, #tpu.memory_space<vmem>>, vector<4x1x8xf32>
    %c0_77 = arith.constant 0 : index
    %c0_78 = arith.constant 0 : index
    %c0_79 = arith.constant 0 : index
    %101 = vector.load %arg21[%c0_77, %c0_78, %c0_79] : memref<4x32x8xf32, #tpu.memory_space<vmem>>, vector<4x32x8xf32>
    %c0_80 = arith.constant 0 : index
    %c0_81 = arith.constant 0 : index
    %c0_82 = arith.constant 0 : index
    %102 = vector.load %arg22[%c0_80, %c0_81, %c0_82] : memref<4x1x8xf32, #tpu.memory_space<vmem>>, vector<4x1x8xf32>
    %c0_83 = arith.constant 0 : index
    %c0_84 = arith.constant 0 : index
    %c0_85 = arith.constant 0 : index
    %103 = vector.load %arg23[%c0_83, %c0_84, %c0_85] : memref<4x32x8xf32, #tpu.memory_space<vmem>>, vector<4x32x8xf32>
    %c0_86 = arith.constant 0 : index
    %c0_87 = arith.constant 0 : index
    %c0_88 = arith.constant 0 : index
    %104 = vector.load %arg24[%c0_86, %c0_87, %c0_88] : memref<4x1x8xf32, #tpu.memory_space<vmem>>, vector<4x1x8xf32>
    %c0_89 = arith.constant 0 : index
    %c0_90 = arith.constant 0 : index
    %c0_91 = arith.constant 0 : index
    %105 = vector.load %arg25[%c0_89, %c0_90, %c0_91] : memref<4x8x32xf32, #tpu.memory_space<vmem>>, vector<4x8x32xf32>
    %c0_92 = arith.constant 0 : index
    %c0_93 = arith.constant 0 : index
    %106 = vector.load %arg26[%c0_92, %c0_93] : memref<32x32xf32, #tpu.memory_space<vmem>>, vector<32x32xf32>
    %c0_94 = arith.constant 0 : index
    %c0_95 = arith.constant 0 : index
    %107 = vector.load %arg27[%c0_94, %c0_95] : memref<1x32xf32, #tpu.memory_space<vmem>>, vector<1x32xf32>
    %108 = vector.shape_cast %99 : vector<4x32xf32> to vector<1x4x32xf32>
    %109 = vector.shape_cast %108 : vector<1x4x32xf32> to vector<1x4x32xf32>
    %110 = vector.broadcast %109 : vector<1x4x32xf32> to vector<4x4x32xf32>
    "tpu.trace_start"() <{level = 10 : i32, message = "hsd,hde->hse"}> : () -> ()
    %cst_96 = arith.constant dense<0.000000e+00> : vector<4x4x8xf32>
    %111 = tpu.matmul %110, %101, %cst_96 {dimension_numbers = #tpu.dot_dimension_numbers<[2], [1], [1], [2], [0, 0, 0, 1, 1, 2], [0], [0]>} : vector<4x4x32xf32>, vector<4x32x8xf32>, vector<4x4x8xf32> -> vector<4x4x8xf32>
    "tpu.trace_stop"() : () -> ()
    %112 = vector.broadcast %102 : vector<4x1x8xf32> to vector<4x4x8xf32>
    %113 = arith.addf %111, %112 : vector<4x4x8xf32>
    %114 = vector.shape_cast %99 : vector<4x32xf32> to vector<1x4x32xf32>
    %115 = vector.shape_cast %114 : vector<1x4x32xf32> to vector<1x4x32xf32>
    %116 = vector.broadcast %115 : vector<1x4x32xf32> to vector<4x4x32xf32>
    "tpu.trace_start"() <{level = 10 : i32, message = "hsd,hde->hse"}> : () -> ()
    %cst_97 = arith.constant dense<0.000000e+00> : vector<4x4x8xf32>
    %117 = tpu.matmul %116, %103, %cst_97 {dimension_numbers = #tpu.dot_dimension_numbers<[2], [1], [1], [2], [0, 0, 0, 1, 1, 2], [0], [0]>} : vector<4x4x32xf32>, vector<4x32x8xf32>, vector<4x4x8xf32> -> vector<4x4x8xf32>
    "tpu.trace_stop"() : () -> ()
    %118 = vector.broadcast %104 : vector<4x1x8xf32> to vector<4x4x8xf32>
    %119 = arith.addf %117, %118 : vector<4x4x8xf32>
    "tpu.trace_start"() <{level = 10 : i32, message = "hqd,hkd->hqk"}> : () -> ()
    %cst_98 = arith.constant dense<0.000000e+00> : vector<4x1x4xf32>
    %120 = tpu.matmul %100, %113, %cst_98 {dimension_numbers = #tpu.dot_dimension_numbers<[2], [2], [1], [1], [0, 0, 0, 1, 1, 1], [0], [0]>} : vector<4x1x8xf32>, vector<4x4x8xf32>, vector<4x1x4xf32> -> vector<4x1x4xf32>
    "tpu.trace_stop"() : () -> ()
    %cst_99 = arith.constant 0.176776692 : f32
    %121 = vector.broadcast %cst_99 : f32 to vector<4x1x4xf32>
    %122 = arith.mulf %120, %121 : vector<4x1x4xf32>
    %cst_100 = arith.constant dense<0xFF800000> : vector<4x1xf32>
    %123 = vector.multi_reduction <maximumf>, %122, %cst_100 [2] : vector<4x1x4xf32> to vector<4x1xf32>
    %124 = vector.shape_cast %123 : vector<4x1xf32> to vector<4x1x1xf32>
    %125 = vector.broadcast %124 : vector<4x1x1xf32> to vector<4x1x4xf32>
    %126 = arith.subf %122, %125 : vector<4x1x4xf32>
    %127 = math.exp %126 : vector<4x1x4xf32>
    %cst_101 = arith.constant dense<0.000000e+00> : vector<4x1xf32>
    %128 = vector.multi_reduction <add>, %127, %cst_101 [2] : vector<4x1x4xf32> to vector<4x1xf32>
    %129 = vector.shape_cast %128 : vector<4x1xf32> to vector<4x1x1xf32>
    %130 = tpu.reciprocal %129 {approx = true} : vector<4x1x1xf32> -> vector<4x1x1xf32>
    %131 = vector.broadcast %130 : vector<4x1x1xf32> to vector<4x1x4xf32>
    %132 = arith.mulf %127, %131 : vector<4x1x4xf32>
    "tpu.trace_start"() <{level = 10 : i32, message = "hqk,hkd->hqd"}> : () -> ()
    %cst_102 = arith.constant dense<0.000000e+00> : vector<4x1x8xf32>
    %133 = tpu.matmul %132, %119, %cst_102 {dimension_numbers = #tpu.dot_dimension_numbers<[2], [1], [1], [2], [0, 0, 0, 1, 1, 2], [0], [0]>} : vector<4x1x4xf32>, vector<4x4x8xf32>, vector<4x1x8xf32> -> vector<4x1x8xf32>
    "tpu.trace_stop"() : () -> ()
    %134 = arith.addf %100, %133 : vector<4x1x8xf32>
    "tpu.trace_start"() <{level = 10 : i32, message = "hqd,hdv->hqv"}> : () -> ()
    %cst_103 = arith.constant dense<0.000000e+00> : vector<4x1x32xf32>
    %135 = tpu.matmul %134, %105, %cst_103 {dimension_numbers = #tpu.dot_dimension_numbers<[2], [1], [1], [2], [0, 0, 0, 1, 1, 2], [0], [0]>} : vector<4x1x8xf32>, vector<4x8x32xf32>, vector<4x1x32xf32> -> vector<4x1x32xf32>
    "tpu.trace_stop"() : () -> ()
    %cst_104 = arith.constant dense<0.000000e+00> : vector<1x32xf32>
    %136 = vector.multi_reduction <add>, %135, %cst_104 [0] : vector<4x1x32xf32> to vector<1x32xf32>
    %cst_105 = arith.constant dense<0.000000e+00> : vector<1x32xf32>
    %137 = tpu.matmul %136, %106, %cst_105 {dimension_numbers = #tpu.dot_dimension_numbers<[1], [0], [0], [1], [0, 0, 1, 1], [], []>} : vector<1x32xf32>, vector<32x32xf32>, vector<1x32xf32> -> vector<1x32xf32>
    %138 = arith.addf %137, %107 : vector<1x32xf32>
    %cst_106 = arith.constant 0.000000e+00 : f32
    %139 = vector.broadcast %cst_106 : f32 to vector<1x32xf32>
    %140 = arith.maximumf %138, %139 : vector<1x32xf32>
    %141 = arith.addf %136, %140 : vector<1x32xf32>
    %c0_107 = arith.constant 0 : index
    %c0_108 = arith.constant 0 : index
    %142 = vector.load %arg28[%c0_107, %c0_108] : memref<32x8xf32, #tpu.memory_space<vmem>>, vector<32x8xf32>
    %cst_109 = arith.constant dense<0.000000e+00> : vector<1x8xf32>
    %143 = tpu.matmul %141, %142, %cst_109 {dimension_numbers = #tpu.dot_dimension_numbers<[1], [0], [0], [1], [0, 0, 1, 1], [], []>} : vector<1x32xf32>, vector<32x8xf32>, vector<1x8xf32> -> vector<1x8xf32>
    %c0_110 = arith.constant 0 : index
    %c0_111 = arith.constant 0 : index
    %144 = vector.load %arg29[%c0_110, %c0_111] : memref<1x8xf32, #tpu.memory_space<vmem>>, vector<1x8xf32>
    %145 = arith.addf %143, %144 : vector<1x8xf32>
    %c0_112 = arith.constant 0 : index
    %c0_113 = arith.constant 0 : index
    %c0_114 = arith.constant 0 : index
    %146 = vector.load %arg30[%c0_112, %c0_113, %c0_114] : memref<1x1x8xf32, #tpu.memory_space<vmem>>, vector<1x1x8xf32>
    %147 = vector.shape_cast %146 : vector<1x1x8xf32> to vector<1x8xf32>
    %148 = vector.shape_cast %145 : vector<1x8xf32> to vector<1x1x8xf32>
    tpu.vector_store %arg30[%c0_112, %c0_113, %c0_114], %148 {strides = array<i32>} : memref<1x1x8xf32, #tpu.memory_space<vmem>>, vector<1x1x8xf32>,
    return
  }
  func.func @transform_0(%arg0: i32) -> (i32, i32, i32) {
    %c0_i32 = arith.constant 0 : i32
    %c0_i32_0 = arith.constant 0 : i32
    %c0_i32_1 = arith.constant 0 : i32
    return %arg0, %c0_i32, %c0_i32_0 : i32, i32, i32
  }
  func.func @transform_1(%arg0: i32) -> (i32, i32, i32) {
    %c0_i32 = arith.constant 0 : i32
    %c0_i32_0 = arith.constant 0 : i32
    %c0_i32_1 = arith.constant 0 : i32
    return %arg0, %c0_i32, %c0_i32_0 : i32, i32, i32
  }
  func.func @transform_2(%arg0: i32) -> (i32, i32, i32) {
    %c0_i32 = arith.constant 0 : i32
    %c0_i32_0 = arith.constant 0 : i32
    %c0_i32_1 = arith.constant 0 : i32
    %c0_i32_2 = arith.constant 0 : i32
    return %c0_i32, %c0_i32_0, %c0_i32_1 : i32, i32, i32
  }
  func.func @transform_3(%arg0: i32) -> (i32, i32, i32) {
    %c0_i32 = arith.constant 0 : i32
    %c0_i32_0 = arith.constant 0 : i32
    %c0_i32_1 = arith.constant 0 : i32
    %c0_i32_2 = arith.constant 0 : i32
    return %c0_i32, %c0_i32_0, %c0_i32_1 : i32, i32, i32
  }
  func.func @transform_4(%arg0: i32) -> (i32, i32, i32) {
    %c0_i32 = arith.constant 0 : i32
    %c0_i32_0 = arith.constant 0 : i32
    %c0_i32_1 = arith.constant 0 : i32
    %c0_i32_2 = arith.constant 0 : i32
    return %c0_i32, %c0_i32_0, %c0_i32_1 : i32, i32, i32
  }
  func.func @transform_5(%arg0: i32) -> (i32, i32, i32) {
    %c0_i32 = arith.constant 0 : i32
    %c0_i32_0 = arith.constant 0 : i32
    %c0_i32_1 = arith.constant 0 : i32
    %c0_i32_2 = arith.constant 0 : i32
    return %c0_i32, %c0_i32_0, %c0_i32_1 : i32, i32, i32
  }
  func.func @transform_6(%arg0: i32) -> (i32, i32, i32) {
    %c0_i32 = arith.constant 0 : i32
    %c0_i32_0 = arith.constant 0 : i32
    %c0_i32_1 = arith.constant 0 : i32
    %c0_i32_2 = arith.constant 0 : i32
    return %c0_i32, %c0_i32_0, %c0_i32_1 : i32, i32, i32
  }
  func.func @transform_7(%arg0: i32) -> (i32, i32, i32) {
    %c0_i32 = arith.constant 0 : i32
    %c0_i32_0 = arith.constant 0 : i32
    %c0_i32_1 = arith.constant 0 : i32
    %c0_i32_2 = arith.constant 0 : i32
    return %c0_i32, %c0_i32_0, %c0_i32_1 : i32, i32, i32
  }
  func.func @transform_8(%arg0: i32) -> (i32, i32) {
    %c0_i32 = arith.constant 0 : i32
    %c0_i32_0 = arith.constant 0 : i32
    %c0_i32_1 = arith.constant 0 : i32
    return %c0_i32, %c0_i32_0 : i32, i32
  }
  func.func @transform_9(%arg0: i32) -> (i32, i32) {
    %c0_i32 = arith.constant 0 : i32
    %c0_i32_0 = arith.constant 0 : i32
    %c0_i32_1 = arith.constant 0 : i32
    return %c0_i32, %c0_i32_0 : i32, i32
  }
  func.func @transform_10(%arg0: i32) -> (i32, i32, i32) {
    %c0_i32 = arith.constant 0 : i32
    %c0_i32_0 = arith.constant 0 : i32
    %c0_i32_1 = arith.constant 0 : i32
    %c0_i32_2 = arith.constant 0 : i32
    return %c0_i32, %c0_i32_0, %c0_i32_1 : i32, i32, i32
  }
  func.func @transform_11(%arg0: i32) -> (i32, i32, i32) {
    %c0_i32 = arith.constant 0 : i32
    %c0_i32_0 = arith.constant 0 : i32
    %c0_i32_1 = arith.constant 0 : i32
    %c0_i32_2 = arith.constant 0 : i32
    return %c0_i32, %c0_i32_0, %c0_i32_1 : i32, i32, i32
  }
  func.func @transform_12(%arg0: i32) -> (i32, i32, i32) {
    %c0_i32 = arith.constant 0 : i32
    %c0_i32_0 = arith.constant 0 : i32
    %c0_i32_1 = arith.constant 0 : i32
    %c0_i32_2 = arith.constant 0 : i32
    return %c0_i32, %c0_i32_0, %c0_i32_1 : i32, i32, i32
  }
  func.func @transform_13(%arg0: i32) -> (i32, i32, i32) {
    %c0_i32 = arith.constant 0 : i32
    %c0_i32_0 = arith.constant 0 : i32
    %c0_i32_1 = arith.constant 0 : i32
    %c0_i32_2 = arith.constant 0 : i32
    return %c0_i32, %c0_i32_0, %c0_i32_1 : i32, i32, i32
  }
  func.func @transform_14(%arg0: i32) -> (i32, i32, i32) {
    %c0_i32 = arith.constant 0 : i32
    %c0_i32_0 = arith.constant 0 : i32
    %c0_i32_1 = arith.constant 0 : i32
    %c0_i32_2 = arith.constant 0 : i32
    return %c0_i32, %c0_i32_0, %c0_i32_1 : i32, i32, i32
  }
  func.func @transform_15(%arg0: i32) -> (i32, i32, i32) {
    %c0_i32 = arith.constant 0 : i32
    %c0_i32_0 = arith.constant 0 : i32
    %c0_i32_1 = arith.constant 0 : i32
    %c0_i32_2 = arith.constant 0 : i32
    return %c0_i32, %c0_i32_0, %c0_i32_1 : i32, i32, i32
  }
  func.func @transform_16(%arg0: i32) -> (i32, i32, i32) {
    %c0_i32 = arith.constant 0 : i32
    %c0_i32_0 = arith.constant 0 : i32
    %c0_i32_1 = arith.constant 0 : i32
    %c0_i32_2 = arith.constant 0 : i32
    return %c0_i32, %c0_i32_0, %c0_i32_1 : i32, i32, i32
  }
  func.func @transform_17(%arg0: i32) -> (i32, i32) {
    %c0_i32 = arith.constant 0 : i32
    %c0_i32_0 = arith.constant 0 : i32
    %c0_i32_1 = arith.constant 0 : i32
    return %c0_i32, %c0_i32_0 : i32, i32
  }
  func.func @transform_18(%arg0: i32) -> (i32, i32) {
    %c0_i32 = arith.constant 0 : i32
    %c0_i32_0 = arith.constant 0 : i32
    %c0_i32_1 = arith.constant 0 : i32
    return %c0_i32, %c0_i32_0 : i32, i32
  }
  func.func @transform_19(%arg0: i32) -> (i32, i32, i32) {
    %c0_i32 = arith.constant 0 : i32
    %c0_i32_0 = arith.constant 0 : i32
    %c0_i32_1 = arith.constant 0 : i32
    %c0_i32_2 = arith.constant 0 : i32
    return %c0_i32, %c0_i32_0, %c0_i32_1 : i32, i32, i32
  }
  func.func @transform_20(%arg0: i32) -> (i32, i32, i32) {
    %c0_i32 = arith.constant 0 : i32
    %c0_i32_0 = arith.constant 0 : i32
    %c0_i32_1 = arith.constant 0 : i32
    %c0_i32_2 = arith.constant 0 : i32
    return %c0_i32, %c0_i32_0, %c0_i32_1 : i32, i32, i32
  }
  func.func @transform_21(%arg0: i32) -> (i32, i32, i32) {
    %c0_i32 = arith.constant 0 : i32
    %c0_i32_0 = arith.constant 0 : i32
    %c0_i32_1 = arith.constant 0 : i32
    %c0_i32_2 = arith.constant 0 : i32
    return %c0_i32, %c0_i32_0, %c0_i32_1 : i32, i32, i32
  }
  func.func @transform_22(%arg0: i32) -> (i32, i32, i32) {
    %c0_i32 = arith.constant 0 : i32
    %c0_i32_0 = arith.constant 0 : i32
    %c0_i32_1 = arith.constant 0 : i32
    %c0_i32_2 = arith.constant 0 : i32
    return %c0_i32, %c0_i32_0, %c0_i32_1 : i32, i32, i32
  }
  func.func @transform_23(%arg0: i32) -> (i32, i32, i32) {
    %c0_i32 = arith.constant 0 : i32
    %c0_i32_0 = arith.constant 0 : i32
    %c0_i32_1 = arith.constant 0 : i32
    %c0_i32_2 = arith.constant 0 : i32
    return %c0_i32, %c0_i32_0, %c0_i32_1 : i32, i32, i32
  }
  func.func @transform_24(%arg0: i32) -> (i32, i32, i32) {
    %c0_i32 = arith.constant 0 : i32
    %c0_i32_0 = arith.constant 0 : i32
    %c0_i32_1 = arith.constant 0 : i32
    %c0_i32_2 = arith.constant 0 : i32
    return %c0_i32, %c0_i32_0, %c0_i32_1 : i32, i32, i32
  }
  func.func @transform_25(%arg0: i32) -> (i32, i32) {
    %c0_i32 = arith.constant 0 : i32
    %c0_i32_0 = arith.constant 0 : i32
    %c0_i32_1 = arith.constant 0 : i32
    return %c0_i32, %c0_i32_0 : i32, i32
  }
  func.func @transform_26(%arg0: i32) -> (i32, i32) {
    %c0_i32 = arith.constant 0 : i32
    %c0_i32_0 = arith.constant 0 : i32
    %c0_i32_1 = arith.constant 0 : i32
    return %c0_i32, %c0_i32_0 : i32, i32
  }
  func.func @transform_27(%arg0: i32) -> (i32, i32) {
    %c0_i32 = arith.constant 0 : i32
    %c0_i32_0 = arith.constant 0 : i32
    %c0_i32_1 = arith.constant 0 : i32
    return %c0_i32, %c0_i32_0 : i32, i32
  }
  func.func @transform_28(%arg0: i32) -> (i32, i32) {
    %c0_i32 = arith.constant 0 : i32
    %c0_i32_0 = arith.constant 0 : i32
    %c0_i32_1 = arith.constant 0 : i32
    return %c0_i32, %c0_i32_0 : i32, i32
  }
  func.func @transform_29(%arg0: i32) -> (i32, i32, i32) {
    %c0_i32 = arith.constant 0 : i32
    %c0_i32_0 = arith.constant 0 : i32
    %c0_i32_1 = arith.constant 0 : i32
    return %arg0, %c0_i32, %c0_i32_0 : i32, i32, i32
  }
}

</mosaic_0001>

<llo_original>
// kernel: tpu_custom_call.1
$region0: #{tpu_custom_call.1}
  #allocation0 [shape = 'u32[]', space=smem, size = 0x4, offset = 0x4, fixed_abs, tag = 'smem constant byte address 0x4 - core index']
  #allocation1 [shape = 'u32[144,128]{1,0:T(1,128)}', space=vmem, size = 0x12000, scoped, tag = 'internal scratch']
  %s0 = inlined_call_operand.smem [shape: u32[30], index: -1, kind: input, shape index: {}]
  %s1 = sld [smem:[%s0]]
  %s2 = scalar_lea.smem %s0, 1
  %s3 = sld [smem:[%s2]]
  %s4 = scalar_lea.smem %s0, 2
  %s5 = sld [smem:[%s4]]
  %s6 = scalar_lea.smem %s0, 3
  %s7 = sld [smem:[%s6]]
  %s8 = scalar_lea.smem %s0, 4
  %s9 = sld [smem:[%s8]]
  %s10 = scalar_lea.smem %s0, 5
  %s11 = sld [smem:[%s10]]
  %s12 = scalar_lea.smem %s0, 6
  %s13 = sld [smem:[%s12]]
  %s14 = scalar_lea.smem %s0, 7
  %s15 = sld [smem:[%s14]]
  %s16 = scalar_lea.smem %s0, 8
  %s17 = sld [smem:[%s16]]
  %s18 = scalar_lea.smem %s0, 9
  %s19 = sld [smem:[%s18]]
  %s20 = scalar_lea.smem %s0, 10
  %s21 = sld [smem:[%s20]]
  %s22 = scalar_lea.smem %s0, 11
  %s23 = sld [smem:[%s22]]
  %s24 = scalar_lea.smem %s0, 12
  %s25 = sld [smem:[%s24]]
  %s26 = scalar_lea.smem %s0, 13
  %s27 = sld [smem:[%s26]]
  %s28 = scalar_lea.smem %s0, 14
  %s29 = sld [smem:[%s28]]
  %s30 = scalar_lea.smem %s0, 15
  %s31 = sld [smem:[%s30]]
  %s32 = scalar_lea.smem %s0, 16
  %s33 = sld [smem:[%s32]]
  %s34 = scalar_lea.smem %s0, 17
  %s35 = sld [smem:[%s34]]
  %s36 = scalar_lea.smem %s0, 18
  %s37 = sld [smem:[%s36]]
  %s38 = scalar_lea.smem %s0, 19
  %s39 = sld [smem:[%s38]]
  %s40 = scalar_lea.smem %s0, 20
  %s41 = sld [smem:[%s40]]
  %s42 = scalar_lea.smem %s0, 21
  %s43 = sld [smem:[%s42]]
  %s44 = scalar_lea.smem %s0, 22
  %s45 = sld [smem:[%s44]]
  %s46 = scalar_lea.smem %s0, 23
  %s47 = sld [smem:[%s46]]
  %s48 = scalar_lea.smem %s0, 24
  %s49 = sld [smem:[%s48]]
  %s50 = scalar_lea.smem %s0, 25
  %s51 = sld [smem:[%s50]]
  %s52 = scalar_lea.smem %s0, 26
  %s53 = sld [smem:[%s52]]
  %s54 = scalar_lea.smem %s0, 27
  %s55 = sld [smem:[%s54]]
  %s56 = scalar_lea.smem %s0, 28
  %s57 = sld [smem:[%s56]]
  %s58 = scalar_lea.smem %s0, 29
  %s59 = sld [smem:[%s58]]
  %s60 = sld [smem:[#allocation0]]
  $region149: #{tpu_custom_call.1} parent=0
    _
  %s62 = ssub.s32 1, %s60
  %s63 = scalar_select 0, %s62, %s60
  $region1: #{tpu_custom_call.1} parent=0
    #allocation2 [shape = 'u8[1024]{0}', space=vmem, size = 0x400, scoped, tag = 'output window, operand 0']
    #allocation3 [shape = 's32[2]{0}', space=sflag, size = 0x8, scoped, tag = 'scoped memory for tpu_custom_call.1']
    %64 = vsyncpa [#allocation3], 0
    %s65 = scalar_lea.sflag [#allocation3], 1
    %66 = vsyncpa %s65, 0
    loop: start=0, step=1, limit=4
    $region2: #{tpu_custom_call.1} parent=1 // loop_pre_header
      _
    $region3: #{tpu_custom_call.1} parent=1 // loop_header
      %s68 = sphi 0, %s72
      %p69 = scmp.ge.s32.totalorder %s68, 4
      %s78 = sphi 0, %s80
      %s81 = sphi 0, %s78
      %s82 = sphi 0, %s81
      %s98 = sphi 0, %s82
      %s104 = sphi 0, %s106
      %s107 = sphi 0, %s104
      %s108 = sphi 0, %s107
      %s124 = sphi 0, %s108
      %s128 = sphi 0, %s128
      %s130 = sphi 0, %s128
      %s131 = sphi 0, %s130
      %s145 = sphi 0, %s131
      %s149 = sphi 0, %s149
      %s151 = sphi 0, %s149
      %s152 = sphi 0, %s151
      %s166 = sphi 0, %s152
      %s170 = sphi 0, %s170
      %s172 = sphi 0, %s170
      %s173 = sphi 0, %s172
      %s187 = sphi 0, %s173
      %s191 = sphi 0, %s191
      %s193 = sphi 0, %s191
      %s194 = sphi 0, %s193
      %s208 = sphi 0, %s194
      %s212 = sphi 0, %s212
      %s214 = sphi 0, %s212
      %s215 = sphi 0, %s214
      %s229 = sphi 0, %s215
      %s233 = sphi 0, %s233
      %s235 = sphi 0, %s233
      %s236 = sphi 0, %s235
      %s250 = sphi 0, %s236
      %s254 = sphi 0, %s254
      %s256 = sphi 0, %s254
      %s257 = sphi 0, %s256
      %s271 = sphi 0, %s257
      %s275 = sphi 0, %s275
      %s277 = sphi 0, %s275
      %s278 = sphi 0, %s277
      %s292 = sphi 0, %s278
      %s296 = sphi 0, %s296
      %s298 = sphi 0, %s296
      %s299 = sphi 0, %s298
      %s313 = sphi 0, %s299
      %s317 = sphi 0, %s317
      %s319 = sphi 0, %s317
      %s320 = sphi 0, %s319
      %s334 = sphi 0, %s320
      %s338 = sphi 0, %s338
      %s340 = sphi 0, %s338
      %s341 = sphi 0, %s340
      %s355 = sphi 0, %s341
      %s359 = sphi 0, %s359
      %s361 = sphi 0, %s359
      %s362 = sphi 0, %s361
      %s376 = sphi 0, %s362
      %s380 = sphi 0, %s380
      %s382 = sphi 0, %s380
      %s383 = sphi 0, %s382
      %s397 = sphi 0, %s383
      %s401 = sphi 0, %s401
      %s403 = sphi 0, %s401
      %s404 = sphi 0, %s403
      %s418 = sphi 0, %s404
      %s422 = sphi 0, %s422
      %s424 = sphi 0, %s422
      %s425 = sphi 0, %s424
      %s439 = sphi 0, %s425
      %s443 = sphi 0, %s443
      %s445 = sphi 0, %s443
      %s446 = sphi 0, %s445
      %s460 = sphi 0, %s446
      %s464 = sphi 0, %s464
      %s466 = sphi 0, %s464
      %s467 = sphi 0, %s466
      %s481 = sphi 0, %s467
      %s485 = sphi 0, %s485
      %s487 = sphi 0, %s485
      %s488 = sphi 0, %s487
      %s502 = sphi 0, %s488
      %s506 = sphi 0, %s506
      %s508 = sphi 0, %s506
      %s509 = sphi 0, %s508
      %s523 = sphi 0, %s509
      %s527 = sphi 0, %s527
      %s529 = sphi 0, %s527
      %s530 = sphi 0, %s529
      %s544 = sphi 0, %s530
      %s548 = sphi 0, %s548
      %s550 = sphi 0, %s548
      %s551 = sphi 0, %s550
      %s565 = sphi 0, %s551
      %s569 = sphi 0, %s569
      %s571 = sphi 0, %s569
      %s572 = sphi 0, %s571
      %s586 = sphi 0, %s572
      %s590 = sphi 0, %s590
      %s592 = sphi 0, %s590
      %s593 = sphi 0, %s592
      %s607 = sphi 0, %s593
      %s611 = sphi 0, %s611
      %s613 = sphi 0, %s611
      %s614 = sphi 0, %s613
      %s628 = sphi 0, %s614
      %s632 = sphi 0, %s632
      %s634 = sphi 0, %s632
      %s635 = sphi 0, %s634
      %s649 = sphi 0, %s635
      %s653 = sphi 0, %s653
      %s655 = sphi 0, %s653
      %s656 = sphi 0, %s655
      %s670 = sphi 0, %s656
      %s674 = sphi 0, %s674
      %s676 = sphi 0, %s674
      %s677 = sphi 0, %s676
      %s691 = sphi 0, %s677
      %s697 = sphi 0, %s699
      %s700 = sphi 0, %s697
      %s701 = sphi 0, %s700
      %s717 = sphi 0, %s701
    $region4: #{tpu_custom_call.1} parent=1 // loop_header_branch
      %71 = sbr.rel (%p69) target = $region8
    $region5: #{tpu_custom_call.1} parent=1 // loop_body
      %s73 = ssub.s32 %s68, 1
      %s74 = ssub.s32 %s68, 2
      %s75 = sadd.s32 %s68, 1
      %s76 = ssub.s32 %s68, %s75
      %p77 = scmp.eq.s32.totalorder %s76, 0
      %s79 = sadd.s32 %s78, 1
      %s80 = scalar_select %p77, %s78, %s79
      %p83 = pneg %p77
      %p84 = scmp.eq.s32.totalorder %s68, 1
      %p85 = por %p83, %p84
      %p86 = scmp.ne.s32.totalorder %s78, %s81
      %p87 = scmp.eq.s32.totalorder %s68, 0
      %p88 = por %p86, %p87
      %p89 = scmp.ne.s32.totalorder %s78, %s81
      %p90 = scmp.eq.s32.totalorder %s73, 1
      %p91 = por %p89, %p90
      %p92 = scmp.ne.s32.totalorder %s81, %s82
      %p93 = scmp.eq.s32.totalorder %s73, 0
      %p94 = por %p92, %p93
      %p95 = scmp.ne.s32.totalorder %s81, %s82
      %p96 = scmp.eq.s32.totalorder %s74, 1
      %p97 = por %p95, %p96
      %p99 = scmp.ne.s32.totalorder %s82, %s98
      %p100 = scmp.eq.s32.totalorder %s74, 0
      %p101 = por %p99, %p100
      %s102 = ssub.s32 %s68, %s75
      %p103 = scmp.eq.s32.totalorder %s102, 0
      %s105 = sadd.s32 %s104, 1
      %s106 = scalar_select %p103, %s104, %s105
      %p109 = pneg %p103
      %p110 = scmp.eq.s32.totalorder %s68, 1
      %p111 = por %p109, %p110
      %p112 = scmp.ne.s32.totalorder %s104, %s107
      %p113 = scmp.eq.s32.totalorder %s68, 0
      %p114 = por %p112, %p113
      %p115 = scmp.ne.s32.totalorder %s104, %s107
      %p116 = scmp.eq.s32.totalorder %s73, 1
      %p117 = por %p115, %p116
      %p118 = scmp.ne.s32.totalorder %s107, %s108
      %p119 = scmp.eq.s32.totalorder %s73, 0
      %p120 = por %p118, %p119
      %p121 = scmp.ne.s32.totalorder %s107, %s108
      %p122 = scmp.eq.s32.totalorder %s74, 1
      %p123 = por %p121, %p122
      %p125 = scmp.ne.s32.totalorder %s108, %s124
      %p126 = scmp.eq.s32.totalorder %s74, 0
      %p127 = por %p125, %p126
      %s129 = sadd.s32 %s128, 1
      %p132 = scmp.eq.s32.totalorder %s68, 1
      %p133 = scmp.ne.s32.totalorder %s128, %s130
      %p134 = scmp.eq.s32.totalorder %s68, 0
      %p135 = por %p133, %p134
      %p136 = scmp.ne.s32.totalorder %s128, %s130
      %p137 = scmp.eq.s32.totalorder %s73, 1
      %p138 = por %p136, %p137
      %p139 = scmp.ne.s32.totalorder %s130, %s131
      %p140 = scmp.eq.s32.totalorder %s73, 0
      %p141 = por %p139, %p140
      %p142 = scmp.ne.s32.totalorder %s130, %s131
      %p143 = scmp.eq.s32.totalorder %s74, 1
      %p144 = por %p142, %p143
      %p146 = scmp.ne.s32.totalorder %s131, %s145
      %p147 = scmp.eq.s32.totalorder %s74, 0
      %p148 = por %p146, %p147
      %s150 = sadd.s32 %s149, 1
      %p153 = scmp.eq.s32.totalorder %s68, 1
      %p154 = scmp.ne.s32.totalorder %s149, %s151
      %p155 = scmp.eq.s32.totalorder %s68, 0
      %p156 = por %p154, %p155
      %p157 = scmp.ne.s32.totalorder %s149, %s151
      %p158 = scmp.eq.s32.totalorder %s73, 1
      %p159 = por %p157, %p158
      %p160 = scmp.ne.s32.totalorder %s151, %s152
      %p161 = scmp.eq.s32.totalorder %s73, 0
      %p162 = por %p160, %p161
      %p163 = scmp.ne.s32.totalorder %s151, %s152
      %p164 = scmp.eq.s32.totalorder %s74, 1
      %p165 = por %p163, %p164
      %p167 = scmp.ne.s32.totalorder %s152, %s166
      %p168 = scmp.eq.s32.totalorder %s74, 0
      %p169 = por %p167, %p168
      %s171 = sadd.s32 %s170, 1
      %p174 = scmp.eq.s32.totalorder %s68, 1
      %p175 = scmp.ne.s32.totalorder %s170, %s172
      %p176 = scmp.eq.s32.totalorder %s68, 0
      %p177 = por %p175, %p176
      %p178 = scmp.ne.s32.totalorder %s170, %s172
      %p179 = scmp.eq.s32.totalorder %s73, 1
      %p180 = por %p178, %p179
      %p181 = scmp.ne.s32.totalorder %s172, %s173
      %p182 = scmp.eq.s32.totalorder %s73, 0
      %p183 = por %p181, %p182
      %p184 = scmp.ne.s32.totalorder %s172, %s173
      %p185 = scmp.eq.s32.totalorder %s74, 1
      %p186 = por %p184, %p185
      %p188 = scmp.ne.s32.totalorder %s173, %s187
      %p189 = scmp.eq.s32.totalorder %s74, 0
      %p190 = por %p188, %p189
      %s192 = sadd.s32 %s191, 1
      %p195 = scmp.eq.s32.totalorder %s68, 1
      %p196 = scmp.ne.s32.totalorder %s191, %s193
      %p197 = scmp.eq.s32.totalorder %s68, 0
      %p198 = por %p196, %p197
      %p199 = scmp.ne.s32.totalorder %s191, %s193
      %p200 = scmp.eq.s32.totalorder %s73, 1
      %p201 = por %p199, %p200
      %p202 = scmp.ne.s32.totalorder %s193, %s194
      %p203 = scmp.eq.s32.totalorder %s73, 0
      %p204 = por %p202, %p203
      %p205 = scmp.ne.s32.totalorder %s193, %s194
      %p206 = scmp.eq.s32.totalorder %s74, 1
      %p207 = por %p205, %p206
      %p209 = scmp.ne.s32.totalorder %s194, %s208
      %p210 = scmp.eq.s32.totalorder %s74, 0
      %p211 = por %p209, %p210
      %s213 = sadd.s32 %s212, 1
      %p216 = scmp.eq.s32.totalorder %s68, 1
      %p217 = scmp.ne.s32.totalorder %s212, %s214
      %p218 = scmp.eq.s32.totalorder %s68, 0
      %p219 = por %p217, %p218
      %p220 = scmp.ne.s32.totalorder %s212, %s214
      %p221 = scmp.eq.s32.totalorder %s73, 1
      %p222 = por %p220, %p221
      %p223 = scmp.ne.s32.totalorder %s214, %s215
      %p224 = scmp.eq.s32.totalorder %s73, 0
      %p225 = por %p223, %p224
      %p226 = scmp.ne.s32.totalorder %s214, %s215
      %p227 = scmp.eq.s32.totalorder %s74, 1
      %p228 = por %p226, %p227
      %p230 = scmp.ne.s32.totalorder %s215, %s229
      %p231 = scmp.eq.s32.totalorder %s74, 0
      %p232 = por %p230, %p231
      %s234 = sadd.s32 %s233, 1
      %p237 = scmp.eq.s32.totalorder %s68, 1
      %p238 = scmp.ne.s32.totalorder %s233, %s235
      %p239 = scmp.eq.s32.totalorder %s68, 0
      %p240 = por %p238, %p239
      %p241 = scmp.ne.s32.totalorder %s233, %s235
      %p242 = scmp.eq.s32.totalorder %s73, 1
      %p243 = por %p241, %p242
      %p244 = scmp.ne.s32.totalorder %s235, %s236
      %p245 = scmp.eq.s32.totalorder %s73, 0
      %p246 = por %p244, %p245
      %p247 = scmp.ne.s32.totalorder %s235, %s236
      %p248 = scmp.eq.s32.totalorder %s74, 1
      %p249 = por %p247, %p248
      %p251 = scmp.ne.s32.totalorder %s236, %s250
      %p252 = scmp.eq.s32.totalorder %s74, 0
      %p253 = por %p251, %p252
      %s255 = sadd.s32 %s254, 1
      %p258 = scmp.eq.s32.totalorder %s68, 1
      %p259 = scmp.ne.s32.totalorder %s254, %s256
      %p260 = scmp.eq.s32.totalorder %s68, 0
      %p261 = por %p259, %p260
      %p262 = scmp.ne.s32.totalorder %s254, %s256
      %p263 = scmp.eq.s32.totalorder %s73, 1
      %p264 = por %p262, %p263
      %p265 = scmp.ne.s32.totalorder %s256, %s257
      %p266 = scmp.eq.s32.totalorder %s73, 0
      %p267 = por %p265, %p266
      %p268 = scmp.ne.s32.totalorder %s256, %s257
      %p269 = scmp.eq.s32.totalorder %s74, 1
      %p270 = por %p268, %p269
      %p272 = scmp.ne.s32.totalorder %s257, %s271
      %p273 = scmp.eq.s32.totalorder %s74, 0
      %p274 = por %p272, %p273
      %s276 = sadd.s32 %s275, 1
      %p279 = scmp.eq.s32.totalorder %s68, 1
      %p280 = scmp.ne.s32.totalorder %s275, %s277
      %p281 = scmp.eq.s32.totalorder %s68, 0
      %p282 = por %p280, %p281
      %p283 = scmp.ne.s32.totalorder %s275, %s277
      %p284 = scmp.eq.s32.totalorder %s73, 1
      %p285 = por %p283, %p284
      %p286 = scmp.ne.s32.totalorder %s277, %s278
      %p287 = scmp.eq.s32.totalorder %s73, 0
      %p288 = por %p286, %p287
      %p289 = scmp.ne.s32.totalorder %s277, %s278
      %p290 = scmp.eq.s32.totalorder %s74, 1
      %p291 = por %p289, %p290
      %p293 = scmp.ne.s32.totalorder %s278, %s292
      %p294 = scmp.eq.s32.totalorder %s74, 0
      %p295 = por %p293, %p294
      %s297 = sadd.s32 %s296, 1
      %p300 = scmp.eq.s32.totalorder %s68, 1
      %p301 = scmp.ne.s32.totalorder %s296, %s298
      %p302 = scmp.eq.s32.totalorder %s68, 0
      %p303 = por %p301, %p302
      %p304 = scmp.ne.s32.totalorder %s296, %s298
      %p305 = scmp.eq.s32.totalorder %s73, 1
      %p306 = por %p304, %p305
      %p307 = scmp.ne.s32.totalorder %s298, %s299
      %p308 = scmp.eq.s32.totalorder %s73, 0
      %p309 = por %p307, %p308
      %p310 = scmp.ne.s32.totalorder %s298, %s299
      %p311 = scmp.eq.s32.totalorder %s74, 1
      %p312 = por %p310, %p311
      %p314 = scmp.ne.s32.totalorder %s299, %s313
      %p315 = scmp.eq.s32.totalorder %s74, 0
      %p316 = por %p314, %p315
      %s318 = sadd.s32 %s317, 1
      %p321 = scmp.eq.s32.totalorder %s68, 1
      %p322 = scmp.ne.s32.totalorder %s317, %s319
      %p323 = scmp.eq.s32.totalorder %s68, 0
      %p324 = por %p322, %p323
      %p325 = scmp.ne.s32.totalorder %s317, %s319
      %p326 = scmp.eq.s32.totalorder %s73, 1
      %p327 = por %p325, %p326
      %p328 = scmp.ne.s32.totalorder %s319, %s320
      %p329 = scmp.eq.s32.totalorder %s73, 0
      %p330 = por %p328, %p329
      %p331 = scmp.ne.s32.totalorder %s319, %s320
      %p332 = scmp.eq.s32.totalorder %s74, 1
      %p333 = por %p331, %p332
      %p335 = scmp.ne.s32.totalorder %s320, %s334
      %p336 = scmp.eq.s32.totalorder %s74, 0
      %p337 = por %p335, %p336
      %s339 = sadd.s32 %s338, 1
      %p342 = scmp.eq.s32.totalorder %s68, 1
      %p343 = scmp.ne.s32.totalorder %s338, %s340
      %p344 = scmp.eq.s32.totalorder %s68, 0
      %p345 = por %p343, %p344
      %p346 = scmp.ne.s32.totalorder %s338, %s340
      %p347 = scmp.eq.s32.totalorder %s73, 1
      %p348 = por %p346, %p347
      %p349 = scmp.ne.s32.totalorder %s340, %s341
      %p350 = scmp.eq.s32.totalorder %s73, 0
      %p351 = por %p349, %p350
      %p352 = scmp.ne.s32.totalorder %s340, %s341
      %p353 = scmp.eq.s32.totalorder %s74, 1
      %p354 = por %p352, %p353
      %p356 = scmp.ne.s32.totalorder %s341, %s355
      %p357 = scmp.eq.s32.totalorder %s74, 0
      %p358 = por %p356, %p357
      %s360 = sadd.s32 %s359, 1
      %p363 = scmp.eq.s32.totalorder %s68, 1
      %p364 = scmp.ne.s32.totalorder %s359, %s361
      %p365 = scmp.eq.s32.totalorder %s68, 0
      %p366 = por %p364, %p365
      %p367 = scmp.ne.s32.totalorder %s359, %s361
      %p368 = scmp.eq.s32.totalorder %s73, 1
      %p369 = por %p367, %p368
      %p370 = scmp.ne.s32.totalorder %s361, %s362
      %p371 = scmp.eq.s32.totalorder %s73, 0
      %p372 = por %p370, %p371
      %p373 = scmp.ne.s32.totalorder %s361, %s362
      %p374 = scmp.eq.s32.totalorder %s74, 1
      %p375 = por %p373, %p374
      %p377 = scmp.ne.s32.totalorder %s362, %s376
      %p378 = scmp.eq.s32.totalorder %s74, 0
      %p379 = por %p377, %p378
      %s381 = sadd.s32 %s380, 1
      %p384 = scmp.eq.s32.totalorder %s68, 1
      %p385 = scmp.ne.s32.totalorder %s380, %s382
      %p386 = scmp.eq.s32.totalorder %s68, 0
      %p387 = por %p385, %p386
      %p388 = scmp.ne.s32.totalorder %s380, %s382
      %p389 = scmp.eq.s32.totalorder %s73, 1
      %p390 = por %p388, %p389
      %p391 = scmp.ne.s32.totalorder %s382, %s383
      %p392 = scmp.eq.s32.totalorder %s73, 0
      %p393 = por %p391, %p392
      %p394 = scmp.ne.s32.totalorder %s382, %s383
      %p395 = scmp.eq.s32.totalorder %s74, 1
      %p396 = por %p394, %p395
      %p398 = scmp.ne.s32.totalorder %s383, %s397
      %p399 = scmp.eq.s32.totalorder %s74, 0
      %p400 = por %p398, %p399
      %s402 = sadd.s32 %s401, 1
      %p405 = scmp.eq.s32.totalorder %s68, 1
      %p406 = scmp.ne.s32.totalorder %s401, %s403
      %p407 = scmp.eq.s32.totalorder %s68, 0
      %p408 = por %p406, %p407
      %p409 = scmp.ne.s32.totalorder %s401, %s403
      %p410 = scmp.eq.s32.totalorder %s73, 1
      %p411 = por %p409, %p410
      %p412 = scmp.ne.s32.totalorder %s403, %s404
      %p413 = scmp.eq.s32.totalorder %s73, 0
      %p414 = por %p412, %p413
      %p415 = scmp.ne.s32.totalorder %s403, %s404
      %p416 = scmp.eq.s32.totalorder %s74, 1
      %p417 = por %p415, %p416
      %p419 = scmp.ne.s32.totalorder %s404, %s418
      %p420 = scmp.eq.s32.totalorder %s74, 0
      %p421 = por %p419, %p420
      %s423 = sadd.s32 %s422, 1
      %p426 = scmp.eq.s32.totalorder %s68, 1
      %p427 = scmp.ne.s32.totalorder %s422, %s424
      %p428 = scmp.eq.s32.totalorder %s68, 0
      %p429 = por %p427, %p428
      %p430 = scmp.ne.s32.totalorder %s422, %s424
      %p431 = scmp.eq.s32.totalorder %s73, 1
      %p432 = por %p430, %p431
      %p433 = scmp.ne.s32.totalorder %s424, %s425
      %p434 = scmp.eq.s32.totalorder %s73, 0
      %p435 = por %p433, %p434
      %p436 = scmp.ne.s32.totalorder %s424, %s425
      %p437 = scmp.eq.s32.totalorder %s74, 1
      %p438 = por %p436, %p437
      %p440 = scmp.ne.s32.totalorder %s425, %s439
      %p441 = scmp.eq.s32.totalorder %s74, 0
      %p442 = por %p440, %p441
      %s444 = sadd.s32 %s443, 1
      %p447 = scmp.eq.s32.totalorder %s68, 1
      %p448 = scmp.ne.s32.totalorder %s443, %s445
      %p449 = scmp.eq.s32.totalorder %s68, 0
      %p450 = por %p448, %p449
      %p451 = scmp.ne.s32.totalorder %s443, %s445
      %p452 = scmp.eq.s32.totalorder %s73, 1
      %p453 = por %p451, %p452
      %p454 = scmp.ne.s32.totalorder %s445, %s446
      %p455 = scmp.eq.s32.totalorder %s73, 0
      %p456 = por %p454, %p455
      %p457 = scmp.ne.s32.totalorder %s445, %s446
      %p458 = scmp.eq.s32.totalorder %s74, 1
      %p459 = por %p457, %p458
      %p461 = scmp.ne.s32.totalorder %s446, %s460
      %p462 = scmp.eq.s32.totalorder %s74, 0
      %p463 = por %p461, %p462
      %s465 = sadd.s32 %s464, 1
      %p468 = scmp.eq.s32.totalorder %s68, 1
      %p469 = scmp.ne.s32.totalorder %s464, %s466
      %p470 = scmp.eq.s32.totalorder %s68, 0
      %p471 = por %p469, %p470
      %p472 = scmp.ne.s32.totalorder %s464, %s466
      %p473 = scmp.eq.s32.totalorder %s73, 1
      %p474 = por %p472, %p473
      %p475 = scmp.ne.s32.totalorder %s466, %s467
      %p476 = scmp.eq.s32.totalorder %s73, 0
      %p477 = por %p475, %p476
      %p478 = scmp.ne.s32.totalorder %s466, %s467
      %p479 = scmp.eq.s32.totalorder %s74, 1
      %p480 = por %p478, %p479
      %p482 = scmp.ne.s32.totalorder %s467, %s481
      %p483 = scmp.eq.s32.totalorder %s74, 0
      %p484 = por %p482, %p483
      %s486 = sadd.s32 %s485, 1
      %p489 = scmp.eq.s32.totalorder %s68, 1
      %p490 = scmp.ne.s32.totalorder %s485, %s487
      %p491 = scmp.eq.s32.totalorder %s68, 0
      %p492 = por %p490, %p491
      %p493 = scmp.ne.s32.totalorder %s485, %s487
      %p494 = scmp.eq.s32.totalorder %s73, 1
      %p495 = por %p493, %p494
      %p496 = scmp.ne.s32.totalorder %s487, %s488
      %p497 = scmp.eq.s32.totalorder %s73, 0
      %p498 = por %p496, %p497
      %p499 = scmp.ne.s32.totalorder %s487, %s488
      %p500 = scmp.eq.s32.totalorder %s74, 1
      %p501 = por %p499, %p500
      %p503 = scmp.ne.s32.totalorder %s488, %s502
      %p504 = scmp.eq.s32.totalorder %s74, 0
      %p505 = por %p503, %p504
      %s507 = sadd.s32 %s506, 1
      %p510 = scmp.eq.s32.totalorder %s68, 1
      %p511 = scmp.ne.s32.totalorder %s506, %s508
      %p512 = scmp.eq.s32.totalorder %s68, 0
      %p513 = por %p511, %p512
      %p514 = scmp.ne.s32.totalorder %s506, %s508
      %p515 = scmp.eq.s32.totalorder %s73, 1
      %p516 = por %p514, %p515
      %p517 = scmp.ne.s32.totalorder %s508, %s509
      %p518 = scmp.eq.s32.totalorder %s73, 0
      %p519 = por %p517, %p518
      %p520 = scmp.ne.s32.totalorder %s508, %s509
      %p521 = scmp.eq.s32.totalorder %s74, 1
      %p522 = por %p520, %p521
      %p524 = scmp.ne.s32.totalorder %s509, %s523
      %p525 = scmp.eq.s32.totalorder %s74, 0
      %p526 = por %p524, %p525
      %s528 = sadd.s32 %s527, 1
      %p531 = scmp.eq.s32.totalorder %s68, 1
      %p532 = scmp.ne.s32.totalorder %s527, %s529
      %p533 = scmp.eq.s32.totalorder %s68, 0
      %p534 = por %p532, %p533
      %p535 = scmp.ne.s32.totalorder %s527, %s529
      %p536 = scmp.eq.s32.totalorder %s73, 1
      %p537 = por %p535, %p536
      %p538 = scmp.ne.s32.totalorder %s529, %s530
      %p539 = scmp.eq.s32.totalorder %s73, 0
      %p540 = por %p538, %p539
      %p541 = scmp.ne.s32.totalorder %s529, %s530
      %p542 = scmp.eq.s32.totalorder %s74, 1
      %p543 = por %p541, %p542
      %p545 = scmp.ne.s32.totalorder %s530, %s544
      %p546 = scmp.eq.s32.totalorder %s74, 0
      %p547 = por %p545, %p546
      %s549 = sadd.s32 %s548, 1
      %p552 = scmp.eq.s32.totalorder %s68, 1
      %p553 = scmp.ne.s32.totalorder %s548, %s550
      %p554 = scmp.eq.s32.totalorder %s68, 0
      %p555 = por %p553, %p554
      %p556 = scmp.ne.s32.totalorder %s548, %s550
      %p557 = scmp.eq.s32.totalorder %s73, 1
      %p558 = por %p556, %p557
      %p559 = scmp.ne.s32.totalorder %s550, %s551
      %p560 = scmp.eq.s32.totalorder %s73, 0
      %p561 = por %p559, %p560
      %p562 = scmp.ne.s32.totalorder %s550, %s551
      %p563 = scmp.eq.s32.totalorder %s74, 1
      %p564 = por %p562, %p563
      %p566 = scmp.ne.s32.totalorder %s551, %s565
      %p567 = scmp.eq.s32.totalorder %s74, 0
      %p568 = por %p566, %p567
      %s570 = sadd.s32 %s569, 1
      %p573 = scmp.eq.s32.totalorder %s68, 1
      %p574 = scmp.ne.s32.totalorder %s569, %s571
      %p575 = scmp.eq.s32.totalorder %s68, 0
      %p576 = por %p574, %p575
      %p577 = scmp.ne.s32.totalorder %s569, %s571
      %p578 = scmp.eq.s32.totalorder %s73, 1
      %p579 = por %p577, %p578
      %p580 = scmp.ne.s32.totalorder %s571, %s572
      %p581 = scmp.eq.s32.totalorder %s73, 0
      %p582 = por %p580, %p581
      %p583 = scmp.ne.s32.totalorder %s571, %s572
      %p584 = scmp.eq.s32.totalorder %s74, 1
      %p585 = por %p583, %p584
      %p587 = scmp.ne.s32.totalorder %s572, %s586
      %p588 = scmp.eq.s32.totalorder %s74, 0
      %p589 = por %p587, %p588
      %s591 = sadd.s32 %s590, 1
      %p594 = scmp.eq.s32.totalorder %s68, 1
      %p595 = scmp.ne.s32.totalorder %s590, %s592
      %p596 = scmp.eq.s32.totalorder %s68, 0
      %p597 = por %p595, %p596
      %p598 = scmp.ne.s32.totalorder %s590, %s592
      %p599 = scmp.eq.s32.totalorder %s73, 1
      %p600 = por %p598, %p599
      %p601 = scmp.ne.s32.totalorder %s592, %s593
      %p602 = scmp.eq.s32.totalorder %s73, 0
      %p603 = por %p601, %p602
      %p604 = scmp.ne.s32.totalorder %s592, %s593
      %p605 = scmp.eq.s32.totalorder %s74, 1
      %p606 = por %p604, %p605
      %p608 = scmp.ne.s32.totalorder %s593, %s607
      %p609 = scmp.eq.s32.totalorder %s74, 0
      %p610 = por %p608, %p609
      %s612 = sadd.s32 %s611, 1
      %p615 = scmp.eq.s32.totalorder %s68, 1
      %p616 = scmp.ne.s32.totalorder %s611, %s613
      %p617 = scmp.eq.s32.totalorder %s68, 0
      %p618 = por %p616, %p617
      %p619 = scmp.ne.s32.totalorder %s611, %s613
      %p620 = scmp.eq.s32.totalorder %s73, 1
      %p621 = por %p619, %p620
      %p622 = scmp.ne.s32.totalorder %s613, %s614
      %p623 = scmp.eq.s32.totalorder %s73, 0
      %p624 = por %p622, %p623
      %p625 = scmp.ne.s32.totalorder %s613, %s614
      %p626 = scmp.eq.s32.totalorder %s74, 1
      %p627 = por %p625, %p626
      %p629 = scmp.ne.s32.totalorder %s614, %s628
      %p630 = scmp.eq.s32.totalorder %s74, 0
      %p631 = por %p629, %p630
      %s633 = sadd.s32 %s632, 1
      %p636 = scmp.eq.s32.totalorder %s68, 1
      %p637 = scmp.ne.s32.totalorder %s632, %s634
      %p638 = scmp.eq.s32.totalorder %s68, 0
      %p639 = por %p637, %p638
      %p640 = scmp.ne.s32.totalorder %s632, %s634
      %p641 = scmp.eq.s32.totalorder %s73, 1
      %p642 = por %p640, %p641
      %p643 = scmp.ne.s32.totalorder %s634, %s635
      %p644 = scmp.eq.s32.totalorder %s73, 0
      %p645 = por %p643, %p644
      %p646 = scmp.ne.s32.totalorder %s634, %s635
      %p647 = scmp.eq.s32.totalorder %s74, 1
      %p648 = por %p646, %p647
      %p650 = scmp.ne.s32.totalorder %s635, %s649
      %p651 = scmp.eq.s32.totalorder %s74, 0
      %p652 = por %p650, %p651
      %s654 = sadd.s32 %s653, 1
      %p657 = scmp.eq.s32.totalorder %s68, 1
      %p658 = scmp.ne.s32.totalorder %s653, %s655
      %p659 = scmp.eq.s32.totalorder %s68, 0
      %p660 = por %p658, %p659
      %p661 = scmp.ne.s32.totalorder %s653, %s655
      %p662 = scmp.eq.s32.totalorder %s73, 1
      %p663 = por %p661, %p662
      %p664 = scmp.ne.s32.totalorder %s655, %s656
      %p665 = scmp.eq.s32.totalorder %s73, 0
      %p666 = por %p664, %p665
      %p667 = scmp.ne.s32.totalorder %s655, %s656
      %p668 = scmp.eq.s32.totalorder %s74, 1
      %p669 = por %p667, %p668
      %p671 = scmp.ne.s32.totalorder %s656, %s670
      %p672 = scmp.eq.s32.totalorder %s74, 0
      %p673 = por %p671, %p672
      %s675 = sadd.s32 %s674, 1
      %p678 = scmp.eq.s32.totalorder %s68, 1
      %p679 = scmp.ne.s32.totalorder %s674, %s676
      %p680 = scmp.eq.s32.totalorder %s68, 0
      %p681 = por %p679, %p680
      %p682 = scmp.ne.s32.totalorder %s674, %s676
      %p683 = scmp.eq.s32.totalorder %s73, 1
      %p684 = por %p682, %p683
      %p685 = scmp.ne.s32.totalorder %s676, %s677
      %p686 = scmp.eq.s32.totalorder %s73, 0
      %p687 = por %p685, %p686
      %p688 = scmp.ne.s32.totalorder %s676, %s677
      %p689 = scmp.eq.s32.totalorder %s74, 1
      %p690 = por %p688, %p689
      %p692 = scmp.ne.s32.totalorder %s677, %s691
      %p693 = scmp.eq.s32.totalorder %s74, 0
      %p694 = por %p692, %p693
      %s695 = ssub.s32 %s68, %s75
      %p696 = scmp.eq.s32.totalorder %s695, 0
      %s698 = sadd.s32 %s697, 1
      %s699 = scalar_select %p696, %s697, %s698
      %p702 = pneg %p696
      %p703 = scmp.eq.s32.totalorder %s68, 1
      %p704 = por %p702, %p703
      %p705 = scmp.ne.s32.totalorder %s697, %s700
      %p706 = scmp.eq.s32.totalorder %s68, 0
      %p707 = por %p705, %p706
      %p708 = scmp.ne.s32.totalorder %s697, %s700
      %p709 = scmp.eq.s32.totalorder %s73, 1
      %p710 = por %p708, %p709
      %p711 = scmp.ne.s32.totalorder %s700, %s701
      %p712 = scmp.eq.s32.totalorder %s73, 0
      %p713 = por %p711, %p712
      %p714 = scmp.ne.s32.totalorder %s700, %s701
      %p715 = scmp.eq.s32.totalorder %s74, 1
      %p716 = por %p714, %p715
      %p718 = scmp.ne.s32.totalorder %s701, %s717
      %p719 = scmp.eq.s32.totalorder %s74, 0
      %p720 = por %p718, %p719
      %p721 = scmp.le.s32.totalorder 1, %s68
      %p722 = scmp.lt.s32.totalorder %s68, 3
      %p723 = pnand %p721, %p722
      %p724 = pneg %p723
      // Predicated region
      $region9: #{tpu_custom_call.1} parent=5 // pred_check
        _
      $region10: #{tpu_custom_call.1} parent=5 // pred_check_branch
        %726 = sbr.rel (%p723) target = $region12
      $region11: #{tpu_custom_call.1} parent=5 // pred_region
        %s727 = ssub.s32 %s68, 1
        // Predicated region
        $region13: #{tpu_custom_call.1} parent=11 // pred_check
          %p728 = pneg %p141
        $region14: #{tpu_custom_call.1} parent=11 // pred_check_branch
          %730 = sbr.rel (%p728) target = $region16
        $region15: #{tpu_custom_call.1} parent=11 // pred_region
          _
        $region16: #{tpu_custom_call.1} parent=11 // pred_fallthru
          _
        // Predicated region
        $region17: #{tpu_custom_call.1} parent=11 // pred_check
          %p731 = pneg %p162
        $region18: #{tpu_custom_call.1} parent=11 // pred_check_branch
          %733 = sbr.rel (%p731) target = $region20
        $region19: #{tpu_custom_call.1} parent=11 // pred_region
          _
        $region20: #{tpu_custom_call.1} parent=11 // pred_fallthru
          _
        // Predicated region
        $region21: #{tpu_custom_call.1} parent=11 // pred_check
          %p734 = pneg %p183
        $region22: #{tpu_custom_call.1} parent=11 // pred_check_branch
          %736 = sbr.rel (%p734) target = $region24
        $region23: #{tpu_custom_call.1} parent=11 // pred_region
          _
        $region24: #{tpu_custom_call.1} parent=11 // pred_fallthru
          _
        // Predicated region
        $region25: #{tpu_custom_call.1} parent=11 // pred_check
          %p737 = pneg %p204
        $region26: #{tpu_custom_call.1} parent=11 // pred_check_branch
          %739 = sbr.rel (%p737) target = $region28
        $region27: #{tpu_custom_call.1} parent=11 // pred_region
          _
        $region28: #{tpu_custom_call.1} parent=11 // pred_fallthru
          _
        // Predicated region
        $region29: #{tpu_custom_call.1} parent=11 // pred_check
          %p740 = pneg %p225
        $region30: #{tpu_custom_call.1} parent=11 // pred_check_branch
          %742 = sbr.rel (%p740) target = $region32
        $region31: #{tpu_custom_call.1} parent=11 // pred_region
          _
        $region32: #{tpu_custom_call.1} parent=11 // pred_fallthru
          _
        // Predicated region
        $region33: #{tpu_custom_call.1} parent=11 // pred_check
          %p743 = pneg %p246
        $region34: #{tpu_custom_call.1} parent=11 // pred_check_branch
          %745 = sbr.rel (%p743) target = $region36
        $region35: #{tpu_custom_call.1} parent=11 // pred_region
          _
        $region36: #{tpu_custom_call.1} parent=11 // pred_fallthru
          _
        // Predicated region
        $region37: #{tpu_custom_call.1} parent=11 // pred_check
          %p746 = pneg %p267
        $region38: #{tpu_custom_call.1} parent=11 // pred_check_branch
          %748 = sbr.rel (%p746) target = $region40
        $region39: #{tpu_custom_call.1} parent=11 // pred_region
          _
        $region40: #{tpu_custom_call.1} parent=11 // pred_fallthru
          _
        // Predicated region
        $region41: #{tpu_custom_call.1} parent=11 // pred_check
          %p749 = pneg %p288
        $region42: #{tpu_custom_call.1} parent=11 // pred_check_branch
          %751 = sbr.rel (%p749) target = $region44
        $region43: #{tpu_custom_call.1} parent=11 // pred_region
          _
        $region44: #{tpu_custom_call.1} parent=11 // pred_fallthru
          _
        // Predicated region
        $region45: #{tpu_custom_call.1} parent=11 // pred_check
          %p752 = pneg %p309
        $region46: #{tpu_custom_call.1} parent=11 // pred_check_branch
          %754 = sbr.rel (%p752) target = $region48
        $region47: #{tpu_custom_call.1} parent=11 // pred_region
          _
        $region48: #{tpu_custom_call.1} parent=11 // pred_fallthru
          _
        // Predicated region
        $region49: #{tpu_custom_call.1} parent=11 // pred_check
          %p755 = pneg %p330
        $region50: #{tpu_custom_call.1} parent=11 // pred_check_branch
          %757 = sbr.rel (%p755) target = $region52
        $region51: #{tpu_custom_call.1} parent=11 // pred_region
          _
        $region52: #{tpu_custom_call.1} parent=11 // pred_fallthru
          _
        // Predicated region
        $region53: #{tpu_custom_call.1} parent=11 // pred_check
          %p758 = pneg %p351
        $region54: #{tpu_custom_call.1} parent=11 // pred_check_branch
          %760 = sbr.rel (%p758) target = $region56
        $region55: #{tpu_custom_call.1} parent=11 // pred_region
          _
        $region56: #{tpu_custom_call.1} parent=11 // pred_fallthru
          _
        // Predicated region
        $region57: #{tpu_custom_call.1} parent=11 // pred_check
          %p761 = pneg %p372
        $region58: #{tpu_custom_call.1} parent=11 // pred_check_branch
          %763 = sbr.rel (%p761) target = $region60
        $region59: #{tpu_custom_call.1} parent=11 // pred_region
          _
        $region60: #{tpu_custom_call.1} parent=11 // pred_fallthru
          _
        // Predicated region
        $region61: #{tpu_custom_call.1} parent=11 // pred_check
          %p764 = pneg %p393
        $region62: #{tpu_custom_call.1} parent=11 // pred_check_branch
          %766 = sbr.rel (%p764) target = $region64
        $region63: #{tpu_custom_call.1} parent=11 // pred_region
          _
        $region64: #{tpu_custom_call.1} parent=11 // pred_fallthru
          _
        // Predicated region
        $region65: #{tpu_custom_call.1} parent=11 // pred_check
          %p767 = pneg %p414
        $region66: #{tpu_custom_call.1} parent=11 // pred_check_branch
          %769 = sbr.rel (%p767) target = $region68
        $region67: #{tpu_custom_call.1} parent=11 // pred_region
          _
        $region68: #{tpu_custom_call.1} parent=11 // pred_fallthru
          _
        // Predicated region
        $region69: #{tpu_custom_call.1} parent=11 // pred_check
          %p770 = pneg %p435
        $region70: #{tpu_custom_call.1} parent=11 // pred_check_branch
          %772 = sbr.rel (%p770) target = $region72
        $region71: #{tpu_custom_call.1} parent=11 // pred_region
          _
        $region72: #{tpu_custom_call.1} parent=11 // pred_fallthru
          _
        // Predicated region
        $region73: #{tpu_custom_call.1} parent=11 // pred_check
          %p773 = pneg %p456
        $region74: #{tpu_custom_call.1} parent=11 // pred_check_branch
          %775 = sbr.rel (%p773) target = $region76
        $region75: #{tpu_custom_call.1} parent=11 // pred_region
          _
        $region76: #{tpu_custom_call.1} parent=11 // pred_fallthru
          _
        // Predicated region
        $region77: #{tpu_custom_call.1} parent=11 // pred_check
          %p776 = pneg %p477
        $region78: #{tpu_custom_call.1} parent=11 // pred_check_branch
          %778 = sbr.rel (%p776) target = $region80
        $region79: #{tpu_custom_call.1} parent=11 // pred_region
          _
        $region80: #{tpu_custom_call.1} parent=11 // pred_fallthru
          _
        // Predicated region
        $region81: #{tpu_custom_call.1} parent=11 // pred_check
          %p779 = pneg %p498
        $region82: #{tpu_custom_call.1} parent=11 // pred_check_branch
          %781 = sbr.rel (%p779) target = $region84
        $region83: #{tpu_custom_call.1} parent=11 // pred_region
          _
        $region84: #{tpu_custom_call.1} parent=11 // pred_fallthru
          _
        // Predicated region
        $region85: #{tpu_custom_call.1} parent=11 // pred_check
          %p782 = pneg %p519
        $region86: #{tpu_custom_call.1} parent=11 // pred_check_branch
          %784 = sbr.rel (%p782) target = $region88
        $region87: #{tpu_custom_call.1} parent=11 // pred_region
          _
        $region88: #{tpu_custom_call.1} parent=11 // pred_fallthru
          _
        // Predicated region
        $region89: #{tpu_custom_call.1} parent=11 // pred_check
          %p785 = pneg %p540
        $region90: #{tpu_custom_call.1} parent=11 // pred_check_branch
          %787 = sbr.rel (%p785) target = $region92
        $region91: #{tpu_custom_call.1} parent=11 // pred_region
          _
        $region92: #{tpu_custom_call.1} parent=11 // pred_fallthru
          _
        // Predicated region
        $region93: #{tpu_custom_call.1} parent=11 // pred_check
          %p788 = pneg %p561
        $region94: #{tpu_custom_call.1} parent=11 // pred_check_branch
          %790 = sbr.rel (%p788) target = $region96
        $region95: #{tpu_custom_call.1} parent=11 // pred_region
          _
        $region96: #{tpu_custom_call.1} parent=11 // pred_fallthru
          _
        // Predicated region
        $region97: #{tpu_custom_call.1} parent=11 // pred_check
          %p791 = pneg %p582
        $region98: #{tpu_custom_call.1} parent=11 // pred_check_branch
          %793 = sbr.rel (%p791) target = $region100
        $region99: #{tpu_custom_call.1} parent=11 // pred_region
          _
        $region100: #{tpu_custom_call.1} parent=11 // pred_fallthru
          _
        // Predicated region
        $region101: #{tpu_custom_call.1} parent=11 // pred_check
          %p794 = pneg %p603
        $region102: #{tpu_custom_call.1} parent=11 // pred_check_branch
          %796 = sbr.rel (%p794) target = $region104
        $region103: #{tpu_custom_call.1} parent=11 // pred_region
          _
        $region104: #{tpu_custom_call.1} parent=11 // pred_fallthru
          _
        // Predicated region
        $region105: #{tpu_custom_call.1} parent=11 // pred_check
          %p797 = pneg %p624
        $region106: #{tpu_custom_call.1} parent=11 // pred_check_branch
          %799 = sbr.rel (%p797) target = $region108
        $region107: #{tpu_custom_call.1} parent=11 // pred_region
          _
        $region108: #{tpu_custom_call.1} parent=11 // pred_fallthru
          _
        // Predicated region
        $region109: #{tpu_custom_call.1} parent=11 // pred_check
          %p800 = pneg %p645
        $region110: #{tpu_custom_call.1} parent=11 // pred_check_branch
          %802 = sbr.rel (%p800) target = $region112
        $region111: #{tpu_custom_call.1} parent=11 // pred_region
          _
        $region112: #{tpu_custom_call.1} parent=11 // pred_fallthru
          _
        // Predicated region
        $region113: #{tpu_custom_call.1} parent=11 // pred_check
          %p803 = pneg %p666
        $region114: #{tpu_custom_call.1} parent=11 // pred_check_branch
          %805 = sbr.rel (%p803) target = $region116
        $region115: #{tpu_custom_call.1} parent=11 // pred_region
          _
        $region116: #{tpu_custom_call.1} parent=11 // pred_fallthru
          _
        // Predicated region
        $region117: #{tpu_custom_call.1} parent=11 // pred_check
          %p806 = pneg %p687
        $region118: #{tpu_custom_call.1} parent=11 // pred_check_branch
          %808 = sbr.rel (%p806) target = $region120
        $region119: #{tpu_custom_call.1} parent=11 // pred_region
          _
        $region120: #{tpu_custom_call.1} parent=11 // pred_fallthru
          _
      $region12: #{tpu_custom_call.1} parent=5 // pred_fallthru
        _
      %p809 = scmp.lt.s32.totalorder %s68, 2
      // Predicated region
      $region121: #{tpu_custom_call.1} parent=5 // pred_check
        %p810 = pneg %p809
      $region122: #{tpu_custom_call.1} parent=5 // pred_check_branch
        %812 = sbr.rel (%p810) target = $region124
      $region123: #{tpu_custom_call.1} parent=5 // pred_region
        // Predicated region
        $region125: #{tpu_custom_call.1} parent=123 // pred_check
          %p813 = pneg %p88
        $region126: #{tpu_custom_call.1} parent=123 // pred_check_branch
          %815 = sbr.rel (%p813) target = $region128
        $region127: #{tpu_custom_call.1} parent=123 // pred_region
          %p816 = scmp.lt.s32.totalorder %s68, 1
          %s817 = scalar_select %p816, %s68, 1
          %s818 = smul.addr %s817, 8
          %s819 = scalar_lea.vmem %s1, %s818
        $region128: #{tpu_custom_call.1} parent=123 // pred_fallthru
          _
        // Predicated region
        $region129: #{tpu_custom_call.1} parent=123 // pred_check
          %p820 = pneg %p114
        $region130: #{tpu_custom_call.1} parent=123 // pred_check_branch
          %822 = sbr.rel (%p820) target = $region132
        $region131: #{tpu_custom_call.1} parent=123 // pred_region
          %p823 = scmp.lt.s32.totalorder %s68, 1
          %s824 = scalar_select %p823, %s68, 1
          %s825 = scalar_lea.vmem %s3, %s824
        $region132: #{tpu_custom_call.1} parent=123 // pred_fallthru
          _
      $region124: #{tpu_custom_call.1} parent=5 // pred_fallthru
        _
      %p826 = scmp.le.s32.totalorder 1, %s68
      %p827 = scmp.lt.s32.totalorder %s68, 3
      %p828 = pnand %p826, %p827
      %p829 = pneg %p828
      // Predicated region
      $region133: #{tpu_custom_call.1} parent=5 // pred_check
        _
      $region134: #{tpu_custom_call.1} parent=5 // pred_check_branch
        %831 = sbr.rel (%p828) target = $region136
      $region135: #{tpu_custom_call.1} parent=5 // pred_region
        %s832 = ssub.s32 %s68, 1
        %p833 = scmp.lt.s32.totalorder %s73, 1
        %s834 = scalar_select %p833, %s73, 1
        %s835 = smul.addr %s834, 8
        %s836 = scalar_lea.vmem %s1, %s835
        %p837 = pneg %p94
        %p838 = pneg %p91
        %p839 = scmp.lt.s32.totalorder %s73, 1
        %s840 = scalar_select %p839, %s73, 1
        %s841 = scalar_lea.vmem %s3, %s840
        %p842 = pneg %p120
        %p843 = pneg %p117
        %p844 = pneg %p141
        %p845 = pneg %p138
        %p846 = pneg %p162
        %p847 = pneg %p159
        %p848 = pneg %p183
        %p849 = pneg %p180
        %p850 = pneg %p204
        %p851 = pneg %p201
        %p852 = pneg %p225
        %p853 = pneg %p222
        %p854 = pneg %p246
        %p855 = pneg %p243
        %p856 = pneg %p267
        %p857 = pneg %p264
        %p858 = pneg %p288
        %p859 = pneg %p285
        %p860 = pneg %p309
        %p861 = pneg %p306
        %p862 = pneg %p330
        %p863 = pneg %p327
        %p864 = pneg %p351
        %p865 = pneg %p348
        %p866 = pneg %p372
        %p867 = pneg %p369
        %p868 = pneg %p393
        %p869 = pneg %p390
        %p870 = pneg %p414
        %p871 = pneg %p411
        %p872 = pneg %p435
        %p873 = pneg %p432
        %p874 = pneg %p456
        %p875 = pneg %p453
        %p876 = pneg %p477
        %p877 = pneg %p474
        %p878 = pneg %p498
        %p879 = pneg %p495
        %p880 = pneg %p519
        %p881 = pneg %p516
        %p882 = pneg %p540
        %p883 = pneg %p537
        %p884 = pneg %p561
        %p885 = pneg %p558
        %p886 = pneg %p582
        %p887 = pneg %p579
        %p888 = pneg %p603
        %p889 = pneg %p600
        %p890 = pneg %p624
        %p891 = pneg %p621
        %p892 = pneg %p645
        %p893 = pneg %p642
        %p894 = pneg %p666
        %p895 = pneg %p663
        %p896 = pneg %p687
        %p897 = pneg %p684
        %p898 = pneg %p713
        %p899 = pneg %p710
        %s900 = sand.u32 %s700, 1
        %s901 = scalar_lea.sflag [#allocation3], %s900
        %s902 = sand.u32 %s700, 1
        %s903 = scalar_lea.vmem [#allocation2], %s902
        %p904 = scmp.lt.s32.totalorder %s73, 1
        %s905 = scalar_select %p904, %s73, 1
        %s906 = smul.addr %s905, 8
        %s907 = scalar_lea.vmem %s1, %s906
        %p908 = scmp.lt.s32.totalorder %s73, 1
        %s909 = scalar_select %p908, %s73, 1
        %s910 = scalar_lea.vmem %s3, %s909
        %v911 = vld [vmem:[%s907] sm:$0xff]
        %v912 = vld [vmem:[%s910] sm:$0x1]
        %v913 = vld [vmem:[%s5] sm:$0xf]
        %v914 = vld [vmem:[%s5 + $0x4] sm:$0xf]
        %v915 = vld [vmem:[%s5 + $0x8] sm:$0xf]
        %v916 = vld [vmem:[%s5 + $0xc] sm:$0xf]
        %v917 = vld [vmem:[%s7] sm:$0xff]
        %v918 = vld [vmem:[%s7 + $0x8] sm:$0xff]
        %v919 = vld [vmem:[%s7 + $0x10] sm:$0xff]
        %v920 = vld [vmem:[%s7 + $0x18] sm:$0xff]
        %v921 = vld [vmem:[%s7 + $0x20] sm:$0xff]
        %v922 = vld [vmem:[%s7 + $0x28] sm:$0xff]
        %v923 = vld [vmem:[%s7 + $0x30] sm:$0xff]
        %v924 = vld [vmem:[%s7 + $0x38] sm:$0xff]
        %v925 = vld [vmem:[%s9] sm:$0x1]
        %v926 = vld [vmem:[%s9 + $0x1] sm:$0x1]
        %v927 = vld [vmem:[%s9 + $0x2] sm:$0x1]
        %v928 = vld [vmem:[%s9 + $0x3] sm:$0x1]
        %v929 = vld [vmem:[%s11] sm:$0xff]
        %v930 = vld [vmem:[%s11 + $0x8] sm:$0xff]
        %v931 = vld [vmem:[%s11 + $0x10] sm:$0xff]
        %v932 = vld [vmem:[%s11 + $0x18] sm:$0xff]
        %v933 = vld [vmem:[%s11 + $0x20] sm:$0xff]
        %v934 = vld [vmem:[%s11 + $0x28] sm:$0xff]
        %v935 = vld [vmem:[%s11 + $0x30] sm:$0xff]
        %v936 = vld [vmem:[%s11 + $0x38] sm:$0xff]
        %v937 = vld [vmem:[%s13] sm:$0x1]
        %v938 = vld [vmem:[%s13 + $0x1] sm:$0x1]
        %v939 = vld [vmem:[%s13 + $0x2] sm:$0x1]
        %v940 = vld [vmem:[%s13 + $0x3] sm:$0x1]
        %v941 = vld [vmem:[%s15] sm:$0xf]
        %v942 = vld [vmem:[%s15 + $0x4] sm:$0xf]
        %v943 = vld [vmem:[%s15 + $0x8] sm:$0xf]
        %v944 = vld [vmem:[%s15 + $0xc] sm:$0xf]
        %v945 = vld [vmem:[%s17] sm:$0xff]
        %v946 = vld [vmem:[%s17 + $0x8] sm:$0xff]
        %v947 = vld [vmem:[%s19] sm:$0x1]
        %v952 = vlaneseq
        %v953 = vshrl.u32 %v952, 7
        %v954 = vsub.s32 0, %v953
        %v955 = vrot.slane %v925, %v954
        %v956 = vlaneseq
        %v957 = vshrl.u32 %v956, 7
        %v958 = vsub.s32 0, %v957
        %v959 = vrot.slane %v926, %v958
        %v960 = vlaneseq
        %v961 = vshrl.u32 %v960, 7
        %v962 = vsub.s32 0, %v961
        %v963 = vrot.slane %v927, %v962
        %v964 = vlaneseq
        %v965 = vshrl.u32 %v964, 7
        %v966 = vsub.s32 0, %v965
        %v967 = vrot.slane %v928, %v966
        %vm972 = vcmask 130048
        %v974 = vsel %vm972, %v911, 0
        %976 = vmatprep.subr.mxu0 0.0
        %977 = vmatpush1.msra.mxu0 %v917
        %978 = vmatprep.subr.mxu0 0.0
        %979 = vmatpush1.msra.mxu0 %v918
        %980 = vmatprep.subr.mxu0 0.0
        %981 = vmatpush1.msra.mxu0 0.0
        %982 = vmatprep.subr.mxu0 0.0
        %983 = vmatpush1.msra.mxu0 0.0
        %984 = vmatprep.subr.mxu0 0.0
        %985 = vmatpush1.msra.mxu0 0.0
        %986 = vmatprep.subr.mxu0 0.0
        %987 = vmatpush1.msra.mxu0 0.0
        %988 = vmatprep.subr.mxu0 0.0
        %989 = vmatpush1.msra.mxu0 0.0
        %990 = vmatprep.subr.mxu0 0.0
        %991 = vmatpush1.msra.mxu0 0.0
        %992 = vmatprep.subr.mxu0 0.0
        %993 = vmatpush1.msra.mxu0 0.0
        %994 = vmatprep.subr.mxu0 0.0
        %995 = vmatpush1.msra.mxu0 0.0
        %996 = vmatprep.subr.mxu0 0.0
        %997 = vmatpush1.msra.mxu0 0.0
        %998 = vmatprep.subr.mxu0 0.0
        %999 = vmatpush1.msra.mxu0 0.0
        %1000 = vmatprep.subr.mxu0 0.0
        %1001 = vmatpush1.msra.mxu0 0.0
        %1002 = vmatprep.subr.mxu0 0.0
        %1003 = vmatpush1.msra.mxu0 0.0
        %1004 = vmatprep.subr.mxu0 0.0
        %1005 = vmatpush1.msra.mxu0 0.0
        %1006 = vmatprep.subr.mxu0 0.0
        %1007 = vmatpush1.msra.mxu0 0.0
        %1008 = vmatprep.subr.mxu0 0.0
        %1009 = vmatpush1.msra.mxu0 0.0
        %1010 = vmatprep.subr.mxu0 0.0
        %1011 = vmatpush1.msra.mxu0 0.0
        %1012 = vmatprep.subr.mxu0 0.0
        %1013 = vmatpush1.msra.mxu0 0.0
        %1014 = vmatprep.subr.mxu0 0.0
        %1015 = vmatpush1.msra.mxu0 0.0
        %1016 = vmatprep.subr.mxu0 0.0
        %1017 = vmatpush1.msra.mxu0 0.0
        %1018 = vmatprep.subr.mxu0 0.0
        %1019 = vmatpush1.msra.mxu0 0.0
        %1020 = vmatprep.subr.mxu0 0.0
        %1021 = vmatpush1.msra.mxu0 0.0
        %1022 = vmatprep.subr.mxu0 0.0
        %1023 = vmatpush1.msra.mxu0 0.0
        %1024 = vmatprep.subr.mxu0 0.0
        %1025 = vmatpush1.msra.mxu0 0.0
        %1026 = vmatprep.subr.mxu0 0.0
        %1027 = vmatpush1.msra.mxu0 0.0
        %1028 = vmatprep.subr.mxu0 0.0
        %1029 = vmatpush1.msra.mxu0 0.0
        %1030 = vmatprep.subr.mxu0 0.0
        %1031 = vmatpush1.msra.mxu0 0.0
        %1032 = vmatprep.subr.mxu0 0.0
        %1033 = vmatpush1.msra.mxu0 0.0
        %1034 = vmatprep.subr.mxu0 0.0
        %1035 = vmatpush1.msra.mxu0 0.0
        %1036 = vmatprep.subr.mxu0 0.0
        %1037 = vmatpush1.msra.mxu0 0.0
        %1038 = vmatprep.subr.mxu0 0.0
        %1039 = vmatpush1.msra.mxu0 0.0
        %1040 = vmatprep.mubr.f32.mxu0 0.0
        %1041 = vmatmul.mubr.f32.gmra.mrb[0].mxu0 %v974
        %v1042 = vpop.f32.mrb[0].mxu0
        %v1043 = vadd.f32 %v955, %v1042
        %v1044 = vpop.f32.mrb[0].mxu0
        %1045 = vdwg.mxu0
        %1046 = vmatprep.subr.mxu0 0.0
        %1047 = vmatpush1.msra.mxu0 %v919
        %1048 = vmatprep.subr.mxu0 0.0
        %1049 = vmatpush1.msra.mxu0 %v920
        %1050 = vmatprep.subr.mxu0 0.0
        %1051 = vmatpush1.msra.mxu0 0.0
        %1052 = vmatprep.subr.mxu0 0.0
        %1053 = vmatpush1.msra.mxu0 0.0
        %1054 = vmatprep.subr.mxu0 0.0
        %1055 = vmatpush1.msra.mxu0 0.0
        %1056 = vmatprep.subr.mxu0 0.0
        %1057 = vmatpush1.msra.mxu0 0.0
        %1058 = vmatprep.subr.mxu0 0.0
        %1059 = vmatpush1.msra.mxu0 0.0
        %1060 = vmatprep.subr.mxu0 0.0
        %1061 = vmatpush1.msra.mxu0 0.0
        %1062 = vmatprep.subr.mxu0 0.0
        %1063 = vmatpush1.msra.mxu0 0.0
        %1064 = vmatprep.subr.mxu0 0.0
        %1065 = vmatpush1.msra.mxu0 0.0
        %1066 = vmatprep.subr.mxu0 0.0
        %1067 = vmatpush1.msra.mxu0 0.0
        %1068 = vmatprep.subr.mxu0 0.0
        %1069 = vmatpush1.msra.mxu0 0.0
        %1070 = vmatprep.subr.mxu0 0.0
        %1071 = vmatpush1.msra.mxu0 0.0
        %1072 = vmatprep.subr.mxu0 0.0
        %1073 = vmatpush1.msra.mxu0 0.0
        %1074 = vmatprep.subr.mxu0 0.0
        %1075 = vmatpush1.msra.mxu0 0.0
        %1076 = vmatprep.subr.mxu0 0.0
        %1077 = vmatpush1.msra.mxu0 0.0
        %1078 = vmatprep.subr.mxu0 0.0
        %1079 = vmatpush1.msra.mxu0 0.0
        %1080 = vmatprep.subr.mxu0 0.0
        %1081 = vmatpush1.msra.mxu0 0.0
        %1082 = vmatprep.subr.mxu0 0.0
        %1083 = vmatpush1.msra.mxu0 0.0
        %1084 = vmatprep.subr.mxu0 0.0
        %1085 = vmatpush1.msra.mxu0 0.0
        %1086 = vmatprep.subr.mxu0 0.0
        %1087 = vmatpush1.msra.mxu0 0.0
        %1088 = vmatprep.subr.mxu0 0.0
        %1089 = vmatpush1.msra.mxu0 0.0
        %1090 = vmatprep.subr.mxu0 0.0
        %1091 = vmatpush1.msra.mxu0 0.0
        %1092 = vmatprep.subr.mxu0 0.0
        %1093 = vmatpush1.msra.mxu0 0.0
        %1094 = vmatprep.subr.mxu0 0.0
        %1095 = vmatpush1.msra.mxu0 0.0
        %1096 = vmatprep.subr.mxu0 0.0
        %1097 = vmatpush1.msra.mxu0 0.0
        %1098 = vmatprep.subr.mxu0 0.0
        %1099 = vmatpush1.msra.mxu0 0.0
        %1100 = vmatprep.subr.mxu0 0.0
        %1101 = vmatpush1.msra.mxu0 0.0
        %1102 = vmatprep.subr.mxu0 0.0
        %1103 = vmatpush1.msra.mxu0 0.0
        %1104 = vmatprep.subr.mxu0 0.0
        %1105 = vmatpush1.msra.mxu0 0.0
        %1106 = vmatprep.subr.mxu0 0.0
        %1107 = vmatpush1.msra.mxu0 0.0
        %1108 = vmatprep.subr.mxu0 0.0
        %1109 = vmatpush1.msra.mxu0 0.0
        %1110 = vmatprep.mubr.f32.mxu0 0.0
        %1111 = vmatmul.mubr.f32.gmra.mrb[0].mxu0 %v974
        %v1112 = vpop.f32.mrb[0].mxu0
        %v1113 = vadd.f32 %v959, %v1112
        %v1114 = vpop.f32.mrb[0].mxu0
        %1115 = vdwg.mxu0
        %1116 = vmatprep.subr.mxu0 0.0
        %1117 = vmatpush1.msra.mxu0 %v921
        %1118 = vmatprep.subr.mxu0 0.0
        %1119 = vmatpush1.msra.mxu0 %v922
        %1120 = vmatprep.subr.mxu0 0.0
        %1121 = vmatpush1.msra.mxu0 0.0
        %1122 = vmatprep.subr.mxu0 0.0
        %1123 = vmatpush1.msra.mxu0 0.0
        %1124 = vmatprep.subr.mxu0 0.0
        %1125 = vmatpush1.msra.mxu0 0.0
        %1126 = vmatprep.subr.mxu0 0.0
        %1127 = vmatpush1.msra.mxu0 0.0
        %1128 = vmatprep.subr.mxu0 0.0
        %1129 = vmatpush1.msra.mxu0 0.0
        %1130 = vmatprep.subr.mxu0 0.0
        %1131 = vmatpush1.msra.mxu0 0.0
        %1132 = vmatprep.subr.mxu0 0.0
        %1133 = vmatpush1.msra.mxu0 0.0
        %1134 = vmatprep.subr.mxu0 0.0
        %1135 = vmatpush1.msra.mxu0 0.0
        %1136 = vmatprep.subr.mxu0 0.0
        %1137 = vmatpush1.msra.mxu0 0.0
        %1138 = vmatprep.subr.mxu0 0.0
        %1139 = vmatpush1.msra.mxu0 0.0
        %1140 = vmatprep.subr.mxu0 0.0
        %1141 = vmatpush1.msra.mxu0 0.0
        %1142 = vmatprep.subr.mxu0 0.0
        %1143 = vmatpush1.msra.mxu0 0.0
        %1144 = vmatprep.subr.mxu0 0.0
        %1145 = vmatpush1.msra.mxu0 0.0
        %1146 = vmatprep.subr.mxu0 0.0
        %1147 = vmatpush1.msra.mxu0 0.0
        %1148 = vmatprep.subr.mxu0 0.0
        %1149 = vmatpush1.msra.mxu0 0.0
        %1150 = vmatprep.subr.mxu0 0.0
        %1151 = vmatpush1.msra.mxu0 0.0
        %1152 = vmatprep.subr.mxu0 0.0
        %1153 = vmatpush1.msra.mxu0 0.0
        %1154 = vmatprep.subr.mxu0 0.0
        %1155 = vmatpush1.msra.mxu0 0.0
        %1156 = vmatprep.subr.mxu0 0.0
        %1157 = vmatpush1.msra.mxu0 0.0
        %1158 = vmatprep.subr.mxu0 0.0
        %1159 = vmatpush1.msra.mxu0 0.0
        %1160 = vmatprep.subr.mxu0 0.0
        %1161 = vmatpush1.msra.mxu0 0.0
        %1162 = vmatprep.subr.mxu0 0.0
        %1163 = vmatpush1.msra.mxu0 0.0
        %1164 = vmatprep.subr.mxu0 0.0
        %1165 = vmatpush1.msra.mxu0 0.0
        %1166 = vmatprep.subr.mxu0 0.0
        %1167 = vmatpush1.msra.mxu0 0.0
        %1168 = vmatprep.subr.mxu0 0.0
        %1169 = vmatpush1.msra.mxu0 0.0
        %1170 = vmatprep.subr.mxu0 0.0
        %1171 = vmatpush1.msra.mxu0 0.0
        %1172 = vmatprep.subr.mxu0 0.0
        %1173 = vmatpush1.msra.mxu0 0.0
        %1174 = vmatprep.subr.mxu0 0.0
        %1175 = vmatpush1.msra.mxu0 0.0
        %1176 = vmatprep.subr.mxu0 0.0
        %1177 = vmatpush1.msra.mxu0 0.0
        %1178 = vmatprep.subr.mxu0 0.0
        %1179 = vmatpush1.msra.mxu0 0.0
        %1180 = vmatprep.mubr.f32.mxu0 0.0
        %1181 = vmatmul.mubr.f32.gmra.mrb[0].mxu0 %v974
        %v1182 = vpop.f32.mrb[0].mxu0
        %v1183 = vadd.f32 %v963, %v1182
        %v1184 = vpop.f32.mrb[0].mxu0
        %1185 = vdwg.mxu0
        %1186 = vmatprep.subr.mxu0 0.0
        %1187 = vmatpush1.msra.mxu0 %v923
        %1188 = vmatprep.subr.mxu0 0.0
        %1189 = vmatpush1.msra.mxu0 %v924
        %1190 = vmatprep.subr.mxu0 0.0
        %1191 = vmatpush1.msra.mxu0 0.0
        %1192 = vmatprep.subr.mxu0 0.0
        %1193 = vmatpush1.msra.mxu0 0.0
        %1194 = vmatprep.subr.mxu0 0.0
        %1195 = vmatpush1.msra.mxu0 0.0
        %1196 = vmatprep.subr.mxu0 0.0
        %1197 = vmatpush1.msra.mxu0 0.0
        %1198 = vmatprep.subr.mxu0 0.0
        %1199 = vmatpush1.msra.mxu0 0.0
        %1200 = vmatprep.subr.mxu0 0.0
        %1201 = vmatpush1.msra.mxu0 0.0
        %1202 = vmatprep.subr.mxu0 0.0
        %1203 = vmatpush1.msra.mxu0 0.0
        %1204 = vmatprep.subr.mxu0 0.0
        %1205 = vmatpush1.msra.mxu0 0.0
        %1206 = vmatprep.subr.mxu0 0.0
        %1207 = vmatpush1.msra.mxu0 0.0
        %1208 = vmatprep.subr.mxu0 0.0
        %1209 = vmatpush1.msra.mxu0 0.0
        %1210 = vmatprep.subr.mxu0 0.0
        %1211 = vmatpush1.msra.mxu0 0.0
        %1212 = vmatprep.subr.mxu0 0.0
        %1213 = vmatpush1.msra.mxu0 0.0
        %1214 = vmatprep.subr.mxu0 0.0
        %1215 = vmatpush1.msra.mxu0 0.0
        %1216 = vmatprep.subr.mxu0 0.0
        %1217 = vmatpush1.msra.mxu0 0.0
        %1218 = vmatprep.subr.mxu0 0.0
        %1219 = vmatpush1.msra.mxu0 0.0
        %1220 = vmatprep.subr.mxu0 0.0
        %1221 = vmatpush1.msra.mxu0 0.0
        %1222 = vmatprep.subr.mxu0 0.0
        %1223 = vmatpush1.msra.mxu0 0.0
        %1224 = vmatprep.subr.mxu0 0.0
        %1225 = vmatpush1.msra.mxu0 0.0
        %1226 = vmatprep.subr.mxu0 0.0
        %1227 = vmatpush1.msra.mxu0 0.0
        %1228 = vmatprep.subr.mxu0 0.0
        %1229 = vmatpush1.msra.mxu0 0.0
        %1230 = vmatprep.subr.mxu0 0.0
        %1231 = vmatpush1.msra.mxu0 0.0
        %1232 = vmatprep.subr.mxu0 0.0
        %1233 = vmatpush1.msra.mxu0 0.0
        %1234 = vmatprep.subr.mxu0 0.0
        %1235 = vmatpush1.msra.mxu0 0.0
        %1236 = vmatprep.subr.mxu0 0.0
        %1237 = vmatpush1.msra.mxu0 0.0
        %1238 = vmatprep.subr.mxu0 0.0
        %1239 = vmatpush1.msra.mxu0 0.0
        %1240 = vmatprep.subr.mxu0 0.0
        %1241 = vmatpush1.msra.mxu0 0.0
        %1242 = vmatprep.subr.mxu0 0.0
        %1243 = vmatpush1.msra.mxu0 0.0
        %1244 = vmatprep.subr.mxu0 0.0
        %1245 = vmatpush1.msra.mxu0 0.0
        %1246 = vmatprep.subr.mxu0 0.0
        %1247 = vmatpush1.msra.mxu0 0.0
        %1248 = vmatprep.subr.mxu0 0.0
        %1249 = vmatpush1.msra.mxu0 0.0
        %1250 = vmatprep.mubr.f32.mxu0 0.0
        %1251 = vmatmul.mubr.f32.gmra.mrb[0].mxu0 %v974
        %v1252 = vpop.f32.mrb[0].mxu0
        %v1253 = vadd.f32 %v967, %v1252
        %v1254 = vpop.f32.mrb[0].mxu0
        %1255 = vdwg.mxu0
        %v1260 = vlaneseq
        %v1261 = vshrl.u32 %v1260, 7
        %v1262 = vsub.s32 0, %v1261
        %v1263 = vrot.slane %v937, %v1262
        %v1264 = vlaneseq
        %v1265 = vshrl.u32 %v1264, 7
        %v1266 = vsub.s32 0, %v1265
        %v1267 = vrot.slane %v938, %v1266
        %v1268 = vlaneseq
        %v1269 = vshrl.u32 %v1268, 7
        %v1270 = vsub.s32 0, %v1269
        %v1271 = vrot.slane %v939, %v1270
        %v1272 = vlaneseq
        %v1273 = vshrl.u32 %v1272, 7
        %v1274 = vsub.s32 0, %v1273
        %v1275 = vrot.slane %v940, %v1274
        %1280 = vmatprep.subr.mxu0 0.0
        %1281 = vmatpush1.msra.mxu0 %v929
        %1282 = vmatprep.subr.mxu0 0.0
        %1283 = vmatpush1.msra.mxu0 %v930
        %1284 = vmatprep.subr.mxu0 0.0
        %1285 = vmatpush1.msra.mxu0 0.0
        %1286 = vmatprep.subr.mxu0 0.0
        %1287 = vmatpush1.msra.mxu0 0.0
        %1288 = vmatprep.subr.mxu0 0.0
        %1289 = vmatpush1.msra.mxu0 0.0
        %1290 = vmatprep.subr.mxu0 0.0
        %1291 = vmatpush1.msra.mxu0 0.0
        %1292 = vmatprep.subr.mxu0 0.0
        %1293 = vmatpush1.msra.mxu0 0.0
        %1294 = vmatprep.subr.mxu0 0.0
        %1295 = vmatpush1.msra.mxu0 0.0
        %1296 = vmatprep.subr.mxu0 0.0
        %1297 = vmatpush1.msra.mxu0 0.0
        %1298 = vmatprep.subr.mxu0 0.0
        %1299 = vmatpush1.msra.mxu0 0.0
        %1300 = vmatprep.subr.mxu0 0.0
        %1301 = vmatpush1.msra.mxu0 0.0
        %1302 = vmatprep.subr.mxu0 0.0
        %1303 = vmatpush1.msra.mxu0 0.0
        %1304 = vmatprep.subr.mxu0 0.0
        %1305 = vmatpush1.msra.mxu0 0.0
        %1306 = vmatprep.subr.mxu0 0.0
        %1307 = vmatpush1.msra.mxu0 0.0
        %1308 = vmatprep.subr.mxu0 0.0
        %1309 = vmatpush1.msra.mxu0 0.0
        %1310 = vmatprep.subr.mxu0 0.0
        %1311 = vmatpush1.msra.mxu0 0.0
        %1312 = vmatprep.subr.mxu0 0.0
        %1313 = vmatpush1.msra.mxu0 0.0
        %1314 = vmatprep.subr.mxu0 0.0
        %1315 = vmatpush1.msra.mxu0 0.0
        %1316 = vmatprep.subr.mxu0 0.0
        %1317 = vmatpush1.msra.mxu0 0.0
        %1318 = vmatprep.subr.mxu0 0.0
        %1319 = vmatpush1.msra.mxu0 0.0
        %1320 = vmatprep.subr.mxu0 0.0
        %1321 = vmatpush1.msra.mxu0 0.0
        %1322 = vmatprep.subr.mxu0 0.0
        %1323 = vmatpush1.msra.mxu0 0.0
        %1324 = vmatprep.subr.mxu0 0.0
        %1325 = vmatpush1.msra.mxu0 0.0
        %1326 = vmatprep.subr.mxu0 0.0
        %1327 = vmatpush1.msra.mxu0 0.0
        %1328 = vmatprep.subr.mxu0 0.0
        %1329 = vmatpush1.msra.mxu0 0.0
        %1330 = vmatprep.subr.mxu0 0.0
        %1331 = vmatpush1.msra.mxu0 0.0
        %1332 = vmatprep.subr.mxu0 0.0
        %1333 = vmatpush1.msra.mxu0 0.0
        %1334 = vmatprep.subr.mxu0 0.0
        %1335 = vmatpush1.msra.mxu0 0.0
        %1336 = vmatprep.subr.mxu0 0.0
        %1337 = vmatpush1.msra.mxu0 0.0
        %1338 = vmatprep.subr.mxu0 0.0
        %1339 = vmatpush1.msra.mxu0 0.0
        %1340 = vmatprep.subr.mxu0 0.0
        %1341 = vmatpush1.msra.mxu0 0.0
        %1342 = vmatprep.subr.mxu0 0.0
        %1343 = vmatpush1.msra.mxu0 0.0
        %1344 = vmatprep.mubr.f32.mxu0 0.0
        %1345 = vmatmul.mubr.f32.gmra.mrb[0].mxu0 %v974
        %v1346 = vpop.f32.mrb[0].mxu0
        %v1347 = vadd.f32 %v1263, %v1346
        %v1348 = vpop.f32.mrb[0].mxu0
        %1349 = vdwg.mxu0
        %1350 = vmatprep.subr.mxu0 0.0
        %1351 = vmatpush1.msra.mxu0 %v931
        %1352 = vmatprep.subr.mxu0 0.0
        %1353 = vmatpush1.msra.mxu0 %v932
        %1354 = vmatprep.subr.mxu0 0.0
        %1355 = vmatpush1.msra.mxu0 0.0
        %1356 = vmatprep.subr.mxu0 0.0
        %1357 = vmatpush1.msra.mxu0 0.0
        %1358 = vmatprep.subr.mxu0 0.0
        %1359 = vmatpush1.msra.mxu0 0.0
        %1360 = vmatprep.subr.mxu0 0.0
        %1361 = vmatpush1.msra.mxu0 0.0
        %1362 = vmatprep.subr.mxu0 0.0
        %1363 = vmatpush1.msra.mxu0 0.0
        %1364 = vmatprep.subr.mxu0 0.0
        %1365 = vmatpush1.msra.mxu0 0.0
        %1366 = vmatprep.subr.mxu0 0.0
        %1367 = vmatpush1.msra.mxu0 0.0
        %1368 = vmatprep.subr.mxu0 0.0
        %1369 = vmatpush1.msra.mxu0 0.0
        %1370 = vmatprep.subr.mxu0 0.0
        %1371 = vmatpush1.msra.mxu0 0.0
        %1372 = vmatprep.subr.mxu0 0.0
        %1373 = vmatpush1.msra.mxu0 0.0
        %1374 = vmatprep.subr.mxu0 0.0
        %1375 = vmatpush1.msra.mxu0 0.0
        %1376 = vmatprep.subr.mxu0 0.0
        %1377 = vmatpush1.msra.mxu0 0.0
        %1378 = vmatprep.subr.mxu0 0.0
        %1379 = vmatpush1.msra.mxu0 0.0
        %1380 = vmatprep.subr.mxu0 0.0
        %1381 = vmatpush1.msra.mxu0 0.0
        %1382 = vmatprep.subr.mxu0 0.0
        %1383 = vmatpush1.msra.mxu0 0.0
        %1384 = vmatprep.subr.mxu0 0.0
        %1385 = vmatpush1.msra.mxu0 0.0
        %1386 = vmatprep.subr.mxu0 0.0
        %1387 = vmatpush1.msra.mxu0 0.0
        %1388 = vmatprep.subr.mxu0 0.0
        %1389 = vmatpush1.msra.mxu0 0.0
        %1390 = vmatprep.subr.mxu0 0.0
        %1391 = vmatpush1.msra.mxu0 0.0
        %1392 = vmatprep.subr.mxu0 0.0
        %1393 = vmatpush1.msra.mxu0 0.0
        %1394 = vmatprep.subr.mxu0 0.0
        %1395 = vmatpush1.msra.mxu0 0.0
        %1396 = vmatprep.subr.mxu0 0.0
        %1397 = vmatpush1.msra.mxu0 0.0
        %1398 = vmatprep.subr.mxu0 0.0
        %1399 = vmatpush1.msra.mxu0 0.0
        %1400 = vmatprep.subr.mxu0 0.0
        %1401 = vmatpush1.msra.mxu0 0.0
        %1402 = vmatprep.subr.mxu0 0.0
        %1403 = vmatpush1.msra.mxu0 0.0
        %1404 = vmatprep.subr.mxu0 0.0
        %1405 = vmatpush1.msra.mxu0 0.0
        %1406 = vmatprep.subr.mxu0 0.0
        %1407 = vmatpush1.msra.mxu0 0.0
        %1408 = vmatprep.subr.mxu0 0.0
        %1409 = vmatpush1.msra.mxu0 0.0
        %1410 = vmatprep.subr.mxu0 0.0
        %1411 = vmatpush1.msra.mxu0 0.0
        %1412 = vmatprep.subr.mxu0 0.0
        %1413 = vmatpush1.msra.mxu0 0.0
        %1414 = vmatprep.mubr.f32.mxu0 0.0
        %1415 = vmatmul.mubr.f32.gmra.mrb[0].mxu0 %v974
        %v1416 = vpop.f32.mrb[0].mxu0
        %v1417 = vadd.f32 %v1267, %v1416
        %v1418 = vpop.f32.mrb[0].mxu0
        %1419 = vdwg.mxu0
        %1420 = vmatprep.subr.mxu0 0.0
        %1421 = vmatpush1.msra.mxu0 %v933
        %1422 = vmatprep.subr.mxu0 0.0
        %1423 = vmatpush1.msra.mxu0 %v934
        %1424 = vmatprep.subr.mxu0 0.0
        %1425 = vmatpush1.msra.mxu0 0.0
        %1426 = vmatprep.subr.mxu0 0.0
        %1427 = vmatpush1.msra.mxu0 0.0
        %1428 = vmatprep.subr.mxu0 0.0
        %1429 = vmatpush1.msra.mxu0 0.0
        %1430 = vmatprep.subr.mxu0 0.0
        %1431 = vmatpush1.msra.mxu0 0.0
        %1432 = vmatprep.subr.mxu0 0.0
        %1433 = vmatpush1.msra.mxu0 0.0
        %1434 = vmatprep.subr.mxu0 0.0
        %1435 = vmatpush1.msra.mxu0 0.0
        %1436 = vmatprep.subr.mxu0 0.0
        %1437 = vmatpush1.msra.mxu0 0.0
        %1438 = vmatprep.subr.mxu0 0.0
        %1439 = vmatpush1.msra.mxu0 0.0
        %1440 = vmatprep.subr.mxu0 0.0
        %1441 = vmatpush1.msra.mxu0 0.0
        %1442 = vmatprep.subr.mxu0 0.0
        %1443 = vmatpush1.msra.mxu0 0.0
        %1444 = vmatprep.subr.mxu0 0.0
        %1445 = vmatpush1.msra.mxu0 0.0
        %1446 = vmatprep.subr.mxu0 0.0
        %1447 = vmatpush1.msra.mxu0 0.0
        %1448 = vmatprep.subr.mxu0 0.0
        %1449 = vmatpush1.msra.mxu0 0.0
        %1450 = vmatprep.subr.mxu0 0.0
        %1451 = vmatpush1.msra.mxu0 0.0
        %1452 = vmatprep.subr.mxu0 0.0
        %1453 = vmatpush1.msra.mxu0 0.0
        %1454 = vmatprep.subr.mxu0 0.0
        %1455 = vmatpush1.msra.mxu0 0.0
        %1456 = vmatprep.subr.mxu0 0.0
        %1457 = vmatpush1.msra.mxu0 0.0
        %1458 = vmatprep.subr.mxu0 0.0
        %1459 = vmatpush1.msra.mxu0 0.0
        %1460 = vmatprep.subr.mxu0 0.0
        %1461 = vmatpush1.msra.mxu0 0.0
        %1462 = vmatprep.subr.mxu0 0.0
        %1463 = vmatpush1.msra.mxu0 0.0
        %1464 = vmatprep.subr.mxu0 0.0
        %1465 = vmatpush1.msra.mxu0 0.0
        %1466 = vmatprep.subr.mxu0 0.0
        %1467 = vmatpush1.msra.mxu0 0.0
        %1468 = vmatprep.subr.mxu0 0.0
        %1469 = vmatpush1.msra.mxu0 0.0
        %1470 = vmatprep.subr.mxu0 0.0
        %1471 = vmatpush1.msra.mxu0 0.0
        %1472 = vmatprep.subr.mxu0 0.0
        %1473 = vmatpush1.msra.mxu0 0.0
        %1474 = vmatprep.subr.mxu0 0.0
        %1475 = vmatpush1.msra.mxu0 0.0
        %1476 = vmatprep.subr.mxu0 0.0
        %1477 = vmatpush1.msra.mxu0 0.0
        %1478 = vmatprep.subr.mxu0 0.0
        %1479 = vmatpush1.msra.mxu0 0.0
        %1480 = vmatprep.subr.mxu0 0.0
        %1481 = vmatpush1.msra.mxu0 0.0
        %1482 = vmatprep.subr.mxu0 0.0
        %1483 = vmatpush1.msra.mxu0 0.0
        %1484 = vmatprep.mubr.f32.mxu0 0.0
        %1485 = vmatmul.mubr.f32.gmra.mrb[0].mxu0 %v974
        %v1486 = vpop.f32.mrb[0].mxu0
        %v1487 = vadd.f32 %v1271, %v1486
        %v1488 = vpop.f32.mrb[0].mxu0
        %1489 = vdwg.mxu0
        %1490 = vmatprep.subr.mxu0 0.0
        %1491 = vmatpush1.msra.mxu0 %v935
        %1492 = vmatprep.subr.mxu0 0.0
        %1493 = vmatpush1.msra.mxu0 %v936
        %1494 = vmatprep.subr.mxu0 0.0
        %1495 = vmatpush1.msra.mxu0 0.0
        %1496 = vmatprep.subr.mxu0 0.0
        %1497 = vmatpush1.msra.mxu0 0.0
        %1498 = vmatprep.subr.mxu0 0.0
        %1499 = vmatpush1.msra.mxu0 0.0
        %1500 = vmatprep.subr.mxu0 0.0
        %1501 = vmatpush1.msra.mxu0 0.0
        %1502 = vmatprep.subr.mxu0 0.0
        %1503 = vmatpush1.msra.mxu0 0.0
        %1504 = vmatprep.subr.mxu0 0.0
        %1505 = vmatpush1.msra.mxu0 0.0
        %1506 = vmatprep.subr.mxu0 0.0
        %1507 = vmatpush1.msra.mxu0 0.0
        %1508 = vmatprep.subr.mxu0 0.0
        %1509 = vmatpush1.msra.mxu0 0.0
        %1510 = vmatprep.subr.mxu0 0.0
        %1511 = vmatpush1.msra.mxu0 0.0
        %1512 = vmatprep.subr.mxu0 0.0
        %1513 = vmatpush1.msra.mxu0 0.0
        %1514 = vmatprep.subr.mxu0 0.0
        %1515 = vmatpush1.msra.mxu0 0.0
        %1516 = vmatprep.subr.mxu0 0.0
        %1517 = vmatpush1.msra.mxu0 0.0
        %1518 = vmatprep.subr.mxu0 0.0
        %1519 = vmatpush1.msra.mxu0 0.0
        %1520 = vmatprep.subr.mxu0 0.0
        %1521 = vmatpush1.msra.mxu0 0.0
        %1522 = vmatprep.subr.mxu0 0.0
        %1523 = vmatpush1.msra.mxu0 0.0
        %1524 = vmatprep.subr.mxu0 0.0
        %1525 = vmatpush1.msra.mxu0 0.0
        %1526 = vmatprep.subr.mxu0 0.0
        %1527 = vmatpush1.msra.mxu0 0.0
        %1528 = vmatprep.subr.mxu0 0.0
        %1529 = vmatpush1.msra.mxu0 0.0
        %1530 = vmatprep.subr.mxu0 0.0
        %1531 = vmatpush1.msra.mxu0 0.0
        %1532 = vmatprep.subr.mxu0 0.0
        %1533 = vmatpush1.msra.mxu0 0.0
        %1534 = vmatprep.subr.mxu0 0.0
        %1535 = vmatpush1.msra.mxu0 0.0
        %1536 = vmatprep.subr.mxu0 0.0
        %1537 = vmatpush1.msra.mxu0 0.0
        %1538 = vmatprep.subr.mxu0 0.0
        %1539 = vmatpush1.msra.mxu0 0.0
        %1540 = vmatprep.subr.mxu0 0.0
        %1541 = vmatpush1.msra.mxu0 0.0
        %1542 = vmatprep.subr.mxu0 0.0
        %1543 = vmatpush1.msra.mxu0 0.0
        %1544 = vmatprep.subr.mxu0 0.0
        %1545 = vmatpush1.msra.mxu0 0.0
        %1546 = vmatprep.subr.mxu0 0.0
        %1547 = vmatpush1.msra.mxu0 0.0
        %1548 = vmatprep.subr.mxu0 0.0
        %1549 = vmatpush1.msra.mxu0 0.0
        %1550 = vmatprep.subr.mxu0 0.0
        %1551 = vmatpush1.msra.mxu0 0.0
        %1552 = vmatprep.subr.mxu0 0.0
        %1553 = vmatpush1.msra.mxu0 0.0
        %1554 = vmatprep.mubr.f32.mxu0 0.0
        %1555 = vmatmul.mubr.f32.gmra.mrb[0].mxu0 %v974
        %v1556 = vpop.f32.mrb[0].mxu0
        %v1557 = vadd.f32 %v1275, %v1556
        %v1558 = vpop.f32.mrb[0].mxu0
        %1559 = vdwg.mxu0
        %vm1560 = vcmask 31744
        %v1562 = vsel %vm1560, %v913, 0
        %v1565 = vsel %vm1560, %v1043, 0
        %1567 = vmatprep.subr.mxu0 0.0
        %1568 = vmatpush1.xpose.msra.mxu0 %v1565
        %1569 = vmatprep.subr.mxu0 0.0
        %1570 = vmatpush1.xpose.msra.mxu0 0.0
        %1571 = vmatprep.subr.mxu0 0.0
        %1572 = vmatpush1.xpose.msra.mxu0 0.0
        %1573 = vmatprep.subr.mxu0 0.0
        %1574 = vmatpush1.xpose.msra.mxu0 0.0
        %1575 = vmatprep.subr.mxu0 0.0
        %1576 = vmatpush1.xpose.msra.mxu0 0.0
        %1577 = vmatprep.subr.mxu0 0.0
        %1578 = vmatpush1.xpose.msra.mxu0 0.0
        %1579 = vmatprep.subr.mxu0 0.0
        %1580 = vmatpush1.xpose.msra.mxu0 0.0
        %1581 = vmatprep.subr.mxu0 0.0
        %1582 = vmatpush1.xpose.msra.mxu0 0.0
        %1583 = vmatprep.subr.mxu0 0.0
        %1584 = vmatpush1.xpose.msra.mxu0 0.0
        %1585 = vmatprep.subr.mxu0 0.0
        %1586 = vmatpush1.xpose.msra.mxu0 0.0
        %1587 = vmatprep.subr.mxu0 0.0
        %1588 = vmatpush1.xpose.msra.mxu0 0.0
        %1589 = vmatprep.subr.mxu0 0.0
        %1590 = vmatpush1.xpose.msra.mxu0 0.0
        %1591 = vmatprep.subr.mxu0 0.0
        %1592 = vmatpush1.xpose.msra.mxu0 0.0
        %1593 = vmatprep.subr.mxu0 0.0
        %1594 = vmatpush1.xpose.msra.mxu0 0.0
        %1595 = vmatprep.subr.mxu0 0.0
        %1596 = vmatpush1.xpose.msra.mxu0 0.0
        %1597 = vmatprep.subr.mxu0 0.0
        %1598 = vmatpush1.xpose.msra.mxu0 0.0
        %1599 = vmatprep.subr.mxu0 0.0
        %1600 = vmatpush1.xpose.msra.mxu0 0.0
        %1601 = vmatprep.subr.mxu0 0.0
        %1602 = vmatpush1.xpose.msra.mxu0 0.0
        %1603 = vmatprep.subr.mxu0 0.0
        %1604 = vmatpush1.xpose.msra.mxu0 0.0
        %1605 = vmatprep.subr.mxu0 0.0
        %1606 = vmatpush1.xpose.msra.mxu0 0.0
        %1607 = vmatprep.subr.mxu0 0.0
        %1608 = vmatpush1.xpose.msra.mxu0 0.0
        %1609 = vmatprep.subr.mxu0 0.0
        %1610 = vmatpush1.xpose.msra.mxu0 0.0
        %1611 = vmatprep.subr.mxu0 0.0
        %1612 = vmatpush1.xpose.msra.mxu0 0.0
        %1613 = vmatprep.subr.mxu0 0.0
        %1614 = vmatpush1.xpose.msra.mxu0 0.0
        %1615 = vmatprep.subr.mxu0 0.0
        %1616 = vmatpush1.xpose.msra.mxu0 0.0
        %1617 = vmatprep.subr.mxu0 0.0
        %1618 = vmatpush1.xpose.msra.mxu0 0.0
        %1619 = vmatprep.subr.mxu0 0.0
        %1620 = vmatpush1.xpose.msra.mxu0 0.0
        %1621 = vmatprep.subr.mxu0 0.0
        %1622 = vmatpush1.xpose.msra.mxu0 0.0
        %1623 = vmatprep.subr.mxu0 0.0
        %1624 = vmatpush1.xpose.msra.mxu0 0.0
        %1625 = vmatprep.subr.mxu0 0.0
        %1626 = vmatpush1.xpose.msra.mxu0 0.0
        %1627 = vmatprep.subr.mxu0 0.0
        %1628 = vmatpush1.xpose.msra.mxu0 0.0
        %1629 = vmatprep.subr.mxu0 0.0
        %1630 = vmatpush1.xpose.msra.mxu0 0.0
        %1631 = vmatprep.mubr.f32.mxu0 0.0
        %1632 = vmatmul.mubr.f32.gmra.mrb[0].mxu0 %v1562
        %v1633 = vpop.f32.mrb[0].mxu0
        %v1634 = vadd.f32 0.0, %v1633
        %v1635 = vpop.f32.mrb[0].mxu0
        %1636 = vdwg.mxu0
        %v1638 = vsel %vm1560, %v914, 0
        %v1641 = vsel %vm1560, %v1113, 0
        %1643 = vmatprep.subr.mxu0 0.0
        %1644 = vmatpush1.xpose.msra.mxu0 %v1641
        %1645 = vmatprep.subr.mxu0 0.0
        %1646 = vmatpush1.xpose.msra.mxu0 0.0
        %1647 = vmatprep.subr.mxu0 0.0
        %1648 = vmatpush1.xpose.msra.mxu0 0.0
        %1649 = vmatprep.subr.mxu0 0.0
        %1650 = vmatpush1.xpose.msra.mxu0 0.0
        %1651 = vmatprep.subr.mxu0 0.0
        %1652 = vmatpush1.xpose.msra.mxu0 0.0
        %1653 = vmatprep.subr.mxu0 0.0
        %1654 = vmatpush1.xpose.msra.mxu0 0.0
        %1655 = vmatprep.subr.mxu0 0.0
        %1656 = vmatpush1.xpose.msra.mxu0 0.0
        %1657 = vmatprep.subr.mxu0 0.0
        %1658 = vmatpush1.xpose.msra.mxu0 0.0
        %1659 = vmatprep.subr.mxu0 0.0
        %1660 = vmatpush1.xpose.msra.mxu0 0.0
        %1661 = vmatprep.subr.mxu0 0.0
        %1662 = vmatpush1.xpose.msra.mxu0 0.0
        %1663 = vmatprep.subr.mxu0 0.0
        %1664 = vmatpush1.xpose.msra.mxu0 0.0
        %1665 = vmatprep.subr.mxu0 0.0
        %1666 = vmatpush1.xpose.msra.mxu0 0.0
        %1667 = vmatprep.subr.mxu0 0.0
        %1668 = vmatpush1.xpose.msra.mxu0 0.0
        %1669 = vmatprep.subr.mxu0 0.0
        %1670 = vmatpush1.xpose.msra.mxu0 0.0
        %1671 = vmatprep.subr.mxu0 0.0
        %1672 = vmatpush1.xpose.msra.mxu0 0.0
        %1673 = vmatprep.subr.mxu0 0.0
        %1674 = vmatpush1.xpose.msra.mxu0 0.0
        %1675 = vmatprep.subr.mxu0 0.0
        %1676 = vmatpush1.xpose.msra.mxu0 0.0
        %1677 = vmatprep.subr.mxu0 0.0
        %1678 = vmatpush1.xpose.msra.mxu0 0.0
        %1679 = vmatprep.subr.mxu0 0.0
        %1680 = vmatpush1.xpose.msra.mxu0 0.0
        %1681 = vmatprep.subr.mxu0 0.0
        %1682 = vmatpush1.xpose.msra.mxu0 0.0
        %1683 = vmatprep.subr.mxu0 0.0
        %1684 = vmatpush1.xpose.msra.mxu0 0.0
        %1685 = vmatprep.subr.mxu0 0.0
        %1686 = vmatpush1.xpose.msra.mxu0 0.0
        %1687 = vmatprep.subr.mxu0 0.0
        %1688 = vmatpush1.xpose.msra.mxu0 0.0
        %1689 = vmatprep.subr.mxu0 0.0
        %1690 = vmatpush1.xpose.msra.mxu0 0.0
        %1691 = vmatprep.subr.mxu0 0.0
        %1692 = vmatpush1.xpose.msra.mxu0 0.0
        %1693 = vmatprep.subr.mxu0 0.0
        %1694 = vmatpush1.xpose.msra.mxu0 0.0
        %1695 = vmatprep.subr.mxu0 0.0
        %1696 = vmatpush1.xpose.msra.mxu0 0.0
        %1697 = vmatprep.subr.mxu0 0.0
        %1698 = vmatpush1.xpose.msra.mxu0 0.0
        %1699 = vmatprep.subr.mxu0 0.0
        %1700 = vmatpush1.xpose.msra.mxu0 0.0
        %1701 = vmatprep.subr.mxu0 0.0
        %1702 = vmatpush1.xpose.msra.mxu0 0.0
        %1703 = vmatprep.subr.mxu0 0.0
        %1704 = vmatpush1.xpose.msra.mxu0 0.0
        %1705 = vmatprep.subr.mxu0 0.0
        %1706 = vmatpush1.xpose.msra.mxu0 0.0
        %1707 = vmatprep.mubr.f32.mxu0 0.0
        %1708 = vmatmul.mubr.f32.gmra.mrb[0].mxu0 %v1638
        %v1709 = vpop.f32.mrb[0].mxu0
        %v1710 = vadd.f32 0.0, %v1709
        %v1711 = vpop.f32.mrb[0].mxu0
        %1712 = vdwg.mxu0
        %v1714 = vsel %vm1560, %v915, 0
        %v1717 = vsel %vm1560, %v1183, 0
        %1719 = vmatprep.subr.mxu0 0.0
        %1720 = vmatpush1.xpose.msra.mxu0 %v1717
        %1721 = vmatprep.subr.mxu0 0.0
        %1722 = vmatpush1.xpose.msra.mxu0 0.0
        %1723 = vmatprep.subr.mxu0 0.0
        %1724 = vmatpush1.xpose.msra.mxu0 0.0
        %1725 = vmatprep.subr.mxu0 0.0
        %1726 = vmatpush1.xpose.msra.mxu0 0.0
        %1727 = vmatprep.subr.mxu0 0.0
        %1728 = vmatpush1.xpose.msra.mxu0 0.0
        %1729 = vmatprep.subr.mxu0 0.0
        %1730 = vmatpush1.xpose.msra.mxu0 0.0
        %1731 = vmatprep.subr.mxu0 0.0
        %1732 = vmatpush1.xpose.msra.mxu0 0.0
        %1733 = vmatprep.subr.mxu0 0.0
        %1734 = vmatpush1.xpose.msra.mxu0 0.0
        %1735 = vmatprep.subr.mxu0 0.0
        %1736 = vmatpush1.xpose.msra.mxu0 0.0
        %1737 = vmatprep.subr.mxu0 0.0
        %1738 = vmatpush1.xpose.msra.mxu0 0.0
        %1739 = vmatprep.subr.mxu0 0.0
        %1740 = vmatpush1.xpose.msra.mxu0 0.0
        %1741 = vmatprep.subr.mxu0 0.0
        %1742 = vmatpush1.xpose.msra.mxu0 0.0
        %1743 = vmatprep.subr.mxu0 0.0
        %1744 = vmatpush1.xpose.msra.mxu0 0.0
        %1745 = vmatprep.subr.mxu0 0.0
        %1746 = vmatpush1.xpose.msra.mxu0 0.0
        %1747 = vmatprep.subr.mxu0 0.0
        %1748 = vmatpush1.xpose.msra.mxu0 0.0
        %1749 = vmatprep.subr.mxu0 0.0
        %1750 = vmatpush1.xpose.msra.mxu0 0.0
        %1751 = vmatprep.subr.mxu0 0.0
        %1752 = vmatpush1.xpose.msra.mxu0 0.0
        %1753 = vmatprep.subr.mxu0 0.0
        %1754 = vmatpush1.xpose.msra.mxu0 0.0
        %1755 = vmatprep.subr.mxu0 0.0
        %1756 = vmatpush1.xpose.msra.mxu0 0.0
        %1757 = vmatprep.subr.mxu0 0.0
        %1758 = vmatpush1.xpose.msra.mxu0 0.0
        %1759 = vmatprep.subr.mxu0 0.0
        %1760 = vmatpush1.xpose.msra.mxu0 0.0
        %1761 = vmatprep.subr.mxu0 0.0
        %1762 = vmatpush1.xpose.msra.mxu0 0.0
        %1763 = vmatprep.subr.mxu0 0.0
        %1764 = vmatpush1.xpose.msra.mxu0 0.0
        %1765 = vmatprep.subr.mxu0 0.0
        %1766 = vmatpush1.xpose.msra.mxu0 0.0
        %1767 = vmatprep.subr.mxu0 0.0
        %1768 = vmatpush1.xpose.msra.mxu0 0.0
        %1769 = vmatprep.subr.mxu0 0.0
        %1770 = vmatpush1.xpose.msra.mxu0 0.0
        %1771 = vmatprep.subr.mxu0 0.0
        %1772 = vmatpush1.xpose.msra.mxu0 0.0
        %1773 = vmatprep.subr.mxu0 0.0
        %1774 = vmatpush1.xpose.msra.mxu0 0.0
        %1775 = vmatprep.subr.mxu0 0.0
        %1776 = vmatpush1.xpose.msra.mxu0 0.0
        %1777 = vmatprep.subr.mxu0 0.0
        %1778 = vmatpush1.xpose.msra.mxu0 0.0
        %1779 = vmatprep.subr.mxu0 0.0
        %1780 = vmatpush1.xpose.msra.mxu0 0.0
        %1781 = vmatprep.subr.mxu0 0.0
        %1782 = vmatpush1.xpose.msra.mxu0 0.0
        %1783 = vmatprep.mubr.f32.mxu0 0.0
        %1784 = vmatmul.mubr.f32.gmra.mrb[0].mxu0 %v1714
        %v1785 = vpop.f32.mrb[0].mxu0
        %v1786 = vadd.f32 0.0, %v1785
        %v1787 = vpop.f32.mrb[0].mxu0
        %1788 = vdwg.mxu0
        %v1790 = vsel %vm1560, %v916, 0
        %v1793 = vsel %vm1560, %v1253, 0
        %1795 = vmatprep.subr.mxu0 0.0
        %1796 = vmatpush1.xpose.msra.mxu0 %v1793
        %1797 = vmatprep.subr.mxu0 0.0
        %1798 = vmatpush1.xpose.msra.mxu0 0.0
        %1799 = vmatprep.subr.mxu0 0.0
        %1800 = vmatpush1.xpose.msra.mxu0 0.0
        %1801 = vmatprep.subr.mxu0 0.0
        %1802 = vmatpush1.xpose.msra.mxu0 0.0
        %1803 = vmatprep.subr.mxu0 0.0
        %1804 = vmatpush1.xpose.msra.mxu0 0.0
        %1805 = vmatprep.subr.mxu0 0.0
        %1806 = vmatpush1.xpose.msra.mxu0 0.0
        %1807 = vmatprep.subr.mxu0 0.0
        %1808 = vmatpush1.xpose.msra.mxu0 0.0
        %1809 = vmatprep.subr.mxu0 0.0
        %1810 = vmatpush1.xpose.msra.mxu0 0.0
        %1811 = vmatprep.subr.mxu0 0.0
        %1812 = vmatpush1.xpose.msra.mxu0 0.0
        %1813 = vmatprep.subr.mxu0 0.0
        %1814 = vmatpush1.xpose.msra.mxu0 0.0
        %1815 = vmatprep.subr.mxu0 0.0
        %1816 = vmatpush1.xpose.msra.mxu0 0.0
        %1817 = vmatprep.subr.mxu0 0.0
        %1818 = vmatpush1.xpose.msra.mxu0 0.0
        %1819 = vmatprep.subr.mxu0 0.0
        %1820 = vmatpush1.xpose.msra.mxu0 0.0
        %1821 = vmatprep.subr.mxu0 0.0
        %1822 = vmatpush1.xpose.msra.mxu0 0.0
        %1823 = vmatprep.subr.mxu0 0.0
        %1824 = vmatpush1.xpose.msra.mxu0 0.0
        %1825 = vmatprep.subr.mxu0 0.0
        %1826 = vmatpush1.xpose.msra.mxu0 0.0
        %1827 = vmatprep.subr.mxu0 0.0
        %1828 = vmatpush1.xpose.msra.mxu0 0.0
        %1829 = vmatprep.subr.mxu0 0.0
        %1830 = vmatpush1.xpose.msra.mxu0 0.0
        %1831 = vmatprep.subr.mxu0 0.0
        %1832 = vmatpush1.xpose.msra.mxu0 0.0
        %1833 = vmatprep.subr.mxu0 0.0
        %1834 = vmatpush1.xpose.msra.mxu0 0.0
        %1835 = vmatprep.subr.mxu0 0.0
        %1836 = vmatpush1.xpose.msra.mxu0 0.0
        %1837 = vmatprep.subr.mxu0 0.0
        %1838 = vmatpush1.xpose.msra.mxu0 0.0
        %1839 = vmatprep.subr.mxu0 0.0
        %1840 = vmatpush1.xpose.msra.mxu0 0.0
        %1841 = vmatprep.subr.mxu0 0.0
        %1842 = vmatpush1.xpose.msra.mxu0 0.0
        %1843 = vmatprep.subr.mxu0 0.0
        %1844 = vmatpush1.xpose.msra.mxu0 0.0
        %1845 = vmatprep.subr.mxu0 0.0
        %1846 = vmatpush1.xpose.msra.mxu0 0.0
        %1847 = vmatprep.subr.mxu0 0.0
        %1848 = vmatpush1.xpose.msra.mxu0 0.0
        %1849 = vmatprep.subr.mxu0 0.0
        %1850 = vmatpush1.xpose.msra.mxu0 0.0
        %1851 = vmatprep.subr.mxu0 0.0
        %1852 = vmatpush1.xpose.msra.mxu0 0.0
        %1853 = vmatprep.subr.mxu0 0.0
        %1854 = vmatpush1.xpose.msra.mxu0 0.0
        %1855 = vmatprep.subr.mxu0 0.0
        %1856 = vmatpush1.xpose.msra.mxu0 0.0
        %1857 = vmatprep.subr.mxu0 0.0
        %1858 = vmatpush1.xpose.msra.mxu0 0.0
        %1859 = vmatprep.mubr.f32.mxu0 0.0
        %1860 = vmatmul.mubr.f32.gmra.mrb[0].mxu0 %v1790
        %v1861 = vpop.f32.mrb[0].mxu0
        %v1862 = vadd.f32 0.0, %v1861
        %v1863 = vpop.f32.mrb[0].mxu0
        %1864 = vdwg.mxu0
        %v1865 = vmul.f32 %v1634, 0.25
        %v1866 = vmul.f32 %v1710, 0.25
        %v1867 = vmul.f32 %v1786, 0.25
        %v1868 = vmul.f32 %v1862, 0.25
        %v1870 = vlaneseq
        %v1871 = vshrl.u32 %v1870, 7
        %v1872 = vsub.s32 0, %v1871
        %v1873 = vrot.slane %v912, %v1872
        %v1875 = vadd.f32 %v1865, %v1873
        %v1876 = vadd.f32 %v1866, %v1873
        %v1877 = vadd.f32 %v1867, %v1873
        %v1878 = vadd.f32 %v1868, %v1873
        %vm1879 = vcmask 60416
        %v1880 = vsel %vm1879, %v1875, -inf
        %1881 = vmax.xlane.f32.xlu0 %v1880
        %v1882 = vpop.xlane.xlu0 %1881
        %v1883 = vsel %vm1879, %v1876, -inf
        %1884 = vmax.xlane.f32.xlu0 %v1883
        %v1885 = vpop.xlane.xlu0 %1884
        %v1886 = vsel %vm1879, %v1877, -inf
        %1887 = vmax.xlane.f32.xlu0 %v1886
        %v1888 = vpop.xlane.xlu0 %1887
        %v1889 = vsel %vm1879, %v1878, -inf
        %1890 = vmax.xlane.f32.xlu0 %v1889
        %v1891 = vpop.xlane.xlu0 %1890
        %v1892 = vsub.f32 %v1875, %v1882
        %v1893 = vsub.f32 %v1876, %v1885
        %v1894 = vsub.f32 %v1877, %v1888
        %v1895 = vsub.f32 %v1878, %v1891
        %v1896 = vmul.f32 %v1892, 1.442695
        %v1897 = vpow.pop %v1896
        %v1898 = vmul.f32 %v1893, 1.442695
        %v1899 = vpow.pop %v1898
        %v1900 = vmul.f32 %v1894, 1.442695
        %v1901 = vpow.pop %v1900
        %v1902 = vmul.f32 %v1895, 1.442695
        %v1903 = vpow.pop %v1902
        %v1904 = vsel %vm1879, %v1897, 0.0
        %1905 = vadd.xlane.f32.xlu0 %v1904
        %v1906 = vpop.xlane.xlu0 %1905
        %v1907 = vsel %vm1879, %v1899, 0.0
        %1908 = vadd.xlane.f32.xlu0 %v1907
        %v1909 = vpop.xlane.xlu0 %1908
        %v1910 = vsel %vm1879, %v1901, 0.0
        %1911 = vadd.xlane.f32.xlu0 %v1910
        %v1912 = vpop.xlane.xlu0 %1911
        %v1913 = vsel %vm1879, %v1903, 0.0
        %1914 = vadd.xlane.f32.xlu0 %v1913
        %v1915 = vpop.xlane.xlu0 %1914
        %v1916 = vrcp.pop %v1906
        %v1917 = vrcp.pop %v1909
        %v1918 = vrcp.pop %v1912
        %v1919 = vrcp.pop %v1915
        %v1920 = vmul.f32 %v1897, %v1916
        %v1921 = vmul.f32 %v1899, %v1917
        %v1922 = vmul.f32 %v1901, %v1918
        %v1923 = vmul.f32 %v1903, %v1919
        %vm1924 = vcmask 64512
        %v1926 = vsel %vm1924, %v1920, 0
        %1928 = vmatprep.subr.mxu0 0.0
        %1929 = vmatpush1.msra.mxu0 %v1347
        %1930 = vmatprep.subr.mxu0 0.0
        %1931 = vmatpush1.msra.mxu0 0.0
        %1932 = vmatprep.subr.mxu0 0.0
        %1933 = vmatpush1.msra.mxu0 0.0
        %1934 = vmatprep.subr.mxu0 0.0
        %1935 = vmatpush1.msra.mxu0 0.0
        %1936 = vmatprep.subr.mxu0 0.0
        %1937 = vmatpush1.msra.mxu0 0.0
        %1938 = vmatprep.subr.mxu0 0.0
        %1939 = vmatpush1.msra.mxu0 0.0
        %1940 = vmatprep.subr.mxu0 0.0
        %1941 = vmatpush1.msra.mxu0 0.0
        %1942 = vmatprep.subr.mxu0 0.0
        %1943 = vmatpush1.msra.mxu0 0.0
        %1944 = vmatprep.subr.mxu0 0.0
        %1945 = vmatpush1.msra.mxu0 0.0
        %1946 = vmatprep.subr.mxu0 0.0
        %1947 = vmatpush1.msra.mxu0 0.0
        %1948 = vmatprep.subr.mxu0 0.0
        %1949 = vmatpush1.msra.mxu0 0.0
        %1950 = vmatprep.subr.mxu0 0.0
        %1951 = vmatpush1.msra.mxu0 0.0
        %1952 = vmatprep.subr.mxu0 0.0
        %1953 = vmatpush1.msra.mxu0 0.0
        %1954 = vmatprep.subr.mxu0 0.0
        %1955 = vmatpush1.msra.mxu0 0.0
        %1956 = vmatprep.subr.mxu0 0.0
        %1957 = vmatpush1.msra.mxu0 0.0
        %1958 = vmatprep.subr.mxu0 0.0
        %1959 = vmatpush1.msra.mxu0 0.0
        %1960 = vmatprep.subr.mxu0 0.0
        %1961 = vmatpush1.msra.mxu0 0.0
        %1962 = vmatprep.subr.mxu0 0.0
        %1963 = vmatpush1.msra.mxu0 0.0
        %1964 = vmatprep.subr.mxu0 0.0
        %1965 = vmatpush1.msra.mxu0 0.0
        %1966 = vmatprep.subr.mxu0 0.0
        %1967 = vmatpush1.msra.mxu0 0.0
        %1968 = vmatprep.subr.mxu0 0.0
        %1969 = vmatpush1.msra.mxu0 0.0
        %1970 = vmatprep.subr.mxu0 0.0
        %1971 = vmatpush1.msra.mxu0 0.0
        %1972 = vmatprep.subr.mxu0 0.0
        %1973 = vmatpush1.msra.mxu0 0.0
        %1974 = vmatprep.subr.mxu0 0.0
        %1975 = vmatpush1.msra.mxu0 0.0
        %1976 = vmatprep.subr.mxu0 0.0
        %1977 = vmatpush1.msra.mxu0 0.0
        %1978 = vmatprep.subr.mxu0 0.0
        %1979 = vmatpush1.msra.mxu0 0.0
        %1980 = vmatprep.subr.mxu0 0.0
        %1981 = vmatpush1.msra.mxu0 0.0
        %1982 = vmatprep.subr.mxu0 0.0
        %1983 = vmatpush1.msra.mxu0 0.0
        %1984 = vmatprep.subr.mxu0 0.0
        %1985 = vmatpush1.msra.mxu0 0.0
        %1986 = vmatprep.subr.mxu0 0.0
        %1987 = vmatpush1.msra.mxu0 0.0
        %1988 = vmatprep.subr.mxu0 0.0
        %1989 = vmatpush1.msra.mxu0 0.0
        %1990 = vmatprep.subr.mxu0 0.0
        %1991 = vmatpush1.msra.mxu0 0.0
        %1992 = vmatprep.mubr.f32.mxu0 0.0
        %1993 = vmatmul.mubr.f32.gmra.mrb[0].mxu0 %v1926
        %v1994 = vpop.f32.mrb[0].mxu0
        %v1995 = vadd.f32 0.0, %v1994
        %v1996 = vpop.f32.mrb[0].mxu0
        %1997 = vdwg.mxu0
        %v1999 = vsel %vm1924, %v1921, 0
        %2001 = vmatprep.subr.mxu0 0.0
        %2002 = vmatpush1.msra.mxu0 %v1417
        %2003 = vmatprep.subr.mxu0 0.0
        %2004 = vmatpush1.msra.mxu0 0.0
        %2005 = vmatprep.subr.mxu0 0.0
        %2006 = vmatpush1.msra.mxu0 0.0
        %2007 = vmatprep.subr.mxu0 0.0
        %2008 = vmatpush1.msra.mxu0 0.0
        %2009 = vmatprep.subr.mxu0 0.0
        %2010 = vmatpush1.msra.mxu0 0.0
        %2011 = vmatprep.subr.mxu0 0.0
        %2012 = vmatpush1.msra.mxu0 0.0
        %2013 = vmatprep.subr.mxu0 0.0
        %2014 = vmatpush1.msra.mxu0 0.0
        %2015 = vmatprep.subr.mxu0 0.0
        %2016 = vmatpush1.msra.mxu0 0.0
        %2017 = vmatprep.subr.mxu0 0.0
        %2018 = vmatpush1.msra.mxu0 0.0
        %2019 = vmatprep.subr.mxu0 0.0
        %2020 = vmatpush1.msra.mxu0 0.0
        %2021 = vmatprep.subr.mxu0 0.0
        %2022 = vmatpush1.msra.mxu0 0.0
        %2023 = vmatprep.subr.mxu0 0.0
        %2024 = vmatpush1.msra.mxu0 0.0
        %2025 = vmatprep.subr.mxu0 0.0
        %2026 = vmatpush1.msra.mxu0 0.0
        %2027 = vmatprep.subr.mxu0 0.0
        %2028 = vmatpush1.msra.mxu0 0.0
        %2029 = vmatprep.subr.mxu0 0.0
        %2030 = vmatpush1.msra.mxu0 0.0
        %2031 = vmatprep.subr.mxu0 0.0
        %2032 = vmatpush1.msra.mxu0 0.0
        %2033 = vmatprep.subr.mxu0 0.0
        %2034 = vmatpush1.msra.mxu0 0.0
        %2035 = vmatprep.subr.mxu0 0.0
        %2036 = vmatpush1.msra.mxu0 0.0
        %2037 = vmatprep.subr.mxu0 0.0
        %2038 = vmatpush1.msra.mxu0 0.0
        %2039 = vmatprep.subr.mxu0 0.0
        %2040 = vmatpush1.msra.mxu0 0.0
        %2041 = vmatprep.subr.mxu0 0.0
        %2042 = vmatpush1.msra.mxu0 0.0
        %2043 = vmatprep.subr.mxu0 0.0
        %2044 = vmatpush1.msra.mxu0 0.0
        %2045 = vmatprep.subr.mxu0 0.0
        %2046 = vmatpush1.msra.mxu0 0.0
        %2047 = vmatprep.subr.mxu0 0.0
        %2048 = vmatpush1.msra.mxu0 0.0
        %2049 = vmatprep.subr.mxu0 0.0
        %2050 = vmatpush1.msra.mxu0 0.0
        %2051 = vmatprep.subr.mxu0 0.0
        %2052 = vmatpush1.msra.mxu0 0.0
        %2053 = vmatprep.subr.mxu0 0.0
        %2054 = vmatpush1.msra.mxu0 0.0
        %2055 = vmatprep.subr.mxu0 0.0
        %2056 = vmatpush1.msra.mxu0 0.0
        %2057 = vmatprep.subr.mxu0 0.0
        %2058 = vmatpush1.msra.mxu0 0.0
        %2059 = vmatprep.subr.mxu0 0.0
        %2060 = vmatpush1.msra.mxu0 0.0
        %2061 = vmatprep.subr.mxu0 0.0
        %2062 = vmatpush1.msra.mxu0 0.0
        %2063 = vmatprep.subr.mxu0 0.0
        %2064 = vmatpush1.msra.mxu0 0.0
        %2065 = vmatprep.mubr.f32.mxu0 0.0
        %2066 = vmatmul.mubr.f32.gmra.mrb[0].mxu0 %v1999
        %v2067 = vpop.f32.mrb[0].mxu0
        %v2068 = vadd.f32 0.0, %v2067
        %v2069 = vpop.f32.mrb[0].mxu0
        %2070 = vdwg.mxu0
        %v2072 = vsel %vm1924, %v1922, 0
        %2074 = vmatprep.subr.mxu0 0.0
        %2075 = vmatpush1.msra.mxu0 %v1487
        %2076 = vmatprep.subr.mxu0 0.0
        %2077 = vmatpush1.msra.mxu0 0.0
        %2078 = vmatprep.subr.mxu0 0.0
        %2079 = vmatpush1.msra.mxu0 0.0
        %2080 = vmatprep.subr.mxu0 0.0
        %2081 = vmatpush1.msra.mxu0 0.0
        %2082 = vmatprep.subr.mxu0 0.0
        %2083 = vmatpush1.msra.mxu0 0.0
        %2084 = vmatprep.subr.mxu0 0.0
        %2085 = vmatpush1.msra.mxu0 0.0
        %2086 = vmatprep.subr.mxu0 0.0
        %2087 = vmatpush1.msra.mxu0 0.0
        %2088 = vmatprep.subr.mxu0 0.0
        %2089 = vmatpush1.msra.mxu0 0.0
        %2090 = vmatprep.subr.mxu0 0.0
        %2091 = vmatpush1.msra.mxu0 0.0
        %2092 = vmatprep.subr.mxu0 0.0
        %2093 = vmatpush1.msra.mxu0 0.0
        %2094 = vmatprep.subr.mxu0 0.0
        %2095 = vmatpush1.msra.mxu0 0.0
        %2096 = vmatprep.subr.mxu0 0.0
        %2097 = vmatpush1.msra.mxu0 0.0
        %2098 = vmatprep.subr.mxu0 0.0
        %2099 = vmatpush1.msra.mxu0 0.0
        %2100 = vmatprep.subr.mxu0 0.0
        %2101 = vmatpush1.msra.mxu0 0.0
        %2102 = vmatprep.subr.mxu0 0.0
        %2103 = vmatpush1.msra.mxu0 0.0
        %2104 = vmatprep.subr.mxu0 0.0
        %2105 = vmatpush1.msra.mxu0 0.0
        %2106 = vmatprep.subr.mxu0 0.0
        %2107 = vmatpush1.msra.mxu0 0.0
        %2108 = vmatprep.subr.mxu0 0.0
        %2109 = vmatpush1.msra.mxu0 0.0
        %2110 = vmatprep.subr.mxu0 0.0
        %2111 = vmatpush1.msra.mxu0 0.0
        %2112 = vmatprep.subr.mxu0 0.0
        %2113 = vmatpush1.msra.mxu0 0.0
        %2114 = vmatprep.subr.mxu0 0.0
        %2115 = vmatpush1.msra.mxu0 0.0
        %2116 = vmatprep.subr.mxu0 0.0
        %2117 = vmatpush1.msra.mxu0 0.0
        %2118 = vmatprep.subr.mxu0 0.0
        %2119 = vmatpush1.msra.mxu0 0.0
        %2120 = vmatprep.subr.mxu0 0.0
        %2121 = vmatpush1.msra.mxu0 0.0
        %2122 = vmatprep.subr.mxu0 0.0
        %2123 = vmatpush1.msra.mxu0 0.0
        %2124 = vmatprep.subr.mxu0 0.0
        %2125 = vmatpush1.msra.mxu0 0.0
        %2126 = vmatprep.subr.mxu0 0.0
        %2127 = vmatpush1.msra.mxu0 0.0
        %2128 = vmatprep.subr.mxu0 0.0
        %2129 = vmatpush1.msra.mxu0 0.0
        %2130 = vmatprep.subr.mxu0 0.0
        %2131 = vmatpush1.msra.mxu0 0.0
        %2132 = vmatprep.subr.mxu0 0.0
        %2133 = vmatpush1.msra.mxu0 0.0
        %2134 = vmatprep.subr.mxu0 0.0
        %2135 = vmatpush1.msra.mxu0 0.0
        %2136 = vmatprep.subr.mxu0 0.0
        %2137 = vmatpush1.msra.mxu0 0.0
        %2138 = vmatprep.mubr.f32.mxu0 0.0
        %2139 = vmatmul.mubr.f32.gmra.mrb[0].mxu0 %v2072
        %v2140 = vpop.f32.mrb[0].mxu0
        %v2141 = vadd.f32 0.0, %v2140
        %v2142 = vpop.f32.mrb[0].mxu0
        %2143 = vdwg.mxu0
        %v2145 = vsel %vm1924, %v1923, 0
        %2147 = vmatprep.subr.mxu0 0.0
        %2148 = vmatpush1.msra.mxu0 %v1557
        %2149 = vmatprep.subr.mxu0 0.0
        %2150 = vmatpush1.msra.mxu0 0.0
        %2151 = vmatprep.subr.mxu0 0.0
        %2152 = vmatpush1.msra.mxu0 0.0
        %2153 = vmatprep.subr.mxu0 0.0
        %2154 = vmatpush1.msra.mxu0 0.0
        %2155 = vmatprep.subr.mxu0 0.0
        %2156 = vmatpush1.msra.mxu0 0.0
        %2157 = vmatprep.subr.mxu0 0.0
        %2158 = vmatpush1.msra.mxu0 0.0
        %2159 = vmatprep.subr.mxu0 0.0
        %2160 = vmatpush1.msra.mxu0 0.0
        %2161 = vmatprep.subr.mxu0 0.0
        %2162 = vmatpush1.msra.mxu0 0.0
        %2163 = vmatprep.subr.mxu0 0.0
        %2164 = vmatpush1.msra.mxu0 0.0
        %2165 = vmatprep.subr.mxu0 0.0
        %2166 = vmatpush1.msra.mxu0 0.0
        %2167 = vmatprep.subr.mxu0 0.0
        %2168 = vmatpush1.msra.mxu0 0.0
        %2169 = vmatprep.subr.mxu0 0.0
        %2170 = vmatpush1.msra.mxu0 0.0
        %2171 = vmatprep.subr.mxu0 0.0
        %2172 = vmatpush1.msra.mxu0 0.0
        %2173 = vmatprep.subr.mxu0 0.0
        %2174 = vmatpush1.msra.mxu0 0.0
        %2175 = vmatprep.subr.mxu0 0.0
        %2176 = vmatpush1.msra.mxu0 0.0
        %2177 = vmatprep.subr.mxu0 0.0
        %2178 = vmatpush1.msra.mxu0 0.0
        %2179 = vmatprep.subr.mxu0 0.0
        %2180 = vmatpush1.msra.mxu0 0.0
        %2181 = vmatprep.subr.mxu0 0.0
        %2182 = vmatpush1.msra.mxu0 0.0
        %2183 = vmatprep.subr.mxu0 0.0
        %2184 = vmatpush1.msra.mxu0 0.0
        %2185 = vmatprep.subr.mxu0 0.0
        %2186 = vmatpush1.msra.mxu0 0.0
        %2187 = vmatprep.subr.mxu0 0.0
        %2188 = vmatpush1.msra.mxu0 0.0
        %2189 = vmatprep.subr.mxu0 0.0
        %2190 = vmatpush1.msra.mxu0 0.0
        %2191 = vmatprep.subr.mxu0 0.0
        %2192 = vmatpush1.msra.mxu0 0.0
        %2193 = vmatprep.subr.mxu0 0.0
        %2194 = vmatpush1.msra.mxu0 0.0
        %2195 = vmatprep.subr.mxu0 0.0
        %2196 = vmatpush1.msra.mxu0 0.0
        %2197 = vmatprep.subr.mxu0 0.0
        %2198 = vmatpush1.msra.mxu0 0.0
        %2199 = vmatprep.subr.mxu0 0.0
        %2200 = vmatpush1.msra.mxu0 0.0
        %2201 = vmatprep.subr.mxu0 0.0
        %2202 = vmatpush1.msra.mxu0 0.0
        %2203 = vmatprep.subr.mxu0 0.0
        %2204 = vmatpush1.msra.mxu0 0.0
        %2205 = vmatprep.subr.mxu0 0.0
        %2206 = vmatpush1.msra.mxu0 0.0
        %2207 = vmatprep.subr.mxu0 0.0
        %2208 = vmatpush1.msra.mxu0 0.0
        %2209 = vmatprep.subr.mxu0 0.0
        %2210 = vmatpush1.msra.mxu0 0.0
        %2211 = vmatprep.mubr.f32.mxu0 0.0
        %2212 = vmatmul.mubr.f32.gmra.mrb[0].mxu0 %v2145
        %v2213 = vpop.f32.mrb[0].mxu0
        %v2214 = vadd.f32 0.0, %v2213
        %v2215 = vpop.f32.mrb[0].mxu0
        %2216 = vdwg.mxu0
        %v2217 = vadd.f32 %v913, %v1995
        %v2218 = vadd.f32 %v914, %v2068
        %v2219 = vadd.f32 %v915, %v2141
        %v2220 = vadd.f32 %v916, %v2214
        %v2222 = vsel %vm1560, %v2217, 0
        %vm2224 = vcmask 1043456
        %v2226 = vsel %vm2224, %v941, 0
        %2228 = vmatprep.subr.mxu0 0.0
        %2229 = vmatpush1.msra.mxu0 %v2226
        %2230 = vmatprep.subr.mxu0 0.0
        %2231 = vmatpush1.msra.mxu0 0.0
        %2232 = vmatprep.subr.mxu0 0.0
        %2233 = vmatpush1.msra.mxu0 0.0
        %2234 = vmatprep.subr.mxu0 0.0
        %2235 = vmatpush1.msra.mxu0 0.0
        %2236 = vmatprep.subr.mxu0 0.0
        %2237 = vmatpush1.msra.mxu0 0.0
        %2238 = vmatprep.subr.mxu0 0.0
        %2239 = vmatpush1.msra.mxu0 0.0
        %2240 = vmatprep.subr.mxu0 0.0
        %2241 = vmatpush1.msra.mxu0 0.0
        %2242 = vmatprep.subr.mxu0 0.0
        %2243 = vmatpush1.msra.mxu0 0.0
        %2244 = vmatprep.subr.mxu0 0.0
        %2245 = vmatpush1.msra.mxu0 0.0
        %2246 = vmatprep.subr.mxu0 0.0
        %2247 = vmatpush1.msra.mxu0 0.0
        %2248 = vmatprep.subr.mxu0 0.0
        %2249 = vmatpush1.msra.mxu0 0.0
        %2250 = vmatprep.subr.mxu0 0.0
        %2251 = vmatpush1.msra.mxu0 0.0
        %2252 = vmatprep.subr.mxu0 0.0
        %2253 = vmatpush1.msra.mxu0 0.0
        %2254 = vmatprep.subr.mxu0 0.0
        %2255 = vmatpush1.msra.mxu0 0.0
        %2256 = vmatprep.subr.mxu0 0.0
        %2257 = vmatpush1.msra.mxu0 0.0
        %2258 = vmatprep.subr.mxu0 0.0
        %2259 = vmatpush1.msra.mxu0 0.0
        %2260 = vmatprep.subr.mxu0 0.0
        %2261 = vmatpush1.msra.mxu0 0.0
        %2262 = vmatprep.subr.mxu0 0.0
        %2263 = vmatpush1.msra.mxu0 0.0
        %2264 = vmatprep.subr.mxu0 0.0
        %2265 = vmatpush1.msra.mxu0 0.0
        %2266 = vmatprep.subr.mxu0 0.0
        %2267 = vmatpush1.msra.mxu0 0.0
        %2268 = vmatprep.subr.mxu0 0.0
        %2269 = vmatpush1.msra.mxu0 0.0
        %2270 = vmatprep.subr.mxu0 0.0
        %2271 = vmatpush1.msra.mxu0 0.0
        %2272 = vmatprep.subr.mxu0 0.0
        %2273 = vmatpush1.msra.mxu0 0.0
        %2274 = vmatprep.subr.mxu0 0.0
        %2275 = vmatpush1.msra.mxu0 0.0
        %2276 = vmatprep.subr.mxu0 0.0
        %2277 = vmatpush1.msra.mxu0 0.0
        %2278 = vmatprep.subr.mxu0 0.0
        %2279 = vmatpush1.msra.mxu0 0.0
        %2280 = vmatprep.subr.mxu0 0.0
        %2281 = vmatpush1.msra.mxu0 0.0
        %2282 = vmatprep.subr.mxu0 0.0
        %2283 = vmatpush1.msra.mxu0 0.0
        %2284 = vmatprep.subr.mxu0 0.0
        %2285 = vmatpush1.msra.mxu0 0.0
        %2286 = vmatprep.subr.mxu0 0.0
        %2287 = vmatpush1.msra.mxu0 0.0
        %2288 = vmatprep.subr.mxu0 0.0
        %2289 = vmatpush1.msra.mxu0 0.0
        %2290 = vmatprep.subr.mxu0 0.0
        %2291 = vmatpush1.msra.mxu0 0.0
        %2292 = vmatprep.mubr.f32.mxu0 0.0
        %2293 = vmatmul.mubr.f32.gmra.mrb[0].mxu0 %v2222
        %v2294 = vpop.f32.mrb[0].mxu0
        %v2295 = vadd.f32 0.0, %v2294
        %v2296 = vpop.f32.mrb[0].mxu0
        %2297 = vdwg.mxu0
        %v2299 = vsel %vm1560, %v2218, 0
        %v2302 = vsel %vm2224, %v942, 0
        %2304 = vmatprep.subr.mxu0 0.0
        %2305 = vmatpush1.msra.mxu0 %v2302
        %2306 = vmatprep.subr.mxu0 0.0
        %2307 = vmatpush1.msra.mxu0 0.0
        %2308 = vmatprep.subr.mxu0 0.0
        %2309 = vmatpush1.msra.mxu0 0.0
        %2310 = vmatprep.subr.mxu0 0.0
        %2311 = vmatpush1.msra.mxu0 0.0
        %2312 = vmatprep.subr.mxu0 0.0
        %2313 = vmatpush1.msra.mxu0 0.0
        %2314 = vmatprep.subr.mxu0 0.0
        %2315 = vmatpush1.msra.mxu0 0.0
        %2316 = vmatprep.subr.mxu0 0.0
        %2317 = vmatpush1.msra.mxu0 0.0
        %2318 = vmatprep.subr.mxu0 0.0
        %2319 = vmatpush1.msra.mxu0 0.0
        %2320 = vmatprep.subr.mxu0 0.0
        %2321 = vmatpush1.msra.mxu0 0.0
        %2322 = vmatprep.subr.mxu0 0.0
        %2323 = vmatpush1.msra.mxu0 0.0
        %2324 = vmatprep.subr.mxu0 0.0
        %2325 = vmatpush1.msra.mxu0 0.0
        %2326 = vmatprep.subr.mxu0 0.0
        %2327 = vmatpush1.msra.mxu0 0.0
        %2328 = vmatprep.subr.mxu0 0.0
        %2329 = vmatpush1.msra.mxu0 0.0
        %2330 = vmatprep.subr.mxu0 0.0
        %2331 = vmatpush1.msra.mxu0 0.0
        %2332 = vmatprep.subr.mxu0 0.0
        %2333 = vmatpush1.msra.mxu0 0.0
        %2334 = vmatprep.subr.mxu0 0.0
        %2335 = vmatpush1.msra.mxu0 0.0
        %2336 = vmatprep.subr.mxu0 0.0
        %2337 = vmatpush1.msra.mxu0 0.0
        %2338 = vmatprep.subr.mxu0 0.0
        %2339 = vmatpush1.msra.mxu0 0.0
        %2340 = vmatprep.subr.mxu0 0.0
        %2341 = vmatpush1.msra.mxu0 0.0
        %2342 = vmatprep.subr.mxu0 0.0
        %2343 = vmatpush1.msra.mxu0 0.0
        %2344 = vmatprep.subr.mxu0 0.0
        %2345 = vmatpush1.msra.mxu0 0.0
        %2346 = vmatprep.subr.mxu0 0.0
        %2347 = vmatpush1.msra.mxu0 0.0
        %2348 = vmatprep.subr.mxu0 0.0
        %2349 = vmatpush1.msra.mxu0 0.0
        %2350 = vmatprep.subr.mxu0 0.0
        %2351 = vmatpush1.msra.mxu0 0.0
        %2352 = vmatprep.subr.mxu0 0.0
        %2353 = vmatpush1.msra.mxu0 0.0
        %2354 = vmatprep.subr.mxu0 0.0
        %2355 = vmatpush1.msra.mxu0 0.0
        %2356 = vmatprep.subr.mxu0 0.0
        %2357 = vmatpush1.msra.mxu0 0.0
        %2358 = vmatprep.subr.mxu0 0.0
        %2359 = vmatpush1.msra.mxu0 0.0
        %2360 = vmatprep.subr.mxu0 0.0
        %2361 = vmatpush1.msra.mxu0 0.0
        %2362 = vmatprep.subr.mxu0 0.0
        %2363 = vmatpush1.msra.mxu0 0.0
        %2364 = vmatprep.subr.mxu0 0.0
        %2365 = vmatpush1.msra.mxu0 0.0
        %2366 = vmatprep.subr.mxu0 0.0
        %2367 = vmatpush1.msra.mxu0 0.0
        %2368 = vmatprep.mubr.f32.mxu0 0.0
        %2369 = vmatmul.mubr.f32.gmra.mrb[0].mxu0 %v2299
        %v2370 = vpop.f32.mrb[0].mxu0
        %v2371 = vadd.f32 0.0, %v2370
        %v2372 = vpop.f32.mrb[0].mxu0
        %2373 = vdwg.mxu0
        %v2375 = vsel %vm1560, %v2219, 0
        %v2378 = vsel %vm2224, %v943, 0
        %2380 = vmatprep.subr.mxu0 0.0
        %2381 = vmatpush1.msra.mxu0 %v2378
        %2382 = vmatprep.subr.mxu0 0.0
        %2383 = vmatpush1.msra.mxu0 0.0
        %2384 = vmatprep.subr.mxu0 0.0
        %2385 = vmatpush1.msra.mxu0 0.0
        %2386 = vmatprep.subr.mxu0 0.0
        %2387 = vmatpush1.msra.mxu0 0.0
        %2388 = vmatprep.subr.mxu0 0.0
        %2389 = vmatpush1.msra.mxu0 0.0
        %2390 = vmatprep.subr.mxu0 0.0
        %2391 = vmatpush1.msra.mxu0 0.0
        %2392 = vmatprep.subr.mxu0 0.0
        %2393 = vmatpush1.msra.mxu0 0.0
        %2394 = vmatprep.subr.mxu0 0.0
        %2395 = vmatpush1.msra.mxu0 0.0
        %2396 = vmatprep.subr.mxu0 0.0
        %2397 = vmatpush1.msra.mxu0 0.0
        %2398 = vmatprep.subr.mxu0 0.0
        %2399 = vmatpush1.msra.mxu0 0.0
        %2400 = vmatprep.subr.mxu0 0.0
        %2401 = vmatpush1.msra.mxu0 0.0
        %2402 = vmatprep.subr.mxu0 0.0
        %2403 = vmatpush1.msra.mxu0 0.0
        %2404 = vmatprep.subr.mxu0 0.0
        %2405 = vmatpush1.msra.mxu0 0.0
        %2406 = vmatprep.subr.mxu0 0.0
        %2407 = vmatpush1.msra.mxu0 0.0
        %2408 = vmatprep.subr.mxu0 0.0
        %2409 = vmatpush1.msra.mxu0 0.0
        %2410 = vmatprep.subr.mxu0 0.0
        %2411 = vmatpush1.msra.mxu0 0.0
        %2412 = vmatprep.subr.mxu0 0.0
        %2413 = vmatpush1.msra.mxu0 0.0
        %2414 = vmatprep.subr.mxu0 0.0
        %2415 = vmatpush1.msra.mxu0 0.0
        %2416 = vmatprep.subr.mxu0 0.0
        %2417 = vmatpush1.msra.mxu0 0.0
        %2418 = vmatprep.subr.mxu0 0.0
        %2419 = vmatpush1.msra.mxu0 0.0
        %2420 = vmatprep.subr.mxu0 0.0
        %2421 = vmatpush1.msra.mxu0 0.0
        %2422 = vmatprep.subr.mxu0 0.0
        %2423 = vmatpush1.msra.mxu0 0.0
        %2424 = vmatprep.subr.mxu0 0.0
        %2425 = vmatpush1.msra.mxu0 0.0
        %2426 = vmatprep.subr.mxu0 0.0
        %2427 = vmatpush1.msra.mxu0 0.0
        %2428 = vmatprep.subr.mxu0 0.0
        %2429 = vmatpush1.msra.mxu0 0.0
        %2430 = vmatprep.subr.mxu0 0.0
        %2431 = vmatpush1.msra.mxu0 0.0
        %2432 = vmatprep.subr.mxu0 0.0
        %2433 = vmatpush1.msra.mxu0 0.0
        %2434 = vmatprep.subr.mxu0 0.0
        %2435 = vmatpush1.msra.mxu0 0.0
        %2436 = vmatprep.subr.mxu0 0.0
        %2437 = vmatpush1.msra.mxu0 0.0
        %2438 = vmatprep.subr.mxu0 0.0
        %2439 = vmatpush1.msra.mxu0 0.0
        %2440 = vmatprep.subr.mxu0 0.0
        %2441 = vmatpush1.msra.mxu0 0.0
        %2442 = vmatprep.subr.mxu0 0.0
        %2443 = vmatpush1.msra.mxu0 0.0
        %2444 = vmatprep.mubr.f32.mxu0 0.0
        %2445 = vmatmul.mubr.f32.gmra.mrb[0].mxu0 %v2375
        %v2446 = vpop.f32.mrb[0].mxu0
        %v2447 = vadd.f32 0.0, %v2446
        %v2448 = vpop.f32.mrb[0].mxu0
        %2449 = vdwg.mxu0
        %v2451 = vsel %vm1560, %v2220, 0
        %v2454 = vsel %vm2224, %v944, 0
        %2456 = vmatprep.subr.mxu0 0.0
        %2457 = vmatpush1.msra.mxu0 %v2454
        %2458 = vmatprep.subr.mxu0 0.0
        %2459 = vmatpush1.msra.mxu0 0.0
        %2460 = vmatprep.subr.mxu0 0.0
        %2461 = vmatpush1.msra.mxu0 0.0
        %2462 = vmatprep.subr.mxu0 0.0
        %2463 = vmatpush1.msra.mxu0 0.0
        %2464 = vmatprep.subr.mxu0 0.0
        %2465 = vmatpush1.msra.mxu0 0.0
        %2466 = vmatprep.subr.mxu0 0.0
        %2467 = vmatpush1.msra.mxu0 0.0
        %2468 = vmatprep.subr.mxu0 0.0
        %2469 = vmatpush1.msra.mxu0 0.0
        %2470 = vmatprep.subr.mxu0 0.0
        %2471 = vmatpush1.msra.mxu0 0.0
        %2472 = vmatprep.subr.mxu0 0.0
        %2473 = vmatpush1.msra.mxu0 0.0
        %2474 = vmatprep.subr.mxu0 0.0
        %2475 = vmatpush1.msra.mxu0 0.0
        %2476 = vmatprep.subr.mxu0 0.0
        %2477 = vmatpush1.msra.mxu0 0.0
        %2478 = vmatprep.subr.mxu0 0.0
        %2479 = vmatpush1.msra.mxu0 0.0
        %2480 = vmatprep.subr.mxu0 0.0
        %2481 = vmatpush1.msra.mxu0 0.0
        %2482 = vmatprep.subr.mxu0 0.0
        %2483 = vmatpush1.msra.mxu0 0.0
        %2484 = vmatprep.subr.mxu0 0.0
        %2485 = vmatpush1.msra.mxu0 0.0
        %2486 = vmatprep.subr.mxu0 0.0
        %2487 = vmatpush1.msra.mxu0 0.0
        %2488 = vmatprep.subr.mxu0 0.0
        %2489 = vmatpush1.msra.mxu0 0.0
        %2490 = vmatprep.subr.mxu0 0.0
        %2491 = vmatpush1.msra.mxu0 0.0
        %2492 = vmatprep.subr.mxu0 0.0
        %2493 = vmatpush1.msra.mxu0 0.0
        %2494 = vmatprep.subr.mxu0 0.0
        %2495 = vmatpush1.msra.mxu0 0.0
        %2496 = vmatprep.subr.mxu0 0.0
        %2497 = vmatpush1.msra.mxu0 0.0
        %2498 = vmatprep.subr.mxu0 0.0
        %2499 = vmatpush1.msra.mxu0 0.0
        %2500 = vmatprep.subr.mxu0 0.0
        %2501 = vmatpush1.msra.mxu0 0.0
        %2502 = vmatprep.subr.mxu0 0.0
        %2503 = vmatpush1.msra.mxu0 0.0
        %2504 = vmatprep.subr.mxu0 0.0
        %2505 = vmatpush1.msra.mxu0 0.0
        %2506 = vmatprep.subr.mxu0 0.0
        %2507 = vmatpush1.msra.mxu0 0.0
        %2508 = vmatprep.subr.mxu0 0.0
        %2509 = vmatpush1.msra.mxu0 0.0
        %2510 = vmatprep.subr.mxu0 0.0
        %2511 = vmatpush1.msra.mxu0 0.0
        %2512 = vmatprep.subr.mxu0 0.0
        %2513 = vmatpush1.msra.mxu0 0.0
        %2514 = vmatprep.subr.mxu0 0.0
        %2515 = vmatpush1.msra.mxu0 0.0
        %2516 = vmatprep.subr.mxu0 0.0
        %2517 = vmatpush1.msra.mxu0 0.0
        %2518 = vmatprep.subr.mxu0 0.0
        %2519 = vmatpush1.msra.mxu0 0.0
        %2520 = vmatprep.mubr.f32.mxu0 0.0
        %2521 = vmatmul.mubr.f32.gmra.mrb[0].mxu0 %v2451
        %v2522 = vpop.f32.mrb[0].mxu0
        %v2523 = vadd.f32 0.0, %v2522
        %v2524 = vpop.f32.mrb[0].mxu0
        %2525 = vdwg.mxu0
        %vm2526 = vcmask 125952
        %v2527 = vsel %vm2526, %v2295, 0.0
        %v2528 = vsel %vm2526, %v2371, 0.0
        %v2529 = vadd.f32 %v2527, %v2528
        %v2530 = vsel %vm2526, %v2447, 0.0
        %v2531 = vadd.f32 %v2529, %v2530
        %v2532 = vsel %vm2526, %v2523, 0.0
        %v2533 = vadd.f32 %v2531, %v2532
        %v2535 = vlaneseq
        %v2536 = vshrl.u32 %v2535, 7
        %v2537 = vsub.s32 0, %v2536
        %v2538 = vrot.slane %v947, %v2537
        %v2541 = vsel %vm972, %v2533, 0
        %2543 = vmatprep.subr.mxu0 0.0
        %2544 = vmatpush1.msra.mxu0 %v945
        %2545 = vmatprep.subr.mxu0 0.0
        %2546 = vmatpush1.msra.mxu0 %v946
        %2547 = vmatprep.subr.mxu0 0.0
        %2548 = vmatpush1.msra.mxu0 0.0
        %2549 = vmatprep.subr.mxu0 0.0
        %2550 = vmatpush1.msra.mxu0 0.0
        %2551 = vmatprep.subr.mxu0 0.0
        %2552 = vmatpush1.msra.mxu0 0.0
        %2553 = vmatprep.subr.mxu0 0.0
        %2554 = vmatpush1.msra.mxu0 0.0
        %2555 = vmatprep.subr.mxu0 0.0
        %2556 = vmatpush1.msra.mxu0 0.0
        %2557 = vmatprep.subr.mxu0 0.0
        %2558 = vmatpush1.msra.mxu0 0.0
        %2559 = vmatprep.subr.mxu0 0.0
        %2560 = vmatpush1.msra.mxu0 0.0
        %2561 = vmatprep.subr.mxu0 0.0
        %2562 = vmatpush1.msra.mxu0 0.0
        %2563 = vmatprep.subr.mxu0 0.0
        %2564 = vmatpush1.msra.mxu0 0.0
        %2565 = vmatprep.subr.mxu0 0.0
        %2566 = vmatpush1.msra.mxu0 0.0
        %2567 = vmatprep.subr.mxu0 0.0
        %2568 = vmatpush1.msra.mxu0 0.0
        %2569 = vmatprep.subr.mxu0 0.0
        %2570 = vmatpush1.msra.mxu0 0.0
        %2571 = vmatprep.subr.mxu0 0.0
        %2572 = vmatpush1.msra.mxu0 0.0
        %2573 = vmatprep.subr.mxu0 0.0
        %2574 = vmatpush1.msra.mxu0 0.0
        %2575 = vmatprep.subr.mxu0 0.0
        %2576 = vmatpush1.msra.mxu0 0.0
        %2577 = vmatprep.subr.mxu0 0.0
        %2578 = vmatpush1.msra.mxu0 0.0
        %2579 = vmatprep.subr.mxu0 0.0
        %2580 = vmatpush1.msra.mxu0 0.0
        %2581 = vmatprep.subr.mxu0 0.0
        %2582 = vmatpush1.msra.mxu0 0.0
        %2583 = vmatprep.subr.mxu0 0.0
        %2584 = vmatpush1.msra.mxu0 0.0
        %2585 = vmatprep.subr.mxu0 0.0
        %2586 = vmatpush1.msra.mxu0 0.0
        %2587 = vmatprep.subr.mxu0 0.0
        %2588 = vmatpush1.msra.mxu0 0.0
        %2589 = vmatprep.subr.mxu0 0.0
        %2590 = vmatpush1.msra.mxu0 0.0
        %2591 = vmatprep.subr.mxu0 0.0
        %2592 = vmatpush1.msra.mxu0 0.0
        %2593 = vmatprep.subr.mxu0 0.0
        %2594 = vmatpush1.msra.mxu0 0.0
        %2595 = vmatprep.subr.mxu0 0.0
        %2596 = vmatpush1.msra.mxu0 0.0
        %2597 = vmatprep.subr.mxu0 0.0
        %2598 = vmatpush1.msra.mxu0 0.0
        %2599 = vmatprep.subr.mxu0 0.0
        %2600 = vmatpush1.msra.mxu0 0.0
        %2601 = vmatprep.subr.mxu0 0.0
        %2602 = vmatpush1.msra.mxu0 0.0
        %2603 = vmatprep.subr.mxu0 0.0
        %2604 = vmatpush1.msra.mxu0 0.0
        %2605 = vmatprep.subr.mxu0 0.0
        %2606 = vmatpush1.msra.mxu0 0.0
        %2607 = vmatprep.mubr.f32.mxu0 0.0
        %2608 = vmatmul.mubr.f32.gmra.mrb[0].mxu0 %v2541
        %v2609 = vpop.f32.mrb[0].mxu0
        %v2610 = vadd.f32 %v2538, %v2609
        %v2611 = vpop.f32.mrb[0].mxu0
        %2612 = vdwg.mxu0
        %v2613 = vmax.f32 %v2610, 0.0
        %v2614 = vadd.f32 %v2533, %v2613
        %v2615 = vld [vmem:[%s21] sm:$0xff]
        %v2616 = vld [vmem:[%s21 + $0x8] sm:$0xff]
        %v2617 = vld [vmem:[%s21 + $0x10] sm:$0xff]
        %v2618 = vld [vmem:[%s21 + $0x18] sm:$0xff]
        %v2619 = vld [vmem:[%s21 + $0x20] sm:$0xff]
        %v2620 = vld [vmem:[%s21 + $0x28] sm:$0xff]
        %v2621 = vld [vmem:[%s21 + $0x30] sm:$0xff]
        %v2622 = vld [vmem:[%s21 + $0x38] sm:$0xff]
        %v2623 = vld [vmem:[%s23] sm:$0x1]
        %v2624 = vld [vmem:[%s23 + $0x1] sm:$0x1]
        %v2625 = vld [vmem:[%s23 + $0x2] sm:$0x1]
        %v2626 = vld [vmem:[%s23 + $0x3] sm:$0x1]
        %v2631 = vlaneseq
        %v2632 = vshrl.u32 %v2631, 7
        %v2633 = vsub.s32 0, %v2632
        %v2634 = vrot.slane %v2623, %v2633
        %v2635 = vlaneseq
        %v2636 = vshrl.u32 %v2635, 7
        %v2637 = vsub.s32 0, %v2636
        %v2638 = vrot.slane %v2624, %v2637
        %v2639 = vlaneseq
        %v2640 = vshrl.u32 %v2639, 7
        %v2641 = vsub.s32 0, %v2640
        %v2642 = vrot.slane %v2625, %v2641
        %v2643 = vlaneseq
        %v2644 = vshrl.u32 %v2643, 7
        %v2645 = vsub.s32 0, %v2644
        %v2646 = vrot.slane %v2626, %v2645
        %v2652 = vsel %vm972, %v2614, 0
        %2654 = vmatprep.subr.mxu0 0.0
        %2655 = vmatpush1.msra.mxu0 %v2615
        %2656 = vmatprep.subr.mxu0 0.0
        %2657 = vmatpush1.msra.mxu0 %v2616
        %2658 = vmatprep.subr.mxu0 0.0
        %2659 = vmatpush1.msra.mxu0 0.0
        %2660 = vmatprep.subr.mxu0 0.0
        %2661 = vmatpush1.msra.mxu0 0.0
        %2662 = vmatprep.subr.mxu0 0.0
        %2663 = vmatpush1.msra.mxu0 0.0
        %2664 = vmatprep.subr.mxu0 0.0
        %2665 = vmatpush1.msra.mxu0 0.0
        %2666 = vmatprep.subr.mxu0 0.0
        %2667 = vmatpush1.msra.mxu0 0.0
        %2668 = vmatprep.subr.mxu0 0.0
        %2669 = vmatpush1.msra.mxu0 0.0
        %2670 = vmatprep.subr.mxu0 0.0
        %2671 = vmatpush1.msra.mxu0 0.0
        %2672 = vmatprep.subr.mxu0 0.0
        %2673 = vmatpush1.msra.mxu0 0.0
        %2674 = vmatprep.subr.mxu0 0.0
        %2675 = vmatpush1.msra.mxu0 0.0
        %2676 = vmatprep.subr.mxu0 0.0
        %2677 = vmatpush1.msra.mxu0 0.0
        %2678 = vmatprep.subr.mxu0 0.0
        %2679 = vmatpush1.msra.mxu0 0.0
        %2680 = vmatprep.subr.mxu0 0.0
        %2681 = vmatpush1.msra.mxu0 0.0
        %2682 = vmatprep.subr.mxu0 0.0
        %2683 = vmatpush1.msra.mxu0 0.0
        %2684 = vmatprep.subr.mxu0 0.0
        %2685 = vmatpush1.msra.mxu0 0.0
        %2686 = vmatprep.subr.mxu0 0.0
        %2687 = vmatpush1.msra.mxu0 0.0
        %2688 = vmatprep.subr.mxu0 0.0
        %2689 = vmatpush1.msra.mxu0 0.0
        %2690 = vmatprep.subr.mxu0 0.0
        %2691 = vmatpush1.msra.mxu0 0.0
        %2692 = vmatprep.subr.mxu0 0.0
        %2693 = vmatpush1.msra.mxu0 0.0
        %2694 = vmatprep.subr.mxu0 0.0
        %2695 = vmatpush1.msra.mxu0 0.0
        %2696 = vmatprep.subr.mxu0 0.0
        %2697 = vmatpush1.msra.mxu0 0.0
        %2698 = vmatprep.subr.mxu0 0.0
        %2699 = vmatpush1.msra.mxu0 0.0
        %2700 = vmatprep.subr.mxu0 0.0
        %2701 = vmatpush1.msra.mxu0 0.0
        %2702 = vmatprep.subr.mxu0 0.0
        %2703 = vmatpush1.msra.mxu0 0.0
        %2704 = vmatprep.subr.mxu0 0.0
        %2705 = vmatpush1.msra.mxu0 0.0
        %2706 = vmatprep.subr.mxu0 0.0
        %2707 = vmatpush1.msra.mxu0 0.0
        %2708 = vmatprep.subr.mxu0 0.0
        %2709 = vmatpush1.msra.mxu0 0.0
        %2710 = vmatprep.subr.mxu0 0.0
        %2711 = vmatpush1.msra.mxu0 0.0
        %2712 = vmatprep.subr.mxu0 0.0
        %2713 = vmatpush1.msra.mxu0 0.0
        %2714 = vmatprep.subr.mxu0 0.0
        %2715 = vmatpush1.msra.mxu0 0.0
        %2716 = vmatprep.subr.mxu0 0.0
        %2717 = vmatpush1.msra.mxu0 0.0
        %2718 = vmatprep.mubr.f32.mxu0 0.0
        %2719 = vmatmul.mubr.f32.gmra.mrb[0].mxu0 %v2652
        %v2720 = vpop.f32.mrb[0].mxu0
        %v2721 = vadd.f32 %v2634, %v2720
        %v2722 = vpop.f32.mrb[0].mxu0
        %2723 = vdwg.mxu0
        %2724 = vmatprep.subr.mxu0 0.0
        %2725 = vmatpush1.msra.mxu0 %v2617
        %2726 = vmatprep.subr.mxu0 0.0
        %2727 = vmatpush1.msra.mxu0 %v2618
        %2728 = vmatprep.subr.mxu0 0.0
        %2729 = vmatpush1.msra.mxu0 0.0
        %2730 = vmatprep.subr.mxu0 0.0
        %2731 = vmatpush1.msra.mxu0 0.0
        %2732 = vmatprep.subr.mxu0 0.0
        %2733 = vmatpush1.msra.mxu0 0.0
        %2734 = vmatprep.subr.mxu0 0.0
        %2735 = vmatpush1.msra.mxu0 0.0
        %2736 = vmatprep.subr.mxu0 0.0
        %2737 = vmatpush1.msra.mxu0 0.0
        %2738 = vmatprep.subr.mxu0 0.0
        %2739 = vmatpush1.msra.mxu0 0.0
        %2740 = vmatprep.subr.mxu0 0.0
        %2741 = vmatpush1.msra.mxu0 0.0
        %2742 = vmatprep.subr.mxu0 0.0
        %2743 = vmatpush1.msra.mxu0 0.0
        %2744 = vmatprep.subr.mxu0 0.0
        %2745 = vmatpush1.msra.mxu0 0.0
        %2746 = vmatprep.subr.mxu0 0.0
        %2747 = vmatpush1.msra.mxu0 0.0
        %2748 = vmatprep.subr.mxu0 0.0
        %2749 = vmatpush1.msra.mxu0 0.0
        %2750 = vmatprep.subr.mxu0 0.0
        %2751 = vmatpush1.msra.mxu0 0.0
        %2752 = vmatprep.subr.mxu0 0.0
        %2753 = vmatpush1.msra.mxu0 0.0
        %2754 = vmatprep.subr.mxu0 0.0
        %2755 = vmatpush1.msra.mxu0 0.0
        %2756 = vmatprep.subr.mxu0 0.0
        %2757 = vmatpush1.msra.mxu0 0.0
        %2758 = vmatprep.subr.mxu0 0.0
        %2759 = vmatpush1.msra.mxu0 0.0
        %2760 = vmatprep.subr.mxu0 0.0
        %2761 = vmatpush1.msra.mxu0 0.0
        %2762 = vmatprep.subr.mxu0 0.0
        %2763 = vmatpush1.msra.mxu0 0.0
        %2764 = vmatprep.subr.mxu0 0.0
        %2765 = vmatpush1.msra.mxu0 0.0
        %2766 = vmatprep.subr.mxu0 0.0
        %2767 = vmatpush1.msra.mxu0 0.0
        %2768 = vmatprep.subr.mxu0 0.0
        %2769 = vmatpush1.msra.mxu0 0.0
        %2770 = vmatprep.subr.mxu0 0.0
        %2771 = vmatpush1.msra.mxu0 0.0
        %2772 = vmatprep.subr.mxu0 0.0
        %2773 = vmatpush1.msra.mxu0 0.0
        %2774 = vmatprep.subr.mxu0 0.0
        %2775 = vmatpush1.msra.mxu0 0.0
        %2776 = vmatprep.subr.mxu0 0.0
        %2777 = vmatpush1.msra.mxu0 0.0
        %2778 = vmatprep.subr.mxu0 0.0
        %2779 = vmatpush1.msra.mxu0 0.0
        %2780 = vmatprep.subr.mxu0 0.0
        %2781 = vmatpush1.msra.mxu0 0.0
        %2782 = vmatprep.subr.mxu0 0.0
        %2783 = vmatpush1.msra.mxu0 0.0
        %2784 = vmatprep.subr.mxu0 0.0
        %2785 = vmatpush1.msra.mxu0 0.0
        %2786 = vmatprep.subr.mxu0 0.0
        %2787 = vmatpush1.msra.mxu0 0.0
        %2788 = vmatprep.mubr.f32.mxu0 0.0
        %2789 = vmatmul.mubr.f32.gmra.mrb[0].mxu0 %v2652
        %v2790 = vpop.f32.mrb[0].mxu0
        %v2791 = vadd.f32 %v2638, %v2790
        %v2792 = vpop.f32.mrb[0].mxu0
        %2793 = vdwg.mxu0
        %2794 = vmatprep.subr.mxu0 0.0
        %2795 = vmatpush1.msra.mxu0 %v2619
        %2796 = vmatprep.subr.mxu0 0.0
        %2797 = vmatpush1.msra.mxu0 %v2620
        %2798 = vmatprep.subr.mxu0 0.0
        %2799 = vmatpush1.msra.mxu0 0.0
        %2800 = vmatprep.subr.mxu0 0.0
        %2801 = vmatpush1.msra.mxu0 0.0
        %2802 = vmatprep.subr.mxu0 0.0
        %2803 = vmatpush1.msra.mxu0 0.0
        %2804 = vmatprep.subr.mxu0 0.0
        %2805 = vmatpush1.msra.mxu0 0.0
        %2806 = vmatprep.subr.mxu0 0.0
        %2807 = vmatpush1.msra.mxu0 0.0
        %2808 = vmatprep.subr.mxu0 0.0
        %2809 = vmatpush1.msra.mxu0 0.0
        %2810 = vmatprep.subr.mxu0 0.0
        %2811 = vmatpush1.msra.mxu0 0.0
        %2812 = vmatprep.subr.mxu0 0.0
        %2813 = vmatpush1.msra.mxu0 0.0
        %2814 = vmatprep.subr.mxu0 0.0
        %2815 = vmatpush1.msra.mxu0 0.0
        %2816 = vmatprep.subr.mxu0 0.0
        %2817 = vmatpush1.msra.mxu0 0.0
        %2818 = vmatprep.subr.mxu0 0.0
        %2819 = vmatpush1.msra.mxu0 0.0
        %2820 = vmatprep.subr.mxu0 0.0
        %2821 = vmatpush1.msra.mxu0 0.0
        %2822 = vmatprep.subr.mxu0 0.0
        %2823 = vmatpush1.msra.mxu0 0.0
        %2824 = vmatprep.subr.mxu0 0.0
        %2825 = vmatpush1.msra.mxu0 0.0
        %2826 = vmatprep.subr.mxu0 0.0
        %2827 = vmatpush1.msra.mxu0 0.0
        %2828 = vmatprep.subr.mxu0 0.0
        %2829 = vmatpush1.msra.mxu0 0.0
        %2830 = vmatprep.subr.mxu0 0.0
        %2831 = vmatpush1.msra.mxu0 0.0
        %2832 = vmatprep.subr.mxu0 0.0
        %2833 = vmatpush1.msra.mxu0 0.0
        %2834 = vmatprep.subr.mxu0 0.0
        %2835 = vmatpush1.msra.mxu0 0.0
        %2836 = vmatprep.subr.mxu0 0.0
        %2837 = vmatpush1.msra.mxu0 0.0
        %2838 = vmatprep.subr.mxu0 0.0
        %2839 = vmatpush1.msra.mxu0 0.0
        %2840 = vmatprep.subr.mxu0 0.0
        %2841 = vmatpush1.msra.mxu0 0.0
        %2842 = vmatprep.subr.mxu0 0.0
        %2843 = vmatpush1.msra.mxu0 0.0
        %2844 = vmatprep.subr.mxu0 0.0
        %2845 = vmatpush1.msra.mxu0 0.0
        %2846 = vmatprep.subr.mxu0 0.0
        %2847 = vmatpush1.msra.mxu0 0.0
        %2848 = vmatprep.subr.mxu0 0.0
        %2849 = vmatpush1.msra.mxu0 0.0
        %2850 = vmatprep.subr.mxu0 0.0
        %2851 = vmatpush1.msra.mxu0 0.0
        %2852 = vmatprep.subr.mxu0 0.0
        %2853 = vmatpush1.msra.mxu0 0.0
        %2854 = vmatprep.subr.mxu0 0.0
        %2855 = vmatpush1.msra.mxu0 0.0
        %2856 = vmatprep.subr.mxu0 0.0
        %2857 = vmatpush1.msra.mxu0 0.0
        %2858 = vmatprep.mubr.f32.mxu0 0.0
        %2859 = vmatmul.mubr.f32.gmra.mrb[0].mxu0 %v2652
        %v2860 = vpop.f32.mrb[0].mxu0
        %v2861 = vadd.f32 %v2642, %v2860
        %v2862 = vpop.f32.mrb[0].mxu0
        %2863 = vdwg.mxu0
        %2864 = vmatprep.subr.mxu0 0.0
        %2865 = vmatpush1.msra.mxu0 %v2621
        %2866 = vmatprep.subr.mxu0 0.0
        %2867 = vmatpush1.msra.mxu0 %v2622
        %2868 = vmatprep.subr.mxu0 0.0
        %2869 = vmatpush1.msra.mxu0 0.0
        %2870 = vmatprep.subr.mxu0 0.0
        %2871 = vmatpush1.msra.mxu0 0.0
        %2872 = vmatprep.subr.mxu0 0.0
        %2873 = vmatpush1.msra.mxu0 0.0
        %2874 = vmatprep.subr.mxu0 0.0
        %2875 = vmatpush1.msra.mxu0 0.0
        %2876 = vmatprep.subr.mxu0 0.0
        %2877 = vmatpush1.msra.mxu0 0.0
        %2878 = vmatprep.subr.mxu0 0.0
        %2879 = vmatpush1.msra.mxu0 0.0
        %2880 = vmatprep.subr.mxu0 0.0
        %2881 = vmatpush1.msra.mxu0 0.0
        %2882 = vmatprep.subr.mxu0 0.0
        %2883 = vmatpush1.msra.mxu0 0.0
        %2884 = vmatprep.subr.mxu0 0.0
        %2885 = vmatpush1.msra.mxu0 0.0
        %2886 = vmatprep.subr.mxu0 0.0
        %2887 = vmatpush1.msra.mxu0 0.0
        %2888 = vmatprep.subr.mxu0 0.0
        %2889 = vmatpush1.msra.mxu0 0.0
        %2890 = vmatprep.subr.mxu0 0.0
        %2891 = vmatpush1.msra.mxu0 0.0
        %2892 = vmatprep.subr.mxu0 0.0
        %2893 = vmatpush1.msra.mxu0 0.0
        %2894 = vmatprep.subr.mxu0 0.0
        %2895 = vmatpush1.msra.mxu0 0.0
        %2896 = vmatprep.subr.mxu0 0.0
        %2897 = vmatpush1.msra.mxu0 0.0
        %2898 = vmatprep.subr.mxu0 0.0
        %2899 = vmatpush1.msra.mxu0 0.0
        %2900 = vmatprep.subr.mxu0 0.0
        %2901 = vmatpush1.msra.mxu0 0.0
        %2902 = vmatprep.subr.mxu0 0.0
        %2903 = vmatpush1.msra.mxu0 0.0
        %2904 = vmatprep.subr.mxu0 0.0
        %2905 = vmatpush1.msra.mxu0 0.0
        %2906 = vmatprep.subr.mxu0 0.0
        %2907 = vmatpush1.msra.mxu0 0.0
        %2908 = vmatprep.subr.mxu0 0.0
        %2909 = vmatpush1.msra.mxu0 0.0
        %2910 = vmatprep.subr.mxu0 0.0
        %2911 = vmatpush1.msra.mxu0 0.0
        %2912 = vmatprep.subr.mxu0 0.0
        %2913 = vmatpush1.msra.mxu0 0.0
        %2914 = vmatprep.subr.mxu0 0.0
        %2915 = vmatpush1.msra.mxu0 0.0
        %2916 = vmatprep.subr.mxu0 0.0
        %2917 = vmatpush1.msra.mxu0 0.0
        %2918 = vmatprep.subr.mxu0 0.0
        %2919 = vmatpush1.msra.mxu0 0.0
        %2920 = vmatprep.subr.mxu0 0.0
        %2921 = vmatpush1.msra.mxu0 0.0
        %2922 = vmatprep.subr.mxu0 0.0
        %2923 = vmatpush1.msra.mxu0 0.0
        %2924 = vmatprep.subr.mxu0 0.0
        %2925 = vmatpush1.msra.mxu0 0.0
        %2926 = vmatprep.subr.mxu0 0.0
        %2927 = vmatpush1.msra.mxu0 0.0
        %2928 = vmatprep.mubr.f32.mxu0 0.0
        %2929 = vmatmul.mubr.f32.gmra.mrb[0].mxu0 %v2652
        %v2930 = vpop.f32.mrb[0].mxu0
        %v2931 = vadd.f32 %v2646, %v2930
        %v2932 = vpop.f32.mrb[0].mxu0
        %2933 = vdwg.mxu0
        %v2934 = vld [vmem:[%s25] sm:$0xff]
        %v2935 = vld [vmem:[%s25 + $0x8] sm:$0xff]
        %v2936 = vld [vmem:[%s25 + $0x10] sm:$0xff]
        %v2937 = vld [vmem:[%s25 + $0x18] sm:$0xff]
        %v2938 = vld [vmem:[%s25 + $0x20] sm:$0xff]
        %v2939 = vld [vmem:[%s25 + $0x28] sm:$0xff]
        %v2940 = vld [vmem:[%s25 + $0x30] sm:$0xff]
        %v2941 = vld [vmem:[%s25 + $0x38] sm:$0xff]
        %v2942 = vld [vmem:[%s27] sm:$0x1]
        %v2943 = vld [vmem:[%s27 + $0x1] sm:$0x1]
        %v2944 = vld [vmem:[%s27 + $0x2] sm:$0x1]
        %v2945 = vld [vmem:[%s27 + $0x3] sm:$0x1]
        %v2946 = vld [vmem:[%s29] sm:$0xff]
        %v2947 = vld [vmem:[%s29 + $0x8] sm:$0xff]
        %v2948 = vld [vmem:[%s29 + $0x10] sm:$0xff]
        %v2949 = vld [vmem:[%s29 + $0x18] sm:$0xff]
        %v2950 = vld [vmem:[%s29 + $0x20] sm:$0xff]
        %v2951 = vld [vmem:[%s29 + $0x28] sm:$0xff]
        %v2952 = vld [vmem:[%s29 + $0x30] sm:$0xff]
        %v2953 = vld [vmem:[%s29 + $0x38] sm:$0xff]
        %v2954 = vld [vmem:[%s31] sm:$0x1]
        %v2955 = vld [vmem:[%s31 + $0x1] sm:$0x1]
        %v2956 = vld [vmem:[%s31 + $0x2] sm:$0x1]
        %v2957 = vld [vmem:[%s31 + $0x3] sm:$0x1]
        %v2958 = vld [vmem:[%s33] sm:$0xff]
        %v2959 = vld [vmem:[%s33 + $0x8] sm:$0xff]
        %v2960 = vld [vmem:[%s33 + $0x10] sm:$0xff]
        %v2961 = vld [vmem:[%s33 + $0x18] sm:$0xff]
        %v2962 = vld [vmem:[%s35] sm:$0xff]
        %v2963 = vld [vmem:[%s35 + $0x8] sm:$0xff]
        %v2964 = vld [vmem:[%s35 + $0x10] sm:$0xff]
        %v2965 = vld [vmem:[%s35 + $0x18] sm:$0xff]
        %v2966 = vld [vmem:[%s37] sm:$0x1]
        %v2971 = vlaneseq
        %v2972 = vshrl.u32 %v2971, 7
        %v2973 = vsub.s32 0, %v2972
        %v2974 = vrot.slane %v2942, %v2973
        %v2975 = vlaneseq
        %v2976 = vshrl.u32 %v2975, 7
        %v2977 = vsub.s32 0, %v2976
        %v2978 = vrot.slane %v2943, %v2977
        %v2979 = vlaneseq
        %v2980 = vshrl.u32 %v2979, 7
        %v2981 = vsub.s32 0, %v2980
        %v2982 = vrot.slane %v2944, %v2981
        %v2983 = vlaneseq
        %v2984 = vshrl.u32 %v2983, 7
        %v2985 = vsub.s32 0, %v2984
        %v2986 = vrot.slane %v2945, %v2985
        %2991 = vmatprep.subr.mxu0 0.0
        %2992 = vmatpush1.msra.mxu0 %v2934
        %2993 = vmatprep.subr.mxu0 0.0
        %2994 = vmatpush1.msra.mxu0 %v2935
        %2995 = vmatprep.subr.mxu0 0.0
        %2996 = vmatpush1.msra.mxu0 0.0
        %2997 = vmatprep.subr.mxu0 0.0
        %2998 = vmatpush1.msra.mxu0 0.0
        %2999 = vmatprep.subr.mxu0 0.0
        %3000 = vmatpush1.msra.mxu0 0.0
        %3001 = vmatprep.subr.mxu0 0.0
        %3002 = vmatpush1.msra.mxu0 0.0
        %3003 = vmatprep.subr.mxu0 0.0
        %3004 = vmatpush1.msra.mxu0 0.0
        %3005 = vmatprep.subr.mxu0 0.0
        %3006 = vmatpush1.msra.mxu0 0.0
        %3007 = vmatprep.subr.mxu0 0.0
        %3008 = vmatpush1.msra.mxu0 0.0
        %3009 = vmatprep.subr.mxu0 0.0
        %3010 = vmatpush1.msra.mxu0 0.0
        %3011 = vmatprep.subr.mxu0 0.0
        %3012 = vmatpush1.msra.mxu0 0.0
        %3013 = vmatprep.subr.mxu0 0.0
        %3014 = vmatpush1.msra.mxu0 0.0
        %3015 = vmatprep.subr.mxu0 0.0
        %3016 = vmatpush1.msra.mxu0 0.0
        %3017 = vmatprep.subr.mxu0 0.0
        %3018 = vmatpush1.msra.mxu0 0.0
        %3019 = vmatprep.subr.mxu0 0.0
        %3020 = vmatpush1.msra.mxu0 0.0
        %3021 = vmatprep.subr.mxu0 0.0
        %3022 = vmatpush1.msra.mxu0 0.0
        %3023 = vmatprep.subr.mxu0 0.0
        %3024 = vmatpush1.msra.mxu0 0.0
        %3025 = vmatprep.subr.mxu0 0.0
        %3026 = vmatpush1.msra.mxu0 0.0
        %3027 = vmatprep.subr.mxu0 0.0
        %3028 = vmatpush1.msra.mxu0 0.0
        %3029 = vmatprep.subr.mxu0 0.0
        %3030 = vmatpush1.msra.mxu0 0.0
        %3031 = vmatprep.subr.mxu0 0.0
        %3032 = vmatpush1.msra.mxu0 0.0
        %3033 = vmatprep.subr.mxu0 0.0
        %3034 = vmatpush1.msra.mxu0 0.0
        %3035 = vmatprep.subr.mxu0 0.0
        %3036 = vmatpush1.msra.mxu0 0.0
        %3037 = vmatprep.subr.mxu0 0.0
        %3038 = vmatpush1.msra.mxu0 0.0
        %3039 = vmatprep.subr.mxu0 0.0
        %3040 = vmatpush1.msra.mxu0 0.0
        %3041 = vmatprep.subr.mxu0 0.0
        %3042 = vmatpush1.msra.mxu0 0.0
        %3043 = vmatprep.subr.mxu0 0.0
        %3044 = vmatpush1.msra.mxu0 0.0
        %3045 = vmatprep.subr.mxu0 0.0
        %3046 = vmatpush1.msra.mxu0 0.0
        %3047 = vmatprep.subr.mxu0 0.0
        %3048 = vmatpush1.msra.mxu0 0.0
        %3049 = vmatprep.subr.mxu0 0.0
        %3050 = vmatpush1.msra.mxu0 0.0
        %3051 = vmatprep.subr.mxu0 0.0
        %3052 = vmatpush1.msra.mxu0 0.0
        %3053 = vmatprep.subr.mxu0 0.0
        %3054 = vmatpush1.msra.mxu0 0.0
        %3055 = vmatprep.mubr.f32.mxu0 0.0
        %3056 = vmatmul.mubr.f32.gmra.mrb[0].mxu0 %v2652
        %v3057 = vpop.f32.mrb[0].mxu0
        %v3058 = vadd.f32 %v2974, %v3057
        %v3059 = vpop.f32.mrb[0].mxu0
        %3060 = vdwg.mxu0
        %3061 = vmatprep.subr.mxu0 0.0
        %3062 = vmatpush1.msra.mxu0 %v2936
        %3063 = vmatprep.subr.mxu0 0.0
        %3064 = vmatpush1.msra.mxu0 %v2937
        %3065 = vmatprep.subr.mxu0 0.0
        %3066 = vmatpush1.msra.mxu0 0.0
        %3067 = vmatprep.subr.mxu0 0.0
        %3068 = vmatpush1.msra.mxu0 0.0
        %3069 = vmatprep.subr.mxu0 0.0
        %3070 = vmatpush1.msra.mxu0 0.0
        %3071 = vmatprep.subr.mxu0 0.0
        %3072 = vmatpush1.msra.mxu0 0.0
        %3073 = vmatprep.subr.mxu0 0.0
        %3074 = vmatpush1.msra.mxu0 0.0
        %3075 = vmatprep.subr.mxu0 0.0
        %3076 = vmatpush1.msra.mxu0 0.0
        %3077 = vmatprep.subr.mxu0 0.0
        %3078 = vmatpush1.msra.mxu0 0.0
        %3079 = vmatprep.subr.mxu0 0.0
        %3080 = vmatpush1.msra.mxu0 0.0
        %3081 = vmatprep.subr.mxu0 0.0
        %3082 = vmatpush1.msra.mxu0 0.0
        %3083 = vmatprep.subr.mxu0 0.0
        %3084 = vmatpush1.msra.mxu0 0.0
        %3085 = vmatprep.subr.mxu0 0.0
        %3086 = vmatpush1.msra.mxu0 0.0
        %3087 = vmatprep.subr.mxu0 0.0
        %3088 = vmatpush1.msra.mxu0 0.0
        %3089 = vmatprep.subr.mxu0 0.0
        %3090 = vmatpush1.msra.mxu0 0.0
        %3091 = vmatprep.subr.mxu0 0.0
        %3092 = vmatpush1.msra.mxu0 0.0
        %3093 = vmatprep.subr.mxu0 0.0
        %3094 = vmatpush1.msra.mxu0 0.0
        %3095 = vmatprep.subr.mxu0 0.0
        %3096 = vmatpush1.msra.mxu0 0.0
        %3097 = vmatprep.subr.mxu0 0.0
        %3098 = vmatpush1.msra.mxu0 0.0
        %3099 = vmatprep.subr.mxu0 0.0
        %3100 = vmatpush1.msra.mxu0 0.0
        %3101 = vmatprep.subr.mxu0 0.0
        %3102 = vmatpush1.msra.mxu0 0.0
        %3103 = vmatprep.subr.mxu0 0.0
        %3104 = vmatpush1.msra.mxu0 0.0
        %3105 = vmatprep.subr.mxu0 0.0
        %3106 = vmatpush1.msra.mxu0 0.0
        %3107 = vmatprep.subr.mxu0 0.0
        %3108 = vmatpush1.msra.mxu0 0.0
        %3109 = vmatprep.subr.mxu0 0.0
        %3110 = vmatpush1.msra.mxu0 0.0
        %3111 = vmatprep.subr.mxu0 0.0
        %3112 = vmatpush1.msra.mxu0 0.0
        %3113 = vmatprep.subr.mxu0 0.0
        %3114 = vmatpush1.msra.mxu0 0.0
        %3115 = vmatprep.subr.mxu0 0.0
        %3116 = vmatpush1.msra.mxu0 0.0
        %3117 = vmatprep.subr.mxu0 0.0
        %3118 = vmatpush1.msra.mxu0 0.0
        %3119 = vmatprep.subr.mxu0 0.0
        %3120 = vmatpush1.msra.mxu0 0.0
        %3121 = vmatprep.subr.mxu0 0.0
        %3122 = vmatpush1.msra.mxu0 0.0
        %3123 = vmatprep.subr.mxu0 0.0
        %3124 = vmatpush1.msra.mxu0 0.0
        %3125 = vmatprep.mubr.f32.mxu0 0.0
        %3126 = vmatmul.mubr.f32.gmra.mrb[0].mxu0 %v2652
        %v3127 = vpop.f32.mrb[0].mxu0
        %v3128 = vadd.f32 %v2978, %v3127
        %v3129 = vpop.f32.mrb[0].mxu0
        %3130 = vdwg.mxu0
        %3131 = vmatprep.subr.mxu0 0.0
        %3132 = vmatpush1.msra.mxu0 %v2938
        %3133 = vmatprep.subr.mxu0 0.0
        %3134 = vmatpush1.msra.mxu0 %v2939
        %3135 = vmatprep.subr.mxu0 0.0
        %3136 = vmatpush1.msra.mxu0 0.0
        %3137 = vmatprep.subr.mxu0 0.0
        %3138 = vmatpush1.msra.mxu0 0.0
        %3139 = vmatprep.subr.mxu0 0.0
        %3140 = vmatpush1.msra.mxu0 0.0
        %3141 = vmatprep.subr.mxu0 0.0
        %3142 = vmatpush1.msra.mxu0 0.0
        %3143 = vmatprep.subr.mxu0 0.0
        %3144 = vmatpush1.msra.mxu0 0.0
        %3145 = vmatprep.subr.mxu0 0.0
        %3146 = vmatpush1.msra.mxu0 0.0
        %3147 = vmatprep.subr.mxu0 0.0
        %3148 = vmatpush1.msra.mxu0 0.0
        %3149 = vmatprep.subr.mxu0 0.0
        %3150 = vmatpush1.msra.mxu0 0.0
        %3151 = vmatprep.subr.mxu0 0.0
        %3152 = vmatpush1.msra.mxu0 0.0
        %3153 = vmatprep.subr.mxu0 0.0
        %3154 = vmatpush1.msra.mxu0 0.0
        %3155 = vmatprep.subr.mxu0 0.0
        %3156 = vmatpush1.msra.mxu0 0.0
        %3157 = vmatprep.subr.mxu0 0.0
        %3158 = vmatpush1.msra.mxu0 0.0
        %3159 = vmatprep.subr.mxu0 0.0
        %3160 = vmatpush1.msra.mxu0 0.0
        %3161 = vmatprep.subr.mxu0 0.0
        %3162 = vmatpush1.msra.mxu0 0.0
        %3163 = vmatprep.subr.mxu0 0.0
        %3164 = vmatpush1.msra.mxu0 0.0
        %3165 = vmatprep.subr.mxu0 0.0
        %3166 = vmatpush1.msra.mxu0 0.0
        %3167 = vmatprep.subr.mxu0 0.0
        %3168 = vmatpush1.msra.mxu0 0.0
        %3169 = vmatprep.subr.mxu0 0.0
        %3170 = vmatpush1.msra.mxu0 0.0
        %3171 = vmatprep.subr.mxu0 0.0
        %3172 = vmatpush1.msra.mxu0 0.0
        %3173 = vmatprep.subr.mxu0 0.0
        %3174 = vmatpush1.msra.mxu0 0.0
        %3175 = vmatprep.subr.mxu0 0.0
        %3176 = vmatpush1.msra.mxu0 0.0
        %3177 = vmatprep.subr.mxu0 0.0
        %3178 = vmatpush1.msra.mxu0 0.0
        %3179 = vmatprep.subr.mxu0 0.0
        %3180 = vmatpush1.msra.mxu0 0.0
        %3181 = vmatprep.subr.mxu0 0.0
        %3182 = vmatpush1.msra.mxu0 0.0
        %3183 = vmatprep.subr.mxu0 0.0
        %3184 = vmatpush1.msra.mxu0 0.0
        %3185 = vmatprep.subr.mxu0 0.0
        %3186 = vmatpush1.msra.mxu0 0.0
        %3187 = vmatprep.subr.mxu0 0.0
        %3188 = vmatpush1.msra.mxu0 0.0
        %3189 = vmatprep.subr.mxu0 0.0
        %3190 = vmatpush1.msra.mxu0 0.0
        %3191 = vmatprep.subr.mxu0 0.0
        %3192 = vmatpush1.msra.mxu0 0.0
        %3193 = vmatprep.subr.mxu0 0.0
        %3194 = vmatpush1.msra.mxu0 0.0
        %3195 = vmatprep.mubr.f32.mxu0 0.0
        %3196 = vmatmul.mubr.f32.gmra.mrb[0].mxu0 %v2652
        %v3197 = vpop.f32.mrb[0].mxu0
        %v3198 = vadd.f32 %v2982, %v3197
        %v3199 = vpop.f32.mrb[0].mxu0
        %3200 = vdwg.mxu0
        %3201 = vmatprep.subr.mxu0 0.0
        %3202 = vmatpush1.msra.mxu0 %v2940
        %3203 = vmatprep.subr.mxu0 0.0
        %3204 = vmatpush1.msra.mxu0 %v2941
        %3205 = vmatprep.subr.mxu0 0.0
        %3206 = vmatpush1.msra.mxu0 0.0
        %3207 = vmatprep.subr.mxu0 0.0
        %3208 = vmatpush1.msra.mxu0 0.0
        %3209 = vmatprep.subr.mxu0 0.0
        %3210 = vmatpush1.msra.mxu0 0.0
        %3211 = vmatprep.subr.mxu0 0.0
        %3212 = vmatpush1.msra.mxu0 0.0
        %3213 = vmatprep.subr.mxu0 0.0
        %3214 = vmatpush1.msra.mxu0 0.0
        %3215 = vmatprep.subr.mxu0 0.0
        %3216 = vmatpush1.msra.mxu0 0.0
        %3217 = vmatprep.subr.mxu0 0.0
        %3218 = vmatpush1.msra.mxu0 0.0
        %3219 = vmatprep.subr.mxu0 0.0
        %3220 = vmatpush1.msra.mxu0 0.0
        %3221 = vmatprep.subr.mxu0 0.0
        %3222 = vmatpush1.msra.mxu0 0.0
        %3223 = vmatprep.subr.mxu0 0.0
        %3224 = vmatpush1.msra.mxu0 0.0
        %3225 = vmatprep.subr.mxu0 0.0
        %3226 = vmatpush1.msra.mxu0 0.0
        %3227 = vmatprep.subr.mxu0 0.0
        %3228 = vmatpush1.msra.mxu0 0.0
        %3229 = vmatprep.subr.mxu0 0.0
        %3230 = vmatpush1.msra.mxu0 0.0
        %3231 = vmatprep.subr.mxu0 0.0
        %3232 = vmatpush1.msra.mxu0 0.0
        %3233 = vmatprep.subr.mxu0 0.0
        %3234 = vmatpush1.msra.mxu0 0.0
        %3235 = vmatprep.subr.mxu0 0.0
        %3236 = vmatpush1.msra.mxu0 0.0
        %3237 = vmatprep.subr.mxu0 0.0
        %3238 = vmatpush1.msra.mxu0 0.0
        %3239 = vmatprep.subr.mxu0 0.0
        %3240 = vmatpush1.msra.mxu0 0.0
        %3241 = vmatprep.subr.mxu0 0.0
        %3242 = vmatpush1.msra.mxu0 0.0
        %3243 = vmatprep.subr.mxu0 0.0
        %3244 = vmatpush1.msra.mxu0 0.0
        %3245 = vmatprep.subr.mxu0 0.0
        %3246 = vmatpush1.msra.mxu0 0.0
        %3247 = vmatprep.subr.mxu0 0.0
        %3248 = vmatpush1.msra.mxu0 0.0
        %3249 = vmatprep.subr.mxu0 0.0
        %3250 = vmatpush1.msra.mxu0 0.0
        %3251 = vmatprep.subr.mxu0 0.0
        %3252 = vmatpush1.msra.mxu0 0.0
        %3253 = vmatprep.subr.mxu0 0.0
        %3254 = vmatpush1.msra.mxu0 0.0
        %3255 = vmatprep.subr.mxu0 0.0
        %3256 = vmatpush1.msra.mxu0 0.0
        %3257 = vmatprep.subr.mxu0 0.0
        %3258 = vmatpush1.msra.mxu0 0.0
        %3259 = vmatprep.subr.mxu0 0.0
        %3260 = vmatpush1.msra.mxu0 0.0
        %3261 = vmatprep.subr.mxu0 0.0
        %3262 = vmatpush1.msra.mxu0 0.0
        %3263 = vmatprep.subr.mxu0 0.0
        %3264 = vmatpush1.msra.mxu0 0.0
        %3265 = vmatprep.mubr.f32.mxu0 0.0
        %3266 = vmatmul.mubr.f32.gmra.mrb[0].mxu0 %v2652
        %v3267 = vpop.f32.mrb[0].mxu0
        %v3268 = vadd.f32 %v2986, %v3267
        %v3269 = vpop.f32.mrb[0].mxu0
        %3270 = vdwg.mxu0
        %v3275 = vlaneseq
        %v3276 = vshrl.u32 %v3275, 7
        %v3277 = vsub.s32 0, %v3276
        %v3278 = vrot.slane %v2954, %v3277
        %v3279 = vlaneseq
        %v3280 = vshrl.u32 %v3279, 7
        %v3281 = vsub.s32 0, %v3280
        %v3282 = vrot.slane %v2955, %v3281
        %v3283 = vlaneseq
        %v3284 = vshrl.u32 %v3283, 7
        %v3285 = vsub.s32 0, %v3284
        %v3286 = vrot.slane %v2956, %v3285
        %v3287 = vlaneseq
        %v3288 = vshrl.u32 %v3287, 7
        %v3289 = vsub.s32 0, %v3288
        %v3290 = vrot.slane %v2957, %v3289
        %3295 = vmatprep.subr.mxu0 0.0
        %3296 = vmatpush1.msra.mxu0 %v2946
        %3297 = vmatprep.subr.mxu0 0.0
        %3298 = vmatpush1.msra.mxu0 %v2947
        %3299 = vmatprep.subr.mxu0 0.0
        %3300 = vmatpush1.msra.mxu0 0.0
        %3301 = vmatprep.subr.mxu0 0.0
        %3302 = vmatpush1.msra.mxu0 0.0
        %3303 = vmatprep.subr.mxu0 0.0
        %3304 = vmatpush1.msra.mxu0 0.0
        %3305 = vmatprep.subr.mxu0 0.0
        %3306 = vmatpush1.msra.mxu0 0.0
        %3307 = vmatprep.subr.mxu0 0.0
        %3308 = vmatpush1.msra.mxu0 0.0
        %3309 = vmatprep.subr.mxu0 0.0
        %3310 = vmatpush1.msra.mxu0 0.0
        %3311 = vmatprep.subr.mxu0 0.0
        %3312 = vmatpush1.msra.mxu0 0.0
        %3313 = vmatprep.subr.mxu0 0.0
        %3314 = vmatpush1.msra.mxu0 0.0
        %3315 = vmatprep.subr.mxu0 0.0
        %3316 = vmatpush1.msra.mxu0 0.0
        %3317 = vmatprep.subr.mxu0 0.0
        %3318 = vmatpush1.msra.mxu0 0.0
        %3319 = vmatprep.subr.mxu0 0.0
        %3320 = vmatpush1.msra.mxu0 0.0
        %3321 = vmatprep.subr.mxu0 0.0
        %3322 = vmatpush1.msra.mxu0 0.0
        %3323 = vmatprep.subr.mxu0 0.0
        %3324 = vmatpush1.msra.mxu0 0.0
        %3325 = vmatprep.subr.mxu0 0.0
        %3326 = vmatpush1.msra.mxu0 0.0
        %3327 = vmatprep.subr.mxu0 0.0
        %3328 = vmatpush1.msra.mxu0 0.0
        %3329 = vmatprep.subr.mxu0 0.0
        %3330 = vmatpush1.msra.mxu0 0.0
        %3331 = vmatprep.subr.mxu0 0.0
        %3332 = vmatpush1.msra.mxu0 0.0
        %3333 = vmatprep.subr.mxu0 0.0
        %3334 = vmatpush1.msra.mxu0 0.0
        %3335 = vmatprep.subr.mxu0 0.0
        %3336 = vmatpush1.msra.mxu0 0.0
        %3337 = vmatprep.subr.mxu0 0.0
        %3338 = vmatpush1.msra.mxu0 0.0
        %3339 = vmatprep.subr.mxu0 0.0
        %3340 = vmatpush1.msra.mxu0 0.0
        %3341 = vmatprep.subr.mxu0 0.0
        %3342 = vmatpush1.msra.mxu0 0.0
        %3343 = vmatprep.subr.mxu0 0.0
        %3344 = vmatpush1.msra.mxu0 0.0
        %3345 = vmatprep.subr.mxu0 0.0
        %3346 = vmatpush1.msra.mxu0 0.0
        %3347 = vmatprep.subr.mxu0 0.0
        %3348 = vmatpush1.msra.mxu0 0.0
        %3349 = vmatprep.subr.mxu0 0.0
        %3350 = vmatpush1.msra.mxu0 0.0
        %3351 = vmatprep.subr.mxu0 0.0
        %3352 = vmatpush1.msra.mxu0 0.0
        %3353 = vmatprep.subr.mxu0 0.0
        %3354 = vmatpush1.msra.mxu0 0.0
        %3355 = vmatprep.subr.mxu0 0.0
        %3356 = vmatpush1.msra.mxu0 0.0
        %3357 = vmatprep.subr.mxu0 0.0
        %3358 = vmatpush1.msra.mxu0 0.0
        %3359 = vmatprep.mubr.f32.mxu0 0.0
        %3360 = vmatmul.mubr.f32.gmra.mrb[0].mxu0 %v2652
        %v3361 = vpop.f32.mrb[0].mxu0
        %v3362 = vadd.f32 %v3278, %v3361
        %v3363 = vpop.f32.mrb[0].mxu0
        %3364 = vdwg.mxu0
        %3365 = vmatprep.subr.mxu0 0.0
        %3366 = vmatpush1.msra.mxu0 %v2948
        %3367 = vmatprep.subr.mxu0 0.0
        %3368 = vmatpush1.msra.mxu0 %v2949
        %3369 = vmatprep.subr.mxu0 0.0
        %3370 = vmatpush1.msra.mxu0 0.0
        %3371 = vmatprep.subr.mxu0 0.0
        %3372 = vmatpush1.msra.mxu0 0.0
        %3373 = vmatprep.subr.mxu0 0.0
        %3374 = vmatpush1.msra.mxu0 0.0
        %3375 = vmatprep.subr.mxu0 0.0
        %3376 = vmatpush1.msra.mxu0 0.0
        %3377 = vmatprep.subr.mxu0 0.0
        %3378 = vmatpush1.msra.mxu0 0.0
        %3379 = vmatprep.subr.mxu0 0.0
        %3380 = vmatpush1.msra.mxu0 0.0
        %3381 = vmatprep.subr.mxu0 0.0
        %3382 = vmatpush1.msra.mxu0 0.0
        %3383 = vmatprep.subr.mxu0 0.0
        %3384 = vmatpush1.msra.mxu0 0.0
        %3385 = vmatprep.subr.mxu0 0.0
        %3386 = vmatpush1.msra.mxu0 0.0
        %3387 = vmatprep.subr.mxu0 0.0
        %3388 = vmatpush1.msra.mxu0 0.0
        %3389 = vmatprep.subr.mxu0 0.0
        %3390 = vmatpush1.msra.mxu0 0.0
        %3391 = vmatprep.subr.mxu0 0.0
        %3392 = vmatpush1.msra.mxu0 0.0
        %3393 = vmatprep.subr.mxu0 0.0
        %3394 = vmatpush1.msra.mxu0 0.0
        %3395 = vmatprep.subr.mxu0 0.0
        %3396 = vmatpush1.msra.mxu0 0.0
        %3397 = vmatprep.subr.mxu0 0.0
        %3398 = vmatpush1.msra.mxu0 0.0
        %3399 = vmatprep.subr.mxu0 0.0
        %3400 = vmatpush1.msra.mxu0 0.0
        %3401 = vmatprep.subr.mxu0 0.0
        %3402 = vmatpush1.msra.mxu0 0.0
        %3403 = vmatprep.subr.mxu0 0.0
        %3404 = vmatpush1.msra.mxu0 0.0
        %3405 = vmatprep.subr.mxu0 0.0
        %3406 = vmatpush1.msra.mxu0 0.0
        %3407 = vmatprep.subr.mxu0 0.0
        %3408 = vmatpush1.msra.mxu0 0.0
        %3409 = vmatprep.subr.mxu0 0.0
        %3410 = vmatpush1.msra.mxu0 0.0
        %3411 = vmatprep.subr.mxu0 0.0
        %3412 = vmatpush1.msra.mxu0 0.0
        %3413 = vmatprep.subr.mxu0 0.0
        %3414 = vmatpush1.msra.mxu0 0.0
        %3415 = vmatprep.subr.mxu0 0.0
        %3416 = vmatpush1.msra.mxu0 0.0
        %3417 = vmatprep.subr.mxu0 0.0
        %3418 = vmatpush1.msra.mxu0 0.0
        %3419 = vmatprep.subr.mxu0 0.0
        %3420 = vmatpush1.msra.mxu0 0.0
        %3421 = vmatprep.subr.mxu0 0.0
        %3422 = vmatpush1.msra.mxu0 0.0
        %3423 = vmatprep.subr.mxu0 0.0
        %3424 = vmatpush1.msra.mxu0 0.0
        %3425 = vmatprep.subr.mxu0 0.0
        %3426 = vmatpush1.msra.mxu0 0.0
        %3427 = vmatprep.subr.mxu0 0.0
        %3428 = vmatpush1.msra.mxu0 0.0
        %3429 = vmatprep.mubr.f32.mxu0 0.0
        %3430 = vmatmul.mubr.f32.gmra.mrb[0].mxu0 %v2652
        %v3431 = vpop.f32.mrb[0].mxu0
        %v3432 = vadd.f32 %v3282, %v3431
        %v3433 = vpop.f32.mrb[0].mxu0
        %3434 = vdwg.mxu0
        %3435 = vmatprep.subr.mxu0 0.0
        %3436 = vmatpush1.msra.mxu0 %v2950
        %3437 = vmatprep.subr.mxu0 0.0
        %3438 = vmatpush1.msra.mxu0 %v2951
        %3439 = vmatprep.subr.mxu0 0.0
        %3440 = vmatpush1.msra.mxu0 0.0
        %3441 = vmatprep.subr.mxu0 0.0
        %3442 = vmatpush1.msra.mxu0 0.0
        %3443 = vmatprep.subr.mxu0 0.0
        %3444 = vmatpush1.msra.mxu0 0.0
        %3445 = vmatprep.subr.mxu0 0.0
        %3446 = vmatpush1.msra.mxu0 0.0
        %3447 = vmatprep.subr.mxu0 0.0
        %3448 = vmatpush1.msra.mxu0 0.0
        %3449 = vmatprep.subr.mxu0 0.0
        %3450 = vmatpush1.msra.mxu0 0.0
        %3451 = vmatprep.subr.mxu0 0.0
        %3452 = vmatpush1.msra.mxu0 0.0
        %3453 = vmatprep.subr.mxu0 0.0
        %3454 = vmatpush1.msra.mxu0 0.0
        %3455 = vmatprep.subr.mxu0 0.0
        %3456 = vmatpush1.msra.mxu0 0.0
        %3457 = vmatprep.subr.mxu0 0.0
        %3458 = vmatpush1.msra.mxu0 0.0
        %3459 = vmatprep.subr.mxu0 0.0
        %3460 = vmatpush1.msra.mxu0 0.0
        %3461 = vmatprep.subr.mxu0 0.0
        %3462 = vmatpush1.msra.mxu0 0.0
        %3463 = vmatprep.subr.mxu0 0.0
        %3464 = vmatpush1.msra.mxu0 0.0
        %3465 = vmatprep.subr.mxu0 0.0
        %3466 = vmatpush1.msra.mxu0 0.0
        %3467 = vmatprep.subr.mxu0 0.0
        %3468 = vmatpush1.msra.mxu0 0.0
        %3469 = vmatprep.subr.mxu0 0.0
        %3470 = vmatpush1.msra.mxu0 0.0
        %3471 = vmatprep.subr.mxu0 0.0
        %3472 = vmatpush1.msra.mxu0 0.0
        %3473 = vmatprep.subr.mxu0 0.0
        %3474 = vmatpush1.msra.mxu0 0.0
        %3475 = vmatprep.subr.mxu0 0.0
        %3476 = vmatpush1.msra.mxu0 0.0
        %3477 = vmatprep.subr.mxu0 0.0
        %3478 = vmatpush1.msra.mxu0 0.0
        %3479 = vmatprep.subr.mxu0 0.0
        %3480 = vmatpush1.msra.mxu0 0.0
        %3481 = vmatprep.subr.mxu0 0.0
        %3482 = vmatpush1.msra.mxu0 0.0
        %3483 = vmatprep.subr.mxu0 0.0
        %3484 = vmatpush1.msra.mxu0 0.0
        %3485 = vmatprep.subr.mxu0 0.0
        %3486 = vmatpush1.msra.mxu0 0.0
        %3487 = vmatprep.subr.mxu0 0.0
        %3488 = vmatpush1.msra.mxu0 0.0
        %3489 = vmatprep.subr.mxu0 0.0
        %3490 = vmatpush1.msra.mxu0 0.0
        %3491 = vmatprep.subr.mxu0 0.0
        %3492 = vmatpush1.msra.mxu0 0.0
        %3493 = vmatprep.subr.mxu0 0.0
        %3494 = vmatpush1.msra.mxu0 0.0
        %3495 = vmatprep.subr.mxu0 0.0
        %3496 = vmatpush1.msra.mxu0 0.0
        %3497 = vmatprep.subr.mxu0 0.0
        %3498 = vmatpush1.msra.mxu0 0.0
        %3499 = vmatprep.mubr.f32.mxu0 0.0
        %3500 = vmatmul.mubr.f32.gmra.mrb[0].mxu0 %v2652
        %v3501 = vpop.f32.mrb[0].mxu0
        %v3502 = vadd.f32 %v3286, %v3501
        %v3503 = vpop.f32.mrb[0].mxu0
        %3504 = vdwg.mxu0
        %3505 = vmatprep.subr.mxu0 0.0
        %3506 = vmatpush1.msra.mxu0 %v2952
        %3507 = vmatprep.subr.mxu0 0.0
        %3508 = vmatpush1.msra.mxu0 %v2953
        %3509 = vmatprep.subr.mxu0 0.0
        %3510 = vmatpush1.msra.mxu0 0.0
        %3511 = vmatprep.subr.mxu0 0.0
        %3512 = vmatpush1.msra.mxu0 0.0
        %3513 = vmatprep.subr.mxu0 0.0
        %3514 = vmatpush1.msra.mxu0 0.0
        %3515 = vmatprep.subr.mxu0 0.0
        %3516 = vmatpush1.msra.mxu0 0.0
        %3517 = vmatprep.subr.mxu0 0.0
        %3518 = vmatpush1.msra.mxu0 0.0
        %3519 = vmatprep.subr.mxu0 0.0
        %3520 = vmatpush1.msra.mxu0 0.0
        %3521 = vmatprep.subr.mxu0 0.0
        %3522 = vmatpush1.msra.mxu0 0.0
        %3523 = vmatprep.subr.mxu0 0.0
        %3524 = vmatpush1.msra.mxu0 0.0
        %3525 = vmatprep.subr.mxu0 0.0
        %3526 = vmatpush1.msra.mxu0 0.0
        %3527 = vmatprep.subr.mxu0 0.0
        %3528 = vmatpush1.msra.mxu0 0.0
        %3529 = vmatprep.subr.mxu0 0.0
        %3530 = vmatpush1.msra.mxu0 0.0
        %3531 = vmatprep.subr.mxu0 0.0
        %3532 = vmatpush1.msra.mxu0 0.0
        %3533 = vmatprep.subr.mxu0 0.0
        %3534 = vmatpush1.msra.mxu0 0.0
        %3535 = vmatprep.subr.mxu0 0.0
        %3536 = vmatpush1.msra.mxu0 0.0
        %3537 = vmatprep.subr.mxu0 0.0
        %3538 = vmatpush1.msra.mxu0 0.0
        %3539 = vmatprep.subr.mxu0 0.0
        %3540 = vmatpush1.msra.mxu0 0.0
        %3541 = vmatprep.subr.mxu0 0.0
        %3542 = vmatpush1.msra.mxu0 0.0
        %3543 = vmatprep.subr.mxu0 0.0
        %3544 = vmatpush1.msra.mxu0 0.0
        %3545 = vmatprep.subr.mxu0 0.0
        %3546 = vmatpush1.msra.mxu0 0.0
        %3547 = vmatprep.subr.mxu0 0.0
        %3548 = vmatpush1.msra.mxu0 0.0
        %3549 = vmatprep.subr.mxu0 0.0
        %3550 = vmatpush1.msra.mxu0 0.0
        %3551 = vmatprep.subr.mxu0 0.0
        %3552 = vmatpush1.msra.mxu0 0.0
        %3553 = vmatprep.subr.mxu0 0.0
        %3554 = vmatpush1.msra.mxu0 0.0
        %3555 = vmatprep.subr.mxu0 0.0
        %3556 = vmatpush1.msra.mxu0 0.0
        %3557 = vmatprep.subr.mxu0 0.0
        %3558 = vmatpush1.msra.mxu0 0.0
        %3559 = vmatprep.subr.mxu0 0.0
        %3560 = vmatpush1.msra.mxu0 0.0
        %3561 = vmatprep.subr.mxu0 0.0
        %3562 = vmatpush1.msra.mxu0 0.0
        %3563 = vmatprep.subr.mxu0 0.0
        %3564 = vmatpush1.msra.mxu0 0.0
        %3565 = vmatprep.subr.mxu0 0.0
        %3566 = vmatpush1.msra.mxu0 0.0
        %3567 = vmatprep.subr.mxu0 0.0
        %3568 = vmatpush1.msra.mxu0 0.0
        %3569 = vmatprep.mubr.f32.mxu0 0.0
        %3570 = vmatmul.mubr.f32.gmra.mrb[0].mxu0 %v2652
        %v3571 = vpop.f32.mrb[0].mxu0
        %v3572 = vadd.f32 %v3290, %v3571
        %v3573 = vpop.f32.mrb[0].mxu0
        %3574 = vdwg.mxu0
        %v3576 = vsel %vm1924, %v2721, 0
        %v3579 = vsel %vm1924, %v3058, 0
        %3581 = vmatprep.subr.mxu0 0.0
        %3582 = vmatpush1.xpose.msra.mxu0 %v3579
        %3583 = vmatprep.subr.mxu0 0.0
        %3584 = vmatpush1.xpose.msra.mxu0 0.0
        %3585 = vmatprep.subr.mxu0 0.0
        %3586 = vmatpush1.xpose.msra.mxu0 0.0
        %3587 = vmatprep.subr.mxu0 0.0
        %3588 = vmatpush1.xpose.msra.mxu0 0.0
        %3589 = vmatprep.subr.mxu0 0.0
        %3590 = vmatpush1.xpose.msra.mxu0 0.0
        %3591 = vmatprep.subr.mxu0 0.0
        %3592 = vmatpush1.xpose.msra.mxu0 0.0
        %3593 = vmatprep.subr.mxu0 0.0
        %3594 = vmatpush1.xpose.msra.mxu0 0.0
        %3595 = vmatprep.subr.mxu0 0.0
        %3596 = vmatpush1.xpose.msra.mxu0 0.0
        %3597 = vmatprep.subr.mxu0 0.0
        %3598 = vmatpush1.xpose.msra.mxu0 0.0
        %3599 = vmatprep.subr.mxu0 0.0
        %3600 = vmatpush1.xpose.msra.mxu0 0.0
        %3601 = vmatprep.subr.mxu0 0.0
        %3602 = vmatpush1.xpose.msra.mxu0 0.0
        %3603 = vmatprep.subr.mxu0 0.0
        %3604 = vmatpush1.xpose.msra.mxu0 0.0
        %3605 = vmatprep.subr.mxu0 0.0
        %3606 = vmatpush1.xpose.msra.mxu0 0.0
        %3607 = vmatprep.subr.mxu0 0.0
        %3608 = vmatpush1.xpose.msra.mxu0 0.0
        %3609 = vmatprep.subr.mxu0 0.0
        %3610 = vmatpush1.xpose.msra.mxu0 0.0
        %3611 = vmatprep.subr.mxu0 0.0
        %3612 = vmatpush1.xpose.msra.mxu0 0.0
        %3613 = vmatprep.subr.mxu0 0.0
        %3614 = vmatpush1.xpose.msra.mxu0 0.0
        %3615 = vmatprep.subr.mxu0 0.0
        %3616 = vmatpush1.xpose.msra.mxu0 0.0
        %3617 = vmatprep.subr.mxu0 0.0
        %3618 = vmatpush1.xpose.msra.mxu0 0.0
        %3619 = vmatprep.subr.mxu0 0.0
        %3620 = vmatpush1.xpose.msra.mxu0 0.0
        %3621 = vmatprep.subr.mxu0 0.0
        %3622 = vmatpush1.xpose.msra.mxu0 0.0
        %3623 = vmatprep.subr.mxu0 0.0
        %3624 = vmatpush1.xpose.msra.mxu0 0.0
        %3625 = vmatprep.subr.mxu0 0.0
        %3626 = vmatpush1.xpose.msra.mxu0 0.0
        %3627 = vmatprep.subr.mxu0 0.0
        %3628 = vmatpush1.xpose.msra.mxu0 0.0
        %3629 = vmatprep.subr.mxu0 0.0
        %3630 = vmatpush1.xpose.msra.mxu0 0.0
        %3631 = vmatprep.subr.mxu0 0.0
        %3632 = vmatpush1.xpose.msra.mxu0 0.0
        %3633 = vmatprep.subr.mxu0 0.0
        %3634 = vmatpush1.xpose.msra.mxu0 0.0
        %3635 = vmatprep.subr.mxu0 0.0
        %3636 = vmatpush1.xpose.msra.mxu0 0.0
        %3637 = vmatprep.subr.mxu0 0.0
        %3638 = vmatpush1.xpose.msra.mxu0 0.0
        %3639 = vmatprep.subr.mxu0 0.0
        %3640 = vmatpush1.xpose.msra.mxu0 0.0
        %3641 = vmatprep.subr.mxu0 0.0
        %3642 = vmatpush1.xpose.msra.mxu0 0.0
        %3643 = vmatprep.subr.mxu0 0.0
        %3644 = vmatpush1.xpose.msra.mxu0 0.0
        %3645 = vmatprep.mubr.f32.mxu0 0.0
        %3646 = vmatmul.mubr.f32.gmra.mrb[0].mxu0 %v3576
        %v3647 = vpop.f32.mrb[0].mxu0
        %v3648 = vadd.f32 0.0, %v3647
        %v3649 = vpop.f32.mrb[0].mxu0
        %3650 = vdwg.mxu0
        %v3652 = vsel %vm1924, %v2791, 0
        %v3655 = vsel %vm1924, %v3128, 0
        %3657 = vmatprep.subr.mxu0 0.0
        %3658 = vmatpush1.xpose.msra.mxu0 %v3655
        %3659 = vmatprep.subr.mxu0 0.0
        %3660 = vmatpush1.xpose.msra.mxu0 0.0
        %3661 = vmatprep.subr.mxu0 0.0
        %3662 = vmatpush1.xpose.msra.mxu0 0.0
        %3663 = vmatprep.subr.mxu0 0.0
        %3664 = vmatpush1.xpose.msra.mxu0 0.0
        %3665 = vmatprep.subr.mxu0 0.0
        %3666 = vmatpush1.xpose.msra.mxu0 0.0
        %3667 = vmatprep.subr.mxu0 0.0
        %3668 = vmatpush1.xpose.msra.mxu0 0.0
        %3669 = vmatprep.subr.mxu0 0.0
        %3670 = vmatpush1.xpose.msra.mxu0 0.0
        %3671 = vmatprep.subr.mxu0 0.0
        %3672 = vmatpush1.xpose.msra.mxu0 0.0
        %3673 = vmatprep.subr.mxu0 0.0
        %3674 = vmatpush1.xpose.msra.mxu0 0.0
        %3675 = vmatprep.subr.mxu0 0.0
        %3676 = vmatpush1.xpose.msra.mxu0 0.0
        %3677 = vmatprep.subr.mxu0 0.0
        %3678 = vmatpush1.xpose.msra.mxu0 0.0
        %3679 = vmatprep.subr.mxu0 0.0
        %3680 = vmatpush1.xpose.msra.mxu0 0.0
        %3681 = vmatprep.subr.mxu0 0.0
        %3682 = vmatpush1.xpose.msra.mxu0 0.0
        %3683 = vmatprep.subr.mxu0 0.0
        %3684 = vmatpush1.xpose.msra.mxu0 0.0
        %3685 = vmatprep.subr.mxu0 0.0
        %3686 = vmatpush1.xpose.msra.mxu0 0.0
        %3687 = vmatprep.subr.mxu0 0.0
        %3688 = vmatpush1.xpose.msra.mxu0 0.0
        %3689 = vmatprep.subr.mxu0 0.0
        %3690 = vmatpush1.xpose.msra.mxu0 0.0
        %3691 = vmatprep.subr.mxu0 0.0
        %3692 = vmatpush1.xpose.msra.mxu0 0.0
        %3693 = vmatprep.subr.mxu0 0.0
        %3694 = vmatpush1.xpose.msra.mxu0 0.0
        %3695 = vmatprep.subr.mxu0 0.0
        %3696 = vmatpush1.xpose.msra.mxu0 0.0
        %3697 = vmatprep.subr.mxu0 0.0
        %3698 = vmatpush1.xpose.msra.mxu0 0.0
        %3699 = vmatprep.subr.mxu0 0.0
        %3700 = vmatpush1.xpose.msra.mxu0 0.0
        %3701 = vmatprep.subr.mxu0 0.0
        %3702 = vmatpush1.xpose.msra.mxu0 0.0
        %3703 = vmatprep.subr.mxu0 0.0
        %3704 = vmatpush1.xpose.msra.mxu0 0.0
        %3705 = vmatprep.subr.mxu0 0.0
        %3706 = vmatpush1.xpose.msra.mxu0 0.0
        %3707 = vmatprep.subr.mxu0 0.0
        %3708 = vmatpush1.xpose.msra.mxu0 0.0
        %3709 = vmatprep.subr.mxu0 0.0
        %3710 = vmatpush1.xpose.msra.mxu0 0.0
        %3711 = vmatprep.subr.mxu0 0.0
        %3712 = vmatpush1.xpose.msra.mxu0 0.0
        %3713 = vmatprep.subr.mxu0 0.0
        %3714 = vmatpush1.xpose.msra.mxu0 0.0
        %3715 = vmatprep.subr.mxu0 0.0
        %3716 = vmatpush1.xpose.msra.mxu0 0.0
        %3717 = vmatprep.subr.mxu0 0.0
        %3718 = vmatpush1.xpose.msra.mxu0 0.0
        %3719 = vmatprep.subr.mxu0 0.0
        %3720 = vmatpush1.xpose.msra.mxu0 0.0
        %3721 = vmatprep.mubr.f32.mxu0 0.0
        %3722 = vmatmul.mubr.f32.gmra.mrb[0].mxu0 %v3652
        %v3723 = vpop.f32.mrb[0].mxu0
        %v3724 = vadd.f32 0.0, %v3723
        %v3725 = vpop.f32.mrb[0].mxu0
        %3726 = vdwg.mxu0
        %v3728 = vsel %vm1924, %v2861, 0
        %v3731 = vsel %vm1924, %v3198, 0
        %3733 = vmatprep.subr.mxu0 0.0
        %3734 = vmatpush1.xpose.msra.mxu0 %v3731
        %3735 = vmatprep.subr.mxu0 0.0
        %3736 = vmatpush1.xpose.msra.mxu0 0.0
        %3737 = vmatprep.subr.mxu0 0.0
        %3738 = vmatpush1.xpose.msra.mxu0 0.0
        %3739 = vmatprep.subr.mxu0 0.0
        %3740 = vmatpush1.xpose.msra.mxu0 0.0
        %3741 = vmatprep.subr.mxu0 0.0
        %3742 = vmatpush1.xpose.msra.mxu0 0.0
        %3743 = vmatprep.subr.mxu0 0.0
        %3744 = vmatpush1.xpose.msra.mxu0 0.0
        %3745 = vmatprep.subr.mxu0 0.0
        %3746 = vmatpush1.xpose.msra.mxu0 0.0
        %3747 = vmatprep.subr.mxu0 0.0
        %3748 = vmatpush1.xpose.msra.mxu0 0.0
        %3749 = vmatprep.subr.mxu0 0.0
        %3750 = vmatpush1.xpose.msra.mxu0 0.0
        %3751 = vmatprep.subr.mxu0 0.0
        %3752 = vmatpush1.xpose.msra.mxu0 0.0
        %3753 = vmatprep.subr.mxu0 0.0
        %3754 = vmatpush1.xpose.msra.mxu0 0.0
        %3755 = vmatprep.subr.mxu0 0.0
        %3756 = vmatpush1.xpose.msra.mxu0 0.0
        %3757 = vmatprep.subr.mxu0 0.0
        %3758 = vmatpush1.xpose.msra.mxu0 0.0
        %3759 = vmatprep.subr.mxu0 0.0
        %3760 = vmatpush1.xpose.msra.mxu0 0.0
        %3761 = vmatprep.subr.mxu0 0.0
        %3762 = vmatpush1.xpose.msra.mxu0 0.0
        %3763 = vmatprep.subr.mxu0 0.0
        %3764 = vmatpush1.xpose.msra.mxu0 0.0
        %3765 = vmatprep.subr.mxu0 0.0
        %3766 = vmatpush1.xpose.msra.mxu0 0.0
        %3767 = vmatprep.subr.mxu0 0.0
        %3768 = vmatpush1.xpose.msra.mxu0 0.0
        %3769 = vmatprep.subr.mxu0 0.0
        %3770 = vmatpush1.xpose.msra.mxu0 0.0
        %3771 = vmatprep.subr.mxu0 0.0
        %3772 = vmatpush1.xpose.msra.mxu0 0.0
        %3773 = vmatprep.subr.mxu0 0.0
        %3774 = vmatpush1.xpose.msra.mxu0 0.0
        %3775 = vmatprep.subr.mxu0 0.0
        %3776 = vmatpush1.xpose.msra.mxu0 0.0
        %3777 = vmatprep.subr.mxu0 0.0
        %3778 = vmatpush1.xpose.msra.mxu0 0.0
        %3779 = vmatprep.subr.mxu0 0.0
        %3780 = vmatpush1.xpose.msra.mxu0 0.0
        %3781 = vmatprep.subr.mxu0 0.0
        %3782 = vmatpush1.xpose.msra.mxu0 0.0
        %3783 = vmatprep.subr.mxu0 0.0
        %3784 = vmatpush1.xpose.msra.mxu0 0.0
        %3785 = vmatprep.subr.mxu0 0.0
        %3786 = vmatpush1.xpose.msra.mxu0 0.0
        %3787 = vmatprep.subr.mxu0 0.0
        %3788 = vmatpush1.xpose.msra.mxu0 0.0
        %3789 = vmatprep.subr.mxu0 0.0
        %3790 = vmatpush1.xpose.msra.mxu0 0.0
        %3791 = vmatprep.subr.mxu0 0.0
        %3792 = vmatpush1.xpose.msra.mxu0 0.0
        %3793 = vmatprep.subr.mxu0 0.0
        %3794 = vmatpush1.xpose.msra.mxu0 0.0
        %3795 = vmatprep.subr.mxu0 0.0
        %3796 = vmatpush1.xpose.msra.mxu0 0.0
        %3797 = vmatprep.mubr.f32.mxu0 0.0
        %3798 = vmatmul.mubr.f32.gmra.mrb[0].mxu0 %v3728
        %v3799 = vpop.f32.mrb[0].mxu0
        %v3800 = vadd.f32 0.0, %v3799
        %v3801 = vpop.f32.mrb[0].mxu0
        %3802 = vdwg.mxu0
        %v3804 = vsel %vm1924, %v2931, 0
        %v3807 = vsel %vm1924, %v3268, 0
        %3809 = vmatprep.subr.mxu0 0.0
        %3810 = vmatpush1.xpose.msra.mxu0 %v3807
        %3811 = vmatprep.subr.mxu0 0.0
        %3812 = vmatpush1.xpose.msra.mxu0 0.0
        %3813 = vmatprep.subr.mxu0 0.0
        %3814 = vmatpush1.xpose.msra.mxu0 0.0
        %3815 = vmatprep.subr.mxu0 0.0
        %3816 = vmatpush1.xpose.msra.mxu0 0.0
        %3817 = vmatprep.subr.mxu0 0.0
        %3818 = vmatpush1.xpose.msra.mxu0 0.0
        %3819 = vmatprep.subr.mxu0 0.0
        %3820 = vmatpush1.xpose.msra.mxu0 0.0
        %3821 = vmatprep.subr.mxu0 0.0
        %3822 = vmatpush1.xpose.msra.mxu0 0.0
        %3823 = vmatprep.subr.mxu0 0.0
        %3824 = vmatpush1.xpose.msra.mxu0 0.0
        %3825 = vmatprep.subr.mxu0 0.0
        %3826 = vmatpush1.xpose.msra.mxu0 0.0
        %3827 = vmatprep.subr.mxu0 0.0
        %3828 = vmatpush1.xpose.msra.mxu0 0.0
        %3829 = vmatprep.subr.mxu0 0.0
        %3830 = vmatpush1.xpose.msra.mxu0 0.0
        %3831 = vmatprep.subr.mxu0 0.0
        %3832 = vmatpush1.xpose.msra.mxu0 0.0
        %3833 = vmatprep.subr.mxu0 0.0
        %3834 = vmatpush1.xpose.msra.mxu0 0.0
        %3835 = vmatprep.subr.mxu0 0.0
        %3836 = vmatpush1.xpose.msra.mxu0 0.0
        %3837 = vmatprep.subr.mxu0 0.0
        %3838 = vmatpush1.xpose.msra.mxu0 0.0
        %3839 = vmatprep.subr.mxu0 0.0
        %3840 = vmatpush1.xpose.msra.mxu0 0.0
        %3841 = vmatprep.subr.mxu0 0.0
        %3842 = vmatpush1.xpose.msra.mxu0 0.0
        %3843 = vmatprep.subr.mxu0 0.0
        %3844 = vmatpush1.xpose.msra.mxu0 0.0
        %3845 = vmatprep.subr.mxu0 0.0
        %3846 = vmatpush1.xpose.msra.mxu0 0.0
        %3847 = vmatprep.subr.mxu0 0.0
        %3848 = vmatpush1.xpose.msra.mxu0 0.0
        %3849 = vmatprep.subr.mxu0 0.0
        %3850 = vmatpush1.xpose.msra.mxu0 0.0
        %3851 = vmatprep.subr.mxu0 0.0
        %3852 = vmatpush1.xpose.msra.mxu0 0.0
        %3853 = vmatprep.subr.mxu0 0.0
        %3854 = vmatpush1.xpose.msra.mxu0 0.0
        %3855 = vmatprep.subr.mxu0 0.0
        %3856 = vmatpush1.xpose.msra.mxu0 0.0
        %3857 = vmatprep.subr.mxu0 0.0
        %3858 = vmatpush1.xpose.msra.mxu0 0.0
        %3859 = vmatprep.subr.mxu0 0.0
        %3860 = vmatpush1.xpose.msra.mxu0 0.0
        %3861 = vmatprep.subr.mxu0 0.0
        %3862 = vmatpush1.xpose.msra.mxu0 0.0
        %3863 = vmatprep.subr.mxu0 0.0
        %3864 = vmatpush1.xpose.msra.mxu0 0.0
        %3865 = vmatprep.subr.mxu0 0.0
        %3866 = vmatpush1.xpose.msra.mxu0 0.0
        %3867 = vmatprep.subr.mxu0 0.0
        %3868 = vmatpush1.xpose.msra.mxu0 0.0
        %3869 = vmatprep.subr.mxu0 0.0
        %3870 = vmatpush1.xpose.msra.mxu0 0.0
        %3871 = vmatprep.subr.mxu0 0.0
        %3872 = vmatpush1.xpose.msra.mxu0 0.0
        %3873 = vmatprep.mubr.f32.mxu0 0.0
        %3874 = vmatmul.mubr.f32.gmra.mrb[0].mxu0 %v3804
        %v3875 = vpop.f32.mrb[0].mxu0
        %v3876 = vadd.f32 0.0, %v3875
        %v3877 = vpop.f32.mrb[0].mxu0
        %3878 = vdwg.mxu0
        %v3879 = vmul.f32 %v3648, 0.17677669
        %v3880 = vmul.f32 %v3724, 0.17677669
        %v3881 = vmul.f32 %v3800, 0.17677669
        %v3882 = vmul.f32 %v3876, 0.17677669
        %vm3883 = vcmask 27648
        %v3884 = vsel %vm3883, %v3879, -inf
        %3885 = vmax.xlane.f32.xlu0 %v3884
        %v3886 = vpop.xlane.xlu0 %3885
        %v3887 = vsel %vm3883, %v3880, -inf
        %3888 = vmax.xlane.f32.xlu0 %v3887
        %v3889 = vpop.xlane.xlu0 %3888
        %v3890 = vsel %vm3883, %v3881, -inf
        %3891 = vmax.xlane.f32.xlu0 %v3890
        %v3892 = vpop.xlane.xlu0 %3891
        %v3893 = vsel %vm3883, %v3882, -inf
        %3894 = vmax.xlane.f32.xlu0 %v3893
        %v3895 = vpop.xlane.xlu0 %3894
        %v3896 = vsub.f32 %v3879, %v3886
        %v3897 = vsub.f32 %v3880, %v3889
        %v3898 = vsub.f32 %v3881, %v3892
        %v3899 = vsub.f32 %v3882, %v3895
        %v3900 = vmul.f32 %v3896, 1.442695
        %v3901 = vpow.pop %v3900
        %v3902 = vmul.f32 %v3897, 1.442695
        %v3903 = vpow.pop %v3902
        %v3904 = vmul.f32 %v3898, 1.442695
        %v3905 = vpow.pop %v3904
        %v3906 = vmul.f32 %v3899, 1.442695
        %v3907 = vpow.pop %v3906
        %v3908 = vsel %vm3883, %v3901, 0.0
        %3909 = vadd.xlane.f32.xlu0 %v3908
        %v3910 = vpop.xlane.xlu0 %3909
        %v3911 = vsel %vm3883, %v3903, 0.0
        %3912 = vadd.xlane.f32.xlu0 %v3911
        %v3913 = vpop.xlane.xlu0 %3912
        %v3914 = vsel %vm3883, %v3905, 0.0
        %3915 = vadd.xlane.f32.xlu0 %v3914
        %v3916 = vpop.xlane.xlu0 %3915
        %v3917 = vsel %vm3883, %v3907, 0.0
        %3918 = vadd.xlane.f32.xlu0 %v3917
        %v3919 = vpop.xlane.xlu0 %3918
        %v3920 = vrcp.pop %v3910
        %v3921 = vrcp.pop %v3913
        %v3922 = vrcp.pop %v3916
        %v3923 = vrcp.pop %v3919
        %v3924 = vmul.f32 %v3901, %v3920
        %v3925 = vmul.f32 %v3903, %v3921
        %v3926 = vmul.f32 %v3905, %v3922
        %v3927 = vmul.f32 %v3907, %v3923
        %v3929 = vsel %vm1560, %v3924, 0
        %v3932 = vsel %vm2224, %v3362, 0
        %3934 = vmatprep.subr.mxu0 0.0
        %3935 = vmatpush1.msra.mxu0 %v3932
        %3936 = vmatprep.subr.mxu0 0.0
        %3937 = vmatpush1.msra.mxu0 0.0
        %3938 = vmatprep.subr.mxu0 0.0
        %3939 = vmatpush1.msra.mxu0 0.0
        %3940 = vmatprep.subr.mxu0 0.0
        %3941 = vmatpush1.msra.mxu0 0.0
        %3942 = vmatprep.subr.mxu0 0.0
        %3943 = vmatpush1.msra.mxu0 0.0
        %3944 = vmatprep.subr.mxu0 0.0
        %3945 = vmatpush1.msra.mxu0 0.0
        %3946 = vmatprep.subr.mxu0 0.0
        %3947 = vmatpush1.msra.mxu0 0.0
        %3948 = vmatprep.subr.mxu0 0.0
        %3949 = vmatpush1.msra.mxu0 0.0
        %3950 = vmatprep.subr.mxu0 0.0
        %3951 = vmatpush1.msra.mxu0 0.0
        %3952 = vmatprep.subr.mxu0 0.0
        %3953 = vmatpush1.msra.mxu0 0.0
        %3954 = vmatprep.subr.mxu0 0.0
        %3955 = vmatpush1.msra.mxu0 0.0
        %3956 = vmatprep.subr.mxu0 0.0
        %3957 = vmatpush1.msra.mxu0 0.0
        %3958 = vmatprep.subr.mxu0 0.0
        %3959 = vmatpush1.msra.mxu0 0.0
        %3960 = vmatprep.subr.mxu0 0.0
        %3961 = vmatpush1.msra.mxu0 0.0
        %3962 = vmatprep.subr.mxu0 0.0
        %3963 = vmatpush1.msra.mxu0 0.0
        %3964 = vmatprep.subr.mxu0 0.0
        %3965 = vmatpush1.msra.mxu0 0.0
        %3966 = vmatprep.subr.mxu0 0.0
        %3967 = vmatpush1.msra.mxu0 0.0
        %3968 = vmatprep.subr.mxu0 0.0
        %3969 = vmatpush1.msra.mxu0 0.0
        %3970 = vmatprep.subr.mxu0 0.0
        %3971 = vmatpush1.msra.mxu0 0.0
        %3972 = vmatprep.subr.mxu0 0.0
        %3973 = vmatpush1.msra.mxu0 0.0
        %3974 = vmatprep.subr.mxu0 0.0
        %3975 = vmatpush1.msra.mxu0 0.0
        %3976 = vmatprep.subr.mxu0 0.0
        %3977 = vmatpush1.msra.mxu0 0.0
        %3978 = vmatprep.subr.mxu0 0.0
        %3979 = vmatpush1.msra.mxu0 0.0
        %3980 = vmatprep.subr.mxu0 0.0
        %3981 = vmatpush1.msra.mxu0 0.0
        %3982 = vmatprep.subr.mxu0 0.0
        %3983 = vmatpush1.msra.mxu0 0.0
        %3984 = vmatprep.subr.mxu0 0.0
        %3985 = vmatpush1.msra.mxu0 0.0
        %3986 = vmatprep.subr.mxu0 0.0
        %3987 = vmatpush1.msra.mxu0 0.0
        %3988 = vmatprep.subr.mxu0 0.0
        %3989 = vmatpush1.msra.mxu0 0.0
        %3990 = vmatprep.subr.mxu0 0.0
        %3991 = vmatpush1.msra.mxu0 0.0
        %3992 = vmatprep.subr.mxu0 0.0
        %3993 = vmatpush1.msra.mxu0 0.0
        %3994 = vmatprep.subr.mxu0 0.0
        %3995 = vmatpush1.msra.mxu0 0.0
        %3996 = vmatprep.subr.mxu0 0.0
        %3997 = vmatpush1.msra.mxu0 0.0
        %3998 = vmatprep.mubr.f32.mxu0 0.0
        %3999 = vmatmul.mubr.f32.gmra.mrb[0].mxu0 %v3929
        %v4000 = vpop.f32.mrb[0].mxu0
        %v4001 = vadd.f32 0.0, %v4000
        %v4002 = vpop.f32.mrb[0].mxu0
        %4003 = vdwg.mxu0
        %v4005 = vsel %vm1560, %v3925, 0
        %v4008 = vsel %vm2224, %v3432, 0
        %4010 = vmatprep.subr.mxu0 0.0
        %4011 = vmatpush1.msra.mxu0 %v4008
        %4012 = vmatprep.subr.mxu0 0.0
        %4013 = vmatpush1.msra.mxu0 0.0
        %4014 = vmatprep.subr.mxu0 0.0
        %4015 = vmatpush1.msra.mxu0 0.0
        %4016 = vmatprep.subr.mxu0 0.0
        %4017 = vmatpush1.msra.mxu0 0.0
        %4018 = vmatprep.subr.mxu0 0.0
        %4019 = vmatpush1.msra.mxu0 0.0
        %4020 = vmatprep.subr.mxu0 0.0
        %4021 = vmatpush1.msra.mxu0 0.0
        %4022 = vmatprep.subr.mxu0 0.0
        %4023 = vmatpush1.msra.mxu0 0.0
        %4024 = vmatprep.subr.mxu0 0.0
        %4025 = vmatpush1.msra.mxu0 0.0
        %4026 = vmatprep.subr.mxu0 0.0
        %4027 = vmatpush1.msra.mxu0 0.0
        %4028 = vmatprep.subr.mxu0 0.0
        %4029 = vmatpush1.msra.mxu0 0.0
        %4030 = vmatprep.subr.mxu0 0.0
        %4031 = vmatpush1.msra.mxu0 0.0
        %4032 = vmatprep.subr.mxu0 0.0
        %4033 = vmatpush1.msra.mxu0 0.0
        %4034 = vmatprep.subr.mxu0 0.0
        %4035 = vmatpush1.msra.mxu0 0.0
        %4036 = vmatprep.subr.mxu0 0.0
        %4037 = vmatpush1.msra.mxu0 0.0
        %4038 = vmatprep.subr.mxu0 0.0
        %4039 = vmatpush1.msra.mxu0 0.0
        %4040 = vmatprep.subr.mxu0 0.0
        %4041 = vmatpush1.msra.mxu0 0.0
        %4042 = vmatprep.subr.mxu0 0.0
        %4043 = vmatpush1.msra.mxu0 0.0
        %4044 = vmatprep.subr.mxu0 0.0
        %4045 = vmatpush1.msra.mxu0 0.0
        %4046 = vmatprep.subr.mxu0 0.0
        %4047 = vmatpush1.msra.mxu0 0.0
        %4048 = vmatprep.subr.mxu0 0.0
        %4049 = vmatpush1.msra.mxu0 0.0
        %4050 = vmatprep.subr.mxu0 0.0
        %4051 = vmatpush1.msra.mxu0 0.0
        %4052 = vmatprep.subr.mxu0 0.0
        %4053 = vmatpush1.msra.mxu0 0.0
        %4054 = vmatprep.subr.mxu0 0.0
        %4055 = vmatpush1.msra.mxu0 0.0
        %4056 = vmatprep.subr.mxu0 0.0
        %4057 = vmatpush1.msra.mxu0 0.0
        %4058 = vmatprep.subr.mxu0 0.0
        %4059 = vmatpush1.msra.mxu0 0.0
        %4060 = vmatprep.subr.mxu0 0.0
        %4061 = vmatpush1.msra.mxu0 0.0
        %4062 = vmatprep.subr.mxu0 0.0
        %4063 = vmatpush1.msra.mxu0 0.0
        %4064 = vmatprep.subr.mxu0 0.0
        %4065 = vmatpush1.msra.mxu0 0.0
        %4066 = vmatprep.subr.mxu0 0.0
        %4067 = vmatpush1.msra.mxu0 0.0
        %4068 = vmatprep.subr.mxu0 0.0
        %4069 = vmatpush1.msra.mxu0 0.0
        %4070 = vmatprep.subr.mxu0 0.0
        %4071 = vmatpush1.msra.mxu0 0.0
        %4072 = vmatprep.subr.mxu0 0.0
        %4073 = vmatpush1.msra.mxu0 0.0
        %4074 = vmatprep.mubr.f32.mxu0 0.0
        %4075 = vmatmul.mubr.f32.gmra.mrb[0].mxu0 %v4005
        %v4076 = vpop.f32.mrb[0].mxu0
        %v4077 = vadd.f32 0.0, %v4076
        %v4078 = vpop.f32.mrb[0].mxu0
        %4079 = vdwg.mxu0
        %v4081 = vsel %vm1560, %v3926, 0
        %v4084 = vsel %vm2224, %v3502, 0
        %4086 = vmatprep.subr.mxu0 0.0
        %4087 = vmatpush1.msra.mxu0 %v4084
        %4088 = vmatprep.subr.mxu0 0.0
        %4089 = vmatpush1.msra.mxu0 0.0
        %4090 = vmatprep.subr.mxu0 0.0
        %4091 = vmatpush1.msra.mxu0 0.0
        %4092 = vmatprep.subr.mxu0 0.0
        %4093 = vmatpush1.msra.mxu0 0.0
        %4094 = vmatprep.subr.mxu0 0.0
        %4095 = vmatpush1.msra.mxu0 0.0
        %4096 = vmatprep.subr.mxu0 0.0
        %4097 = vmatpush1.msra.mxu0 0.0
        %4098 = vmatprep.subr.mxu0 0.0
        %4099 = vmatpush1.msra.mxu0 0.0
        %4100 = vmatprep.subr.mxu0 0.0
        %4101 = vmatpush1.msra.mxu0 0.0
        %4102 = vmatprep.subr.mxu0 0.0
        %4103 = vmatpush1.msra.mxu0 0.0
        %4104 = vmatprep.subr.mxu0 0.0
        %4105 = vmatpush1.msra.mxu0 0.0
        %4106 = vmatprep.subr.mxu0 0.0
        %4107 = vmatpush1.msra.mxu0 0.0
        %4108 = vmatprep.subr.mxu0 0.0
        %4109 = vmatpush1.msra.mxu0 0.0
        %4110 = vmatprep.subr.mxu0 0.0
        %4111 = vmatpush1.msra.mxu0 0.0
        %4112 = vmatprep.subr.mxu0 0.0
        %4113 = vmatpush1.msra.mxu0 0.0
        %4114 = vmatprep.subr.mxu0 0.0
        %4115 = vmatpush1.msra.mxu0 0.0
        %4116 = vmatprep.subr.mxu0 0.0
        %4117 = vmatpush1.msra.mxu0 0.0
        %4118 = vmatprep.subr.mxu0 0.0
        %4119 = vmatpush1.msra.mxu0 0.0
        %4120 = vmatprep.subr.mxu0 0.0
        %4121 = vmatpush1.msra.mxu0 0.0
        %4122 = vmatprep.subr.mxu0 0.0
        %4123 = vmatpush1.msra.mxu0 0.0
        %4124 = vmatprep.subr.mxu0 0.0
        %4125 = vmatpush1.msra.mxu0 0.0
        %4126 = vmatprep.subr.mxu0 0.0
        %4127 = vmatpush1.msra.mxu0 0.0
        %4128 = vmatprep.subr.mxu0 0.0
        %4129 = vmatpush1.msra.mxu0 0.0
        %4130 = vmatprep.subr.mxu0 0.0
        %4131 = vmatpush1.msra.mxu0 0.0
        %4132 = vmatprep.subr.mxu0 0.0
        %4133 = vmatpush1.msra.mxu0 0.0
        %4134 = vmatprep.subr.mxu0 0.0
        %4135 = vmatpush1.msra.mxu0 0.0
        %4136 = vmatprep.subr.mxu0 0.0
        %4137 = vmatpush1.msra.mxu0 0.0
        %4138 = vmatprep.subr.mxu0 0.0
        %4139 = vmatpush1.msra.mxu0 0.0
        %4140 = vmatprep.subr.mxu0 0.0
        %4141 = vmatpush1.msra.mxu0 0.0
        %4142 = vmatprep.subr.mxu0 0.0
        %4143 = vmatpush1.msra.mxu0 0.0
        %4144 = vmatprep.subr.mxu0 0.0
        %4145 = vmatpush1.msra.mxu0 0.0
        %4146 = vmatprep.subr.mxu0 0.0
        %4147 = vmatpush1.msra.mxu0 0.0
        %4148 = vmatprep.subr.mxu0 0.0
        %4149 = vmatpush1.msra.mxu0 0.0
        %4150 = vmatprep.mubr.f32.mxu0 0.0
        %4151 = vmatmul.mubr.f32.gmra.mrb[0].mxu0 %v4081
        %v4152 = vpop.f32.mrb[0].mxu0
        %v4153 = vadd.f32 0.0, %v4152
        %v4154 = vpop.f32.mrb[0].mxu0
        %4155 = vdwg.mxu0
        %v4157 = vsel %vm1560, %v3927, 0
        %v4160 = vsel %vm2224, %v3572, 0
        %4162 = vmatprep.subr.mxu0 0.0
        %4163 = vmatpush1.msra.mxu0 %v4160
        %4164 = vmatprep.subr.mxu0 0.0
        %4165 = vmatpush1.msra.mxu0 0.0
        %4166 = vmatprep.subr.mxu0 0.0
        %4167 = vmatpush1.msra.mxu0 0.0
        %4168 = vmatprep.subr.mxu0 0.0
        %4169 = vmatpush1.msra.mxu0 0.0
        %4170 = vmatprep.subr.mxu0 0.0
        %4171 = vmatpush1.msra.mxu0 0.0
        %4172 = vmatprep.subr.mxu0 0.0
        %4173 = vmatpush1.msra.mxu0 0.0
        %4174 = vmatprep.subr.mxu0 0.0
        %4175 = vmatpush1.msra.mxu0 0.0
        %4176 = vmatprep.subr.mxu0 0.0
        %4177 = vmatpush1.msra.mxu0 0.0
        %4178 = vmatprep.subr.mxu0 0.0
        %4179 = vmatpush1.msra.mxu0 0.0
        %4180 = vmatprep.subr.mxu0 0.0
        %4181 = vmatpush1.msra.mxu0 0.0
        %4182 = vmatprep.subr.mxu0 0.0
        %4183 = vmatpush1.msra.mxu0 0.0
        %4184 = vmatprep.subr.mxu0 0.0
        %4185 = vmatpush1.msra.mxu0 0.0
        %4186 = vmatprep.subr.mxu0 0.0
        %4187 = vmatpush1.msra.mxu0 0.0
        %4188 = vmatprep.subr.mxu0 0.0
        %4189 = vmatpush1.msra.mxu0 0.0
        %4190 = vmatprep.subr.mxu0 0.0
        %4191 = vmatpush1.msra.mxu0 0.0
        %4192 = vmatprep.subr.mxu0 0.0
        %4193 = vmatpush1.msra.mxu0 0.0
        %4194 = vmatprep.subr.mxu0 0.0
        %4195 = vmatpush1.msra.mxu0 0.0
        %4196 = vmatprep.subr.mxu0 0.0
        %4197 = vmatpush1.msra.mxu0 0.0
        %4198 = vmatprep.subr.mxu0 0.0
        %4199 = vmatpush1.msra.mxu0 0.0
        %4200 = vmatprep.subr.mxu0 0.0
        %4201 = vmatpush1.msra.mxu0 0.0
        %4202 = vmatprep.subr.mxu0 0.0
        %4203 = vmatpush1.msra.mxu0 0.0
        %4204 = vmatprep.subr.mxu0 0.0
        %4205 = vmatpush1.msra.mxu0 0.0
        %4206 = vmatprep.subr.mxu0 0.0
        %4207 = vmatpush1.msra.mxu0 0.0
        %4208 = vmatprep.subr.mxu0 0.0
        %4209 = vmatpush1.msra.mxu0 0.0
        %4210 = vmatprep.subr.mxu0 0.0
        %4211 = vmatpush1.msra.mxu0 0.0
        %4212 = vmatprep.subr.mxu0 0.0
        %4213 = vmatpush1.msra.mxu0 0.0
        %4214 = vmatprep.subr.mxu0 0.0
        %4215 = vmatpush1.msra.mxu0 0.0
        %4216 = vmatprep.subr.mxu0 0.0
        %4217 = vmatpush1.msra.mxu0 0.0
        %4218 = vmatprep.subr.mxu0 0.0
        %4219 = vmatpush1.msra.mxu0 0.0
        %4220 = vmatprep.subr.mxu0 0.0
        %4221 = vmatpush1.msra.mxu0 0.0
        %4222 = vmatprep.subr.mxu0 0.0
        %4223 = vmatpush1.msra.mxu0 0.0
        %4224 = vmatprep.subr.mxu0 0.0
        %4225 = vmatpush1.msra.mxu0 0.0
        %4226 = vmatprep.mubr.f32.mxu0 0.0
        %4227 = vmatmul.mubr.f32.gmra.mrb[0].mxu0 %v4157
        %v4228 = vpop.f32.mrb[0].mxu0
        %v4229 = vadd.f32 0.0, %v4228
        %v4230 = vpop.f32.mrb[0].mxu0
        %4231 = vdwg.mxu0
        %v4232 = vadd.f32 %v2721, %v4001
        %v4233 = vadd.f32 %v2791, %v4077
        %v4234 = vadd.f32 %v2861, %v4153
        %v4235 = vadd.f32 %v2931, %v4229
        %v4237 = vsel %vm1924, %v4232, 0
        %4239 = vmatprep.subr.mxu0 0.0
        %4240 = vmatpush1.msra.mxu0 %v2958
        %4241 = vmatprep.subr.mxu0 0.0
        %4242 = vmatpush1.msra.mxu0 0.0
        %4243 = vmatprep.subr.mxu0 0.0
        %4244 = vmatpush1.msra.mxu0 0.0
        %4245 = vmatprep.subr.mxu0 0.0
        %4246 = vmatpush1.msra.mxu0 0.0
        %4247 = vmatprep.subr.mxu0 0.0
        %4248 = vmatpush1.msra.mxu0 0.0
        %4249 = vmatprep.subr.mxu0 0.0
        %4250 = vmatpush1.msra.mxu0 0.0
        %4251 = vmatprep.subr.mxu0 0.0
        %4252 = vmatpush1.msra.mxu0 0.0
        %4253 = vmatprep.subr.mxu0 0.0
        %4254 = vmatpush1.msra.mxu0 0.0
        %4255 = vmatprep.subr.mxu0 0.0
        %4256 = vmatpush1.msra.mxu0 0.0
        %4257 = vmatprep.subr.mxu0 0.0
        %4258 = vmatpush1.msra.mxu0 0.0
        %4259 = vmatprep.subr.mxu0 0.0
        %4260 = vmatpush1.msra.mxu0 0.0
        %4261 = vmatprep.subr.mxu0 0.0
        %4262 = vmatpush1.msra.mxu0 0.0
        %4263 = vmatprep.subr.mxu0 0.0
        %4264 = vmatpush1.msra.mxu0 0.0
        %4265 = vmatprep.subr.mxu0 0.0
        %4266 = vmatpush1.msra.mxu0 0.0
        %4267 = vmatprep.subr.mxu0 0.0
        %4268 = vmatpush1.msra.mxu0 0.0
        %4269 = vmatprep.subr.mxu0 0.0
        %4270 = vmatpush1.msra.mxu0 0.0
        %4271 = vmatprep.subr.mxu0 0.0
        %4272 = vmatpush1.msra.mxu0 0.0
        %4273 = vmatprep.subr.mxu0 0.0
        %4274 = vmatpush1.msra.mxu0 0.0
        %4275 = vmatprep.subr.mxu0 0.0
        %4276 = vmatpush1.msra.mxu0 0.0
        %4277 = vmatprep.subr.mxu0 0.0
        %4278 = vmatpush1.msra.mxu0 0.0
        %4279 = vmatprep.subr.mxu0 0.0
        %4280 = vmatpush1.msra.mxu0 0.0
        %4281 = vmatprep.subr.mxu0 0.0
        %4282 = vmatpush1.msra.mxu0 0.0
        %4283 = vmatprep.subr.mxu0 0.0
        %4284 = vmatpush1.msra.mxu0 0.0
        %4285 = vmatprep.subr.mxu0 0.0
        %4286 = vmatpush1.msra.mxu0 0.0
        %4287 = vmatprep.subr.mxu0 0.0
        %4288 = vmatpush1.msra.mxu0 0.0
        %4289 = vmatprep.subr.mxu0 0.0
        %4290 = vmatpush1.msra.mxu0 0.0
        %4291 = vmatprep.subr.mxu0 0.0
        %4292 = vmatpush1.msra.mxu0 0.0
        %4293 = vmatprep.subr.mxu0 0.0
        %4294 = vmatpush1.msra.mxu0 0.0
        %4295 = vmatprep.subr.mxu0 0.0
        %4296 = vmatpush1.msra.mxu0 0.0
        %4297 = vmatprep.subr.mxu0 0.0
        %4298 = vmatpush1.msra.mxu0 0.0
        %4299 = vmatprep.subr.mxu0 0.0
        %4300 = vmatpush1.msra.mxu0 0.0
        %4301 = vmatprep.subr.mxu0 0.0
        %4302 = vmatpush1.msra.mxu0 0.0
        %4303 = vmatprep.mubr.f32.mxu0 0.0
        %4304 = vmatmul.mubr.f32.gmra.mrb[0].mxu0 %v4237
        %v4305 = vpop.f32.mrb[0].mxu0
        %v4306 = vadd.f32 0.0, %v4305
        %v4307 = vpop.f32.mrb[0].mxu0
        %4308 = vdwg.mxu0
        %v4310 = vsel %vm1924, %v4233, 0
        %4312 = vmatprep.subr.mxu0 0.0
        %4313 = vmatpush1.msra.mxu0 %v2959
        %4314 = vmatprep.subr.mxu0 0.0
        %4315 = vmatpush1.msra.mxu0 0.0
        %4316 = vmatprep.subr.mxu0 0.0
        %4317 = vmatpush1.msra.mxu0 0.0
        %4318 = vmatprep.subr.mxu0 0.0
        %4319 = vmatpush1.msra.mxu0 0.0
        %4320 = vmatprep.subr.mxu0 0.0
        %4321 = vmatpush1.msra.mxu0 0.0
        %4322 = vmatprep.subr.mxu0 0.0
        %4323 = vmatpush1.msra.mxu0 0.0
        %4324 = vmatprep.subr.mxu0 0.0
        %4325 = vmatpush1.msra.mxu0 0.0
        %4326 = vmatprep.subr.mxu0 0.0
        %4327 = vmatpush1.msra.mxu0 0.0
        %4328 = vmatprep.subr.mxu0 0.0
        %4329 = vmatpush1.msra.mxu0 0.0
        %4330 = vmatprep.subr.mxu0 0.0
        %4331 = vmatpush1.msra.mxu0 0.0
        %4332 = vmatprep.subr.mxu0 0.0
        %4333 = vmatpush1.msra.mxu0 0.0
        %4334 = vmatprep.subr.mxu0 0.0
        %4335 = vmatpush1.msra.mxu0 0.0
        %4336 = vmatprep.subr.mxu0 0.0
        %4337 = vmatpush1.msra.mxu0 0.0
        %4338 = vmatprep.subr.mxu0 0.0
        %4339 = vmatpush1.msra.mxu0 0.0
        %4340 = vmatprep.subr.mxu0 0.0
        %4341 = vmatpush1.msra.mxu0 0.0
        %4342 = vmatprep.subr.mxu0 0.0
        %4343 = vmatpush1.msra.mxu0 0.0
        %4344 = vmatprep.subr.mxu0 0.0
        %4345 = vmatpush1.msra.mxu0 0.0
        %4346 = vmatprep.subr.mxu0 0.0
        %4347 = vmatpush1.msra.mxu0 0.0
        %4348 = vmatprep.subr.mxu0 0.0
        %4349 = vmatpush1.msra.mxu0 0.0
        %4350 = vmatprep.subr.mxu0 0.0
        %4351 = vmatpush1.msra.mxu0 0.0
        %4352 = vmatprep.subr.mxu0 0.0
        %4353 = vmatpush1.msra.mxu0 0.0
        %4354 = vmatprep.subr.mxu0 0.0
        %4355 = vmatpush1.msra.mxu0 0.0
        %4356 = vmatprep.subr.mxu0 0.0
        %4357 = vmatpush1.msra.mxu0 0.0
        %4358 = vmatprep.subr.mxu0 0.0
        %4359 = vmatpush1.msra.mxu0 0.0
        %4360 = vmatprep.subr.mxu0 0.0
        %4361 = vmatpush1.msra.mxu0 0.0
        %4362 = vmatprep.subr.mxu0 0.0
        %4363 = vmatpush1.msra.mxu0 0.0
        %4364 = vmatprep.subr.mxu0 0.0
        %4365 = vmatpush1.msra.mxu0 0.0
        %4366 = vmatprep.subr.mxu0 0.0
        %4367 = vmatpush1.msra.mxu0 0.0
        %4368 = vmatprep.subr.mxu0 0.0
        %4369 = vmatpush1.msra.mxu0 0.0
        %4370 = vmatprep.subr.mxu0 0.0
        %4371 = vmatpush1.msra.mxu0 0.0
        %4372 = vmatprep.subr.mxu0 0.0
        %4373 = vmatpush1.msra.mxu0 0.0
        %4374 = vmatprep.subr.mxu0 0.0
        %4375 = vmatpush1.msra.mxu0 0.0
        %4376 = vmatprep.mubr.f32.mxu0 0.0
        %4377 = vmatmul.mubr.f32.gmra.mrb[0].mxu0 %v4310
        %v4378 = vpop.f32.mrb[0].mxu0
        %v4379 = vadd.f32 0.0, %v4378
        %v4380 = vpop.f32.mrb[0].mxu0
        %4381 = vdwg.mxu0
        %v4383 = vsel %vm1924, %v4234, 0
        %4385 = vmatprep.subr.mxu0 0.0
        %4386 = vmatpush1.msra.mxu0 %v2960
        %4387 = vmatprep.subr.mxu0 0.0
        %4388 = vmatpush1.msra.mxu0 0.0
        %4389 = vmatprep.subr.mxu0 0.0
        %4390 = vmatpush1.msra.mxu0 0.0
        %4391 = vmatprep.subr.mxu0 0.0
        %4392 = vmatpush1.msra.mxu0 0.0
        %4393 = vmatprep.subr.mxu0 0.0
        %4394 = vmatpush1.msra.mxu0 0.0
        %4395 = vmatprep.subr.mxu0 0.0
        %4396 = vmatpush1.msra.mxu0 0.0
        %4397 = vmatprep.subr.mxu0 0.0
        %4398 = vmatpush1.msra.mxu0 0.0
        %4399 = vmatprep.subr.mxu0 0.0
        %4400 = vmatpush1.msra.mxu0 0.0
        %4401 = vmatprep.subr.mxu0 0.0
        %4402 = vmatpush1.msra.mxu0 0.0
        %4403 = vmatprep.subr.mxu0 0.0
        %4404 = vmatpush1.msra.mxu0 0.0
        %4405 = vmatprep.subr.mxu0 0.0
        %4406 = vmatpush1.msra.mxu0 0.0
        %4407 = vmatprep.subr.mxu0 0.0
        %4408 = vmatpush1.msra.mxu0 0.0
        %4409 = vmatprep.subr.mxu0 0.0
        %4410 = vmatpush1.msra.mxu0 0.0
        %4411 = vmatprep.subr.mxu0 0.0
        %4412 = vmatpush1.msra.mxu0 0.0
        %4413 = vmatprep.subr.mxu0 0.0
        %4414 = vmatpush1.msra.mxu0 0.0
        %4415 = vmatprep.subr.mxu0 0.0
        %4416 = vmatpush1.msra.mxu0 0.0
        %4417 = vmatprep.subr.mxu0 0.0
        %4418 = vmatpush1.msra.mxu0 0.0
        %4419 = vmatprep.subr.mxu0 0.0
        %4420 = vmatpush1.msra.mxu0 0.0
        %4421 = vmatprep.subr.mxu0 0.0
        %4422 = vmatpush1.msra.mxu0 0.0
        %4423 = vmatprep.subr.mxu0 0.0
        %4424 = vmatpush1.msra.mxu0 0.0
        %4425 = vmatprep.subr.mxu0 0.0
        %4426 = vmatpush1.msra.mxu0 0.0
        %4427 = vmatprep.subr.mxu0 0.0
        %4428 = vmatpush1.msra.mxu0 0.0
        %4429 = vmatprep.subr.mxu0 0.0
        %4430 = vmatpush1.msra.mxu0 0.0
        %4431 = vmatprep.subr.mxu0 0.0
        %4432 = vmatpush1.msra.mxu0 0.0
        %4433 = vmatprep.subr.mxu0 0.0
        %4434 = vmatpush1.msra.mxu0 0.0
        %4435 = vmatprep.subr.mxu0 0.0
        %4436 = vmatpush1.msra.mxu0 0.0
        %4437 = vmatprep.subr.mxu0 0.0
        %4438 = vmatpush1.msra.mxu0 0.0
        %4439 = vmatprep.subr.mxu0 0.0
        %4440 = vmatpush1.msra.mxu0 0.0
        %4441 = vmatprep.subr.mxu0 0.0
        %4442 = vmatpush1.msra.mxu0 0.0
        %4443 = vmatprep.subr.mxu0 0.0
        %4444 = vmatpush1.msra.mxu0 0.0
        %4445 = vmatprep.subr.mxu0 0.0
        %4446 = vmatpush1.msra.mxu0 0.0
        %4447 = vmatprep.subr.mxu0 0.0
        %4448 = vmatpush1.msra.mxu0 0.0
        %4449 = vmatprep.mubr.f32.mxu0 0.0
        %4450 = vmatmul.mubr.f32.gmra.mrb[0].mxu0 %v4383
        %v4451 = vpop.f32.mrb[0].mxu0
        %v4452 = vadd.f32 0.0, %v4451
        %v4453 = vpop.f32.mrb[0].mxu0
        %4454 = vdwg.mxu0
        %v4456 = vsel %vm1924, %v4235, 0
        %4458 = vmatprep.subr.mxu0 0.0
        %4459 = vmatpush1.msra.mxu0 %v2961
        %4460 = vmatprep.subr.mxu0 0.0
        %4461 = vmatpush1.msra.mxu0 0.0
        %4462 = vmatprep.subr.mxu0 0.0
        %4463 = vmatpush1.msra.mxu0 0.0
        %4464 = vmatprep.subr.mxu0 0.0
        %4465 = vmatpush1.msra.mxu0 0.0
        %4466 = vmatprep.subr.mxu0 0.0
        %4467 = vmatpush1.msra.mxu0 0.0
        %4468 = vmatprep.subr.mxu0 0.0
        %4469 = vmatpush1.msra.mxu0 0.0
        %4470 = vmatprep.subr.mxu0 0.0
        %4471 = vmatpush1.msra.mxu0 0.0
        %4472 = vmatprep.subr.mxu0 0.0
        %4473 = vmatpush1.msra.mxu0 0.0
        %4474 = vmatprep.subr.mxu0 0.0
        %4475 = vmatpush1.msra.mxu0 0.0
        %4476 = vmatprep.subr.mxu0 0.0
        %4477 = vmatpush1.msra.mxu0 0.0
        %4478 = vmatprep.subr.mxu0 0.0
        %4479 = vmatpush1.msra.mxu0 0.0
        %4480 = vmatprep.subr.mxu0 0.0
        %4481 = vmatpush1.msra.mxu0 0.0
        %4482 = vmatprep.subr.mxu0 0.0
        %4483 = vmatpush1.msra.mxu0 0.0
        %4484 = vmatprep.subr.mxu0 0.0
        %4485 = vmatpush1.msra.mxu0 0.0
        %4486 = vmatprep.subr.mxu0 0.0
        %4487 = vmatpush1.msra.mxu0 0.0
        %4488 = vmatprep.subr.mxu0 0.0
        %4489 = vmatpush1.msra.mxu0 0.0
        %4490 = vmatprep.subr.mxu0 0.0
        %4491 = vmatpush1.msra.mxu0 0.0
        %4492 = vmatprep.subr.mxu0 0.0
        %4493 = vmatpush1.msra.mxu0 0.0
        %4494 = vmatprep.subr.mxu0 0.0
        %4495 = vmatpush1.msra.mxu0 0.0
        %4496 = vmatprep.subr.mxu0 0.0
        %4497 = vmatpush1.msra.mxu0 0.0
        %4498 = vmatprep.subr.mxu0 0.0
        %4499 = vmatpush1.msra.mxu0 0.0
        %4500 = vmatprep.subr.mxu0 0.0
        %4501 = vmatpush1.msra.mxu0 0.0
        %4502 = vmatprep.subr.mxu0 0.0
        %4503 = vmatpush1.msra.mxu0 0.0
        %4504 = vmatprep.subr.mxu0 0.0
        %4505 = vmatpush1.msra.mxu0 0.0
        %4506 = vmatprep.subr.mxu0 0.0
        %4507 = vmatpush1.msra.mxu0 0.0
        %4508 = vmatprep.subr.mxu0 0.0
        %4509 = vmatpush1.msra.mxu0 0.0
        %4510 = vmatprep.subr.mxu0 0.0
        %4511 = vmatpush1.msra.mxu0 0.0
        %4512 = vmatprep.subr.mxu0 0.0
        %4513 = vmatpush1.msra.mxu0 0.0
        %4514 = vmatprep.subr.mxu0 0.0
        %4515 = vmatpush1.msra.mxu0 0.0
        %4516 = vmatprep.subr.mxu0 0.0
        %4517 = vmatpush1.msra.mxu0 0.0
        %4518 = vmatprep.subr.mxu0 0.0
        %4519 = vmatpush1.msra.mxu0 0.0
        %4520 = vmatprep.subr.mxu0 0.0
        %4521 = vmatpush1.msra.mxu0 0.0
        %4522 = vmatprep.mubr.f32.mxu0 0.0
        %4523 = vmatmul.mubr.f32.gmra.mrb[0].mxu0 %v4456
        %v4524 = vpop.f32.mrb[0].mxu0
        %v4525 = vadd.f32 0.0, %v4524
        %v4526 = vpop.f32.mrb[0].mxu0
        %4527 = vdwg.mxu0
        %vm4528 = vcmask 257024
        %v4529 = vsel %vm4528, %v4306, 0.0
        %v4530 = vsel %vm4528, %v4379, 0.0
        %v4531 = vadd.f32 %v4529, %v4530
        %v4532 = vsel %vm4528, %v4452, 0.0
        %v4533 = vadd.f32 %v4531, %v4532
        %v4534 = vsel %vm4528, %v4525, 0.0
        %v4535 = vadd.f32 %v4533, %v4534
        %v4537 = vlaneseq
        %v4538 = vshrl.u32 %v4537, 7
        %v4539 = vsub.s32 0, %v4538
        %v4540 = vrot.slane %v2966, %v4539
        %vm4542 = vcmask 261120
        %v4544 = vsel %vm4542, %v4535, 0
        %4546 = vmatprep.subr.mxu0 0.0
        %4547 = vmatpush1.msra.mxu0 %v2962
        %4548 = vmatprep.subr.mxu0 0.0
        %4549 = vmatpush1.msra.mxu0 %v2963
        %4550 = vmatprep.subr.mxu0 0.0
        %4551 = vmatpush1.msra.mxu0 %v2964
        %4552 = vmatprep.subr.mxu0 0.0
        %4553 = vmatpush1.msra.mxu0 %v2965
        %4554 = vmatprep.subr.mxu0 0.0
        %4555 = vmatpush1.msra.mxu0 0.0
        %4556 = vmatprep.subr.mxu0 0.0
        %4557 = vmatpush1.msra.mxu0 0.0
        %4558 = vmatprep.subr.mxu0 0.0
        %4559 = vmatpush1.msra.mxu0 0.0
        %4560 = vmatprep.subr.mxu0 0.0
        %4561 = vmatpush1.msra.mxu0 0.0
        %4562 = vmatprep.subr.mxu0 0.0
        %4563 = vmatpush1.msra.mxu0 0.0
        %4564 = vmatprep.subr.mxu0 0.0
        %4565 = vmatpush1.msra.mxu0 0.0
        %4566 = vmatprep.subr.mxu0 0.0
        %4567 = vmatpush1.msra.mxu0 0.0
        %4568 = vmatprep.subr.mxu0 0.0
        %4569 = vmatpush1.msra.mxu0 0.0
        %4570 = vmatprep.subr.mxu0 0.0
        %4571 = vmatpush1.msra.mxu0 0.0
        %4572 = vmatprep.subr.mxu0 0.0
        %4573 = vmatpush1.msra.mxu0 0.0
        %4574 = vmatprep.subr.mxu0 0.0
        %4575 = vmatpush1.msra.mxu0 0.0
        %4576 = vmatprep.subr.mxu0 0.0
        %4577 = vmatpush1.msra.mxu0 0.0
        %4578 = vmatprep.subr.mxu0 0.0
        %4579 = vmatpush1.msra.mxu0 0.0
        %4580 = vmatprep.subr.mxu0 0.0
        %4581 = vmatpush1.msra.mxu0 0.0
        %4582 = vmatprep.subr.mxu0 0.0
        %4583 = vmatpush1.msra.mxu0 0.0
        %4584 = vmatprep.subr.mxu0 0.0
        %4585 = vmatpush1.msra.mxu0 0.0
        %4586 = vmatprep.subr.mxu0 0.0
        %4587 = vmatpush1.msra.mxu0 0.0
        %4588 = vmatprep.subr.mxu0 0.0
        %4589 = vmatpush1.msra.mxu0 0.0
        %4590 = vmatprep.subr.mxu0 0.0
        %4591 = vmatpush1.msra.mxu0 0.0
        %4592 = vmatprep.subr.mxu0 0.0
        %4593 = vmatpush1.msra.mxu0 0.0
        %4594 = vmatprep.subr.mxu0 0.0
        %4595 = vmatpush1.msra.mxu0 0.0
        %4596 = vmatprep.subr.mxu0 0.0
        %4597 = vmatpush1.msra.mxu0 0.0
        %4598 = vmatprep.subr.mxu0 0.0
        %4599 = vmatpush1.msra.mxu0 0.0
        %4600 = vmatprep.subr.mxu0 0.0
        %4601 = vmatpush1.msra.mxu0 0.0
        %4602 = vmatprep.subr.mxu0 0.0
        %4603 = vmatpush1.msra.mxu0 0.0
        %4604 = vmatprep.subr.mxu0 0.0
        %4605 = vmatpush1.msra.mxu0 0.0
        %4606 = vmatprep.subr.mxu0 0.0
        %4607 = vmatpush1.msra.mxu0 0.0
        %4608 = vmatprep.subr.mxu0 0.0
        %4609 = vmatpush1.msra.mxu0 0.0
        %4610 = vmatprep.mubr.f32.mxu0 0.0
        %4611 = vmatmul.mubr.f32.gmra.mrb[0].mxu0 %v4544
        %v4612 = vpop.f32.mrb[0].mxu0
        %v4613 = vadd.f32 %v4540, %v4612
        %v4614 = vpop.f32.mrb[0].mxu0
        %4615 = vdwg.mxu0
        %v4616 = vmax.f32 %v4613, 0.0
        %v4617 = vadd.f32 %v4535, %v4616
        %v4618 = vld [vmem:[%s39] sm:$0x1]
        %v4619 = vld [vmem:[%s39 + $0x1] sm:$0x1]
        %v4620 = vld [vmem:[%s39 + $0x2] sm:$0x1]
        %v4621 = vld [vmem:[%s39 + $0x3] sm:$0x1]
        %v4622 = vld [vmem:[%s41] sm:$0xff]
        %v4623 = vld [vmem:[%s41 + $0x8] sm:$0xff]
        %v4624 = vld [vmem:[%s41 + $0x10] sm:$0xff]
        %v4625 = vld [vmem:[%s41 + $0x18] sm:$0xff]
        %v4626 = vld [vmem:[%s41 + $0x20] sm:$0xff]
        %v4627 = vld [vmem:[%s41 + $0x28] sm:$0xff]
        %v4628 = vld [vmem:[%s41 + $0x30] sm:$0xff]
        %v4629 = vld [vmem:[%s41 + $0x38] sm:$0xff]
        %v4630 = vld [vmem:[%s41 + $0x40] sm:$0xff]
        %v4631 = vld [vmem:[%s41 + $0x48] sm:$0xff]
        %v4632 = vld [vmem:[%s41 + $0x50] sm:$0xff]
        %v4633 = vld [vmem:[%s41 + $0x58] sm:$0xff]
        %v4634 = vld [vmem:[%s41 + $0x60] sm:$0xff]
        %v4635 = vld [vmem:[%s41 + $0x68] sm:$0xff]
        %v4636 = vld [vmem:[%s41 + $0x70] sm:$0xff]
        %v4637 = vld [vmem:[%s41 + $0x78] sm:$0xff]
        %v4638 = vld [vmem:[%s43] sm:$0x1]
        %v4639 = vld [vmem:[%s43 + $0x1] sm:$0x1]
        %v4640 = vld [vmem:[%s43 + $0x2] sm:$0x1]
        %v4641 = vld [vmem:[%s43 + $0x3] sm:$0x1]
        %v4642 = vld [vmem:[%s45] sm:$0xff]
        %v4643 = vld [vmem:[%s45 + $0x8] sm:$0xff]
        %v4644 = vld [vmem:[%s45 + $0x10] sm:$0xff]
        %v4645 = vld [vmem:[%s45 + $0x18] sm:$0xff]
        %v4646 = vld [vmem:[%s45 + $0x20] sm:$0xff]
        %v4647 = vld [vmem:[%s45 + $0x28] sm:$0xff]
        %v4648 = vld [vmem:[%s45 + $0x30] sm:$0xff]
        %v4649 = vld [vmem:[%s45 + $0x38] sm:$0xff]
        %v4650 = vld [vmem:[%s45 + $0x40] sm:$0xff]
        %v4651 = vld [vmem:[%s45 + $0x48] sm:$0xff]
        %v4652 = vld [vmem:[%s45 + $0x50] sm:$0xff]
        %v4653 = vld [vmem:[%s45 + $0x58] sm:$0xff]
        %v4654 = vld [vmem:[%s45 + $0x60] sm:$0xff]
        %v4655 = vld [vmem:[%s45 + $0x68] sm:$0xff]
        %v4656 = vld [vmem:[%s45 + $0x70] sm:$0xff]
        %v4657 = vld [vmem:[%s45 + $0x78] sm:$0xff]
        %v4658 = vld [vmem:[%s47] sm:$0x1]
        %v4659 = vld [vmem:[%s47 + $0x1] sm:$0x1]
        %v4660 = vld [vmem:[%s47 + $0x2] sm:$0x1]
        %v4661 = vld [vmem:[%s47 + $0x3] sm:$0x1]
        %v4662 = vld [vmem:[%s49] sm:$0xff]
        %v4663 = vld [vmem:[%s49 + $0x8] sm:$0xff]
        %v4664 = vld [vmem:[%s49 + $0x10] sm:$0xff]
        %v4665 = vld [vmem:[%s49 + $0x18] sm:$0xff]
        %v4666 = vld [vmem:[%s51] sm:$0xff]
        %v4667 = vld [vmem:[%s51 + $0x8] sm:$0xff]
        %v4668 = vld [vmem:[%s51 + $0x10] sm:$0xff]
        %v4669 = vld [vmem:[%s51 + $0x18] sm:$0xff]
        %v4670 = vld [vmem:[%s53] sm:$0x1]
        %v4675 = vlaneseq
        %v4676 = vshrl.u32 %v4675, 7
        %v4677 = vsub.s32 0, %v4676
        %v4678 = vrot.slane %v4638, %v4677
        %v4679 = vlaneseq
        %v4680 = vshrl.u32 %v4679, 7
        %v4681 = vsub.s32 0, %v4680
        %v4682 = vrot.slane %v4639, %v4681
        %v4683 = vlaneseq
        %v4684 = vshrl.u32 %v4683, 7
        %v4685 = vsub.s32 0, %v4684
        %v4686 = vrot.slane %v4640, %v4685
        %v4687 = vlaneseq
        %v4688 = vshrl.u32 %v4687, 7
        %v4689 = vsub.s32 0, %v4688
        %v4690 = vrot.slane %v4641, %v4689
        %v4696 = vsel %vm4542, %v4617, 0
        %4698 = vmatprep.subr.mxu0 0.0
        %4699 = vmatpush1.msra.mxu0 %v4622
        %4700 = vmatprep.subr.mxu0 0.0
        %4701 = vmatpush1.msra.mxu0 %v4623
        %4702 = vmatprep.subr.mxu0 0.0
        %4703 = vmatpush1.msra.mxu0 %v4624
        %4704 = vmatprep.subr.mxu0 0.0
        %4705 = vmatpush1.msra.mxu0 %v4625
        %4706 = vmatprep.subr.mxu0 0.0
        %4707 = vmatpush1.msra.mxu0 0.0
        %4708 = vmatprep.subr.mxu0 0.0
        %4709 = vmatpush1.msra.mxu0 0.0
        %4710 = vmatprep.subr.mxu0 0.0
        %4711 = vmatpush1.msra.mxu0 0.0
        %4712 = vmatprep.subr.mxu0 0.0
        %4713 = vmatpush1.msra.mxu0 0.0
        %4714 = vmatprep.subr.mxu0 0.0
        %4715 = vmatpush1.msra.mxu0 0.0
        %4716 = vmatprep.subr.mxu0 0.0
        %4717 = vmatpush1.msra.mxu0 0.0
        %4718 = vmatprep.subr.mxu0 0.0
        %4719 = vmatpush1.msra.mxu0 0.0
        %4720 = vmatprep.subr.mxu0 0.0
        %4721 = vmatpush1.msra.mxu0 0.0
        %4722 = vmatprep.subr.mxu0 0.0
        %4723 = vmatpush1.msra.mxu0 0.0
        %4724 = vmatprep.subr.mxu0 0.0
        %4725 = vmatpush1.msra.mxu0 0.0
        %4726 = vmatprep.subr.mxu0 0.0
        %4727 = vmatpush1.msra.mxu0 0.0
        %4728 = vmatprep.subr.mxu0 0.0
        %4729 = vmatpush1.msra.mxu0 0.0
        %4730 = vmatprep.subr.mxu0 0.0
        %4731 = vmatpush1.msra.mxu0 0.0
        %4732 = vmatprep.subr.mxu0 0.0
        %4733 = vmatpush1.msra.mxu0 0.0
        %4734 = vmatprep.subr.mxu0 0.0
        %4735 = vmatpush1.msra.mxu0 0.0
        %4736 = vmatprep.subr.mxu0 0.0
        %4737 = vmatpush1.msra.mxu0 0.0
        %4738 = vmatprep.subr.mxu0 0.0
        %4739 = vmatpush1.msra.mxu0 0.0
        %4740 = vmatprep.subr.mxu0 0.0
        %4741 = vmatpush1.msra.mxu0 0.0
        %4742 = vmatprep.subr.mxu0 0.0
        %4743 = vmatpush1.msra.mxu0 0.0
        %4744 = vmatprep.subr.mxu0 0.0
        %4745 = vmatpush1.msra.mxu0 0.0
        %4746 = vmatprep.subr.mxu0 0.0
        %4747 = vmatpush1.msra.mxu0 0.0
        %4748 = vmatprep.subr.mxu0 0.0
        %4749 = vmatpush1.msra.mxu0 0.0
        %4750 = vmatprep.subr.mxu0 0.0
        %4751 = vmatpush1.msra.mxu0 0.0
        %4752 = vmatprep.subr.mxu0 0.0
        %4753 = vmatpush1.msra.mxu0 0.0
        %4754 = vmatprep.subr.mxu0 0.0
        %4755 = vmatpush1.msra.mxu0 0.0
        %4756 = vmatprep.subr.mxu0 0.0
        %4757 = vmatpush1.msra.mxu0 0.0
        %4758 = vmatprep.subr.mxu0 0.0
        %4759 = vmatpush1.msra.mxu0 0.0
        %4760 = vmatprep.subr.mxu0 0.0
        %4761 = vmatpush1.msra.mxu0 0.0
        %4762 = vmatprep.mubr.f32.mxu0 0.0
        %4763 = vmatmul.mubr.f32.gmra.mrb[0].mxu0 %v4696
        %v4764 = vpop.f32.mrb[0].mxu0
        %v4765 = vadd.f32 %v4678, %v4764
        %v4766 = vpop.f32.mrb[0].mxu0
        %4767 = vdwg.mxu0
        %4768 = vmatprep.subr.mxu0 0.0
        %4769 = vmatpush1.msra.mxu0 %v4626
        %4770 = vmatprep.subr.mxu0 0.0
        %4771 = vmatpush1.msra.mxu0 %v4627
        %4772 = vmatprep.subr.mxu0 0.0
        %4773 = vmatpush1.msra.mxu0 %v4628
        %4774 = vmatprep.subr.mxu0 0.0
        %4775 = vmatpush1.msra.mxu0 %v4629
        %4776 = vmatprep.subr.mxu0 0.0
        %4777 = vmatpush1.msra.mxu0 0.0
        %4778 = vmatprep.subr.mxu0 0.0
        %4779 = vmatpush1.msra.mxu0 0.0
        %4780 = vmatprep.subr.mxu0 0.0
        %4781 = vmatpush1.msra.mxu0 0.0
        %4782 = vmatprep.subr.mxu0 0.0
        %4783 = vmatpush1.msra.mxu0 0.0
        %4784 = vmatprep.subr.mxu0 0.0
        %4785 = vmatpush1.msra.mxu0 0.0
        %4786 = vmatprep.subr.mxu0 0.0
        %4787 = vmatpush1.msra.mxu0 0.0
        %4788 = vmatprep.subr.mxu0 0.0
        %4789 = vmatpush1.msra.mxu0 0.0
        %4790 = vmatprep.subr.mxu0 0.0
        %4791 = vmatpush1.msra.mxu0 0.0
        %4792 = vmatprep.subr.mxu0 0.0
        %4793 = vmatpush1.msra.mxu0 0.0
        %4794 = vmatprep.subr.mxu0 0.0
        %4795 = vmatpush1.msra.mxu0 0.0
        %4796 = vmatprep.subr.mxu0 0.0
        %4797 = vmatpush1.msra.mxu0 0.0
        %4798 = vmatprep.subr.mxu0 0.0
        %4799 = vmatpush1.msra.mxu0 0.0
        %4800 = vmatprep.subr.mxu0 0.0
        %4801 = vmatpush1.msra.mxu0 0.0
        %4802 = vmatprep.subr.mxu0 0.0
        %4803 = vmatpush1.msra.mxu0 0.0
        %4804 = vmatprep.subr.mxu0 0.0
        %4805 = vmatpush1.msra.mxu0 0.0
        %4806 = vmatprep.subr.mxu0 0.0
        %4807 = vmatpush1.msra.mxu0 0.0
        %4808 = vmatprep.subr.mxu0 0.0
        %4809 = vmatpush1.msra.mxu0 0.0
        %4810 = vmatprep.subr.mxu0 0.0
        %4811 = vmatpush1.msra.mxu0 0.0
        %4812 = vmatprep.subr.mxu0 0.0
        %4813 = vmatpush1.msra.mxu0 0.0
        %4814 = vmatprep.subr.mxu0 0.0
        %4815 = vmatpush1.msra.mxu0 0.0
        %4816 = vmatprep.subr.mxu0 0.0
        %4817 = vmatpush1.msra.mxu0 0.0
        %4818 = vmatprep.subr.mxu0 0.0
        %4819 = vmatpush1.msra.mxu0 0.0
        %4820 = vmatprep.subr.mxu0 0.0
        %4821 = vmatpush1.msra.mxu0 0.0
        %4822 = vmatprep.subr.mxu0 0.0
        %4823 = vmatpush1.msra.mxu0 0.0
        %4824 = vmatprep.subr.mxu0 0.0
        %4825 = vmatpush1.msra.mxu0 0.0
        %4826 = vmatprep.subr.mxu0 0.0
        %4827 = vmatpush1.msra.mxu0 0.0
        %4828 = vmatprep.subr.mxu0 0.0
        %4829 = vmatpush1.msra.mxu0 0.0
        %4830 = vmatprep.subr.mxu0 0.0
        %4831 = vmatpush1.msra.mxu0 0.0
        %4832 = vmatprep.mubr.f32.mxu0 0.0
        %4833 = vmatmul.mubr.f32.gmra.mrb[0].mxu0 %v4696
        %v4834 = vpop.f32.mrb[0].mxu0
        %v4835 = vadd.f32 %v4682, %v4834
        %v4836 = vpop.f32.mrb[0].mxu0
        %4837 = vdwg.mxu0
        %4838 = vmatprep.subr.mxu0 0.0
        %4839 = vmatpush1.msra.mxu0 %v4630
        %4840 = vmatprep.subr.mxu0 0.0
        %4841 = vmatpush1.msra.mxu0 %v4631
        %4842 = vmatprep.subr.mxu0 0.0
        %4843 = vmatpush1.msra.mxu0 %v4632
        %4844 = vmatprep.subr.mxu0 0.0
        %4845 = vmatpush1.msra.mxu0 %v4633
        %4846 = vmatprep.subr.mxu0 0.0
        %4847 = vmatpush1.msra.mxu0 0.0
        %4848 = vmatprep.subr.mxu0 0.0
        %4849 = vmatpush1.msra.mxu0 0.0
        %4850 = vmatprep.subr.mxu0 0.0
        %4851 = vmatpush1.msra.mxu0 0.0
        %4852 = vmatprep.subr.mxu0 0.0
        %4853 = vmatpush1.msra.mxu0 0.0
        %4854 = vmatprep.subr.mxu0 0.0
        %4855 = vmatpush1.msra.mxu0 0.0
        %4856 = vmatprep.subr.mxu0 0.0
        %4857 = vmatpush1.msra.mxu0 0.0
        %4858 = vmatprep.subr.mxu0 0.0
        %4859 = vmatpush1.msra.mxu0 0.0
        %4860 = vmatprep.subr.mxu0 0.0
        %4861 = vmatpush1.msra.mxu0 0.0
        %4862 = vmatprep.subr.mxu0 0.0
        %4863 = vmatpush1.msra.mxu0 0.0
        %4864 = vmatprep.subr.mxu0 0.0
        %4865 = vmatpush1.msra.mxu0 0.0
        %4866 = vmatprep.subr.mxu0 0.0
        %4867 = vmatpush1.msra.mxu0 0.0
        %4868 = vmatprep.subr.mxu0 0.0
        %4869 = vmatpush1.msra.mxu0 0.0
        %4870 = vmatprep.subr.mxu0 0.0
        %4871 = vmatpush1.msra.mxu0 0.0
        %4872 = vmatprep.subr.mxu0 0.0
        %4873 = vmatpush1.msra.mxu0 0.0
        %4874 = vmatprep.subr.mxu0 0.0
        %4875 = vmatpush1.msra.mxu0 0.0
        %4876 = vmatprep.subr.mxu0 0.0
        %4877 = vmatpush1.msra.mxu0 0.0
        %4878 = vmatprep.subr.mxu0 0.0
        %4879 = vmatpush1.msra.mxu0 0.0
        %4880 = vmatprep.subr.mxu0 0.0
        %4881 = vmatpush1.msra.mxu0 0.0
        %4882 = vmatprep.subr.mxu0 0.0
        %4883 = vmatpush1.msra.mxu0 0.0
        %4884 = vmatprep.subr.mxu0 0.0
        %4885 = vmatpush1.msra.mxu0 0.0
        %4886 = vmatprep.subr.mxu0 0.0
        %4887 = vmatpush1.msra.mxu0 0.0
        %4888 = vmatprep.subr.mxu0 0.0
        %4889 = vmatpush1.msra.mxu0 0.0
        %4890 = vmatprep.subr.mxu0 0.0
        %4891 = vmatpush1.msra.mxu0 0.0
        %4892 = vmatprep.subr.mxu0 0.0
        %4893 = vmatpush1.msra.mxu0 0.0
        %4894 = vmatprep.subr.mxu0 0.0
        %4895 = vmatpush1.msra.mxu0 0.0
        %4896 = vmatprep.subr.mxu0 0.0
        %4897 = vmatpush1.msra.mxu0 0.0
        %4898 = vmatprep.subr.mxu0 0.0
        %4899 = vmatpush1.msra.mxu0 0.0
        %4900 = vmatprep.subr.mxu0 0.0
        %4901 = vmatpush1.msra.mxu0 0.0
        %4902 = vmatprep.mubr.f32.mxu0 0.0
        %4903 = vmatmul.mubr.f32.gmra.mrb[0].mxu0 %v4696
        %v4904 = vpop.f32.mrb[0].mxu0
        %v4905 = vadd.f32 %v4686, %v4904
        %v4906 = vpop.f32.mrb[0].mxu0
        %4907 = vdwg.mxu0
        %4908 = vmatprep.subr.mxu0 0.0
        %4909 = vmatpush1.msra.mxu0 %v4634
        %4910 = vmatprep.subr.mxu0 0.0
        %4911 = vmatpush1.msra.mxu0 %v4635
        %4912 = vmatprep.subr.mxu0 0.0
        %4913 = vmatpush1.msra.mxu0 %v4636
        %4914 = vmatprep.subr.mxu0 0.0
        %4915 = vmatpush1.msra.mxu0 %v4637
        %4916 = vmatprep.subr.mxu0 0.0
        %4917 = vmatpush1.msra.mxu0 0.0
        %4918 = vmatprep.subr.mxu0 0.0
        %4919 = vmatpush1.msra.mxu0 0.0
        %4920 = vmatprep.subr.mxu0 0.0
        %4921 = vmatpush1.msra.mxu0 0.0
        %4922 = vmatprep.subr.mxu0 0.0
        %4923 = vmatpush1.msra.mxu0 0.0
        %4924 = vmatprep.subr.mxu0 0.0
        %4925 = vmatpush1.msra.mxu0 0.0
        %4926 = vmatprep.subr.mxu0 0.0
        %4927 = vmatpush1.msra.mxu0 0.0
        %4928 = vmatprep.subr.mxu0 0.0
        %4929 = vmatpush1.msra.mxu0 0.0
        %4930 = vmatprep.subr.mxu0 0.0
        %4931 = vmatpush1.msra.mxu0 0.0
        %4932 = vmatprep.subr.mxu0 0.0
        %4933 = vmatpush1.msra.mxu0 0.0
        %4934 = vmatprep.subr.mxu0 0.0
        %4935 = vmatpush1.msra.mxu0 0.0
        %4936 = vmatprep.subr.mxu0 0.0
        %4937 = vmatpush1.msra.mxu0 0.0
        %4938 = vmatprep.subr.mxu0 0.0
        %4939 = vmatpush1.msra.mxu0 0.0
        %4940 = vmatprep.subr.mxu0 0.0
        %4941 = vmatpush1.msra.mxu0 0.0
        %4942 = vmatprep.subr.mxu0 0.0
        %4943 = vmatpush1.msra.mxu0 0.0
        %4944 = vmatprep.subr.mxu0 0.0
        %4945 = vmatpush1.msra.mxu0 0.0
        %4946 = vmatprep.subr.mxu0 0.0
        %4947 = vmatpush1.msra.mxu0 0.0
        %4948 = vmatprep.subr.mxu0 0.0
        %4949 = vmatpush1.msra.mxu0 0.0
        %4950 = vmatprep.subr.mxu0 0.0
        %4951 = vmatpush1.msra.mxu0 0.0
        %4952 = vmatprep.subr.mxu0 0.0
        %4953 = vmatpush1.msra.mxu0 0.0
        %4954 = vmatprep.subr.mxu0 0.0
        %4955 = vmatpush1.msra.mxu0 0.0
        %4956 = vmatprep.subr.mxu0 0.0
        %4957 = vmatpush1.msra.mxu0 0.0
        %4958 = vmatprep.subr.mxu0 0.0
        %4959 = vmatpush1.msra.mxu0 0.0
        %4960 = vmatprep.subr.mxu0 0.0
        %4961 = vmatpush1.msra.mxu0 0.0
        %4962 = vmatprep.subr.mxu0 0.0
        %4963 = vmatpush1.msra.mxu0 0.0
        %4964 = vmatprep.subr.mxu0 0.0
        %4965 = vmatpush1.msra.mxu0 0.0
        %4966 = vmatprep.subr.mxu0 0.0
        %4967 = vmatpush1.msra.mxu0 0.0
        %4968 = vmatprep.subr.mxu0 0.0
        %4969 = vmatpush1.msra.mxu0 0.0
        %4970 = vmatprep.subr.mxu0 0.0
        %4971 = vmatpush1.msra.mxu0 0.0
        %4972 = vmatprep.mubr.f32.mxu0 0.0
        %4973 = vmatmul.mubr.f32.gmra.mrb[0].mxu0 %v4696
        %v4974 = vpop.f32.mrb[0].mxu0
        %v4975 = vadd.f32 %v4690, %v4974
        %v4976 = vpop.f32.mrb[0].mxu0
        %4977 = vdwg.mxu0
        %v4982 = vlaneseq
        %v4983 = vshrl.u32 %v4982, 7
        %v4984 = vsub.s32 0, %v4983
        %v4985 = vrot.slane %v4658, %v4984
        %v4986 = vlaneseq
        %v4987 = vshrl.u32 %v4986, 7
        %v4988 = vsub.s32 0, %v4987
        %v4989 = vrot.slane %v4659, %v4988
        %v4990 = vlaneseq
        %v4991 = vshrl.u32 %v4990, 7
        %v4992 = vsub.s32 0, %v4991
        %v4993 = vrot.slane %v4660, %v4992
        %v4994 = vlaneseq
        %v4995 = vshrl.u32 %v4994, 7
        %v4996 = vsub.s32 0, %v4995
        %v4997 = vrot.slane %v4661, %v4996
        %5002 = vmatprep.subr.mxu0 0.0
        %5003 = vmatpush1.msra.mxu0 %v4642
        %5004 = vmatprep.subr.mxu0 0.0
        %5005 = vmatpush1.msra.mxu0 %v4643
        %5006 = vmatprep.subr.mxu0 0.0
        %5007 = vmatpush1.msra.mxu0 %v4644
        %5008 = vmatprep.subr.mxu0 0.0
        %5009 = vmatpush1.msra.mxu0 %v4645
        %5010 = vmatprep.subr.mxu0 0.0
        %5011 = vmatpush1.msra.mxu0 0.0
        %5012 = vmatprep.subr.mxu0 0.0
        %5013 = vmatpush1.msra.mxu0 0.0
        %5014 = vmatprep.subr.mxu0 0.0
        %5015 = vmatpush1.msra.mxu0 0.0
        %5016 = vmatprep.subr.mxu0 0.0
        %5017 = vmatpush1.msra.mxu0 0.0
        %5018 = vmatprep.subr.mxu0 0.0
        %5019 = vmatpush1.msra.mxu0 0.0
        %5020 = vmatprep.subr.mxu0 0.0
        %5021 = vmatpush1.msra.mxu0 0.0
        %5022 = vmatprep.subr.mxu0 0.0
        %5023 = vmatpush1.msra.mxu0 0.0
        %5024 = vmatprep.subr.mxu0 0.0
        %5025 = vmatpush1.msra.mxu0 0.0
        %5026 = vmatprep.subr.mxu0 0.0
        %5027 = vmatpush1.msra.mxu0 0.0
        %5028 = vmatprep.subr.mxu0 0.0
        %5029 = vmatpush1.msra.mxu0 0.0
        %5030 = vmatprep.subr.mxu0 0.0
        %5031 = vmatpush1.msra.mxu0 0.0
        %5032 = vmatprep.subr.mxu0 0.0
        %5033 = vmatpush1.msra.mxu0 0.0
        %5034 = vmatprep.subr.mxu0 0.0
        %5035 = vmatpush1.msra.mxu0 0.0
        %5036 = vmatprep.subr.mxu0 0.0
        %5037 = vmatpush1.msra.mxu0 0.0
        %5038 = vmatprep.subr.mxu0 0.0
        %5039 = vmatpush1.msra.mxu0 0.0
        %5040 = vmatprep.subr.mxu0 0.0
        %5041 = vmatpush1.msra.mxu0 0.0
        %5042 = vmatprep.subr.mxu0 0.0
        %5043 = vmatpush1.msra.mxu0 0.0
        %5044 = vmatprep.subr.mxu0 0.0
        %5045 = vmatpush1.msra.mxu0 0.0
        %5046 = vmatprep.subr.mxu0 0.0
        %5047 = vmatpush1.msra.mxu0 0.0
        %5048 = vmatprep.subr.mxu0 0.0
        %5049 = vmatpush1.msra.mxu0 0.0
        %5050 = vmatprep.subr.mxu0 0.0
        %5051 = vmatpush1.msra.mxu0 0.0
        %5052 = vmatprep.subr.mxu0 0.0
        %5053 = vmatpush1.msra.mxu0 0.0
        %5054 = vmatprep.subr.mxu0 0.0
        %5055 = vmatpush1.msra.mxu0 0.0
        %5056 = vmatprep.subr.mxu0 0.0
        %5057 = vmatpush1.msra.mxu0 0.0
        %5058 = vmatprep.subr.mxu0 0.0
        %5059 = vmatpush1.msra.mxu0 0.0
        %5060 = vmatprep.subr.mxu0 0.0
        %5061 = vmatpush1.msra.mxu0 0.0
        %5062 = vmatprep.subr.mxu0 0.0
        %5063 = vmatpush1.msra.mxu0 0.0
        %5064 = vmatprep.subr.mxu0 0.0
        %5065 = vmatpush1.msra.mxu0 0.0
        %5066 = vmatprep.mubr.f32.mxu0 0.0
        %5067 = vmatmul.mubr.f32.gmra.mrb[0].mxu0 %v4696
        %v5068 = vpop.f32.mrb[0].mxu0
        %v5069 = vadd.f32 %v4985, %v5068
        %v5070 = vpop.f32.mrb[0].mxu0
        %5071 = vdwg.mxu0
        %5072 = vmatprep.subr.mxu0 0.0
        %5073 = vmatpush1.msra.mxu0 %v4646
        %5074 = vmatprep.subr.mxu0 0.0
        %5075 = vmatpush1.msra.mxu0 %v4647
        %5076 = vmatprep.subr.mxu0 0.0
        %5077 = vmatpush1.msra.mxu0 %v4648
        %5078 = vmatprep.subr.mxu0 0.0
        %5079 = vmatpush1.msra.mxu0 %v4649
        %5080 = vmatprep.subr.mxu0 0.0
        %5081 = vmatpush1.msra.mxu0 0.0
        %5082 = vmatprep.subr.mxu0 0.0
        %5083 = vmatpush1.msra.mxu0 0.0
        %5084 = vmatprep.subr.mxu0 0.0
        %5085 = vmatpush1.msra.mxu0 0.0
        %5086 = vmatprep.subr.mxu0 0.0
        %5087 = vmatpush1.msra.mxu0 0.0
        %5088 = vmatprep.subr.mxu0 0.0
        %5089 = vmatpush1.msra.mxu0 0.0
        %5090 = vmatprep.subr.mxu0 0.0
        %5091 = vmatpush1.msra.mxu0 0.0
        %5092 = vmatprep.subr.mxu0 0.0
        %5093 = vmatpush1.msra.mxu0 0.0
        %5094 = vmatprep.subr.mxu0 0.0
        %5095 = vmatpush1.msra.mxu0 0.0
        %5096 = vmatprep.subr.mxu0 0.0
        %5097 = vmatpush1.msra.mxu0 0.0
        %5098 = vmatprep.subr.mxu0 0.0
        %5099 = vmatpush1.msra.mxu0 0.0
        %5100 = vmatprep.subr.mxu0 0.0
        %5101 = vmatpush1.msra.mxu0 0.0
        %5102 = vmatprep.subr.mxu0 0.0
        %5103 = vmatpush1.msra.mxu0 0.0
        %5104 = vmatprep.subr.mxu0 0.0
        %5105 = vmatpush1.msra.mxu0 0.0
        %5106 = vmatprep.subr.mxu0 0.0
        %5107 = vmatpush1.msra.mxu0 0.0
        %5108 = vmatprep.subr.mxu0 0.0
        %5109 = vmatpush1.msra.mxu0 0.0
        %5110 = vmatprep.subr.mxu0 0.0
        %5111 = vmatpush1.msra.mxu0 0.0
        %5112 = vmatprep.subr.mxu0 0.0
        %5113 = vmatpush1.msra.mxu0 0.0
        %5114 = vmatprep.subr.mxu0 0.0
        %5115 = vmatpush1.msra.mxu0 0.0
        %5116 = vmatprep.subr.mxu0 0.0
        %5117 = vmatpush1.msra.mxu0 0.0
        %5118 = vmatprep.subr.mxu0 0.0
        %5119 = vmatpush1.msra.mxu0 0.0
        %5120 = vmatprep.subr.mxu0 0.0
        %5121 = vmatpush1.msra.mxu0 0.0
        %5122 = vmatprep.subr.mxu0 0.0
        %5123 = vmatpush1.msra.mxu0 0.0
        %5124 = vmatprep.subr.mxu0 0.0
        %5125 = vmatpush1.msra.mxu0 0.0
        %5126 = vmatprep.subr.mxu0 0.0
        %5127 = vmatpush1.msra.mxu0 0.0
        %5128 = vmatprep.subr.mxu0 0.0
        %5129 = vmatpush1.msra.mxu0 0.0
        %5130 = vmatprep.subr.mxu0 0.0
        %5131 = vmatpush1.msra.mxu0 0.0
        %5132 = vmatprep.subr.mxu0 0.0
        %5133 = vmatpush1.msra.mxu0 0.0
        %5134 = vmatprep.subr.mxu0 0.0
        %5135 = vmatpush1.msra.mxu0 0.0
        %5136 = vmatprep.mubr.f32.mxu0 0.0
        %5137 = vmatmul.mubr.f32.gmra.mrb[0].mxu0 %v4696
        %v5138 = vpop.f32.mrb[0].mxu0
        %v5139 = vadd.f32 %v4989, %v5138
        %v5140 = vpop.f32.mrb[0].mxu0
        %5141 = vdwg.mxu0
        %5142 = vmatprep.subr.mxu0 0.0
        %5143 = vmatpush1.msra.mxu0 %v4650
        %5144 = vmatprep.subr.mxu0 0.0
        %5145 = vmatpush1.msra.mxu0 %v4651
        %5146 = vmatprep.subr.mxu0 0.0
        %5147 = vmatpush1.msra.mxu0 %v4652
        %5148 = vmatprep.subr.mxu0 0.0
        %5149 = vmatpush1.msra.mxu0 %v4653
        %5150 = vmatprep.subr.mxu0 0.0
        %5151 = vmatpush1.msra.mxu0 0.0
        %5152 = vmatprep.subr.mxu0 0.0
        %5153 = vmatpush1.msra.mxu0 0.0
        %5154 = vmatprep.subr.mxu0 0.0
        %5155 = vmatpush1.msra.mxu0 0.0
        %5156 = vmatprep.subr.mxu0 0.0
        %5157 = vmatpush1.msra.mxu0 0.0
        %5158 = vmatprep.subr.mxu0 0.0
        %5159 = vmatpush1.msra.mxu0 0.0
        %5160 = vmatprep.subr.mxu0 0.0
        %5161 = vmatpush1.msra.mxu0 0.0
        %5162 = vmatprep.subr.mxu0 0.0
        %5163 = vmatpush1.msra.mxu0 0.0
        %5164 = vmatprep.subr.mxu0 0.0
        %5165 = vmatpush1.msra.mxu0 0.0
        %5166 = vmatprep.subr.mxu0 0.0
        %5167 = vmatpush1.msra.mxu0 0.0
        %5168 = vmatprep.subr.mxu0 0.0
        %5169 = vmatpush1.msra.mxu0 0.0
        %5170 = vmatprep.subr.mxu0 0.0
        %5171 = vmatpush1.msra.mxu0 0.0
        %5172 = vmatprep.subr.mxu0 0.0
        %5173 = vmatpush1.msra.mxu0 0.0
        %5174 = vmatprep.subr.mxu0 0.0
        %5175 = vmatpush1.msra.mxu0 0.0
        %5176 = vmatprep.subr.mxu0 0.0
        %5177 = vmatpush1.msra.mxu0 0.0
        %5178 = vmatprep.subr.mxu0 0.0
        %5179 = vmatpush1.msra.mxu0 0.0
        %5180 = vmatprep.subr.mxu0 0.0
        %5181 = vmatpush1.msra.mxu0 0.0
        %5182 = vmatprep.subr.mxu0 0.0
        %5183 = vmatpush1.msra.mxu0 0.0
        %5184 = vmatprep.subr.mxu0 0.0
        %5185 = vmatpush1.msra.mxu0 0.0
        %5186 = vmatprep.subr.mxu0 0.0
        %5187 = vmatpush1.msra.mxu0 0.0
        %5188 = vmatprep.subr.mxu0 0.0
        %5189 = vmatpush1.msra.mxu0 0.0
        %5190 = vmatprep.subr.mxu0 0.0
        %5191 = vmatpush1.msra.mxu0 0.0
        %5192 = vmatprep.subr.mxu0 0.0
        %5193 = vmatpush1.msra.mxu0 0.0
        %5194 = vmatprep.subr.mxu0 0.0
        %5195 = vmatpush1.msra.mxu0 0.0
        %5196 = vmatprep.subr.mxu0 0.0
        %5197 = vmatpush1.msra.mxu0 0.0
        %5198 = vmatprep.subr.mxu0 0.0
        %5199 = vmatpush1.msra.mxu0 0.0
        %5200 = vmatprep.subr.mxu0 0.0
        %5201 = vmatpush1.msra.mxu0 0.0
        %5202 = vmatprep.subr.mxu0 0.0
        %5203 = vmatpush1.msra.mxu0 0.0
        %5204 = vmatprep.subr.mxu0 0.0
        %5205 = vmatpush1.msra.mxu0 0.0
        %5206 = vmatprep.mubr.f32.mxu0 0.0
        %5207 = vmatmul.mubr.f32.gmra.mrb[0].mxu0 %v4696
        %v5208 = vpop.f32.mrb[0].mxu0
        %v5209 = vadd.f32 %v4993, %v5208
        %v5210 = vpop.f32.mrb[0].mxu0
        %5211 = vdwg.mxu0
        %5212 = vmatprep.subr.mxu0 0.0
        %5213 = vmatpush1.msra.mxu0 %v4654
        %5214 = vmatprep.subr.mxu0 0.0
        %5215 = vmatpush1.msra.mxu0 %v4655
        %5216 = vmatprep.subr.mxu0 0.0
        %5217 = vmatpush1.msra.mxu0 %v4656
        %5218 = vmatprep.subr.mxu0 0.0
        %5219 = vmatpush1.msra.mxu0 %v4657
        %5220 = vmatprep.subr.mxu0 0.0
        %5221 = vmatpush1.msra.mxu0 0.0
        %5222 = vmatprep.subr.mxu0 0.0
        %5223 = vmatpush1.msra.mxu0 0.0
        %5224 = vmatprep.subr.mxu0 0.0
        %5225 = vmatpush1.msra.mxu0 0.0
        %5226 = vmatprep.subr.mxu0 0.0
        %5227 = vmatpush1.msra.mxu0 0.0
        %5228 = vmatprep.subr.mxu0 0.0
        %5229 = vmatpush1.msra.mxu0 0.0
        %5230 = vmatprep.subr.mxu0 0.0
        %5231 = vmatpush1.msra.mxu0 0.0
        %5232 = vmatprep.subr.mxu0 0.0
        %5233 = vmatpush1.msra.mxu0 0.0
        %5234 = vmatprep.subr.mxu0 0.0
        %5235 = vmatpush1.msra.mxu0 0.0
        %5236 = vmatprep.subr.mxu0 0.0
        %5237 = vmatpush1.msra.mxu0 0.0
        %5238 = vmatprep.subr.mxu0 0.0
        %5239 = vmatpush1.msra.mxu0 0.0
        %5240 = vmatprep.subr.mxu0 0.0
        %5241 = vmatpush1.msra.mxu0 0.0
        %5242 = vmatprep.subr.mxu0 0.0
        %5243 = vmatpush1.msra.mxu0 0.0
        %5244 = vmatprep.subr.mxu0 0.0
        %5245 = vmatpush1.msra.mxu0 0.0
        %5246 = vmatprep.subr.mxu0 0.0
        %5247 = vmatpush1.msra.mxu0 0.0
        %5248 = vmatprep.subr.mxu0 0.0
        %5249 = vmatpush1.msra.mxu0 0.0
        %5250 = vmatprep.subr.mxu0 0.0
        %5251 = vmatpush1.msra.mxu0 0.0
        %5252 = vmatprep.subr.mxu0 0.0
        %5253 = vmatpush1.msra.mxu0 0.0
        %5254 = vmatprep.subr.mxu0 0.0
        %5255 = vmatpush1.msra.mxu0 0.0
        %5256 = vmatprep.subr.mxu0 0.0
        %5257 = vmatpush1.msra.mxu0 0.0
        %5258 = vmatprep.subr.mxu0 0.0
        %5259 = vmatpush1.msra.mxu0 0.0
        %5260 = vmatprep.subr.mxu0 0.0
        %5261 = vmatpush1.msra.mxu0 0.0
        %5262 = vmatprep.subr.mxu0 0.0
        %5263 = vmatpush1.msra.mxu0 0.0
        %5264 = vmatprep.subr.mxu0 0.0
        %5265 = vmatpush1.msra.mxu0 0.0
        %5266 = vmatprep.subr.mxu0 0.0
        %5267 = vmatpush1.msra.mxu0 0.0
        %5268 = vmatprep.subr.mxu0 0.0
        %5269 = vmatpush1.msra.mxu0 0.0
        %5270 = vmatprep.subr.mxu0 0.0
        %5271 = vmatpush1.msra.mxu0 0.0
        %5272 = vmatprep.subr.mxu0 0.0
        %5273 = vmatpush1.msra.mxu0 0.0
        %5274 = vmatprep.subr.mxu0 0.0
        %5275 = vmatpush1.msra.mxu0 0.0
        %5276 = vmatprep.mubr.f32.mxu0 0.0
        %5277 = vmatmul.mubr.f32.gmra.mrb[0].mxu0 %v4696
        %v5278 = vpop.f32.mrb[0].mxu0
        %v5279 = vadd.f32 %v4997, %v5278
        %v5280 = vpop.f32.mrb[0].mxu0
        %5281 = vdwg.mxu0
        %v5283 = vsel %vm1924, %v4618, 0
        %v5286 = vsel %vm1924, %v4765, 0
        %5288 = vmatprep.subr.mxu0 0.0
        %5289 = vmatpush1.xpose.msra.mxu0 %v5286
        %5290 = vmatprep.subr.mxu0 0.0
        %5291 = vmatpush1.xpose.msra.mxu0 0.0
        %5292 = vmatprep.subr.mxu0 0.0
        %5293 = vmatpush1.xpose.msra.mxu0 0.0
        %5294 = vmatprep.subr.mxu0 0.0
        %5295 = vmatpush1.xpose.msra.mxu0 0.0
        %5296 = vmatprep.subr.mxu0 0.0
        %5297 = vmatpush1.xpose.msra.mxu0 0.0
        %5298 = vmatprep.subr.mxu0 0.0
        %5299 = vmatpush1.xpose.msra.mxu0 0.0
        %5300 = vmatprep.subr.mxu0 0.0
        %5301 = vmatpush1.xpose.msra.mxu0 0.0
        %5302 = vmatprep.subr.mxu0 0.0
        %5303 = vmatpush1.xpose.msra.mxu0 0.0
        %5304 = vmatprep.subr.mxu0 0.0
        %5305 = vmatpush1.xpose.msra.mxu0 0.0
        %5306 = vmatprep.subr.mxu0 0.0
        %5307 = vmatpush1.xpose.msra.mxu0 0.0
        %5308 = vmatprep.subr.mxu0 0.0
        %5309 = vmatpush1.xpose.msra.mxu0 0.0
        %5310 = vmatprep.subr.mxu0 0.0
        %5311 = vmatpush1.xpose.msra.mxu0 0.0
        %5312 = vmatprep.subr.mxu0 0.0
        %5313 = vmatpush1.xpose.msra.mxu0 0.0
        %5314 = vmatprep.subr.mxu0 0.0
        %5315 = vmatpush1.xpose.msra.mxu0 0.0
        %5316 = vmatprep.subr.mxu0 0.0
        %5317 = vmatpush1.xpose.msra.mxu0 0.0
        %5318 = vmatprep.subr.mxu0 0.0
        %5319 = vmatpush1.xpose.msra.mxu0 0.0
        %5320 = vmatprep.subr.mxu0 0.0
        %5321 = vmatpush1.xpose.msra.mxu0 0.0
        %5322 = vmatprep.subr.mxu0 0.0
        %5323 = vmatpush1.xpose.msra.mxu0 0.0
        %5324 = vmatprep.subr.mxu0 0.0
        %5325 = vmatpush1.xpose.msra.mxu0 0.0
        %5326 = vmatprep.subr.mxu0 0.0
        %5327 = vmatpush1.xpose.msra.mxu0 0.0
        %5328 = vmatprep.subr.mxu0 0.0
        %5329 = vmatpush1.xpose.msra.mxu0 0.0
        %5330 = vmatprep.subr.mxu0 0.0
        %5331 = vmatpush1.xpose.msra.mxu0 0.0
        %5332 = vmatprep.subr.mxu0 0.0
        %5333 = vmatpush1.xpose.msra.mxu0 0.0
        %5334 = vmatprep.subr.mxu0 0.0
        %5335 = vmatpush1.xpose.msra.mxu0 0.0
        %5336 = vmatprep.subr.mxu0 0.0
        %5337 = vmatpush1.xpose.msra.mxu0 0.0
        %5338 = vmatprep.subr.mxu0 0.0
        %5339 = vmatpush1.xpose.msra.mxu0 0.0
        %5340 = vmatprep.subr.mxu0 0.0
        %5341 = vmatpush1.xpose.msra.mxu0 0.0
        %5342 = vmatprep.subr.mxu0 0.0
        %5343 = vmatpush1.xpose.msra.mxu0 0.0
        %5344 = vmatprep.subr.mxu0 0.0
        %5345 = vmatpush1.xpose.msra.mxu0 0.0
        %5346 = vmatprep.subr.mxu0 0.0
        %5347 = vmatpush1.xpose.msra.mxu0 0.0
        %5348 = vmatprep.subr.mxu0 0.0
        %5349 = vmatpush1.xpose.msra.mxu0 0.0
        %5350 = vmatprep.subr.mxu0 0.0
        %5351 = vmatpush1.xpose.msra.mxu0 0.0
        %5352 = vmatprep.mubr.f32.mxu0 0.0
        %5353 = vmatmul.mubr.f32.gmra.mrb[0].mxu0 %v5283
        %v5354 = vpop.f32.mrb[0].mxu0
        %v5355 = vadd.f32 0.0, %v5354
        %v5356 = vpop.f32.mrb[0].mxu0
        %5357 = vdwg.mxu0
        %v5359 = vsel %vm1924, %v4619, 0
        %v5362 = vsel %vm1924, %v4835, 0
        %5364 = vmatprep.subr.mxu0 0.0
        %5365 = vmatpush1.xpose.msra.mxu0 %v5362
        %5366 = vmatprep.subr.mxu0 0.0
        %5367 = vmatpush1.xpose.msra.mxu0 0.0
        %5368 = vmatprep.subr.mxu0 0.0
        %5369 = vmatpush1.xpose.msra.mxu0 0.0
        %5370 = vmatprep.subr.mxu0 0.0
        %5371 = vmatpush1.xpose.msra.mxu0 0.0
        %5372 = vmatprep.subr.mxu0 0.0
        %5373 = vmatpush1.xpose.msra.mxu0 0.0
        %5374 = vmatprep.subr.mxu0 0.0
        %5375 = vmatpush1.xpose.msra.mxu0 0.0
        %5376 = vmatprep.subr.mxu0 0.0
        %5377 = vmatpush1.xpose.msra.mxu0 0.0
        %5378 = vmatprep.subr.mxu0 0.0
        %5379 = vmatpush1.xpose.msra.mxu0 0.0
        %5380 = vmatprep.subr.mxu0 0.0
        %5381 = vmatpush1.xpose.msra.mxu0 0.0
        %5382 = vmatprep.subr.mxu0 0.0
        %5383 = vmatpush1.xpose.msra.mxu0 0.0
        %5384 = vmatprep.subr.mxu0 0.0
        %5385 = vmatpush1.xpose.msra.mxu0 0.0
        %5386 = vmatprep.subr.mxu0 0.0
        %5387 = vmatpush1.xpose.msra.mxu0 0.0
        %5388 = vmatprep.subr.mxu0 0.0
        %5389 = vmatpush1.xpose.msra.mxu0 0.0
        %5390 = vmatprep.subr.mxu0 0.0
        %5391 = vmatpush1.xpose.msra.mxu0 0.0
        %5392 = vmatprep.subr.mxu0 0.0
        %5393 = vmatpush1.xpose.msra.mxu0 0.0
        %5394 = vmatprep.subr.mxu0 0.0
        %5395 = vmatpush1.xpose.msra.mxu0 0.0
        %5396 = vmatprep.subr.mxu0 0.0
        %5397 = vmatpush1.xpose.msra.mxu0 0.0
        %5398 = vmatprep.subr.mxu0 0.0
        %5399 = vmatpush1.xpose.msra.mxu0 0.0
        %5400 = vmatprep.subr.mxu0 0.0
        %5401 = vmatpush1.xpose.msra.mxu0 0.0
        %5402 = vmatprep.subr.mxu0 0.0
        %5403 = vmatpush1.xpose.msra.mxu0 0.0
        %5404 = vmatprep.subr.mxu0 0.0
        %5405 = vmatpush1.xpose.msra.mxu0 0.0
        %5406 = vmatprep.subr.mxu0 0.0
        %5407 = vmatpush1.xpose.msra.mxu0 0.0
        %5408 = vmatprep.subr.mxu0 0.0
        %5409 = vmatpush1.xpose.msra.mxu0 0.0
        %5410 = vmatprep.subr.mxu0 0.0
        %5411 = vmatpush1.xpose.msra.mxu0 0.0
        %5412 = vmatprep.subr.mxu0 0.0
        %5413 = vmatpush1.xpose.msra.mxu0 0.0
        %5414 = vmatprep.subr.mxu0 0.0
        %5415 = vmatpush1.xpose.msra.mxu0 0.0
        %5416 = vmatprep.subr.mxu0 0.0
        %5417 = vmatpush1.xpose.msra.mxu0 0.0
        %5418 = vmatprep.subr.mxu0 0.0
        %5419 = vmatpush1.xpose.msra.mxu0 0.0
        %5420 = vmatprep.subr.mxu0 0.0
        %5421 = vmatpush1.xpose.msra.mxu0 0.0
        %5422 = vmatprep.subr.mxu0 0.0
        %5423 = vmatpush1.xpose.msra.mxu0 0.0
        %5424 = vmatprep.subr.mxu0 0.0
        %5425 = vmatpush1.xpose.msra.mxu0 0.0
        %5426 = vmatprep.subr.mxu0 0.0
        %5427 = vmatpush1.xpose.msra.mxu0 0.0
        %5428 = vmatprep.mubr.f32.mxu0 0.0
        %5429 = vmatmul.mubr.f32.gmra.mrb[0].mxu0 %v5359
        %v5430 = vpop.f32.mrb[0].mxu0
        %v5431 = vadd.f32 0.0, %v5430
        %v5432 = vpop.f32.mrb[0].mxu0
        %5433 = vdwg.mxu0
        %v5435 = vsel %vm1924, %v4620, 0
        %v5438 = vsel %vm1924, %v4905, 0
        %5440 = vmatprep.subr.mxu0 0.0
        %5441 = vmatpush1.xpose.msra.mxu0 %v5438
        %5442 = vmatprep.subr.mxu0 0.0
        %5443 = vmatpush1.xpose.msra.mxu0 0.0
        %5444 = vmatprep.subr.mxu0 0.0
        %5445 = vmatpush1.xpose.msra.mxu0 0.0
        %5446 = vmatprep.subr.mxu0 0.0
        %5447 = vmatpush1.xpose.msra.mxu0 0.0
        %5448 = vmatprep.subr.mxu0 0.0
        %5449 = vmatpush1.xpose.msra.mxu0 0.0
        %5450 = vmatprep.subr.mxu0 0.0
        %5451 = vmatpush1.xpose.msra.mxu0 0.0
        %5452 = vmatprep.subr.mxu0 0.0
        %5453 = vmatpush1.xpose.msra.mxu0 0.0
        %5454 = vmatprep.subr.mxu0 0.0
        %5455 = vmatpush1.xpose.msra.mxu0 0.0
        %5456 = vmatprep.subr.mxu0 0.0
        %5457 = vmatpush1.xpose.msra.mxu0 0.0
        %5458 = vmatprep.subr.mxu0 0.0
        %5459 = vmatpush1.xpose.msra.mxu0 0.0
        %5460 = vmatprep.subr.mxu0 0.0
        %5461 = vmatpush1.xpose.msra.mxu0 0.0
        %5462 = vmatprep.subr.mxu0 0.0
        %5463 = vmatpush1.xpose.msra.mxu0 0.0
        %5464 = vmatprep.subr.mxu0 0.0
        %5465 = vmatpush1.xpose.msra.mxu0 0.0
        %5466 = vmatprep.subr.mxu0 0.0
        %5467 = vmatpush1.xpose.msra.mxu0 0.0
        %5468 = vmatprep.subr.mxu0 0.0
        %5469 = vmatpush1.xpose.msra.mxu0 0.0
        %5470 = vmatprep.subr.mxu0 0.0
        %5471 = vmatpush1.xpose.msra.mxu0 0.0
        %5472 = vmatprep.subr.mxu0 0.0
        %5473 = vmatpush1.xpose.msra.mxu0 0.0
        %5474 = vmatprep.subr.mxu0 0.0
        %5475 = vmatpush1.xpose.msra.mxu0 0.0
        %5476 = vmatprep.subr.mxu0 0.0
        %5477 = vmatpush1.xpose.msra.mxu0 0.0
        %5478 = vmatprep.subr.mxu0 0.0
        %5479 = vmatpush1.xpose.msra.mxu0 0.0
        %5480 = vmatprep.subr.mxu0 0.0
        %5481 = vmatpush1.xpose.msra.mxu0 0.0
        %5482 = vmatprep.subr.mxu0 0.0
        %5483 = vmatpush1.xpose.msra.mxu0 0.0
        %5484 = vmatprep.subr.mxu0 0.0
        %5485 = vmatpush1.xpose.msra.mxu0 0.0
        %5486 = vmatprep.subr.mxu0 0.0
        %5487 = vmatpush1.xpose.msra.mxu0 0.0
        %5488 = vmatprep.subr.mxu0 0.0
        %5489 = vmatpush1.xpose.msra.mxu0 0.0
        %5490 = vmatprep.subr.mxu0 0.0
        %5491 = vmatpush1.xpose.msra.mxu0 0.0
        %5492 = vmatprep.subr.mxu0 0.0
        %5493 = vmatpush1.xpose.msra.mxu0 0.0
        %5494 = vmatprep.subr.mxu0 0.0
        %5495 = vmatpush1.xpose.msra.mxu0 0.0
        %5496 = vmatprep.subr.mxu0 0.0
        %5497 = vmatpush1.xpose.msra.mxu0 0.0
        %5498 = vmatprep.subr.mxu0 0.0
        %5499 = vmatpush1.xpose.msra.mxu0 0.0
        %5500 = vmatprep.subr.mxu0 0.0
        %5501 = vmatpush1.xpose.msra.mxu0 0.0
        %5502 = vmatprep.subr.mxu0 0.0
        %5503 = vmatpush1.xpose.msra.mxu0 0.0
        %5504 = vmatprep.mubr.f32.mxu0 0.0
        %5505 = vmatmul.mubr.f32.gmra.mrb[0].mxu0 %v5435
        %v5506 = vpop.f32.mrb[0].mxu0
        %v5507 = vadd.f32 0.0, %v5506
        %v5508 = vpop.f32.mrb[0].mxu0
        %5509 = vdwg.mxu0
        %v5511 = vsel %vm1924, %v4621, 0
        %v5514 = vsel %vm1924, %v4975, 0
        %5516 = vmatprep.subr.mxu0 0.0
        %5517 = vmatpush1.xpose.msra.mxu0 %v5514
        %5518 = vmatprep.subr.mxu0 0.0
        %5519 = vmatpush1.xpose.msra.mxu0 0.0
        %5520 = vmatprep.subr.mxu0 0.0
        %5521 = vmatpush1.xpose.msra.mxu0 0.0
        %5522 = vmatprep.subr.mxu0 0.0
        %5523 = vmatpush1.xpose.msra.mxu0 0.0
        %5524 = vmatprep.subr.mxu0 0.0
        %5525 = vmatpush1.xpose.msra.mxu0 0.0
        %5526 = vmatprep.subr.mxu0 0.0
        %5527 = vmatpush1.xpose.msra.mxu0 0.0
        %5528 = vmatprep.subr.mxu0 0.0
        %5529 = vmatpush1.xpose.msra.mxu0 0.0
        %5530 = vmatprep.subr.mxu0 0.0
        %5531 = vmatpush1.xpose.msra.mxu0 0.0
        %5532 = vmatprep.subr.mxu0 0.0
        %5533 = vmatpush1.xpose.msra.mxu0 0.0
        %5534 = vmatprep.subr.mxu0 0.0
        %5535 = vmatpush1.xpose.msra.mxu0 0.0
        %5536 = vmatprep.subr.mxu0 0.0
        %5537 = vmatpush1.xpose.msra.mxu0 0.0
        %5538 = vmatprep.subr.mxu0 0.0
        %5539 = vmatpush1.xpose.msra.mxu0 0.0
        %5540 = vmatprep.subr.mxu0 0.0
        %5541 = vmatpush1.xpose.msra.mxu0 0.0
        %5542 = vmatprep.subr.mxu0 0.0
        %5543 = vmatpush1.xpose.msra.mxu0 0.0
        %5544 = vmatprep.subr.mxu0 0.0
        %5545 = vmatpush1.xpose.msra.mxu0 0.0
        %5546 = vmatprep.subr.mxu0 0.0
        %5547 = vmatpush1.xpose.msra.mxu0 0.0
        %5548 = vmatprep.subr.mxu0 0.0
        %5549 = vmatpush1.xpose.msra.mxu0 0.0
        %5550 = vmatprep.subr.mxu0 0.0
        %5551 = vmatpush1.xpose.msra.mxu0 0.0
        %5552 = vmatprep.subr.mxu0 0.0
        %5553 = vmatpush1.xpose.msra.mxu0 0.0
        %5554 = vmatprep.subr.mxu0 0.0
        %5555 = vmatpush1.xpose.msra.mxu0 0.0
        %5556 = vmatprep.subr.mxu0 0.0
        %5557 = vmatpush1.xpose.msra.mxu0 0.0
        %5558 = vmatprep.subr.mxu0 0.0
        %5559 = vmatpush1.xpose.msra.mxu0 0.0
        %5560 = vmatprep.subr.mxu0 0.0
        %5561 = vmatpush1.xpose.msra.mxu0 0.0
        %5562 = vmatprep.subr.mxu0 0.0
        %5563 = vmatpush1.xpose.msra.mxu0 0.0
        %5564 = vmatprep.subr.mxu0 0.0
        %5565 = vmatpush1.xpose.msra.mxu0 0.0
        %5566 = vmatprep.subr.mxu0 0.0
        %5567 = vmatpush1.xpose.msra.mxu0 0.0
        %5568 = vmatprep.subr.mxu0 0.0
        %5569 = vmatpush1.xpose.msra.mxu0 0.0
        %5570 = vmatprep.subr.mxu0 0.0
        %5571 = vmatpush1.xpose.msra.mxu0 0.0
        %5572 = vmatprep.subr.mxu0 0.0
        %5573 = vmatpush1.xpose.msra.mxu0 0.0
        %5574 = vmatprep.subr.mxu0 0.0
        %5575 = vmatpush1.xpose.msra.mxu0 0.0
        %5576 = vmatprep.subr.mxu0 0.0
        %5577 = vmatpush1.xpose.msra.mxu0 0.0
        %5578 = vmatprep.subr.mxu0 0.0
        %5579 = vmatpush1.xpose.msra.mxu0 0.0
        %5580 = vmatprep.mubr.f32.mxu0 0.0
        %5581 = vmatmul.mubr.f32.gmra.mrb[0].mxu0 %v5511
        %v5582 = vpop.f32.mrb[0].mxu0
        %v5583 = vadd.f32 0.0, %v5582
        %v5584 = vpop.f32.mrb[0].mxu0
        %5585 = vdwg.mxu0
        %v5586 = vmul.f32 %v5355, 0.17677669
        %v5587 = vmul.f32 %v5431, 0.17677669
        %v5588 = vmul.f32 %v5507, 0.17677669
        %v5589 = vmul.f32 %v5583, 0.17677669
        %vm5590 = vcmask 24576
        %v5591 = vsel %vm5590, %v5586, -inf
        %5592 = vmax.xlane.f32.xlu0 %v5591
        %v5593 = vpop.xlane.xlu0 %5592
        %v5594 = vsel %vm5590, %v5587, -inf
        %5595 = vmax.xlane.f32.xlu0 %v5594
        %v5596 = vpop.xlane.xlu0 %5595
        %v5597 = vsel %vm5590, %v5588, -inf
        %5598 = vmax.xlane.f32.xlu0 %v5597
        %v5599 = vpop.xlane.xlu0 %5598
        %v5600 = vsel %vm5590, %v5589, -inf
        %5601 = vmax.xlane.f32.xlu0 %v5600
        %v5602 = vpop.xlane.xlu0 %5601
        %v5603 = vsub.f32 %v5586, %v5593
        %v5604 = vsub.f32 %v5587, %v5596
        %v5605 = vsub.f32 %v5588, %v5599
        %v5606 = vsub.f32 %v5589, %v5602
        %v5607 = vmul.f32 %v5603, 1.442695
        %v5608 = vpow.pop %v5607
        %v5609 = vmul.f32 %v5604, 1.442695
        %v5610 = vpow.pop %v5609
        %v5611 = vmul.f32 %v5605, 1.442695
        %v5612 = vpow.pop %v5611
        %v5613 = vmul.f32 %v5606, 1.442695
        %v5614 = vpow.pop %v5613
        %v5615 = vsel %vm5590, %v5608, 0.0
        %5616 = vadd.xlane.f32.xlu0 %v5615
        %v5617 = vpop.xlane.xlu0 %5616
        %v5618 = vsel %vm5590, %v5610, 0.0
        %5619 = vadd.xlane.f32.xlu0 %v5618
        %v5620 = vpop.xlane.xlu0 %5619
        %v5621 = vsel %vm5590, %v5612, 0.0
        %5622 = vadd.xlane.f32.xlu0 %v5621
        %v5623 = vpop.xlane.xlu0 %5622
        %v5624 = vsel %vm5590, %v5614, 0.0
        %5625 = vadd.xlane.f32.xlu0 %v5624
        %v5626 = vpop.xlane.xlu0 %5625
        %v5627 = vrcp.pop %v5617
        %v5628 = vrcp.pop %v5620
        %v5629 = vrcp.pop %v5623
        %v5630 = vrcp.pop %v5626
        %v5631 = vmul.f32 %v5608, %v5627
        %v5632 = vmul.f32 %v5610, %v5628
        %v5633 = vmul.f32 %v5612, %v5629
        %v5634 = vmul.f32 %v5614, %v5630
        %v5636 = vsel %vm1560, %v5631, 0
        %v5639 = vsel %vm2224, %v5069, 0
        %5641 = vmatprep.subr.mxu0 0.0
        %5642 = vmatpush1.msra.mxu0 %v5639
        %5643 = vmatprep.subr.mxu0 0.0
        %5644 = vmatpush1.msra.mxu0 0.0
        %5645 = vmatprep.subr.mxu0 0.0
        %5646 = vmatpush1.msra.mxu0 0.0
        %5647 = vmatprep.subr.mxu0 0.0
        %5648 = vmatpush1.msra.mxu0 0.0
        %5649 = vmatprep.subr.mxu0 0.0
        %5650 = vmatpush1.msra.mxu0 0.0
        %5651 = vmatprep.subr.mxu0 0.0
        %5652 = vmatpush1.msra.mxu0 0.0
        %5653 = vmatprep.subr.mxu0 0.0
        %5654 = vmatpush1.msra.mxu0 0.0
        %5655 = vmatprep.subr.mxu0 0.0
        %5656 = vmatpush1.msra.mxu0 0.0
        %5657 = vmatprep.subr.mxu0 0.0
        %5658 = vmatpush1.msra.mxu0 0.0
        %5659 = vmatprep.subr.mxu0 0.0
        %5660 = vmatpush1.msra.mxu0 0.0
        %5661 = vmatprep.subr.mxu0 0.0
        %5662 = vmatpush1.msra.mxu0 0.0
        %5663 = vmatprep.subr.mxu0 0.0
        %5664 = vmatpush1.msra.mxu0 0.0
        %5665 = vmatprep.subr.mxu0 0.0
        %5666 = vmatpush1.msra.mxu0 0.0
        %5667 = vmatprep.subr.mxu0 0.0
        %5668 = vmatpush1.msra.mxu0 0.0
        %5669 = vmatprep.subr.mxu0 0.0
        %5670 = vmatpush1.msra.mxu0 0.0
        %5671 = vmatprep.subr.mxu0 0.0
        %5672 = vmatpush1.msra.mxu0 0.0
        %5673 = vmatprep.subr.mxu0 0.0
        %5674 = vmatpush1.msra.mxu0 0.0
        %5675 = vmatprep.subr.mxu0 0.0
        %5676 = vmatpush1.msra.mxu0 0.0
        %5677 = vmatprep.subr.mxu0 0.0
        %5678 = vmatpush1.msra.mxu0 0.0
        %5679 = vmatprep.subr.mxu0 0.0
        %5680 = vmatpush1.msra.mxu0 0.0
        %5681 = vmatprep.subr.mxu0 0.0
        %5682 = vmatpush1.msra.mxu0 0.0
        %5683 = vmatprep.subr.mxu0 0.0
        %5684 = vmatpush1.msra.mxu0 0.0
        %5685 = vmatprep.subr.mxu0 0.0
        %5686 = vmatpush1.msra.mxu0 0.0
        %5687 = vmatprep.subr.mxu0 0.0
        %5688 = vmatpush1.msra.mxu0 0.0
        %5689 = vmatprep.subr.mxu0 0.0
        %5690 = vmatpush1.msra.mxu0 0.0
        %5691 = vmatprep.subr.mxu0 0.0
        %5692 = vmatpush1.msra.mxu0 0.0
        %5693 = vmatprep.subr.mxu0 0.0
        %5694 = vmatpush1.msra.mxu0 0.0
        %5695 = vmatprep.subr.mxu0 0.0
        %5696 = vmatpush1.msra.mxu0 0.0
        %5697 = vmatprep.subr.mxu0 0.0
        %5698 = vmatpush1.msra.mxu0 0.0
        %5699 = vmatprep.subr.mxu0 0.0
        %5700 = vmatpush1.msra.mxu0 0.0
        %5701 = vmatprep.subr.mxu0 0.0
        %5702 = vmatpush1.msra.mxu0 0.0
        %5703 = vmatprep.subr.mxu0 0.0
        %5704 = vmatpush1.msra.mxu0 0.0
        %5705 = vmatprep.mubr.f32.mxu0 0.0
        %5706 = vmatmul.mubr.f32.gmra.mrb[0].mxu0 %v5636
        %v5707 = vpop.f32.mrb[0].mxu0
        %v5708 = vadd.f32 0.0, %v5707
        %v5709 = vpop.f32.mrb[0].mxu0
        %5710 = vdwg.mxu0
        %v5712 = vsel %vm1560, %v5632, 0
        %v5715 = vsel %vm2224, %v5139, 0
        %5717 = vmatprep.subr.mxu0 0.0
        %5718 = vmatpush1.msra.mxu0 %v5715
        %5719 = vmatprep.subr.mxu0 0.0
        %5720 = vmatpush1.msra.mxu0 0.0
        %5721 = vmatprep.subr.mxu0 0.0
        %5722 = vmatpush1.msra.mxu0 0.0
        %5723 = vmatprep.subr.mxu0 0.0
        %5724 = vmatpush1.msra.mxu0 0.0
        %5725 = vmatprep.subr.mxu0 0.0
        %5726 = vmatpush1.msra.mxu0 0.0
        %5727 = vmatprep.subr.mxu0 0.0
        %5728 = vmatpush1.msra.mxu0 0.0
        %5729 = vmatprep.subr.mxu0 0.0
        %5730 = vmatpush1.msra.mxu0 0.0
        %5731 = vmatprep.subr.mxu0 0.0
        %5732 = vmatpush1.msra.mxu0 0.0
        %5733 = vmatprep.subr.mxu0 0.0
        %5734 = vmatpush1.msra.mxu0 0.0
        %5735 = vmatprep.subr.mxu0 0.0
        %5736 = vmatpush1.msra.mxu0 0.0
        %5737 = vmatprep.subr.mxu0 0.0
        %5738 = vmatpush1.msra.mxu0 0.0
        %5739 = vmatprep.subr.mxu0 0.0
        %5740 = vmatpush1.msra.mxu0 0.0
        %5741 = vmatprep.subr.mxu0 0.0
        %5742 = vmatpush1.msra.mxu0 0.0
        %5743 = vmatprep.subr.mxu0 0.0
        %5744 = vmatpush1.msra.mxu0 0.0
        %5745 = vmatprep.subr.mxu0 0.0
        %5746 = vmatpush1.msra.mxu0 0.0
        %5747 = vmatprep.subr.mxu0 0.0
        %5748 = vmatpush1.msra.mxu0 0.0
        %5749 = vmatprep.subr.mxu0 0.0
        %5750 = vmatpush1.msra.mxu0 0.0
        %5751 = vmatprep.subr.mxu0 0.0
        %5752 = vmatpush1.msra.mxu0 0.0
        %5753 = vmatprep.subr.mxu0 0.0
        %5754 = vmatpush1.msra.mxu0 0.0
        %5755 = vmatprep.subr.mxu0 0.0
        %5756 = vmatpush1.msra.mxu0 0.0
        %5757 = vmatprep.subr.mxu0 0.0
        %5758 = vmatpush1.msra.mxu0 0.0
        %5759 = vmatprep.subr.mxu0 0.0
        %5760 = vmatpush1.msra.mxu0 0.0
        %5761 = vmatprep.subr.mxu0 0.0
        %5762 = vmatpush1.msra.mxu0 0.0
        %5763 = vmatprep.subr.mxu0 0.0
        %5764 = vmatpush1.msra.mxu0 0.0
        %5765 = vmatprep.subr.mxu0 0.0
        %5766 = vmatpush1.msra.mxu0 0.0
        %5767 = vmatprep.subr.mxu0 0.0
        %5768 = vmatpush1.msra.mxu0 0.0
        %5769 = vmatprep.subr.mxu0 0.0
        %5770 = vmatpush1.msra.mxu0 0.0
        %5771 = vmatprep.subr.mxu0 0.0
        %5772 = vmatpush1.msra.mxu0 0.0
        %5773 = vmatprep.subr.mxu0 0.0
        %5774 = vmatpush1.msra.mxu0 0.0
        %5775 = vmatprep.subr.mxu0 0.0
        %5776 = vmatpush1.msra.mxu0 0.0
        %5777 = vmatprep.subr.mxu0 0.0
        %5778 = vmatpush1.msra.mxu0 0.0
        %5779 = vmatprep.subr.mxu0 0.0
        %5780 = vmatpush1.msra.mxu0 0.0
        %5781 = vmatprep.mubr.f32.mxu0 0.0
        %5782 = vmatmul.mubr.f32.gmra.mrb[0].mxu0 %v5712
        %v5783 = vpop.f32.mrb[0].mxu0
        %v5784 = vadd.f32 0.0, %v5783
        %v5785 = vpop.f32.mrb[0].mxu0
        %5786 = vdwg.mxu0
        %v5788 = vsel %vm1560, %v5633, 0
        %v5791 = vsel %vm2224, %v5209, 0
        %5793 = vmatprep.subr.mxu0 0.0
        %5794 = vmatpush1.msra.mxu0 %v5791
        %5795 = vmatprep.subr.mxu0 0.0
        %5796 = vmatpush1.msra.mxu0 0.0
        %5797 = vmatprep.subr.mxu0 0.0
        %5798 = vmatpush1.msra.mxu0 0.0
        %5799 = vmatprep.subr.mxu0 0.0
        %5800 = vmatpush1.msra.mxu0 0.0
        %5801 = vmatprep.subr.mxu0 0.0
        %5802 = vmatpush1.msra.mxu0 0.0
        %5803 = vmatprep.subr.mxu0 0.0
        %5804 = vmatpush1.msra.mxu0 0.0
        %5805 = vmatprep.subr.mxu0 0.0
        %5806 = vmatpush1.msra.mxu0 0.0
        %5807 = vmatprep.subr.mxu0 0.0
        %5808 = vmatpush1.msra.mxu0 0.0
        %5809 = vmatprep.subr.mxu0 0.0
        %5810 = vmatpush1.msra.mxu0 0.0
        %5811 = vmatprep.subr.mxu0 0.0
        %5812 = vmatpush1.msra.mxu0 0.0
        %5813 = vmatprep.subr.mxu0 0.0
        %5814 = vmatpush1.msra.mxu0 0.0
        %5815 = vmatprep.subr.mxu0 0.0
        %5816 = vmatpush1.msra.mxu0 0.0
        %5817 = vmatprep.subr.mxu0 0.0
        %5818 = vmatpush1.msra.mxu0 0.0
        %5819 = vmatprep.subr.mxu0 0.0
        %5820 = vmatpush1.msra.mxu0 0.0
        %5821 = vmatprep.subr.mxu0 0.0
        %5822 = vmatpush1.msra.mxu0 0.0
        %5823 = vmatprep.subr.mxu0 0.0
        %5824 = vmatpush1.msra.mxu0 0.0
        %5825 = vmatprep.subr.mxu0 0.0
        %5826 = vmatpush1.msra.mxu0 0.0
        %5827 = vmatprep.subr.mxu0 0.0
        %5828 = vmatpush1.msra.mxu0 0.0
        %5829 = vmatprep.subr.mxu0 0.0
        %5830 = vmatpush1.msra.mxu0 0.0
        %5831 = vmatprep.subr.mxu0 0.0
        %5832 = vmatpush1.msra.mxu0 0.0
        %5833 = vmatprep.subr.mxu0 0.0
        %5834 = vmatpush1.msra.mxu0 0.0
        %5835 = vmatprep.subr.mxu0 0.0
        %5836 = vmatpush1.msra.mxu0 0.0
        %5837 = vmatprep.subr.mxu0 0.0
        %5838 = vmatpush1.msra.mxu0 0.0
        %5839 = vmatprep.subr.mxu0 0.0
        %5840 = vmatpush1.msra.mxu0 0.0
        %5841 = vmatprep.subr.mxu0 0.0
        %5842 = vmatpush1.msra.mxu0 0.0
        %5843 = vmatprep.subr.mxu0 0.0
        %5844 = vmatpush1.msra.mxu0 0.0
        %5845 = vmatprep.subr.mxu0 0.0
        %5846 = vmatpush1.msra.mxu0 0.0
        %5847 = vmatprep.subr.mxu0 0.0
        %5848 = vmatpush1.msra.mxu0 0.0
        %5849 = vmatprep.subr.mxu0 0.0
        %5850 = vmatpush1.msra.mxu0 0.0
        %5851 = vmatprep.subr.mxu0 0.0
        %5852 = vmatpush1.msra.mxu0 0.0
        %5853 = vmatprep.subr.mxu0 0.0
        %5854 = vmatpush1.msra.mxu0 0.0
        %5855 = vmatprep.subr.mxu0 0.0
        %5856 = vmatpush1.msra.mxu0 0.0
        %5857 = vmatprep.mubr.f32.mxu0 0.0
        %5858 = vmatmul.mubr.f32.gmra.mrb[0].mxu0 %v5788
        %v5859 = vpop.f32.mrb[0].mxu0
        %v5860 = vadd.f32 0.0, %v5859
        %v5861 = vpop.f32.mrb[0].mxu0
        %5862 = vdwg.mxu0
        %v5864 = vsel %vm1560, %v5634, 0
        %v5867 = vsel %vm2224, %v5279, 0
        %5869 = vmatprep.subr.mxu0 0.0
        %5870 = vmatpush1.msra.mxu0 %v5867
        %5871 = vmatprep.subr.mxu0 0.0
        %5872 = vmatpush1.msra.mxu0 0.0
        %5873 = vmatprep.subr.mxu0 0.0
        %5874 = vmatpush1.msra.mxu0 0.0
        %5875 = vmatprep.subr.mxu0 0.0
        %5876 = vmatpush1.msra.mxu0 0.0
        %5877 = vmatprep.subr.mxu0 0.0
        %5878 = vmatpush1.msra.mxu0 0.0
        %5879 = vmatprep.subr.mxu0 0.0
        %5880 = vmatpush1.msra.mxu0 0.0
        %5881 = vmatprep.subr.mxu0 0.0
        %5882 = vmatpush1.msra.mxu0 0.0
        %5883 = vmatprep.subr.mxu0 0.0
        %5884 = vmatpush1.msra.mxu0 0.0
        %5885 = vmatprep.subr.mxu0 0.0
        %5886 = vmatpush1.msra.mxu0 0.0
        %5887 = vmatprep.subr.mxu0 0.0
        %5888 = vmatpush1.msra.mxu0 0.0
        %5889 = vmatprep.subr.mxu0 0.0
        %5890 = vmatpush1.msra.mxu0 0.0
        %5891 = vmatprep.subr.mxu0 0.0
        %5892 = vmatpush1.msra.mxu0 0.0
        %5893 = vmatprep.subr.mxu0 0.0
        %5894 = vmatpush1.msra.mxu0 0.0
        %5895 = vmatprep.subr.mxu0 0.0
        %5896 = vmatpush1.msra.mxu0 0.0
        %5897 = vmatprep.subr.mxu0 0.0
        %5898 = vmatpush1.msra.mxu0 0.0
        %5899 = vmatprep.subr.mxu0 0.0
        %5900 = vmatpush1.msra.mxu0 0.0
        %5901 = vmatprep.subr.mxu0 0.0
        %5902 = vmatpush1.msra.mxu0 0.0
        %5903 = vmatprep.subr.mxu0 0.0
        %5904 = vmatpush1.msra.mxu0 0.0
        %5905 = vmatprep.subr.mxu0 0.0
        %5906 = vmatpush1.msra.mxu0 0.0
        %5907 = vmatprep.subr.mxu0 0.0
        %5908 = vmatpush1.msra.mxu0 0.0
        %5909 = vmatprep.subr.mxu0 0.0
        %5910 = vmatpush1.msra.mxu0 0.0
        %5911 = vmatprep.subr.mxu0 0.0
        %5912 = vmatpush1.msra.mxu0 0.0
        %5913 = vmatprep.subr.mxu0 0.0
        %5914 = vmatpush1.msra.mxu0 0.0
        %5915 = vmatprep.subr.mxu0 0.0
        %5916 = vmatpush1.msra.mxu0 0.0
        %5917 = vmatprep.subr.mxu0 0.0
        %5918 = vmatpush1.msra.mxu0 0.0
        %5919 = vmatprep.subr.mxu0 0.0
        %5920 = vmatpush1.msra.mxu0 0.0
        %5921 = vmatprep.subr.mxu0 0.0
        %5922 = vmatpush1.msra.mxu0 0.0
        %5923 = vmatprep.subr.mxu0 0.0
        %5924 = vmatpush1.msra.mxu0 0.0
        %5925 = vmatprep.subr.mxu0 0.0
        %5926 = vmatpush1.msra.mxu0 0.0
        %5927 = vmatprep.subr.mxu0 0.0
        %5928 = vmatpush1.msra.mxu0 0.0
        %5929 = vmatprep.subr.mxu0 0.0
        %5930 = vmatpush1.msra.mxu0 0.0
        %5931 = vmatprep.subr.mxu0 0.0
        %5932 = vmatpush1.msra.mxu0 0.0
        %5933 = vmatprep.mubr.f32.mxu0 0.0
        %5934 = vmatmul.mubr.f32.gmra.mrb[0].mxu0 %v5864
        %v5935 = vpop.f32.mrb[0].mxu0
        %v5936 = vadd.f32 0.0, %v5935
        %v5937 = vpop.f32.mrb[0].mxu0
        %5938 = vdwg.mxu0
        %v5939 = vadd.f32 %v4618, %v5708
        %v5940 = vadd.f32 %v4619, %v5784
        %v5941 = vadd.f32 %v4620, %v5860
        %v5942 = vadd.f32 %v4621, %v5936
        %v5944 = vsel %vm1924, %v5939, 0
        %5946 = vmatprep.subr.mxu0 0.0
        %5947 = vmatpush1.msra.mxu0 %v4662
        %5948 = vmatprep.subr.mxu0 0.0
        %5949 = vmatpush1.msra.mxu0 0.0
        %5950 = vmatprep.subr.mxu0 0.0
        %5951 = vmatpush1.msra.mxu0 0.0
        %5952 = vmatprep.subr.mxu0 0.0
        %5953 = vmatpush1.msra.mxu0 0.0
        %5954 = vmatprep.subr.mxu0 0.0
        %5955 = vmatpush1.msra.mxu0 0.0
        %5956 = vmatprep.subr.mxu0 0.0
        %5957 = vmatpush1.msra.mxu0 0.0
        %5958 = vmatprep.subr.mxu0 0.0
        %5959 = vmatpush1.msra.mxu0 0.0
        %5960 = vmatprep.subr.mxu0 0.0
        %5961 = vmatpush1.msra.mxu0 0.0
        %5962 = vmatprep.subr.mxu0 0.0
        %5963 = vmatpush1.msra.mxu0 0.0
        %5964 = vmatprep.subr.mxu0 0.0
        %5965 = vmatpush1.msra.mxu0 0.0
        %5966 = vmatprep.subr.mxu0 0.0
        %5967 = vmatpush1.msra.mxu0 0.0
        %5968 = vmatprep.subr.mxu0 0.0
        %5969 = vmatpush1.msra.mxu0 0.0
        %5970 = vmatprep.subr.mxu0 0.0
        %5971 = vmatpush1.msra.mxu0 0.0
        %5972 = vmatprep.subr.mxu0 0.0
        %5973 = vmatpush1.msra.mxu0 0.0
        %5974 = vmatprep.subr.mxu0 0.0
        %5975 = vmatpush1.msra.mxu0 0.0
        %5976 = vmatprep.subr.mxu0 0.0
        %5977 = vmatpush1.msra.mxu0 0.0
        %5978 = vmatprep.subr.mxu0 0.0
        %5979 = vmatpush1.msra.mxu0 0.0
        %5980 = vmatprep.subr.mxu0 0.0
        %5981 = vmatpush1.msra.mxu0 0.0
        %5982 = vmatprep.subr.mxu0 0.0
        %5983 = vmatpush1.msra.mxu0 0.0
        %5984 = vmatprep.subr.mxu0 0.0
        %5985 = vmatpush1.msra.mxu0 0.0
        %5986 = vmatprep.subr.mxu0 0.0
        %5987 = vmatpush1.msra.mxu0 0.0
        %5988 = vmatprep.subr.mxu0 0.0
        %5989 = vmatpush1.msra.mxu0 0.0
        %5990 = vmatprep.subr.mxu0 0.0
        %5991 = vmatpush1.msra.mxu0 0.0
        %5992 = vmatprep.subr.mxu0 0.0
        %5993 = vmatpush1.msra.mxu0 0.0
        %5994 = vmatprep.subr.mxu0 0.0
        %5995 = vmatpush1.msra.mxu0 0.0
        %5996 = vmatprep.subr.mxu0 0.0
        %5997 = vmatpush1.msra.mxu0 0.0
        %5998 = vmatprep.subr.mxu0 0.0
        %5999 = vmatpush1.msra.mxu0 0.0
        %6000 = vmatprep.subr.mxu0 0.0
        %6001 = vmatpush1.msra.mxu0 0.0
        %6002 = vmatprep.subr.mxu0 0.0
        %6003 = vmatpush1.msra.mxu0 0.0
        %6004 = vmatprep.subr.mxu0 0.0
        %6005 = vmatpush1.msra.mxu0 0.0
        %6006 = vmatprep.subr.mxu0 0.0
        %6007 = vmatpush1.msra.mxu0 0.0
        %6008 = vmatprep.subr.mxu0 0.0
        %6009 = vmatpush1.msra.mxu0 0.0
        %6010 = vmatprep.mubr.f32.mxu0 0.0
        %6011 = vmatmul.mubr.f32.gmra.mrb[0].mxu0 %v5944
        %v6012 = vpop.f32.mrb[0].mxu0
        %v6013 = vadd.f32 0.0, %v6012
        %v6014 = vpop.f32.mrb[0].mxu0
        %6015 = vdwg.mxu0
        %v6017 = vsel %vm1924, %v5940, 0
        %6019 = vmatprep.subr.mxu0 0.0
        %6020 = vmatpush1.msra.mxu0 %v4663
        %6021 = vmatprep.subr.mxu0 0.0
        %6022 = vmatpush1.msra.mxu0 0.0
        %6023 = vmatprep.subr.mxu0 0.0
        %6024 = vmatpush1.msra.mxu0 0.0
        %6025 = vmatprep.subr.mxu0 0.0
        %6026 = vmatpush1.msra.mxu0 0.0
        %6027 = vmatprep.subr.mxu0 0.0
        %6028 = vmatpush1.msra.mxu0 0.0
        %6029 = vmatprep.subr.mxu0 0.0
        %6030 = vmatpush1.msra.mxu0 0.0
        %6031 = vmatprep.subr.mxu0 0.0
        %6032 = vmatpush1.msra.mxu0 0.0
        %6033 = vmatprep.subr.mxu0 0.0
        %6034 = vmatpush1.msra.mxu0 0.0
        %6035 = vmatprep.subr.mxu0 0.0
        %6036 = vmatpush1.msra.mxu0 0.0
        %6037 = vmatprep.subr.mxu0 0.0
        %6038 = vmatpush1.msra.mxu0 0.0
        %6039 = vmatprep.subr.mxu0 0.0
        %6040 = vmatpush1.msra.mxu0 0.0
        %6041 = vmatprep.subr.mxu0 0.0
        %6042 = vmatpush1.msra.mxu0 0.0
        %6043 = vmatprep.subr.mxu0 0.0
        %6044 = vmatpush1.msra.mxu0 0.0
        %6045 = vmatprep.subr.mxu0 0.0
        %6046 = vmatpush1.msra.mxu0 0.0
        %6047 = vmatprep.subr.mxu0 0.0
        %6048 = vmatpush1.msra.mxu0 0.0
        %6049 = vmatprep.subr.mxu0 0.0
        %6050 = vmatpush1.msra.mxu0 0.0
        %6051 = vmatprep.subr.mxu0 0.0
        %6052 = vmatpush1.msra.mxu0 0.0
        %6053 = vmatprep.subr.mxu0 0.0
        %6054 = vmatpush1.msra.mxu0 0.0
        %6055 = vmatprep.subr.mxu0 0.0
        %6056 = vmatpush1.msra.mxu0 0.0
        %6057 = vmatprep.subr.mxu0 0.0
        %6058 = vmatpush1.msra.mxu0 0.0
        %6059 = vmatprep.subr.mxu0 0.0
        %6060 = vmatpush1.msra.mxu0 0.0
        %6061 = vmatprep.subr.mxu0 0.0
        %6062 = vmatpush1.msra.mxu0 0.0
        %6063 = vmatprep.subr.mxu0 0.0
        %6064 = vmatpush1.msra.mxu0 0.0
        %6065 = vmatprep.subr.mxu0 0.0
        %6066 = vmatpush1.msra.mxu0 0.0
        %6067 = vmatprep.subr.mxu0 0.0
        %6068 = vmatpush1.msra.mxu0 0.0
        %6069 = vmatprep.subr.mxu0 0.0
        %6070 = vmatpush1.msra.mxu0 0.0
        %6071 = vmatprep.subr.mxu0 0.0
        %6072 = vmatpush1.msra.mxu0 0.0
        %6073 = vmatprep.subr.mxu0 0.0
        %6074 = vmatpush1.msra.mxu0 0.0
        %6075 = vmatprep.subr.mxu0 0.0
        %6076 = vmatpush1.msra.mxu0 0.0
        %6077 = vmatprep.subr.mxu0 0.0
        %6078 = vmatpush1.msra.mxu0 0.0
        %6079 = vmatprep.subr.mxu0 0.0
        %6080 = vmatpush1.msra.mxu0 0.0
        %6081 = vmatprep.subr.mxu0 0.0
        %6082 = vmatpush1.msra.mxu0 0.0
        %6083 = vmatprep.mubr.f32.mxu0 0.0
        %6084 = vmatmul.mubr.f32.gmra.mrb[0].mxu0 %v6017
        %v6085 = vpop.f32.mrb[0].mxu0
        %v6086 = vadd.f32 0.0, %v6085
        %v6087 = vpop.f32.mrb[0].mxu0
        %6088 = vdwg.mxu0
        %v6090 = vsel %vm1924, %v5941, 0
        %6092 = vmatprep.subr.mxu0 0.0
        %6093 = vmatpush1.msra.mxu0 %v4664
        %6094 = vmatprep.subr.mxu0 0.0
        %6095 = vmatpush1.msra.mxu0 0.0
        %6096 = vmatprep.subr.mxu0 0.0
        %6097 = vmatpush1.msra.mxu0 0.0
        %6098 = vmatprep.subr.mxu0 0.0
        %6099 = vmatpush1.msra.mxu0 0.0
        %6100 = vmatprep.subr.mxu0 0.0
        %6101 = vmatpush1.msra.mxu0 0.0
        %6102 = vmatprep.subr.mxu0 0.0
        %6103 = vmatpush1.msra.mxu0 0.0
        %6104 = vmatprep.subr.mxu0 0.0
        %6105 = vmatpush1.msra.mxu0 0.0
        %6106 = vmatprep.subr.mxu0 0.0
        %6107 = vmatpush1.msra.mxu0 0.0
        %6108 = vmatprep.subr.mxu0 0.0
        %6109 = vmatpush1.msra.mxu0 0.0
        %6110 = vmatprep.subr.mxu0 0.0
        %6111 = vmatpush1.msra.mxu0 0.0
        %6112 = vmatprep.subr.mxu0 0.0
        %6113 = vmatpush1.msra.mxu0 0.0
        %6114 = vmatprep.subr.mxu0 0.0
        %6115 = vmatpush1.msra.mxu0 0.0
        %6116 = vmatprep.subr.mxu0 0.0
        %6117 = vmatpush1.msra.mxu0 0.0
        %6118 = vmatprep.subr.mxu0 0.0
        %6119 = vmatpush1.msra.mxu0 0.0
        %6120 = vmatprep.subr.mxu0 0.0
        %6121 = vmatpush1.msra.mxu0 0.0
        %6122 = vmatprep.subr.mxu0 0.0
        %6123 = vmatpush1.msra.mxu0 0.0
        %6124 = vmatprep.subr.mxu0 0.0
        %6125 = vmatpush1.msra.mxu0 0.0
        %6126 = vmatprep.subr.mxu0 0.0
        %6127 = vmatpush1.msra.mxu0 0.0
        %6128 = vmatprep.subr.mxu0 0.0
        %6129 = vmatpush1.msra.mxu0 0.0
        %6130 = vmatprep.subr.mxu0 0.0
        %6131 = vmatpush1.msra.mxu0 0.0
        %6132 = vmatprep.subr.mxu0 0.0
        %6133 = vmatpush1.msra.mxu0 0.0
        %6134 = vmatprep.subr.mxu0 0.0
        %6135 = vmatpush1.msra.mxu0 0.0
        %6136 = vmatprep.subr.mxu0 0.0
        %6137 = vmatpush1.msra.mxu0 0.0
        %6138 = vmatprep.subr.mxu0 0.0
        %6139 = vmatpush1.msra.mxu0 0.0
        %6140 = vmatprep.subr.mxu0 0.0
        %6141 = vmatpush1.msra.mxu0 0.0
        %6142 = vmatprep.subr.mxu0 0.0
        %6143 = vmatpush1.msra.mxu0 0.0
        %6144 = vmatprep.subr.mxu0 0.0
        %6145 = vmatpush1.msra.mxu0 0.0
        %6146 = vmatprep.subr.mxu0 0.0
        %6147 = vmatpush1.msra.mxu0 0.0
        %6148 = vmatprep.subr.mxu0 0.0
        %6149 = vmatpush1.msra.mxu0 0.0
        %6150 = vmatprep.subr.mxu0 0.0
        %6151 = vmatpush1.msra.mxu0 0.0
        %6152 = vmatprep.subr.mxu0 0.0
        %6153 = vmatpush1.msra.mxu0 0.0
        %6154 = vmatprep.subr.mxu0 0.0
        %6155 = vmatpush1.msra.mxu0 0.0
        %6156 = vmatprep.mubr.f32.mxu0 0.0
        %6157 = vmatmul.mubr.f32.gmra.mrb[0].mxu0 %v6090
        %v6158 = vpop.f32.mrb[0].mxu0
        %v6159 = vadd.f32 0.0, %v6158
        %v6160 = vpop.f32.mrb[0].mxu0
        %6161 = vdwg.mxu0
        %v6163 = vsel %vm1924, %v5942, 0
        %6165 = vmatprep.subr.mxu0 0.0
        %6166 = vmatpush1.msra.mxu0 %v4665
        %6167 = vmatprep.subr.mxu0 0.0
        %6168 = vmatpush1.msra.mxu0 0.0
        %6169 = vmatprep.subr.mxu0 0.0
        %6170 = vmatpush1.msra.mxu0 0.0
        %6171 = vmatprep.subr.mxu0 0.0
        %6172 = vmatpush1.msra.mxu0 0.0
        %6173 = vmatprep.subr.mxu0 0.0
        %6174 = vmatpush1.msra.mxu0 0.0
        %6175 = vmatprep.subr.mxu0 0.0
        %6176 = vmatpush1.msra.mxu0 0.0
        %6177 = vmatprep.subr.mxu0 0.0
        %6178 = vmatpush1.msra.mxu0 0.0
        %6179 = vmatprep.subr.mxu0 0.0
        %6180 = vmatpush1.msra.mxu0 0.0
        %6181 = vmatprep.subr.mxu0 0.0
        %6182 = vmatpush1.msra.mxu0 0.0
        %6183 = vmatprep.subr.mxu0 0.0
        %6184 = vmatpush1.msra.mxu0 0.0
        %6185 = vmatprep.subr.mxu0 0.0
        %6186 = vmatpush1.msra.mxu0 0.0
        %6187 = vmatprep.subr.mxu0 0.0
        %6188 = vmatpush1.msra.mxu0 0.0
        %6189 = vmatprep.subr.mxu0 0.0
        %6190 = vmatpush1.msra.mxu0 0.0
        %6191 = vmatprep.subr.mxu0 0.0
        %6192 = vmatpush1.msra.mxu0 0.0
        %6193 = vmatprep.subr.mxu0 0.0
        %6194 = vmatpush1.msra.mxu0 0.0
        %6195 = vmatprep.subr.mxu0 0.0
        %6196 = vmatpush1.msra.mxu0 0.0
        %6197 = vmatprep.subr.mxu0 0.0
        %6198 = vmatpush1.msra.mxu0 0.0
        %6199 = vmatprep.subr.mxu0 0.0
        %6200 = vmatpush1.msra.mxu0 0.0
        %6201 = vmatprep.subr.mxu0 0.0
        %6202 = vmatpush1.msra.mxu0 0.0
        %6203 = vmatprep.subr.mxu0 0.0
        %6204 = vmatpush1.msra.mxu0 0.0
        %6205 = vmatprep.subr.mxu0 0.0
        %6206 = vmatpush1.msra.mxu0 0.0
        %6207 = vmatprep.subr.mxu0 0.0
        %6208 = vmatpush1.msra.mxu0 0.0
        %6209 = vmatprep.subr.mxu0 0.0
        %6210 = vmatpush1.msra.mxu0 0.0
        %6211 = vmatprep.subr.mxu0 0.0
        %6212 = vmatpush1.msra.mxu0 0.0
        %6213 = vmatprep.subr.mxu0 0.0
        %6214 = vmatpush1.msra.mxu0 0.0
        %6215 = vmatprep.subr.mxu0 0.0
        %6216 = vmatpush1.msra.mxu0 0.0
        %6217 = vmatprep.subr.mxu0 0.0
        %6218 = vmatpush1.msra.mxu0 0.0
        %6219 = vmatprep.subr.mxu0 0.0
        %6220 = vmatpush1.msra.mxu0 0.0
        %6221 = vmatprep.subr.mxu0 0.0
        %6222 = vmatpush1.msra.mxu0 0.0
        %6223 = vmatprep.subr.mxu0 0.0
        %6224 = vmatpush1.msra.mxu0 0.0
        %6225 = vmatprep.subr.mxu0 0.0
        %6226 = vmatpush1.msra.mxu0 0.0
        %6227 = vmatprep.subr.mxu0 0.0
        %6228 = vmatpush1.msra.mxu0 0.0
        %6229 = vmatprep.mubr.f32.mxu0 0.0
        %6230 = vmatmul.mubr.f32.gmra.mrb[0].mxu0 %v6163
        %v6231 = vpop.f32.mrb[0].mxu0
        %v6232 = vadd.f32 0.0, %v6231
        %v6233 = vpop.f32.mrb[0].mxu0
        %6234 = vdwg.mxu0
        %vm6235 = vcmask 253952
        %v6236 = vsel %vm6235, %v6013, 0.0
        %v6237 = vsel %vm6235, %v6086, 0.0
        %v6238 = vadd.f32 %v6236, %v6237
        %v6239 = vsel %vm6235, %v6159, 0.0
        %v6240 = vadd.f32 %v6238, %v6239
        %v6241 = vsel %vm6235, %v6232, 0.0
        %v6242 = vadd.f32 %v6240, %v6241
        %v6244 = vsel %vm4542, %v6242, 0
        %6246 = vmatprep.subr.mxu0 0.0
        %6247 = vmatpush1.msra.mxu0 %v4666
        %6248 = vmatprep.subr.mxu0 0.0
        %6249 = vmatpush1.msra.mxu0 %v4667
        %6250 = vmatprep.subr.mxu0 0.0
        %6251 = vmatpush1.msra.mxu0 %v4668
        %6252 = vmatprep.subr.mxu0 0.0
        %6253 = vmatpush1.msra.mxu0 %v4669
        %6254 = vmatprep.subr.mxu0 0.0
        %6255 = vmatpush1.msra.mxu0 0.0
        %6256 = vmatprep.subr.mxu0 0.0
        %6257 = vmatpush1.msra.mxu0 0.0
        %6258 = vmatprep.subr.mxu0 0.0
        %6259 = vmatpush1.msra.mxu0 0.0
        %6260 = vmatprep.subr.mxu0 0.0
        %6261 = vmatpush1.msra.mxu0 0.0
        %6262 = vmatprep.subr.mxu0 0.0
        %6263 = vmatpush1.msra.mxu0 0.0
        %6264 = vmatprep.subr.mxu0 0.0
        %6265 = vmatpush1.msra.mxu0 0.0
        %6266 = vmatprep.subr.mxu0 0.0
        %6267 = vmatpush1.msra.mxu0 0.0
        %6268 = vmatprep.subr.mxu0 0.0
        %6269 = vmatpush1.msra.mxu0 0.0
        %6270 = vmatprep.subr.mxu0 0.0
        %6271 = vmatpush1.msra.mxu0 0.0
        %6272 = vmatprep.subr.mxu0 0.0
        %6273 = vmatpush1.msra.mxu0 0.0
        %6274 = vmatprep.subr.mxu0 0.0
        %6275 = vmatpush1.msra.mxu0 0.0
        %6276 = vmatprep.subr.mxu0 0.0
        %6277 = vmatpush1.msra.mxu0 0.0
        %6278 = vmatprep.subr.mxu0 0.0
        %6279 = vmatpush1.msra.mxu0 0.0
        %6280 = vmatprep.subr.mxu0 0.0
        %6281 = vmatpush1.msra.mxu0 0.0
        %6282 = vmatprep.subr.mxu0 0.0
        %6283 = vmatpush1.msra.mxu0 0.0
        %6284 = vmatprep.subr.mxu0 0.0
        %6285 = vmatpush1.msra.mxu0 0.0
        %6286 = vmatprep.subr.mxu0 0.0
        %6287 = vmatpush1.msra.mxu0 0.0
        %6288 = vmatprep.subr.mxu0 0.0
        %6289 = vmatpush1.msra.mxu0 0.0
        %6290 = vmatprep.subr.mxu0 0.0
        %6291 = vmatpush1.msra.mxu0 0.0
        %6292 = vmatprep.subr.mxu0 0.0
        %6293 = vmatpush1.msra.mxu0 0.0
        %6294 = vmatprep.subr.mxu0 0.0
        %6295 = vmatpush1.msra.mxu0 0.0
        %6296 = vmatprep.subr.mxu0 0.0
        %6297 = vmatpush1.msra.mxu0 0.0
        %6298 = vmatprep.subr.mxu0 0.0
        %6299 = vmatpush1.msra.mxu0 0.0
        %6300 = vmatprep.subr.mxu0 0.0
        %6301 = vmatpush1.msra.mxu0 0.0
        %6302 = vmatprep.subr.mxu0 0.0
        %6303 = vmatpush1.msra.mxu0 0.0
        %6304 = vmatprep.subr.mxu0 0.0
        %6305 = vmatpush1.msra.mxu0 0.0
        %6306 = vmatprep.subr.mxu0 0.0
        %6307 = vmatpush1.msra.mxu0 0.0
        %6308 = vmatprep.subr.mxu0 0.0
        %6309 = vmatpush1.msra.mxu0 0.0
        %6310 = vmatprep.mubr.f32.mxu0 0.0
        %6311 = vmatmul.mubr.f32.gmra.mrb[0].mxu0 %v6244
        %v6312 = vpop.f32.mrb[0].mxu0
        %v6313 = vadd.f32 %v4670, %v6312
        %v6314 = vpop.f32.mrb[0].mxu0
        %6315 = vdwg.mxu0
        %v6316 = vmax.f32 %v6313, 0.0
        %v6317 = vadd.f32 %v6242, %v6316
        %v6318 = vld [vmem:[%s55] sm:$0xff]
        %v6319 = vld [vmem:[%s55 + $0x8] sm:$0xff]
        %v6320 = vld [vmem:[%s55 + $0x10] sm:$0xff]
        %v6321 = vld [vmem:[%s55 + $0x18] sm:$0xff]
        %v6322 = vld [vmem:[%s57] sm:$0x1]
        %v6324 = vsel %vm4542, %v6317, 0
        %6326 = vmatprep.subr.mxu0 0.0
        %6327 = vmatpush1.msra.mxu0 %v6318
        %6328 = vmatprep.subr.mxu0 0.0
        %6329 = vmatpush1.msra.mxu0 %v6319
        %6330 = vmatprep.subr.mxu0 0.0
        %6331 = vmatpush1.msra.mxu0 %v6320
        %6332 = vmatprep.subr.mxu0 0.0
        %6333 = vmatpush1.msra.mxu0 %v6321
        %6334 = vmatprep.subr.mxu0 0.0
        %6335 = vmatpush1.msra.mxu0 0.0
        %6336 = vmatprep.subr.mxu0 0.0
        %6337 = vmatpush1.msra.mxu0 0.0
        %6338 = vmatprep.subr.mxu0 0.0
        %6339 = vmatpush1.msra.mxu0 0.0
        %6340 = vmatprep.subr.mxu0 0.0
        %6341 = vmatpush1.msra.mxu0 0.0
        %6342 = vmatprep.subr.mxu0 0.0
        %6343 = vmatpush1.msra.mxu0 0.0
        %6344 = vmatprep.subr.mxu0 0.0
        %6345 = vmatpush1.msra.mxu0 0.0
        %6346 = vmatprep.subr.mxu0 0.0
        %6347 = vmatpush1.msra.mxu0 0.0
        %6348 = vmatprep.subr.mxu0 0.0
        %6349 = vmatpush1.msra.mxu0 0.0
        %6350 = vmatprep.subr.mxu0 0.0
        %6351 = vmatpush1.msra.mxu0 0.0
        %6352 = vmatprep.subr.mxu0 0.0
        %6353 = vmatpush1.msra.mxu0 0.0
        %6354 = vmatprep.subr.mxu0 0.0
        %6355 = vmatpush1.msra.mxu0 0.0
        %6356 = vmatprep.subr.mxu0 0.0
        %6357 = vmatpush1.msra.mxu0 0.0
        %6358 = vmatprep.subr.mxu0 0.0
        %6359 = vmatpush1.msra.mxu0 0.0
        %6360 = vmatprep.subr.mxu0 0.0
        %6361 = vmatpush1.msra.mxu0 0.0
        %6362 = vmatprep.subr.mxu0 0.0
        %6363 = vmatpush1.msra.mxu0 0.0
        %6364 = vmatprep.subr.mxu0 0.0
        %6365 = vmatpush1.msra.mxu0 0.0
        %6366 = vmatprep.subr.mxu0 0.0
        %6367 = vmatpush1.msra.mxu0 0.0
        %6368 = vmatprep.subr.mxu0 0.0
        %6369 = vmatpush1.msra.mxu0 0.0
        %6370 = vmatprep.subr.mxu0 0.0
        %6371 = vmatpush1.msra.mxu0 0.0
        %6372 = vmatprep.subr.mxu0 0.0
        %6373 = vmatpush1.msra.mxu0 0.0
        %6374 = vmatprep.subr.mxu0 0.0
        %6375 = vmatpush1.msra.mxu0 0.0
        %6376 = vmatprep.subr.mxu0 0.0
        %6377 = vmatpush1.msra.mxu0 0.0
        %6378 = vmatprep.subr.mxu0 0.0
        %6379 = vmatpush1.msra.mxu0 0.0
        %6380 = vmatprep.subr.mxu0 0.0
        %6381 = vmatpush1.msra.mxu0 0.0
        %6382 = vmatprep.subr.mxu0 0.0
        %6383 = vmatpush1.msra.mxu0 0.0
        %6384 = vmatprep.subr.mxu0 0.0
        %6385 = vmatpush1.msra.mxu0 0.0
        %6386 = vmatprep.subr.mxu0 0.0
        %6387 = vmatpush1.msra.mxu0 0.0
        %6388 = vmatprep.subr.mxu0 0.0
        %6389 = vmatpush1.msra.mxu0 0.0
        %6390 = vmatprep.mubr.f32.mxu0 0.0
        %6391 = vmatmul.mubr.f32.gmra.mrb[0].mxu0 %v6324
        %v6392 = vpop.f32.mrb[0].mxu0
        %v6393 = vadd.f32 %v6322, %v6392
        %v6394 = vpop.f32.mrb[0].mxu0
        %6395 = vdwg.mxu0
        %vm6396 = vcmask 57344
        %6397 = vst.msk [vmem:[%s903] sm:$0x1] %vm6396, %v6393
        %s6398 = sand.u32 %s700, 1
        %s6399 = scalar_lea.sflag [#allocation3], %s6398
        %s6400 = sand.u32 %s700, 1
        %s6401 = scalar_lea.vmem [#allocation2], %s6400
        // Predicated region
        $region137: #{tpu_custom_call.1} parent=135 // pred_check
          %p6402 = pneg %p710
        $region138: #{tpu_custom_call.1} parent=135 // pred_check_branch
          %6404 = sbr.rel (%p6402) target = $region140
        $region139: #{tpu_custom_call.1} parent=135 // pred_region
          %s6406 = ssub.s32 16, 16
          %6407 = vsyncadd %s6399, %s6406
          %s6408 = smul.addr %s73, 16
          %s6409 = scalar_lea.hbm %s59, %s6408
          %s6411 = sshll.u32 %s6401, 4
          %s6412 = int_to_ptr.vmem [resolvable:$true] %s6411
          %6414 = dma.vmem_to_hbm [thread:$0]  %s6412, 16, %s6409, %s6399
        $region140: #{tpu_custom_call.1} parent=135 // pred_fallthru
          _
      $region136: #{tpu_custom_call.1} parent=5 // pred_fallthru
        _
      %p6415 = scmp.le.s32.totalorder 2, %s68
      // Predicated region
      $region141: #{tpu_custom_call.1} parent=5 // pred_check
        %p6416 = pneg %p6415
      $region142: #{tpu_custom_call.1} parent=5 // pred_check_branch
        %6418 = sbr.rel (%p6416) target = $region144
      $region143: #{tpu_custom_call.1} parent=5 // pred_region
        %s6419 = ssub.s32 %s68, 2
        // Predicated region
        $region145: #{tpu_custom_call.1} parent=143 // pred_check
          %p6420 = pneg %p716
        $region146: #{tpu_custom_call.1} parent=143 // pred_check_branch
          %6422 = sbr.rel (%p6420) target = $region148
        $region147: #{tpu_custom_call.1} parent=143 // pred_region
          %s6423 = sand.u32 %s701, 1
          %s6424 = scalar_lea.sflag [#allocation3], %s6423
          %s6425 = sand.u32 %s701, 1
          %s6426 = scalar_lea.vmem [#allocation2], %s6425
          %6427 = dma.done %s6424, 16
        $region148: #{tpu_custom_call.1} parent=143 // pred_fallthru
          _
      $region144: #{tpu_custom_call.1} parent=5 // pred_fallthru
        _
    $region6: #{tpu_custom_call.1} parent=1 // loop_footer
      %s72 = sadd.s32 1, %s68
    $region7: #{tpu_custom_call.1} parent=1 // loop_footer_branch
      %67 = sbr.rel target = $region3
    $region8: #{tpu_custom_call.1} parent=1 // loop_exit
      _
    %6428 = vsyncpa [#allocation3], 1
    %s6429 = scalar_lea.sflag [#allocation3], 1
    %6430 = vsyncpa %s6429, 1

</llo_original>
